<compile_context>
chip_gen: v5e
topology: v5e:2x2
jax: 0.10.0
libtpu: 0.0.40
codegen_flags: <defaults>
</compile_context>

<pallas_src>
import jax
import jax.numpy as jnp
from jax import lax
from jax.experimental import pallas as pl
from jax.experimental.pallas import tpu as pltpu


def _make_kernel(use_im2col):
    def kernel(x_ref, w1_ref, s1_ref, b1_ref, w2_ref, s2_ref, b2_ref, o_ref,
               xpad_ref, ypad_ref):
        # x_ref:   (1, H, W, Cin)     un-padded NHWC input tile (one image)
        # w1_ref:  (9*Cin, Cin)       conv1 weights, HWIO flattened over (ky,kx,ci)
        # s1/b1:   (1, Cin)           folded BN1 scale / (conv-bias + BN1) bias
        # w2_ref:  (9*Cin, Cout)      conv2 weights
        # s2/b2:   (1, Cout)
        # o_ref:   (1, H, W, Cout)
        # xpad/ypad: (H+2, W+2, Cin)  VMEM scratch: zero border ring + live interior
        H, W, Cin = x_ref.shape[1], x_ref.shape[2], x_ref.shape[3]
        Cout = w2_ref.shape[1]

        # Re-zero only the 1-pixel border ring (interior is overwritten below).
        # Done every step so per-core scratch is valid under "parallel" sharding.
        zrow = jnp.zeros((1, W + 2, Cin), jnp.float32)
        zcol = jnp.zeros((H + 2, 1, Cin), jnp.float32)
        for pad in (xpad_ref, ypad_ref):
            pad[0:1, :, :] = zrow
            pad[H + 1:H + 2, :, :] = zrow
            pad[:, 0:1, :] = zcol
            pad[:, W + 1:W + 2, :] = zcol

        def conv3x3(pad_ref, wf_ref, cout):
            # pad_ref: (H+2, W+2, Cin) zero-bordered input; wf_ref: (9*Cin, cout)
            if use_im2col:
                # Single MXU matmul per conv: patches (H*W, 9*Cin) @ (9*Cin, cout).
                cols = [pad_ref[ky:ky + H, kx:kx + W, :].reshape(H * W, Cin)
                        for ky in range(3) for kx in range(3)]
                patches = jnp.concatenate(cols, axis=1)          # (H*W, 9*Cin)
                return jnp.dot(patches, wf_ref[...],
                               preferred_element_type=jnp.float32)
            # Fallback: 9 shifted matmuls accumulated in f32.
            acc = jnp.zeros((H * W, cout), jnp.float32)
            for t in range(9):
                ky, kx = divmod(t, 3)
                patch = pad_ref[ky:ky + H, kx:kx + W, :].reshape(H * W, Cin)
                acc = acc + jnp.dot(patch, wf_ref[t * Cin:(t + 1) * Cin, :],
                                    preferred_element_type=jnp.float32)
            return acc

        # conv1 + fused (conv-bias + BN) scale/bias + ReLU
        xpad_ref[1:H + 1, 1:W + 1, :] = x_ref[0].astype(jnp.float32)
        y1 = conv3x3(xpad_ref, w1_ref, Cin)
        y1 = jnp.maximum(y1 * s1_ref[0] + b1_ref[0], 0.0)          # (H*W, Cin)

        # conv2 + fused scale/bias + ReLU
        ypad_ref[1:H + 1, 1:W + 1, :] = y1.reshape(H, W, Cin)
        y2 = conv3x3(ypad_ref, w2_ref, Cout)
        y2 = jnp.maximum(y2 * s2_ref[0] + b2_ref[0], 0.0)          # (H*W, Cout)

        o_ref[0] = y2.reshape(H, W, Cout).astype(o_ref.dtype)

    return kernel


def _d_double_conv_impl(x_nchw, params, eps, use_im2col):
    (w1, bconv1, g1, be1, m1, v1, w2, bconv2, g2, be2, m2, v2) = params
    N, Cin, H, W = x_nchw.shape
    Cout = w2.shape[3]

    # Fold conv bias + BN (inference, running stats) into per-channel scale & bias.
    s1 = g1 / jnp.sqrt(v1 + eps)
    b1 = (bconv1 - m1) * s1 + be1
    s2 = g2 / jnp.sqrt(v2 + eps)
    b2 = (bconv2 - m2) * s2 + be2

    # NCHW -> NHWC (no host-side spatial padding: halo built in-kernel).
    x = jnp.transpose(x_nchw, (0, 2, 3, 1)).astype(jnp.float32)
    # HWIO -> im2col layout (9*Cin, C), row order = (ky, kx, ci).
    w1f = w1.reshape(9 * Cin, Cin).astype(jnp.float32)
    w2f = w2.reshape(9 * Cin, Cout).astype(jnp.float32)

    out_nhwc = pl.pallas_call(
        _make_kernel(use_im2col),
        out_shape=jax.ShapeDtypeStruct((N, H, W, Cout), jnp.float32),
        grid_spec=pltpu.PrefetchScalarGridSpec(
            num_scalar_prefetch=0,
            grid=(N,),
            in_specs=[
                pl.BlockSpec((1, H, W, Cin), lambda n: (n, 0, 0, 0)),
                pl.BlockSpec((9 * Cin, Cin), lambda n: (0, 0)),
                pl.BlockSpec((1, Cin), lambda n: (0, 0)),
                pl.BlockSpec((1, Cin), lambda n: (0, 0)),
                pl.BlockSpec((9 * Cin, Cout), lambda n: (0, 0)),
                pl.BlockSpec((1, Cout), lambda n: (0, 0)),
                pl.BlockSpec((1, Cout), lambda n: (0, 0)),
            ],
            out_specs=pl.BlockSpec((1, H, W, Cout), lambda n: (n, 0, 0, 0)),
            scratch_shapes=[
                pltpu.VMEM((H + 2, W + 2, Cin), jnp.float32),
                pltpu.VMEM((H + 2, W + 2, Cin), jnp.float32),
            ],
        ),
        compiler_params=pltpu.CompilerParams(
            dimension_semantics=("parallel",)),
    )(x, w1f, s1.reshape(1, Cin), b1.reshape(1, Cin),
      w2f, s2.reshape(1, Cout), b2.reshape(1, Cout))

    # NHWC -> NCHW to match PyTorch output layout.
    return jnp.transpose(out_nhwc, (0, 3, 1, 2))


def d_double_conv(x_nchw, params, eps=1e-5):
    """Runs D_DoubleConv. x_nchw: (N, Cin, H, W) float32 (PyTorch layout)."""
    try:
        out = _d_double_conv_impl(x_nchw, params, eps, use_im2col=True)
        return jax.block_until_ready(out)
    except Exception:
        # If minor-dim concatenation (im2col patch assembly) does not lower on
        # this toolchain, fall back to 9 shifted matmuls per conv (same math).
        out = _d_double_conv_impl(x_nchw, params, eps, use_im2col=False)
        return jax.block_until_ready(out)


def _reference(x_nchw, params, eps=1e-5):
    """Pure-JAX reference (inference-mode BN), NHWC conv via lax."""
    (w1, bconv1, g1, be1, m1, v1, w2, bconv2, g2, be2, m2, v2) = params
    x = jnp.transpose(x_nchw, (0, 2, 3, 1)).astype(jnp.float32)
    dn = ('NHWC', 'HWIO', 'NHWC')
    y = lax.conv_general_dilated(x, w1, (1, 1), 'SAME',
                                 dimension_numbers=dn) + bconv1
    y = (y - m1) / jnp.sqrt(v1 + eps) * g1 + be1
    y = jnp.maximum(y, 0.0)
    y = lax.conv_general_dilated(y, w2, (1, 1), 'SAME',
                                 dimension_numbers=dn) + bconv2
    y = (y - m2) / jnp.sqrt(v2 + eps) * g2 + be2
    y = jnp.maximum(y, 0.0)
    return jnp.transpose(y, (0, 3, 1, 2))


if __name__ == "__main__":
    # Small shapes consistent with the module: N=2, in_ch=4, out_ch=8, 16x16.
    N, Cin, Cout, H, W = 2, 4, 8, 16, 16

    key = jax.random.PRNGKey(0)
    ks = jax.random.split(key, 13)

    x = jax.random.normal(ks[0], (N, Cin, H, W), jnp.float32)

    # Conv weights in HWIO (PyTorch OIHW transposed), roughly Kaiming-scaled.
    w1 = jax.random.normal(ks[1], (3, 3, Cin, Cin), jnp.float32) * 0.2
    bconv1 = jax.random.normal(ks[2], (Cin,), jnp.float32) * 0.1
    g1 = 1.0 + 0.1 * jax.random.normal(ks[3], (Cin,), jnp.float32)
    be1 = 0.1 * jax.random.normal(ks[4], (Cin,), jnp.float32)
    m1 = 0.1 * jax.random.normal(ks[5], (Cin,), jnp.float32)
    v1 = jnp.abs(jax.random.normal(ks[6], (Cin,), jnp.float32)) + 0.5

    w2 = jax.random.normal(ks[7], (3, 3, Cin, Cout), jnp.float32) * 0.2
    bconv2 = jax.random.normal(ks[8], (Cout,), jnp.float32) * 0.1
    g2 = 1.0 + 0.1 * jax.random.normal(ks[9], (Cout,), jnp.float32)
    be2 = 0.1 * jax.random.normal(ks[10], (Cout,), jnp.float32)
    m2 = 0.1 * jax.random.normal(ks[11], (Cout,), jnp.float32)
    v2 = jnp.abs(jax.random.normal(ks[12], (Cout,), jnp.float32)) + 0.5

    params = (w1, bconv1, g1, be1, m1, v1, w2, bconv2, g2, be2, m2, v2)

    out = d_double_conv(x, params)

    ref = _reference(x, params)
    assert out.shape == (N, Cout, H, W), out.shape
    assert jnp.allclose(out, ref, atol=1e-4, rtol=1e-4), \
        float(jnp.max(jnp.abs(out - ref)))

    print("KERNEL_OK")
</pallas_src>

<mosaic_0001>
module attributes {stable_mosaic.version = 11 : i64} {
  func.func @kernel(%arg0: i32, %arg1: memref<1x16x16x4xf32, #tpu.memory_space<vmem>>, %arg2: memref<36x4xf32, #tpu.memory_space<vmem>>, %arg3: memref<1x4xf32, #tpu.memory_space<vmem>>, %arg4: memref<1x4xf32, #tpu.memory_space<vmem>>, %arg5: memref<36x8xf32, #tpu.memory_space<vmem>>, %arg6: memref<1x8xf32, #tpu.memory_space<vmem>>, %arg7: memref<1x8xf32, #tpu.memory_space<vmem>>, %arg8: memref<1x16x16x8xf32, #tpu.memory_space<vmem>>, %arg9: memref<18x18x4xf32, #tpu.memory_space<vmem>>, %arg10: memref<18x18x4xf32, #tpu.memory_space<vmem>>) attributes {dimension_semantics = [#tpu.dimension_semantics<parallel>], iteration_bounds = array<i64: 2>, scalar_prefetch = 0 : i64, scratch_operands = 2 : i64, tpu.core_type = #tpu.core_type<tc>, window_params = [{transform_indices = @transform_0, window_bounds = array<i64: 1, 16, 16, 4>}, {pipeline_mode = #tpu.pipeline_mode<synchronous>, transform_indices = @transform_1, window_bounds = array<i64: 36, 4>}, {pipeline_mode = #tpu.pipeline_mode<synchronous>, transform_indices = @transform_2, window_bounds = array<i64: 1, 4>}, {pipeline_mode = #tpu.pipeline_mode<synchronous>, transform_indices = @transform_3, window_bounds = array<i64: 1, 4>}, {pipeline_mode = #tpu.pipeline_mode<synchronous>, transform_indices = @transform_4, window_bounds = array<i64: 36, 8>}, {pipeline_mode = #tpu.pipeline_mode<synchronous>, transform_indices = @transform_5, window_bounds = array<i64: 1, 8>}, {pipeline_mode = #tpu.pipeline_mode<synchronous>, transform_indices = @transform_6, window_bounds = array<i64: 1, 8>}, {transform_indices = @transform_7, window_bounds = array<i64: 1, 16, 16, 8>}]} {
    %cst = arith.constant 0.000000e+00 : f32
    %0 = vector.broadcast %cst : f32 to vector<1x18x4xf32>
    %cst_0 = arith.constant 0.000000e+00 : f32
    %1 = vector.broadcast %cst_0 : f32 to vector<18x1x4xf32>
    %c0 = arith.constant 0 : index
    %c0_1 = arith.constant 0 : index
    %c0_2 = arith.constant 0 : index
    %2 = vector.load %arg9[%c0, %c0_1, %c0_2] : memref<18x18x4xf32, #tpu.memory_space<vmem>>, vector<1x18x4xf32>
    tpu.vector_store %arg9[%c0, %c0_1, %c0_2], %0 {strides = array<i32>} : memref<18x18x4xf32, #tpu.memory_space<vmem>>, vector<1x18x4xf32>,
    %c17 = arith.constant 17 : index
    %c0_3 = arith.constant 0 : index
    %c0_4 = arith.constant 0 : index
    %3 = vector.load %arg9[%c17, %c0_3, %c0_4] : memref<18x18x4xf32, #tpu.memory_space<vmem>>, vector<1x18x4xf32>
    tpu.vector_store %arg9[%c17, %c0_3, %c0_4], %0 {strides = array<i32>} : memref<18x18x4xf32, #tpu.memory_space<vmem>>, vector<1x18x4xf32>,
    %c0_5 = arith.constant 0 : index
    %c0_6 = arith.constant 0 : index
    %c0_7 = arith.constant 0 : index
    %4 = vector.load %arg9[%c0_5, %c0_6, %c0_7] : memref<18x18x4xf32, #tpu.memory_space<vmem>>, vector<18x1x4xf32>
    tpu.vector_store %arg9[%c0_5, %c0_6, %c0_7], %1 {strides = array<i32>} : memref<18x18x4xf32, #tpu.memory_space<vmem>>, vector<18x1x4xf32>,
    %c0_8 = arith.constant 0 : index
    %c17_9 = arith.constant 17 : index
    %c0_10 = arith.constant 0 : index
    %5 = vector.load %arg9[%c0_8, %c17_9, %c0_10] : memref<18x18x4xf32, #tpu.memory_space<vmem>>, vector<18x1x4xf32>
    tpu.vector_store %arg9[%c0_8, %c17_9, %c0_10], %1 {strides = array<i32>} : memref<18x18x4xf32, #tpu.memory_space<vmem>>, vector<18x1x4xf32>,
    %c0_11 = arith.constant 0 : index
    %c0_12 = arith.constant 0 : index
    %c0_13 = arith.constant 0 : index
    %6 = vector.load %arg10[%c0_11, %c0_12, %c0_13] : memref<18x18x4xf32, #tpu.memory_space<vmem>>, vector<1x18x4xf32>
    tpu.vector_store %arg10[%c0_11, %c0_12, %c0_13], %0 {strides = array<i32>} : memref<18x18x4xf32, #tpu.memory_space<vmem>>, vector<1x18x4xf32>,
    %c17_14 = arith.constant 17 : index
    %c0_15 = arith.constant 0 : index
    %c0_16 = arith.constant 0 : index
    %7 = vector.load %arg10[%c17_14, %c0_15, %c0_16] : memref<18x18x4xf32, #tpu.memory_space<vmem>>, vector<1x18x4xf32>
    tpu.vector_store %arg10[%c17_14, %c0_15, %c0_16], %0 {strides = array<i32>} : memref<18x18x4xf32, #tpu.memory_space<vmem>>, vector<1x18x4xf32>,
    %c0_17 = arith.constant 0 : index
    %c0_18 = arith.constant 0 : index
    %c0_19 = arith.constant 0 : index
    %8 = vector.load %arg10[%c0_17, %c0_18, %c0_19] : memref<18x18x4xf32, #tpu.memory_space<vmem>>, vector<18x1x4xf32>
    tpu.vector_store %arg10[%c0_17, %c0_18, %c0_19], %1 {strides = array<i32>} : memref<18x18x4xf32, #tpu.memory_space<vmem>>, vector<18x1x4xf32>,
    %c0_20 = arith.constant 0 : index
    %c17_21 = arith.constant 17 : index
    %c0_22 = arith.constant 0 : index
    %9 = vector.load %arg10[%c0_20, %c17_21, %c0_22] : memref<18x18x4xf32, #tpu.memory_space<vmem>>, vector<18x1x4xf32>
    tpu.vector_store %arg10[%c0_20, %c17_21, %c0_22], %1 {strides = array<i32>} : memref<18x18x4xf32, #tpu.memory_space<vmem>>, vector<18x1x4xf32>,
    %c0_23 = arith.constant 0 : index
    %c0_24 = arith.constant 0 : index
    %c0_25 = arith.constant 0 : index
    %c0_26 = arith.constant 0 : index
    %10 = vector.load %arg1[%c0_23, %c0_24, %c0_25, %c0_26] : memref<1x16x16x4xf32, #tpu.memory_space<vmem>>, vector<1x16x16x4xf32>
    %11 = vector.shape_cast %10 : vector<1x16x16x4xf32> to vector<16x16x4xf32>
    %c1 = arith.constant 1 : index
    %c1_27 = arith.constant 1 : index
    %c0_28 = arith.constant 0 : index
    %12 = vector.load %arg9[%c1, %c1_27, %c0_28] : memref<18x18x4xf32, #tpu.memory_space<vmem>>, vector<16x16x4xf32>
    tpu.vector_store %arg9[%c1, %c1_27, %c0_28], %11 {strides = array<i32>} : memref<18x18x4xf32, #tpu.memory_space<vmem>>, vector<16x16x4xf32>,
    %c0_29 = arith.constant 0 : index
    %c0_30 = arith.constant 0 : index
    %c0_31 = arith.constant 0 : index
    %13 = vector.load %arg9[%c0_29, %c0_30, %c0_31] : memref<18x18x4xf32, #tpu.memory_space<vmem>>, vector<16x16x4xf32>
    %14 = vector.shape_cast %13 : vector<16x16x4xf32> to vector<256x4xf32>
    %c0_32 = arith.constant 0 : index
    %c1_33 = arith.constant 1 : index
    %c0_34 = arith.constant 0 : index
    %15 = vector.load %arg9[%c0_32, %c1_33, %c0_34] : memref<18x18x4xf32, #tpu.memory_space<vmem>>, vector<16x16x4xf32>
    %16 = vector.shape_cast %15 : vector<16x16x4xf32> to vector<256x4xf32>
    %c0_35 = arith.constant 0 : index
    %c2 = arith.constant 2 : index
    %c0_36 = arith.constant 0 : index
    %17 = vector.load %arg9[%c0_35, %c2, %c0_36] : memref<18x18x4xf32, #tpu.memory_space<vmem>>, vector<16x16x4xf32>
    %18 = vector.shape_cast %17 : vector<16x16x4xf32> to vector<256x4xf32>
    %c1_37 = arith.constant 1 : index
    %c0_38 = arith.constant 0 : index
    %c0_39 = arith.constant 0 : index
    %19 = vector.load %arg9[%c1_37, %c0_38, %c0_39] : memref<18x18x4xf32, #tpu.memory_space<vmem>>, vector<16x16x4xf32>
    %20 = vector.shape_cast %19 : vector<16x16x4xf32> to vector<256x4xf32>
    %c1_40 = arith.constant 1 : index
    %c1_41 = arith.constant 1 : index
    %c0_42 = arith.constant 0 : index
    %21 = vector.load %arg9[%c1_40, %c1_41, %c0_42] : memref<18x18x4xf32, #tpu.memory_space<vmem>>, vector<16x16x4xf32>
    %22 = vector.shape_cast %21 : vector<16x16x4xf32> to vector<256x4xf32>
    %c1_43 = arith.constant 1 : index
    %c2_44 = arith.constant 2 : index
    %c0_45 = arith.constant 0 : index
    %23 = vector.load %arg9[%c1_43, %c2_44, %c0_45] : memref<18x18x4xf32, #tpu.memory_space<vmem>>, vector<16x16x4xf32>
    %24 = vector.shape_cast %23 : vector<16x16x4xf32> to vector<256x4xf32>
    %c2_46 = arith.constant 2 : index
    %c0_47 = arith.constant 0 : index
    %c0_48 = arith.constant 0 : index
    %25 = vector.load %arg9[%c2_46, %c0_47, %c0_48] : memref<18x18x4xf32, #tpu.memory_space<vmem>>, vector<16x16x4xf32>
    %26 = vector.shape_cast %25 : vector<16x16x4xf32> to vector<256x4xf32>
    %c2_49 = arith.constant 2 : index
    %c1_50 = arith.constant 1 : index
    %c0_51 = arith.constant 0 : index
    %27 = vector.load %arg9[%c2_49, %c1_50, %c0_51] : memref<18x18x4xf32, #tpu.memory_space<vmem>>, vector<16x16x4xf32>
    %28 = vector.shape_cast %27 : vector<16x16x4xf32> to vector<256x4xf32>
    %c2_52 = arith.constant 2 : index
    %c2_53 = arith.constant 2 : index
    %c0_54 = arith.constant 0 : index
    %29 = vector.load %arg9[%c2_52, %c2_53, %c0_54] : memref<18x18x4xf32, #tpu.memory_space<vmem>>, vector<16x16x4xf32>
    %30 = vector.shape_cast %29 : vector<16x16x4xf32> to vector<256x4xf32>
    %31 = tpu.concatenate %14, %16, %18, %20, %22, %24, %26, %28, %30 in 1 : vector<256x4xf32>, vector<256x4xf32>, vector<256x4xf32>, vector<256x4xf32>, vector<256x4xf32>, vector<256x4xf32>, vector<256x4xf32>, vector<256x4xf32>, vector<256x4xf32> -> vector<256x36xf32>
    %c0_55 = arith.constant 0 : index
    %c0_56 = arith.constant 0 : index
    %32 = vector.load %arg2[%c0_55, %c0_56] : memref<36x4xf32, #tpu.memory_space<vmem>>, vector<36x4xf32>
    %cst_57 = arith.constant dense<0.000000e+00> : vector<256x4xf32>
    %33 = tpu.matmul %31, %32, %cst_57 {dimension_numbers = #tpu.dot_dimension_numbers<[1], [0], [0], [1], [0, 0, 1, 1], [], []>} : vector<256x36xf32>, vector<36x4xf32>, vector<256x4xf32> -> vector<256x4xf32>
    %c0_58 = arith.constant 0 : index
    %c0_59 = arith.constant 0 : index
    %34 = vector.load %arg3[%c0_58, %c0_59] : memref<1x4xf32, #tpu.memory_space<vmem>>, vector<1x4xf32>
    %35 = vector.shape_cast %34 : vector<1x4xf32> to vector<4xf32>
    %36 = vector.shape_cast %35 : vector<4xf32> to vector<1x4xf32>
    %37 = vector.broadcast %36 : vector<1x4xf32> to vector<256x4xf32>
    %38 = arith.mulf %33, %37 : vector<256x4xf32>
    %c0_60 = arith.constant 0 : index
    %c0_61 = arith.constant 0 : index
    %39 = vector.load %arg4[%c0_60, %c0_61] : memref<1x4xf32, #tpu.memory_space<vmem>>, vector<1x4xf32>
    %40 = vector.shape_cast %39 : vector<1x4xf32> to vector<4xf32>
    %41 = vector.shape_cast %40 : vector<4xf32> to vector<1x4xf32>
    %42 = vector.broadcast %41 : vector<1x4xf32> to vector<256x4xf32>
    %43 = arith.addf %38, %42 : vector<256x4xf32>
    %cst_62 = arith.constant 0.000000e+00 : f32
    %44 = vector.broadcast %cst_62 : f32 to vector<256x4xf32>
    %45 = arith.maximumf %43, %44 : vector<256x4xf32>
    %46 = vector.shape_cast %45 : vector<256x4xf32> to vector<16x16x4xf32>
    %c1_63 = arith.constant 1 : index
    %c1_64 = arith.constant 1 : index
    %c0_65 = arith.constant 0 : index
    %47 = vector.load %arg10[%c1_63, %c1_64, %c0_65] : memref<18x18x4xf32, #tpu.memory_space<vmem>>, vector<16x16x4xf32>
    tpu.vector_store %arg10[%c1_63, %c1_64, %c0_65], %46 {strides = array<i32>} : memref<18x18x4xf32, #tpu.memory_space<vmem>>, vector<16x16x4xf32>,
    %c0_66 = arith.constant 0 : index
    %c0_67 = arith.constant 0 : index
    %c0_68 = arith.constant 0 : index
    %48 = vector.load %arg10[%c0_66, %c0_67, %c0_68] : memref<18x18x4xf32, #tpu.memory_space<vmem>>, vector<16x16x4xf32>
    %49 = vector.shape_cast %48 : vector<16x16x4xf32> to vector<256x4xf32>
    %c0_69 = arith.constant 0 : index
    %c1_70 = arith.constant 1 : index
    %c0_71 = arith.constant 0 : index
    %50 = vector.load %arg10[%c0_69, %c1_70, %c0_71] : memref<18x18x4xf32, #tpu.memory_space<vmem>>, vector<16x16x4xf32>
    %51 = vector.shape_cast %50 : vector<16x16x4xf32> to vector<256x4xf32>
    %c0_72 = arith.constant 0 : index
    %c2_73 = arith.constant 2 : index
    %c0_74 = arith.constant 0 : index
    %52 = vector.load %arg10[%c0_72, %c2_73, %c0_74] : memref<18x18x4xf32, #tpu.memory_space<vmem>>, vector<16x16x4xf32>
    %53 = vector.shape_cast %52 : vector<16x16x4xf32> to vector<256x4xf32>
    %c1_75 = arith.constant 1 : index
    %c0_76 = arith.constant 0 : index
    %c0_77 = arith.constant 0 : index
    %54 = vector.load %arg10[%c1_75, %c0_76, %c0_77] : memref<18x18x4xf32, #tpu.memory_space<vmem>>, vector<16x16x4xf32>
    %55 = vector.shape_cast %54 : vector<16x16x4xf32> to vector<256x4xf32>
    %c1_78 = arith.constant 1 : index
    %c1_79 = arith.constant 1 : index
    %c0_80 = arith.constant 0 : index
    %56 = vector.load %arg10[%c1_78, %c1_79, %c0_80] : memref<18x18x4xf32, #tpu.memory_space<vmem>>, vector<16x16x4xf32>
    %57 = vector.shape_cast %56 : vector<16x16x4xf32> to vector<256x4xf32>
    %c1_81 = arith.constant 1 : index
    %c2_82 = arith.constant 2 : index
    %c0_83 = arith.constant 0 : index
    %58 = vector.load %arg10[%c1_81, %c2_82, %c0_83] : memref<18x18x4xf32, #tpu.memory_space<vmem>>, vector<16x16x4xf32>
    %59 = vector.shape_cast %58 : vector<16x16x4xf32> to vector<256x4xf32>
    %c2_84 = arith.constant 2 : index
    %c0_85 = arith.constant 0 : index
    %c0_86 = arith.constant 0 : index
    %60 = vector.load %arg10[%c2_84, %c0_85, %c0_86] : memref<18x18x4xf32, #tpu.memory_space<vmem>>, vector<16x16x4xf32>
    %61 = vector.shape_cast %60 : vector<16x16x4xf32> to vector<256x4xf32>
    %c2_87 = arith.constant 2 : index
    %c1_88 = arith.constant 1 : index
    %c0_89 = arith.constant 0 : index
    %62 = vector.load %arg10[%c2_87, %c1_88, %c0_89] : memref<18x18x4xf32, #tpu.memory_space<vmem>>, vector<16x16x4xf32>
    %63 = vector.shape_cast %62 : vector<16x16x4xf32> to vector<256x4xf32>
    %c2_90 = arith.constant 2 : index
    %c2_91 = arith.constant 2 : index
    %c0_92 = arith.constant 0 : index
    %64 = vector.load %arg10[%c2_90, %c2_91, %c0_92] : memref<18x18x4xf32, #tpu.memory_space<vmem>>, vector<16x16x4xf32>
    %65 = vector.shape_cast %64 : vector<16x16x4xf32> to vector<256x4xf32>
    %66 = tpu.concatenate %49, %51, %53, %55, %57, %59, %61, %63, %65 in 1 : vector<256x4xf32>, vector<256x4xf32>, vector<256x4xf32>, vector<256x4xf32>, vector<256x4xf32>, vector<256x4xf32>, vector<256x4xf32>, vector<256x4xf32>, vector<256x4xf32> -> vector<256x36xf32>
    %c0_93 = arith.constant 0 : index
    %c0_94 = arith.constant 0 : index
    %67 = vector.load %arg5[%c0_93, %c0_94] : memref<36x8xf32, #tpu.memory_space<vmem>>, vector<36x8xf32>
    %cst_95 = arith.constant dense<0.000000e+00> : vector<256x8xf32>
    %68 = tpu.matmul %66, %67, %cst_95 {dimension_numbers = #tpu.dot_dimension_numbers<[1], [0], [0], [1], [0, 0, 1, 1], [], []>} : vector<256x36xf32>, vector<36x8xf32>, vector<256x8xf32> -> vector<256x8xf32>
    %c0_96 = arith.constant 0 : index
    %c0_97 = arith.constant 0 : index
    %69 = vector.load %arg6[%c0_96, %c0_97] : memref<1x8xf32, #tpu.memory_space<vmem>>, vector<1x8xf32>
    %70 = vector.shape_cast %69 : vector<1x8xf32> to vector<8xf32>
    %71 = vector.shape_cast %70 : vector<8xf32> to vector<1x8xf32>
    %72 = vector.broadcast %71 : vector<1x8xf32> to vector<256x8xf32>
    %73 = arith.mulf %68, %72 : vector<256x8xf32>
    %c0_98 = arith.constant 0 : index
    %c0_99 = arith.constant 0 : index
    %74 = vector.load %arg7[%c0_98, %c0_99] : memref<1x8xf32, #tpu.memory_space<vmem>>, vector<1x8xf32>
    %75 = vector.shape_cast %74 : vector<1x8xf32> to vector<8xf32>
    %76 = vector.shape_cast %75 : vector<8xf32> to vector<1x8xf32>
    %77 = vector.broadcast %76 : vector<1x8xf32> to vector<256x8xf32>
    %78 = arith.addf %73, %77 : vector<256x8xf32>
    %cst_100 = arith.constant 0.000000e+00 : f32
    %79 = vector.broadcast %cst_100 : f32 to vector<256x8xf32>
    %80 = arith.maximumf %78, %79 : vector<256x8xf32>
    %81 = vector.shape_cast %80 : vector<256x8xf32> to vector<16x16x8xf32>
    %c0_101 = arith.constant 0 : index
    %c0_102 = arith.constant 0 : index
    %c0_103 = arith.constant 0 : index
    %c0_104 = arith.constant 0 : index
    %82 = vector.load %arg8[%c0_101, %c0_102, %c0_103, %c0_104] : memref<1x16x16x8xf32, #tpu.memory_space<vmem>>, vector<1x16x16x8xf32>
    %83 = vector.shape_cast %82 : vector<1x16x16x8xf32> to vector<16x16x8xf32>
    %84 = vector.shape_cast %81 : vector<16x16x8xf32> to vector<1x16x16x8xf32>
    tpu.vector_store %arg8[%c0_101, %c0_102, %c0_103, %c0_104], %84 {strides = array<i32>} : memref<1x16x16x8xf32, #tpu.memory_space<vmem>>, vector<1x16x16x8xf32>,
    return
  }
  func.func @transform_0(%arg0: i32) -> (i32, i32, i32, i32) {
    %c0_i32 = arith.constant 0 : i32
    %c0_i32_0 = arith.constant 0 : i32
    %c0_i32_1 = arith.constant 0 : i32
    %c0_i32_2 = arith.constant 0 : i32
    return %arg0, %c0_i32, %c0_i32_0, %c0_i32_1 : i32, i32, i32, i32
  }
  func.func @transform_1(%arg0: i32) -> (i32, i32) {
    %c0_i32 = arith.constant 0 : i32
    %c0_i32_0 = arith.constant 0 : i32
    %c0_i32_1 = arith.constant 0 : i32
    return %c0_i32, %c0_i32_0 : i32, i32
  }
  func.func @transform_2(%arg0: i32) -> (i32, i32) {
    %c0_i32 = arith.constant 0 : i32
    %c0_i32_0 = arith.constant 0 : i32
    %c0_i32_1 = arith.constant 0 : i32
    return %c0_i32, %c0_i32_0 : i32, i32
  }
  func.func @transform_3(%arg0: i32) -> (i32, i32) {
    %c0_i32 = arith.constant 0 : i32
    %c0_i32_0 = arith.constant 0 : i32
    %c0_i32_1 = arith.constant 0 : i32
    return %c0_i32, %c0_i32_0 : i32, i32
  }
  func.func @transform_4(%arg0: i32) -> (i32, i32) {
    %c0_i32 = arith.constant 0 : i32
    %c0_i32_0 = arith.constant 0 : i32
    %c0_i32_1 = arith.constant 0 : i32
    return %c0_i32, %c0_i32_0 : i32, i32
  }
  func.func @transform_5(%arg0: i32) -> (i32, i32) {
    %c0_i32 = arith.constant 0 : i32
    %c0_i32_0 = arith.constant 0 : i32
    %c0_i32_1 = arith.constant 0 : i32
    return %c0_i32, %c0_i32_0 : i32, i32
  }
  func.func @transform_6(%arg0: i32) -> (i32, i32) {
    %c0_i32 = arith.constant 0 : i32
    %c0_i32_0 = arith.constant 0 : i32
    %c0_i32_1 = arith.constant 0 : i32
    return %c0_i32, %c0_i32_0 : i32, i32
  }
  func.func @transform_7(%arg0: i32) -> (i32, i32, i32, i32) {
    %c0_i32 = arith.constant 0 : i32
    %c0_i32_0 = arith.constant 0 : i32
    %c0_i32_1 = arith.constant 0 : i32
    %c0_i32_2 = arith.constant 0 : i32
    return %arg0, %c0_i32, %c0_i32_0, %c0_i32_1 : i32, i32, i32, i32
  }
}

module attributes {stable_mosaic.version = 11 : i64} {
  func.func @kernel(%arg0: i32, %arg1: memref<1x16x16x4xf32, #tpu.memory_space<vmem>>, %arg2: memref<36x4xf32, #tpu.memory_space<vmem>>, %arg3: memref<1x4xf32, #tpu.memory_space<vmem>>, %arg4: memref<1x4xf32, #tpu.memory_space<vmem>>, %arg5: memref<36x8xf32, #tpu.memory_space<vmem>>, %arg6: memref<1x8xf32, #tpu.memory_space<vmem>>, %arg7: memref<1x8xf32, #tpu.memory_space<vmem>>, %arg8: memref<1x16x16x8xf32, #tpu.memory_space<vmem>>, %arg9: memref<18x18x4xf32, #tpu.memory_space<vmem>>, %arg10: memref<18x18x4xf32, #tpu.memory_space<vmem>>) attributes {dimension_semantics = [#tpu.dimension_semantics<parallel>], iteration_bounds = array<i64: 2>, scalar_prefetch = 0 : i64, scratch_operands = 2 : i64, tpu.core_type = #tpu.core_type<tc>, window_params = [{transform_indices = @transform_0, window_bounds = array<i64: 1, 16, 16, 4>}, {pipeline_mode = #tpu.pipeline_mode<synchronous>, transform_indices = @transform_1, window_bounds = array<i64: 36, 4>}, {pipeline_mode = #tpu.pipeline_mode<synchronous>, transform_indices = @transform_2, window_bounds = array<i64: 1, 4>}, {pipeline_mode = #tpu.pipeline_mode<synchronous>, transform_indices = @transform_3, window_bounds = array<i64: 1, 4>}, {pipeline_mode = #tpu.pipeline_mode<synchronous>, transform_indices = @transform_4, window_bounds = array<i64: 36, 8>}, {pipeline_mode = #tpu.pipeline_mode<synchronous>, transform_indices = @transform_5, window_bounds = array<i64: 1, 8>}, {pipeline_mode = #tpu.pipeline_mode<synchronous>, transform_indices = @transform_6, window_bounds = array<i64: 1, 8>}, {transform_indices = @transform_7, window_bounds = array<i64: 1, 16, 16, 8>}]} {
    %cst = arith.constant 0.000000e+00 : f32
    %0 = vector.broadcast %cst : f32 to vector<1x18x4xf32>
    %cst_0 = arith.constant 0.000000e+00 : f32
    %1 = vector.broadcast %cst_0 : f32 to vector<18x1x4xf32>
    %c0 = arith.constant 0 : index
    %c0_1 = arith.constant 0 : index
    %c0_2 = arith.constant 0 : index
    %2 = vector.load %arg9[%c0, %c0_1, %c0_2] : memref<18x18x4xf32, #tpu.memory_space<vmem>>, vector<1x18x4xf32>
    tpu.vector_store %arg9[%c0, %c0_1, %c0_2], %0 {strides = array<i32>} : memref<18x18x4xf32, #tpu.memory_space<vmem>>, vector<1x18x4xf32>,
    %c17 = arith.constant 17 : index
    %c0_3 = arith.constant 0 : index
    %c0_4 = arith.constant 0 : index
    %3 = vector.load %arg9[%c17, %c0_3, %c0_4] : memref<18x18x4xf32, #tpu.memory_space<vmem>>, vector<1x18x4xf32>
    tpu.vector_store %arg9[%c17, %c0_3, %c0_4], %0 {strides = array<i32>} : memref<18x18x4xf32, #tpu.memory_space<vmem>>, vector<1x18x4xf32>,
    %c0_5 = arith.constant 0 : index
    %c0_6 = arith.constant 0 : index
    %c0_7 = arith.constant 0 : index
    %4 = vector.load %arg9[%c0_5, %c0_6, %c0_7] : memref<18x18x4xf32, #tpu.memory_space<vmem>>, vector<18x1x4xf32>
    tpu.vector_store %arg9[%c0_5, %c0_6, %c0_7], %1 {strides = array<i32>} : memref<18x18x4xf32, #tpu.memory_space<vmem>>, vector<18x1x4xf32>,
    %c0_8 = arith.constant 0 : index
    %c17_9 = arith.constant 17 : index
    %c0_10 = arith.constant 0 : index
    %5 = vector.load %arg9[%c0_8, %c17_9, %c0_10] : memref<18x18x4xf32, #tpu.memory_space<vmem>>, vector<18x1x4xf32>
    tpu.vector_store %arg9[%c0_8, %c17_9, %c0_10], %1 {strides = array<i32>} : memref<18x18x4xf32, #tpu.memory_space<vmem>>, vector<18x1x4xf32>,
    %c0_11 = arith.constant 0 : index
    %c0_12 = arith.constant 0 : index
    %c0_13 = arith.constant 0 : index
    %6 = vector.load %arg10[%c0_11, %c0_12, %c0_13] : memref<18x18x4xf32, #tpu.memory_space<vmem>>, vector<1x18x4xf32>
    tpu.vector_store %arg10[%c0_11, %c0_12, %c0_13], %0 {strides = array<i32>} : memref<18x18x4xf32, #tpu.memory_space<vmem>>, vector<1x18x4xf32>,
    %c17_14 = arith.constant 17 : index
    %c0_15 = arith.constant 0 : index
    %c0_16 = arith.constant 0 : index
    %7 = vector.load %arg10[%c17_14, %c0_15, %c0_16] : memref<18x18x4xf32, #tpu.memory_space<vmem>>, vector<1x18x4xf32>
    tpu.vector_store %arg10[%c17_14, %c0_15, %c0_16], %0 {strides = array<i32>} : memref<18x18x4xf32, #tpu.memory_space<vmem>>, vector<1x18x4xf32>,
    %c0_17 = arith.constant 0 : index
    %c0_18 = arith.constant 0 : index
    %c0_19 = arith.constant 0 : index
    %8 = vector.load %arg10[%c0_17, %c0_18, %c0_19] : memref<18x18x4xf32, #tpu.memory_space<vmem>>, vector<18x1x4xf32>
    tpu.vector_store %arg10[%c0_17, %c0_18, %c0_19], %1 {strides = array<i32>} : memref<18x18x4xf32, #tpu.memory_space<vmem>>, vector<18x1x4xf32>,
    %c0_20 = arith.constant 0 : index
    %c17_21 = arith.constant 17 : index
    %c0_22 = arith.constant 0 : index
    %9 = vector.load %arg10[%c0_20, %c17_21, %c0_22] : memref<18x18x4xf32, #tpu.memory_space<vmem>>, vector<18x1x4xf32>
    tpu.vector_store %arg10[%c0_20, %c17_21, %c0_22], %1 {strides = array<i32>} : memref<18x18x4xf32, #tpu.memory_space<vmem>>, vector<18x1x4xf32>,
    %c0_23 = arith.constant 0 : index
    %c0_24 = arith.constant 0 : index
    %c0_25 = arith.constant 0 : index
    %c0_26 = arith.constant 0 : index
    %10 = vector.load %arg1[%c0_23, %c0_24, %c0_25, %c0_26] : memref<1x16x16x4xf32, #tpu.memory_space<vmem>>, vector<1x16x16x4xf32>
    %11 = vector.shape_cast %10 : vector<1x16x16x4xf32> to vector<16x16x4xf32>
    %c1 = arith.constant 1 : index
    %c1_27 = arith.constant 1 : index
    %c0_28 = arith.constant 0 : index
    %12 = vector.load %arg9[%c1, %c1_27, %c0_28] : memref<18x18x4xf32, #tpu.memory_space<vmem>>, vector<16x16x4xf32>
    tpu.vector_store %arg9[%c1, %c1_27, %c0_28], %11 {strides = array<i32>} : memref<18x18x4xf32, #tpu.memory_space<vmem>>, vector<16x16x4xf32>,
    %cst_29 = arith.constant 0.000000e+00 : f32
    %13 = vector.broadcast %cst_29 : f32 to vector<256x4xf32>
    %c0_30 = arith.constant 0 : index
    %c0_31 = arith.constant 0 : index
    %c0_32 = arith.constant 0 : index
    %14 = vector.load %arg9[%c0_30, %c0_31, %c0_32] : memref<18x18x4xf32, #tpu.memory_space<vmem>>, vector<16x16x4xf32>
    %15 = vector.shape_cast %14 : vector<16x16x4xf32> to vector<256x4xf32>
    %c0_33 = arith.constant 0 : index
    %c0_34 = arith.constant 0 : index
    %16 = vector.load %arg2[%c0_33, %c0_34] : memref<36x4xf32, #tpu.memory_space<vmem>>, vector<4x4xf32>
    %cst_35 = arith.constant dense<0.000000e+00> : vector<256x4xf32>
    %17 = tpu.matmul %15, %16, %cst_35 {dimension_numbers = #tpu.dot_dimension_numbers<[1], [0], [0], [1], [0, 0, 1, 1], [], []>} : vector<256x4xf32>, vector<4x4xf32>, vector<256x4xf32> -> vector<256x4xf32>
    %18 = arith.addf %13, %17 : vector<256x4xf32>
    %c0_36 = arith.constant 0 : index
    %c1_37 = arith.constant 1 : index
    %c0_38 = arith.constant 0 : index
    %19 = vector.load %arg9[%c0_36, %c1_37, %c0_38] : memref<18x18x4xf32, #tpu.memory_space<vmem>>, vector<16x16x4xf32>
    %20 = vector.shape_cast %19 : vector<16x16x4xf32> to vector<256x4xf32>
    %c4 = arith.constant 4 : index
    %c0_39 = arith.constant 0 : index
    %21 = vector.load %arg2[%c4, %c0_39] : memref<36x4xf32, #tpu.memory_space<vmem>>, vector<4x4xf32>
    %cst_40 = arith.constant dense<0.000000e+00> : vector<256x4xf32>
    %22 = tpu.matmul %20, %21, %cst_40 {dimension_numbers = #tpu.dot_dimension_numbers<[1], [0], [0], [1], [0, 0, 1, 1], [], []>} : vector<256x4xf32>, vector<4x4xf32>, vector<256x4xf32> -> vector<256x4xf32>
    %23 = arith.addf %18, %22 : vector<256x4xf32>
    %c0_41 = arith.constant 0 : index
    %c2 = arith.constant 2 : index
    %c0_42 = arith.constant 0 : index
    %24 = vector.load %arg9[%c0_41, %c2, %c0_42] : memref<18x18x4xf32, #tpu.memory_space<vmem>>, vector<16x16x4xf32>
    %25 = vector.shape_cast %24 : vector<16x16x4xf32> to vector<256x4xf32>
    %c8 = arith.constant 8 : index
    %c0_43 = arith.constant 0 : index
    %26 = vector.load %arg2[%c8, %c0_43] : memref<36x4xf32, #tpu.memory_space<vmem>>, vector<4x4xf32>
    %cst_44 = arith.constant dense<0.000000e+00> : vector<256x4xf32>
    %27 = tpu.matmul %25, %26, %cst_44 {dimension_numbers = #tpu.dot_dimension_numbers<[1], [0], [0], [1], [0, 0, 1, 1], [], []>} : vector<256x4xf32>, vector<4x4xf32>, vector<256x4xf32> -> vector<256x4xf32>
    %28 = arith.addf %23, %27 : vector<256x4xf32>
    %c1_45 = arith.constant 1 : index
    %c0_46 = arith.constant 0 : index
    %c0_47 = arith.constant 0 : index
    %29 = vector.load %arg9[%c1_45, %c0_46, %c0_47] : memref<18x18x4xf32, #tpu.memory_space<vmem>>, vector<16x16x4xf32>
    %30 = vector.shape_cast %29 : vector<16x16x4xf32> to vector<256x4xf32>
    %c12 = arith.constant 12 : index
    %c0_48 = arith.constant 0 : index
    %31 = vector.load %arg2[%c12, %c0_48] : memref<36x4xf32, #tpu.memory_space<vmem>>, vector<4x4xf32>
    %cst_49 = arith.constant dense<0.000000e+00> : vector<256x4xf32>
    %32 = tpu.matmul %30, %31, %cst_49 {dimension_numbers = #tpu.dot_dimension_numbers<[1], [0], [0], [1], [0, 0, 1, 1], [], []>} : vector<256x4xf32>, vector<4x4xf32>, vector<256x4xf32> -> vector<256x4xf32>
    %33 = arith.addf %28, %32 : vector<256x4xf32>
    %c1_50 = arith.constant 1 : index
    %c1_51 = arith.constant 1 : index
    %c0_52 = arith.constant 0 : index
    %34 = vector.load %arg9[%c1_50, %c1_51, %c0_52] : memref<18x18x4xf32, #tpu.memory_space<vmem>>, vector<16x16x4xf32>
    %35 = vector.shape_cast %34 : vector<16x16x4xf32> to vector<256x4xf32>
    %c16 = arith.constant 16 : index
    %c0_53 = arith.constant 0 : index
    %36 = vector.load %arg2[%c16, %c0_53] : memref<36x4xf32, #tpu.memory_space<vmem>>, vector<4x4xf32>
    %cst_54 = arith.constant dense<0.000000e+00> : vector<256x4xf32>
    %37 = tpu.matmul %35, %36, %cst_54 {dimension_numbers = #tpu.dot_dimension_numbers<[1], [0], [0], [1], [0, 0, 1, 1], [], []>} : vector<256x4xf32>, vector<4x4xf32>, vector<256x4xf32> -> vector<256x4xf32>
    %38 = arith.addf %33, %37 : vector<256x4xf32>
    %c1_55 = arith.constant 1 : index
    %c2_56 = arith.constant 2 : index
    %c0_57 = arith.constant 0 : index
    %39 = vector.load %arg9[%c1_55, %c2_56, %c0_57] : memref<18x18x4xf32, #tpu.memory_space<vmem>>, vector<16x16x4xf32>
    %40 = vector.shape_cast %39 : vector<16x16x4xf32> to vector<256x4xf32>
    %c20 = arith.constant 20 : index
    %c0_58 = arith.constant 0 : index
    %41 = vector.load %arg2[%c20, %c0_58] : memref<36x4xf32, #tpu.memory_space<vmem>>, vector<4x4xf32>
    %cst_59 = arith.constant dense<0.000000e+00> : vector<256x4xf32>
    %42 = tpu.matmul %40, %41, %cst_59 {dimension_numbers = #tpu.dot_dimension_numbers<[1], [0], [0], [1], [0, 0, 1, 1], [], []>} : vector<256x4xf32>, vector<4x4xf32>, vector<256x4xf32> -> vector<256x4xf32>
    %43 = arith.addf %38, %42 : vector<256x4xf32>
    %c2_60 = arith.constant 2 : index
    %c0_61 = arith.constant 0 : index
    %c0_62 = arith.constant 0 : index
    %44 = vector.load %arg9[%c2_60, %c0_61, %c0_62] : memref<18x18x4xf32, #tpu.memory_space<vmem>>, vector<16x16x4xf32>
    %45 = vector.shape_cast %44 : vector<16x16x4xf32> to vector<256x4xf32>
    %c24 = arith.constant 24 : index
    %c0_63 = arith.constant 0 : index
    %46 = vector.load %arg2[%c24, %c0_63] : memref<36x4xf32, #tpu.memory_space<vmem>>, vector<4x4xf32>
    %cst_64 = arith.constant dense<0.000000e+00> : vector<256x4xf32>
    %47 = tpu.matmul %45, %46, %cst_64 {dimension_numbers = #tpu.dot_dimension_numbers<[1], [0], [0], [1], [0, 0, 1, 1], [], []>} : vector<256x4xf32>, vector<4x4xf32>, vector<256x4xf32> -> vector<256x4xf32>
    %48 = arith.addf %43, %47 : vector<256x4xf32>
    %c2_65 = arith.constant 2 : index
    %c1_66 = arith.constant 1 : index
    %c0_67 = arith.constant 0 : index
    %49 = vector.load %arg9[%c2_65, %c1_66, %c0_67] : memref<18x18x4xf32, #tpu.memory_space<vmem>>, vector<16x16x4xf32>
    %50 = vector.shape_cast %49 : vector<16x16x4xf32> to vector<256x4xf32>
    %c28 = arith.constant 28 : index
    %c0_68 = arith.constant 0 : index
    %51 = vector.load %arg2[%c28, %c0_68] : memref<36x4xf32, #tpu.memory_space<vmem>>, vector<4x4xf32>
    %cst_69 = arith.constant dense<0.000000e+00> : vector<256x4xf32>
    %52 = tpu.matmul %50, %51, %cst_69 {dimension_numbers = #tpu.dot_dimension_numbers<[1], [0], [0], [1], [0, 0, 1, 1], [], []>} : vector<256x4xf32>, vector<4x4xf32>, vector<256x4xf32> -> vector<256x4xf32>
    %53 = arith.addf %48, %52 : vector<256x4xf32>
    %c2_70 = arith.constant 2 : index
    %c2_71 = arith.constant 2 : index
    %c0_72 = arith.constant 0 : index
    %54 = vector.load %arg9[%c2_70, %c2_71, %c0_72] : memref<18x18x4xf32, #tpu.memory_space<vmem>>, vector<16x16x4xf32>
    %55 = vector.shape_cast %54 : vector<16x16x4xf32> to vector<256x4xf32>
    %c32 = arith.constant 32 : index
    %c0_73 = arith.constant 0 : index
    %56 = vector.load %arg2[%c32, %c0_73] : memref<36x4xf32, #tpu.memory_space<vmem>>, vector<4x4xf32>
    %cst_74 = arith.constant dense<0.000000e+00> : vector<256x4xf32>
    %57 = tpu.matmul %55, %56, %cst_74 {dimension_numbers = #tpu.dot_dimension_numbers<[1], [0], [0], [1], [0, 0, 1, 1], [], []>} : vector<256x4xf32>, vector<4x4xf32>, vector<256x4xf32> -> vector<256x4xf32>
    %58 = arith.addf %53, %57 : vector<256x4xf32>
    %c0_75 = arith.constant 0 : index
    %c0_76 = arith.constant 0 : index
    %59 = vector.load %arg3[%c0_75, %c0_76] : memref<1x4xf32, #tpu.memory_space<vmem>>, vector<1x4xf32>
    %60 = vector.shape_cast %59 : vector<1x4xf32> to vector<4xf32>
    %61 = vector.shape_cast %60 : vector<4xf32> to vector<1x4xf32>
    %62 = vector.broadcast %61 : vector<1x4xf32> to vector<256x4xf32>
    %63 = arith.mulf %58, %62 : vector<256x4xf32>
    %c0_77 = arith.constant 0 : index
    %c0_78 = arith.constant 0 : index
    %64 = vector.load %arg4[%c0_77, %c0_78] : memref<1x4xf32, #tpu.memory_space<vmem>>, vector<1x4xf32>
    %65 = vector.shape_cast %64 : vector<1x4xf32> to vector<4xf32>
    %66 = vector.shape_cast %65 : vector<4xf32> to vector<1x4xf32>
    %67 = vector.broadcast %66 : vector<1x4xf32> to vector<256x4xf32>
    %68 = arith.addf %63, %67 : vector<256x4xf32>
    %cst_79 = arith.constant 0.000000e+00 : f32
    %69 = vector.broadcast %cst_79 : f32 to vector<256x4xf32>
    %70 = arith.maximumf %68, %69 : vector<256x4xf32>
    %71 = vector.shape_cast %70 : vector<256x4xf32> to vector<16x16x4xf32>
    %c1_80 = arith.constant 1 : index
    %c1_81 = arith.constant 1 : index
    %c0_82 = arith.constant 0 : index
    %72 = vector.load %arg10[%c1_80, %c1_81, %c0_82] : memref<18x18x4xf32, #tpu.memory_space<vmem>>, vector<16x16x4xf32>
    tpu.vector_store %arg10[%c1_80, %c1_81, %c0_82], %71 {strides = array<i32>} : memref<18x18x4xf32, #tpu.memory_space<vmem>>, vector<16x16x4xf32>,
    %cst_83 = arith.constant 0.000000e+00 : f32
    %73 = vector.broadcast %cst_83 : f32 to vector<256x8xf32>
    %c0_84 = arith.constant 0 : index
    %c0_85 = arith.constant 0 : index
    %c0_86 = arith.constant 0 : index
    %74 = vector.load %arg10[%c0_84, %c0_85, %c0_86] : memref<18x18x4xf32, #tpu.memory_space<vmem>>, vector<16x16x4xf32>
    %75 = vector.shape_cast %74 : vector<16x16x4xf32> to vector<256x4xf32>
    %c0_87 = arith.constant 0 : index
    %c0_88 = arith.constant 0 : index
    %76 = vector.load %arg5[%c0_87, %c0_88] : memref<36x8xf32, #tpu.memory_space<vmem>>, vector<4x8xf32>
    %cst_89 = arith.constant dense<0.000000e+00> : vector<256x8xf32>
    %77 = tpu.matmul %75, %76, %cst_89 {dimension_numbers = #tpu.dot_dimension_numbers<[1], [0], [0], [1], [0, 0, 1, 1], [], []>} : vector<256x4xf32>, vector<4x8xf32>, vector<256x8xf32> -> vector<256x8xf32>
    %78 = arith.addf %73, %77 : vector<256x8xf32>
    %c0_90 = arith.constant 0 : index
    %c1_91 = arith.constant 1 : index
    %c0_92 = arith.constant 0 : index
    %79 = vector.load %arg10[%c0_90, %c1_91, %c0_92] : memref<18x18x4xf32, #tpu.memory_space<vmem>>, vector<16x16x4xf32>
    %80 = vector.shape_cast %79 : vector<16x16x4xf32> to vector<256x4xf32>
    %c4_93 = arith.constant 4 : index
    %c0_94 = arith.constant 0 : index
    %81 = vector.load %arg5[%c4_93, %c0_94] : memref<36x8xf32, #tpu.memory_space<vmem>>, vector<4x8xf32>
    %cst_95 = arith.constant dense<0.000000e+00> : vector<256x8xf32>
    %82 = tpu.matmul %80, %81, %cst_95 {dimension_numbers = #tpu.dot_dimension_numbers<[1], [0], [0], [1], [0, 0, 1, 1], [], []>} : vector<256x4xf32>, vector<4x8xf32>, vector<256x8xf32> -> vector<256x8xf32>
    %83 = arith.addf %78, %82 : vector<256x8xf32>
    %c0_96 = arith.constant 0 : index
    %c2_97 = arith.constant 2 : index
    %c0_98 = arith.constant 0 : index
    %84 = vector.load %arg10[%c0_96, %c2_97, %c0_98] : memref<18x18x4xf32, #tpu.memory_space<vmem>>, vector<16x16x4xf32>
    %85 = vector.shape_cast %84 : vector<16x16x4xf32> to vector<256x4xf32>
    %c8_99 = arith.constant 8 : index
    %c0_100 = arith.constant 0 : index
    %86 = vector.load %arg5[%c8_99, %c0_100] : memref<36x8xf32, #tpu.memory_space<vmem>>, vector<4x8xf32>
    %cst_101 = arith.constant dense<0.000000e+00> : vector<256x8xf32>
    %87 = tpu.matmul %85, %86, %cst_101 {dimension_numbers = #tpu.dot_dimension_numbers<[1], [0], [0], [1], [0, 0, 1, 1], [], []>} : vector<256x4xf32>, vector<4x8xf32>, vector<256x8xf32> -> vector<256x8xf32>
    %88 = arith.addf %83, %87 : vector<256x8xf32>
    %c1_102 = arith.constant 1 : index
    %c0_103 = arith.constant 0 : index
    %c0_104 = arith.constant 0 : index
    %89 = vector.load %arg10[%c1_102, %c0_103, %c0_104] : memref<18x18x4xf32, #tpu.memory_space<vmem>>, vector<16x16x4xf32>
    %90 = vector.shape_cast %89 : vector<16x16x4xf32> to vector<256x4xf32>
    %c12_105 = arith.constant 12 : index
    %c0_106 = arith.constant 0 : index
    %91 = vector.load %arg5[%c12_105, %c0_106] : memref<36x8xf32, #tpu.memory_space<vmem>>, vector<4x8xf32>
    %cst_107 = arith.constant dense<0.000000e+00> : vector<256x8xf32>
    %92 = tpu.matmul %90, %91, %cst_107 {dimension_numbers = #tpu.dot_dimension_numbers<[1], [0], [0], [1], [0, 0, 1, 1], [], []>} : vector<256x4xf32>, vector<4x8xf32>, vector<256x8xf32> -> vector<256x8xf32>
    %93 = arith.addf %88, %92 : vector<256x8xf32>
    %c1_108 = arith.constant 1 : index
    %c1_109 = arith.constant 1 : index
    %c0_110 = arith.constant 0 : index
    %94 = vector.load %arg10[%c1_108, %c1_109, %c0_110] : memref<18x18x4xf32, #tpu.memory_space<vmem>>, vector<16x16x4xf32>
    %95 = vector.shape_cast %94 : vector<16x16x4xf32> to vector<256x4xf32>
    %c16_111 = arith.constant 16 : index
    %c0_112 = arith.constant 0 : index
    %96 = vector.load %arg5[%c16_111, %c0_112] : memref<36x8xf32, #tpu.memory_space<vmem>>, vector<4x8xf32>
    %cst_113 = arith.constant dense<0.000000e+00> : vector<256x8xf32>
    %97 = tpu.matmul %95, %96, %cst_113 {dimension_numbers = #tpu.dot_dimension_numbers<[1], [0], [0], [1], [0, 0, 1, 1], [], []>} : vector<256x4xf32>, vector<4x8xf32>, vector<256x8xf32> -> vector<256x8xf32>
    %98 = arith.addf %93, %97 : vector<256x8xf32>
    %c1_114 = arith.constant 1 : index
    %c2_115 = arith.constant 2 : index
    %c0_116 = arith.constant 0 : index
    %99 = vector.load %arg10[%c1_114, %c2_115, %c0_116] : memref<18x18x4xf32, #tpu.memory_space<vmem>>, vector<16x16x4xf32>
    %100 = vector.shape_cast %99 : vector<16x16x4xf32> to vector<256x4xf32>
    %c20_117 = arith.constant 20 : index
    %c0_118 = arith.constant 0 : index
    %101 = vector.load %arg5[%c20_117, %c0_118] : memref<36x8xf32, #tpu.memory_space<vmem>>, vector<4x8xf32>
    %cst_119 = arith.constant dense<0.000000e+00> : vector<256x8xf32>
    %102 = tpu.matmul %100, %101, %cst_119 {dimension_numbers = #tpu.dot_dimension_numbers<[1], [0], [0], [1], [0, 0, 1, 1], [], []>} : vector<256x4xf32>, vector<4x8xf32>, vector<256x8xf32> -> vector<256x8xf32>
    %103 = arith.addf %98, %102 : vector<256x8xf32>
    %c2_120 = arith.constant 2 : index
    %c0_121 = arith.constant 0 : index
    %c0_122 = arith.constant 0 : index
    %104 = vector.load %arg10[%c2_120, %c0_121, %c0_122] : memref<18x18x4xf32, #tpu.memory_space<vmem>>, vector<16x16x4xf32>
    %105 = vector.shape_cast %104 : vector<16x16x4xf32> to vector<256x4xf32>
    %c24_123 = arith.constant 24 : index
    %c0_124 = arith.constant 0 : index
    %106 = vector.load %arg5[%c24_123, %c0_124] : memref<36x8xf32, #tpu.memory_space<vmem>>, vector<4x8xf32>
    %cst_125 = arith.constant dense<0.000000e+00> : vector<256x8xf32>
    %107 = tpu.matmul %105, %106, %cst_125 {dimension_numbers = #tpu.dot_dimension_numbers<[1], [0], [0], [1], [0, 0, 1, 1], [], []>} : vector<256x4xf32>, vector<4x8xf32>, vector<256x8xf32> -> vector<256x8xf32>
    %108 = arith.addf %103, %107 : vector<256x8xf32>
    %c2_126 = arith.constant 2 : index
    %c1_127 = arith.constant 1 : index
    %c0_128 = arith.constant 0 : index
    %109 = vector.load %arg10[%c2_126, %c1_127, %c0_128] : memref<18x18x4xf32, #tpu.memory_space<vmem>>, vector<16x16x4xf32>
    %110 = vector.shape_cast %109 : vector<16x16x4xf32> to vector<256x4xf32>
    %c28_129 = arith.constant 28 : index
    %c0_130 = arith.constant 0 : index
    %111 = vector.load %arg5[%c28_129, %c0_130] : memref<36x8xf32, #tpu.memory_space<vmem>>, vector<4x8xf32>
    %cst_131 = arith.constant dense<0.000000e+00> : vector<256x8xf32>
    %112 = tpu.matmul %110, %111, %cst_131 {dimension_numbers = #tpu.dot_dimension_numbers<[1], [0], [0], [1], [0, 0, 1, 1], [], []>} : vector<256x4xf32>, vector<4x8xf32>, vector<256x8xf32> -> vector<256x8xf32>
    %113 = arith.addf %108, %112 : vector<256x8xf32>
    %c2_132 = arith.constant 2 : index
    %c2_133 = arith.constant 2 : index
    %c0_134 = arith.constant 0 : index
    %114 = vector.load %arg10[%c2_132, %c2_133, %c0_134] : memref<18x18x4xf32, #tpu.memory_space<vmem>>, vector<16x16x4xf32>
    %115 = vector.shape_cast %114 : vector<16x16x4xf32> to vector<256x4xf32>
    %c32_135 = arith.constant 32 : index
    %c0_136 = arith.constant 0 : index
    %116 = vector.load %arg5[%c32_135, %c0_136] : memref<36x8xf32, #tpu.memory_space<vmem>>, vector<4x8xf32>
    %cst_137 = arith.constant dense<0.000000e+00> : vector<256x8xf32>
    %117 = tpu.matmul %115, %116, %cst_137 {dimension_numbers = #tpu.dot_dimension_numbers<[1], [0], [0], [1], [0, 0, 1, 1], [], []>} : vector<256x4xf32>, vector<4x8xf32>, vector<256x8xf32> -> vector<256x8xf32>
    %118 = arith.addf %113, %117 : vector<256x8xf32>
    %c0_138 = arith.constant 0 : index
    %c0_139 = arith.constant 0 : index
    %119 = vector.load %arg6[%c0_138, %c0_139] : memref<1x8xf32, #tpu.memory_space<vmem>>, vector<1x8xf32>
    %120 = vector.shape_cast %119 : vector<1x8xf32> to vector<8xf32>
    %121 = vector.shape_cast %120 : vector<8xf32> to vector<1x8xf32>
    %122 = vector.broadcast %121 : vector<1x8xf32> to vector<256x8xf32>
    %123 = arith.mulf %118, %122 : vector<256x8xf32>
    %c0_140 = arith.constant 0 : index
    %c0_141 = arith.constant 0 : index
    %124 = vector.load %arg7[%c0_140, %c0_141] : memref<1x8xf32, #tpu.memory_space<vmem>>, vector<1x8xf32>
    %125 = vector.shape_cast %124 : vector<1x8xf32> to vector<8xf32>
    %126 = vector.shape_cast %125 : vector<8xf32> to vector<1x8xf32>
    %127 = vector.broadcast %126 : vector<1x8xf32> to vector<256x8xf32>
    %128 = arith.addf %123, %127 : vector<256x8xf32>
    %cst_142 = arith.constant 0.000000e+00 : f32
    %129 = vector.broadcast %cst_142 : f32 to vector<256x8xf32>
    %130 = arith.maximumf %128, %129 : vector<256x8xf32>
    %131 = vector.shape_cast %130 : vector<256x8xf32> to vector<16x16x8xf32>
    %c0_143 = arith.constant 0 : index
    %c0_144 = arith.constant 0 : index
    %c0_145 = arith.constant 0 : index
    %c0_146 = arith.constant 0 : index
    %132 = vector.load %arg8[%c0_143, %c0_144, %c0_145, %c0_146] : memref<1x16x16x8xf32, #tpu.memory_space<vmem>>, vector<1x16x16x8xf32>
    %133 = vector.shape_cast %132 : vector<1x16x16x8xf32> to vector<16x16x8xf32>
    %134 = vector.shape_cast %131 : vector<16x16x8xf32> to vector<1x16x16x8xf32>
    tpu.vector_store %arg8[%c0_143, %c0_144, %c0_145, %c0_146], %134 {strides = array<i32>} : memref<1x16x16x8xf32, #tpu.memory_space<vmem>>, vector<1x16x16x8xf32>,
    return
  }
  func.func @transform_0(%arg0: i32) -> (i32, i32, i32, i32) {
    %c0_i32 = arith.constant 0 : i32
    %c0_i32_0 = arith.constant 0 : i32
    %c0_i32_1 = arith.constant 0 : i32
    %c0_i32_2 = arith.constant 0 : i32
    return %arg0, %c0_i32, %c0_i32_0, %c0_i32_1 : i32, i32, i32, i32
  }
  func.func @transform_1(%arg0: i32) -> (i32, i32) {
    %c0_i32 = arith.constant 0 : i32
    %c0_i32_0 = arith.constant 0 : i32
    %c0_i32_1 = arith.constant 0 : i32
    return %c0_i32, %c0_i32_0 : i32, i32
  }
  func.func @transform_2(%arg0: i32) -> (i32, i32) {
    %c0_i32 = arith.constant 0 : i32
    %c0_i32_0 = arith.constant 0 : i32
    %c0_i32_1 = arith.constant 0 : i32
    return %c0_i32, %c0_i32_0 : i32, i32
  }
  func.func @transform_3(%arg0: i32) -> (i32, i32) {
    %c0_i32 = arith.constant 0 : i32
    %c0_i32_0 = arith.constant 0 : i32
    %c0_i32_1 = arith.constant 0 : i32
    return %c0_i32, %c0_i32_0 : i32, i32
  }
  func.func @transform_4(%arg0: i32) -> (i32, i32) {
    %c0_i32 = arith.constant 0 : i32
    %c0_i32_0 = arith.constant 0 : i32
    %c0_i32_1 = arith.constant 0 : i32
    return %c0_i32, %c0_i32_0 : i32, i32
  }
  func.func @transform_5(%arg0: i32) -> (i32, i32) {
    %c0_i32 = arith.constant 0 : i32
    %c0_i32_0 = arith.constant 0 : i32
    %c0_i32_1 = arith.constant 0 : i32
    return %c0_i32, %c0_i32_0 : i32, i32
  }
  func.func @transform_6(%arg0: i32) -> (i32, i32) {
    %c0_i32 = arith.constant 0 : i32
    %c0_i32_0 = arith.constant 0 : i32
    %c0_i32_1 = arith.constant 0 : i32
    return %c0_i32, %c0_i32_0 : i32, i32
  }
  func.func @transform_7(%arg0: i32) -> (i32, i32, i32, i32) {
    %c0_i32 = arith.constant 0 : i32
    %c0_i32_0 = arith.constant 0 : i32
    %c0_i32_1 = arith.constant 0 : i32
    %c0_i32_2 = arith.constant 0 : i32
    return %arg0, %c0_i32, %c0_i32_0, %c0_i32_1 : i32, i32, i32, i32
  }
}

</mosaic_0001>

<llo_original>
// kernel: tpu_custom_call.1
$region0: #{tpu_custom_call.1}
  #allocation0 [shape = 'u32[]', space=smem, size = 0x4, offset = 0x4, fixed_abs, tag = 'smem constant byte address 0x4 - core index']
  #allocation1 [shape = 'u32[72,128]{1,0:T(1,128)}', space=vmem, size = 0x9000, scoped, tag = 'internal scratch']
  #allocation2 [shape = 'f32[18,18,4]{2,1,0:T(8,128)}', space=vmem, size = 0x36000, scoped, tag = 'scratch operand']
  #allocation3 [shape = 'f32[18,18,4]{2,1,0:T(8,128)}', space=vmem, size = 0x36000, scoped, tag = 'scratch operand']
  %s0 = inlined_call_operand.vmem [shape: f32[2,16,16,4], index: 0, kind: input, shape index: {}]
  %s1 = inlined_call_operand.vmem [shape: f32[36,4], index: 1, kind: input, shape index: {}]
  %s2 = inlined_call_operand.vmem [shape: f32[1,4], index: 2, kind: input, shape index: {}]
  %s3 = inlined_call_operand.vmem [shape: f32[1,4], index: 3, kind: input, shape index: {}]
  %s4 = inlined_call_operand.vmem [shape: f32[36,8], index: 4, kind: input, shape index: {}]
  %s5 = inlined_call_operand.vmem [shape: f32[1,8], index: 5, kind: input, shape index: {}]
  %s6 = inlined_call_operand.vmem [shape: f32[1,8], index: 6, kind: input, shape index: {}]
  %s7 = inlined_call_operand.vmem [shape: f32[2,16,16,8], index: 7, kind: output, shape index: {}]
  %s8 = sld [smem:[#allocation0]]
  $region61: #{tpu_custom_call.1} parent=0
    _
  %s10 = ssub.s32 1, %s8
  %s11 = scalar_select 0, %s10, %s8
  loop: start=0, step=1, limit=4
  $region2: #{tpu_custom_call.1} parent=0 // loop_pre_header
    _
  $region3: #{tpu_custom_call.1} parent=0 // loop_header
    %s13 = sphi 0, %s17
    %p14 = scmp.ge.s32.totalorder %s13, 4
    %s23 = sphi 0, %s25
    %s26 = sphi 0, %s23
    %s27 = sphi 0, %s26
    %s43 = sphi 0, %s27
    %s47 = sphi 0, %s47
    %s49 = sphi 0, %s47
    %s50 = sphi 0, %s49
    %s64 = sphi 0, %s50
    %s68 = sphi 0, %s68
    %s70 = sphi 0, %s68
    %s71 = sphi 0, %s70
    %s85 = sphi 0, %s71
    %s89 = sphi 0, %s89
    %s91 = sphi 0, %s89
    %s92 = sphi 0, %s91
    %s106 = sphi 0, %s92
    %s110 = sphi 0, %s110
    %s112 = sphi 0, %s110
    %s113 = sphi 0, %s112
    %s127 = sphi 0, %s113
    %s131 = sphi 0, %s131
    %s133 = sphi 0, %s131
    %s134 = sphi 0, %s133
    %s148 = sphi 0, %s134
    %s152 = sphi 0, %s152
    %s154 = sphi 0, %s152
    %s155 = sphi 0, %s154
    %s169 = sphi 0, %s155
    %s175 = sphi 0, %s177
    %s178 = sphi 0, %s175
    %s179 = sphi 0, %s178
    %s195 = sphi 0, %s179
  $region4: #{tpu_custom_call.1} parent=0 // loop_header_branch
    %16 = sbr.rel (%p14) target = $region8
  $region5: #{tpu_custom_call.1} parent=0 // loop_body
    %s18 = ssub.s32 %s13, 1
    %s19 = ssub.s32 %s13, 2
    %s20 = sadd.s32 %s13, 1
    %s21 = ssub.s32 %s13, %s20
    %p22 = scmp.eq.s32.totalorder %s21, 0
    %s24 = sadd.s32 %s23, 1
    %s25 = scalar_select %p22, %s23, %s24
    %p28 = pneg %p22
    %p29 = scmp.eq.s32.totalorder %s13, 1
    %p30 = por %p28, %p29
    %p31 = scmp.ne.s32.totalorder %s23, %s26
    %p32 = scmp.eq.s32.totalorder %s13, 0
    %p33 = por %p31, %p32
    %p34 = scmp.ne.s32.totalorder %s23, %s26
    %p35 = scmp.eq.s32.totalorder %s18, 1
    %p36 = por %p34, %p35
    %p37 = scmp.ne.s32.totalorder %s26, %s27
    %p38 = scmp.eq.s32.totalorder %s18, 0
    %p39 = por %p37, %p38
    %p40 = scmp.ne.s32.totalorder %s26, %s27
    %p41 = scmp.eq.s32.totalorder %s19, 1
    %p42 = por %p40, %p41
    %p44 = scmp.ne.s32.totalorder %s27, %s43
    %p45 = scmp.eq.s32.totalorder %s19, 0
    %p46 = por %p44, %p45
    %s48 = sadd.s32 %s47, 1
    %p51 = scmp.eq.s32.totalorder %s13, 1
    %p52 = scmp.ne.s32.totalorder %s47, %s49
    %p53 = scmp.eq.s32.totalorder %s13, 0
    %p54 = por %p52, %p53
    %p55 = scmp.ne.s32.totalorder %s47, %s49
    %p56 = scmp.eq.s32.totalorder %s18, 1
    %p57 = por %p55, %p56
    %p58 = scmp.ne.s32.totalorder %s49, %s50
    %p59 = scmp.eq.s32.totalorder %s18, 0
    %p60 = por %p58, %p59
    %p61 = scmp.ne.s32.totalorder %s49, %s50
    %p62 = scmp.eq.s32.totalorder %s19, 1
    %p63 = por %p61, %p62
    %p65 = scmp.ne.s32.totalorder %s50, %s64
    %p66 = scmp.eq.s32.totalorder %s19, 0
    %p67 = por %p65, %p66
    %s69 = sadd.s32 %s68, 1
    %p72 = scmp.eq.s32.totalorder %s13, 1
    %p73 = scmp.ne.s32.totalorder %s68, %s70
    %p74 = scmp.eq.s32.totalorder %s13, 0
    %p75 = por %p73, %p74
    %p76 = scmp.ne.s32.totalorder %s68, %s70
    %p77 = scmp.eq.s32.totalorder %s18, 1
    %p78 = por %p76, %p77
    %p79 = scmp.ne.s32.totalorder %s70, %s71
    %p80 = scmp.eq.s32.totalorder %s18, 0
    %p81 = por %p79, %p80
    %p82 = scmp.ne.s32.totalorder %s70, %s71
    %p83 = scmp.eq.s32.totalorder %s19, 1
    %p84 = por %p82, %p83
    %p86 = scmp.ne.s32.totalorder %s71, %s85
    %p87 = scmp.eq.s32.totalorder %s19, 0
    %p88 = por %p86, %p87
    %s90 = sadd.s32 %s89, 1
    %p93 = scmp.eq.s32.totalorder %s13, 1
    %p94 = scmp.ne.s32.totalorder %s89, %s91
    %p95 = scmp.eq.s32.totalorder %s13, 0
    %p96 = por %p94, %p95
    %p97 = scmp.ne.s32.totalorder %s89, %s91
    %p98 = scmp.eq.s32.totalorder %s18, 1
    %p99 = por %p97, %p98
    %p100 = scmp.ne.s32.totalorder %s91, %s92
    %p101 = scmp.eq.s32.totalorder %s18, 0
    %p102 = por %p100, %p101
    %p103 = scmp.ne.s32.totalorder %s91, %s92
    %p104 = scmp.eq.s32.totalorder %s19, 1
    %p105 = por %p103, %p104
    %p107 = scmp.ne.s32.totalorder %s92, %s106
    %p108 = scmp.eq.s32.totalorder %s19, 0
    %p109 = por %p107, %p108
    %s111 = sadd.s32 %s110, 1
    %p114 = scmp.eq.s32.totalorder %s13, 1
    %p115 = scmp.ne.s32.totalorder %s110, %s112
    %p116 = scmp.eq.s32.totalorder %s13, 0
    %p117 = por %p115, %p116
    %p118 = scmp.ne.s32.totalorder %s110, %s112
    %p119 = scmp.eq.s32.totalorder %s18, 1
    %p120 = por %p118, %p119
    %p121 = scmp.ne.s32.totalorder %s112, %s113
    %p122 = scmp.eq.s32.totalorder %s18, 0
    %p123 = por %p121, %p122
    %p124 = scmp.ne.s32.totalorder %s112, %s113
    %p125 = scmp.eq.s32.totalorder %s19, 1
    %p126 = por %p124, %p125
    %p128 = scmp.ne.s32.totalorder %s113, %s127
    %p129 = scmp.eq.s32.totalorder %s19, 0
    %p130 = por %p128, %p129
    %s132 = sadd.s32 %s131, 1
    %p135 = scmp.eq.s32.totalorder %s13, 1
    %p136 = scmp.ne.s32.totalorder %s131, %s133
    %p137 = scmp.eq.s32.totalorder %s13, 0
    %p138 = por %p136, %p137
    %p139 = scmp.ne.s32.totalorder %s131, %s133
    %p140 = scmp.eq.s32.totalorder %s18, 1
    %p141 = por %p139, %p140
    %p142 = scmp.ne.s32.totalorder %s133, %s134
    %p143 = scmp.eq.s32.totalorder %s18, 0
    %p144 = por %p142, %p143
    %p145 = scmp.ne.s32.totalorder %s133, %s134
    %p146 = scmp.eq.s32.totalorder %s19, 1
    %p147 = por %p145, %p146
    %p149 = scmp.ne.s32.totalorder %s134, %s148
    %p150 = scmp.eq.s32.totalorder %s19, 0
    %p151 = por %p149, %p150
    %s153 = sadd.s32 %s152, 1
    %p156 = scmp.eq.s32.totalorder %s13, 1
    %p157 = scmp.ne.s32.totalorder %s152, %s154
    %p158 = scmp.eq.s32.totalorder %s13, 0
    %p159 = por %p157, %p158
    %p160 = scmp.ne.s32.totalorder %s152, %s154
    %p161 = scmp.eq.s32.totalorder %s18, 1
    %p162 = por %p160, %p161
    %p163 = scmp.ne.s32.totalorder %s154, %s155
    %p164 = scmp.eq.s32.totalorder %s18, 0
    %p165 = por %p163, %p164
    %p166 = scmp.ne.s32.totalorder %s154, %s155
    %p167 = scmp.eq.s32.totalorder %s19, 1
    %p168 = por %p166, %p167
    %p170 = scmp.ne.s32.totalorder %s155, %s169
    %p171 = scmp.eq.s32.totalorder %s19, 0
    %p172 = por %p170, %p171
    %s173 = ssub.s32 %s13, %s20
    %p174 = scmp.eq.s32.totalorder %s173, 0
    %s176 = sadd.s32 %s175, 1
    %s177 = scalar_select %p174, %s175, %s176
    %p180 = pneg %p174
    %p181 = scmp.eq.s32.totalorder %s13, 1
    %p182 = por %p180, %p181
    %p183 = scmp.ne.s32.totalorder %s175, %s178
    %p184 = scmp.eq.s32.totalorder %s13, 0
    %p185 = por %p183, %p184
    %p186 = scmp.ne.s32.totalorder %s175, %s178
    %p187 = scmp.eq.s32.totalorder %s18, 1
    %p188 = por %p186, %p187
    %p189 = scmp.ne.s32.totalorder %s178, %s179
    %p190 = scmp.eq.s32.totalorder %s18, 0
    %p191 = por %p189, %p190
    %p192 = scmp.ne.s32.totalorder %s178, %s179
    %p193 = scmp.eq.s32.totalorder %s19, 1
    %p194 = por %p192, %p193
    %p196 = scmp.ne.s32.totalorder %s179, %s195
    %p197 = scmp.eq.s32.totalorder %s19, 0
    %p198 = por %p196, %p197
    %p199 = scmp.le.s32.totalorder 1, %s13
    %p200 = scmp.lt.s32.totalorder %s13, 3
    %p201 = pnand %p199, %p200
    %p202 = pneg %p201
    // Predicated region
    $region9: #{tpu_custom_call.1} parent=5 // pred_check
      _
    $region10: #{tpu_custom_call.1} parent=5 // pred_check_branch
      %204 = sbr.rel (%p201) target = $region12
    $region11: #{tpu_custom_call.1} parent=5 // pred_region
      %s205 = ssub.s32 %s13, 1
      // Predicated region
      $region13: #{tpu_custom_call.1} parent=11 // pred_check
        %p206 = pneg %p60
      $region14: #{tpu_custom_call.1} parent=11 // pred_check_branch
        %208 = sbr.rel (%p206) target = $region16
      $region15: #{tpu_custom_call.1} parent=11 // pred_region
        _
      $region16: #{tpu_custom_call.1} parent=11 // pred_fallthru
        _
      // Predicated region
      $region17: #{tpu_custom_call.1} parent=11 // pred_check
        %p209 = pneg %p81
      $region18: #{tpu_custom_call.1} parent=11 // pred_check_branch
        %211 = sbr.rel (%p209) target = $region20
      $region19: #{tpu_custom_call.1} parent=11 // pred_region
        _
      $region20: #{tpu_custom_call.1} parent=11 // pred_fallthru
        _
      // Predicated region
      $region21: #{tpu_custom_call.1} parent=11 // pred_check
        %p212 = pneg %p102
      $region22: #{tpu_custom_call.1} parent=11 // pred_check_branch
        %214 = sbr.rel (%p212) target = $region24
      $region23: #{tpu_custom_call.1} parent=11 // pred_region
        _
      $region24: #{tpu_custom_call.1} parent=11 // pred_fallthru
        _
      // Predicated region
      $region25: #{tpu_custom_call.1} parent=11 // pred_check
        %p215 = pneg %p123
      $region26: #{tpu_custom_call.1} parent=11 // pred_check_branch
        %217 = sbr.rel (%p215) target = $region28
      $region27: #{tpu_custom_call.1} parent=11 // pred_region
        _
      $region28: #{tpu_custom_call.1} parent=11 // pred_fallthru
        _
      // Predicated region
      $region29: #{tpu_custom_call.1} parent=11 // pred_check
        %p218 = pneg %p144
      $region30: #{tpu_custom_call.1} parent=11 // pred_check_branch
        %220 = sbr.rel (%p218) target = $region32
      $region31: #{tpu_custom_call.1} parent=11 // pred_region
        _
      $region32: #{tpu_custom_call.1} parent=11 // pred_fallthru
        _
      // Predicated region
      $region33: #{tpu_custom_call.1} parent=11 // pred_check
        %p221 = pneg %p165
      $region34: #{tpu_custom_call.1} parent=11 // pred_check_branch
        %223 = sbr.rel (%p221) target = $region36
      $region35: #{tpu_custom_call.1} parent=11 // pred_region
        _
      $region36: #{tpu_custom_call.1} parent=11 // pred_fallthru
        _
    $region12: #{tpu_custom_call.1} parent=5 // pred_fallthru
      _
    %p224 = scmp.lt.s32.totalorder %s13, 2
    // Predicated region
    $region37: #{tpu_custom_call.1} parent=5 // pred_check
      %p225 = pneg %p224
    $region38: #{tpu_custom_call.1} parent=5 // pred_check_branch
      %227 = sbr.rel (%p225) target = $region40
    $region39: #{tpu_custom_call.1} parent=5 // pred_region
      // Predicated region
      $region41: #{tpu_custom_call.1} parent=39 // pred_check
        %p228 = pneg %p33
      $region42: #{tpu_custom_call.1} parent=39 // pred_check_branch
        %230 = sbr.rel (%p228) target = $region44
      $region43: #{tpu_custom_call.1} parent=39 // pred_region
        %p231 = scmp.lt.s32.totalorder %s13, 1
        %s232 = scalar_select %p231, %s13, 1
        %s233 = smul.addr %s232, 32
        %s234 = smul.addr %s233, 8
        %s235 = scalar_lea.vmem %s0, %s234
      $region44: #{tpu_custom_call.1} parent=39 // pred_fallthru
        _
    $region40: #{tpu_custom_call.1} parent=5 // pred_fallthru
      _
    %p236 = scmp.le.s32.totalorder 1, %s13
    %p237 = scmp.lt.s32.totalorder %s13, 3
    %p238 = pnand %p236, %p237
    %p239 = pneg %p238
    // Predicated region
    $region45: #{tpu_custom_call.1} parent=5 // pred_check
      _
    $region46: #{tpu_custom_call.1} parent=5 // pred_check_branch
      %241 = sbr.rel (%p238) target = $region48
    $region47: #{tpu_custom_call.1} parent=5 // pred_region
      %s242 = ssub.s32 %s13, 1
      %p243 = scmp.lt.s32.totalorder %s18, 1
      %s244 = scalar_select %p243, %s18, 1
      %s245 = smul.addr %s244, 32
      %s246 = smul.addr %s245, 8
      %s247 = scalar_lea.vmem %s0, %s246
      %p248 = pneg %p39
      %p249 = pneg %p36
      %p250 = pneg %p60
      %p251 = pneg %p57
      %p252 = pneg %p81
      %p253 = pneg %p78
      %p254 = pneg %p102
      %p255 = pneg %p99
      %p256 = pneg %p123
      %p257 = pneg %p120
      %p258 = pneg %p144
      %p259 = pneg %p141
      %p260 = pneg %p165
      %p261 = pneg %p162
      %p262 = pneg %p191
      %p263 = pneg %p188
      %p264 = scmp.lt.s32.totalorder %s18, 1
      %s265 = scalar_select %p264, %s18, 1
      %s266 = smul.addr %s265, 32
      %s267 = smul.addr %s266, 8
      %s268 = scalar_lea.vmem %s7, %s267
      %p269 = scmp.lt.s32.totalorder %s18, 1
      %s270 = scalar_select %p269, %s18, 1
      %s271 = smul.addr %s270, 32
      %s272 = smul.addr %s271, 8
      %s273 = scalar_lea.vmem %s0, %s272
      %p274 = scmp.lt.s32.totalorder %s18, 1
      %s275 = scalar_select %p274, %s18, 1
      %s276 = smul.addr %s275, 32
      %s277 = smul.addr %s276, 8
      %s278 = scalar_lea.vmem %s7, %s277
      %vm279 = vcmask 31744
      %280 = vst.msk [vmem:[#allocation2] sm:$0xff] %vm279, 0.0
      %281 = vst.msk [vmem:[#allocation2 + $0x8] sm:$0xff] %vm279, 0.0
      %vm282 = vcmask 25600
      %283 = vst.msk [vmem:[#allocation2 + $0x10] sm:$0x3] %vm282, 0.0
      %s284 = scalar_lea.vmem [#allocation2], 408
      %285 = vst.msk [vmem:[%s284] sm:$0xff] %vm279, 0.0
      %286 = vst.msk [vmem:[%s284 + $0x8] sm:$0xff] %vm279, 0.0
      %287 = vst.msk [vmem:[%s284 + $0x10] sm:$0x3] %vm282, 0.0
      %vm288 = vcmask 24576
      %289 = vst.msk [vmem:[#allocation2] sm:$0x1] %vm288, 0.0
      %290 = vst.msk [vmem:[#allocation2 + $0x18] sm:$0x1] %vm288, 0.0
      %291 = vst.msk [vmem:[#allocation2 + $0x30] sm:$0x1] %vm288, 0.0
      %292 = vst.msk [vmem:[#allocation2 + $0x48] sm:$0x1] %vm288, 0.0
      %293 = vst.msk [vmem:[#allocation2 + $0x60] sm:$0x1] %vm288, 0.0
      %294 = vst.msk [vmem:[#allocation2 + $0x78] sm:$0x1] %vm288, 0.0
      %295 = vst.msk [vmem:[#allocation2 + $0x90] sm:$0x1] %vm288, 0.0
      %296 = vst.msk [vmem:[#allocation2 + $0xa8] sm:$0x1] %vm288, 0.0
      %297 = vst.msk [vmem:[#allocation2 + $0xc0] sm:$0x1] %vm288, 0.0
      %298 = vst.msk [vmem:[#allocation2 + $0xd8] sm:$0x1] %vm288, 0.0
      %299 = vst.msk [vmem:[#allocation2 + $0xf0] sm:$0x1] %vm288, 0.0
      %300 = vst.msk [vmem:[#allocation2 + $0x108] sm:$0x1] %vm288, 0.0
      %301 = vst.msk [vmem:[#allocation2 + $0x120] sm:$0x1] %vm288, 0.0
      %302 = vst.msk [vmem:[#allocation2 + $0x138] sm:$0x1] %vm288, 0.0
      %303 = vst.msk [vmem:[#allocation2 + $0x150] sm:$0x1] %vm288, 0.0
      %304 = vst.msk [vmem:[#allocation2 + $0x168] sm:$0x1] %vm288, 0.0
      %305 = vst.msk [vmem:[#allocation2 + $0x180] sm:$0x1] %vm288, 0.0
      %306 = vst.msk [vmem:[#allocation2 + $0x198] sm:$0x1] %vm288, 0.0
      %307 = vst.msk [vmem:[#allocation2 + $0x11] sm:$0x1] %vm288, 0.0
      %308 = vst.msk [vmem:[#allocation2 + $0x29] sm:$0x1] %vm288, 0.0
      %309 = vst.msk [vmem:[#allocation2 + $0x41] sm:$0x1] %vm288, 0.0
      %310 = vst.msk [vmem:[#allocation2 + $0x59] sm:$0x1] %vm288, 0.0
      %311 = vst.msk [vmem:[#allocation2 + $0x71] sm:$0x1] %vm288, 0.0
      %312 = vst.msk [vmem:[#allocation2 + $0x89] sm:$0x1] %vm288, 0.0
      %313 = vst.msk [vmem:[#allocation2 + $0xa1] sm:$0x1] %vm288, 0.0
      %314 = vst.msk [vmem:[#allocation2 + $0xb9] sm:$0x1] %vm288, 0.0
      %315 = vst.msk [vmem:[#allocation2 + $0xd1] sm:$0x1] %vm288, 0.0
      %316 = vst.msk [vmem:[#allocation2 + $0xe9] sm:$0x1] %vm288, 0.0
      %317 = vst.msk [vmem:[#allocation2 + $0x101] sm:$0x1] %vm288, 0.0
      %318 = vst.msk [vmem:[#allocation2 + $0x119] sm:$0x1] %vm288, 0.0
      %319 = vst.msk [vmem:[#allocation2 + $0x131] sm:$0x1] %vm288, 0.0
      %320 = vst.msk [vmem:[#allocation2 + $0x149] sm:$0x1] %vm288, 0.0
      %321 = vst.msk [vmem:[#allocation2 + $0x161] sm:$0x1] %vm288, 0.0
      %322 = vst.msk [vmem:[#allocation2 + $0x179] sm:$0x1] %vm288, 0.0
      %323 = vst.msk [vmem:[#allocation2 + $0x191] sm:$0x1] %vm288, 0.0
      %324 = vst.msk [vmem:[#allocation2 + $0x1a9] sm:$0x1] %vm288, 0.0
      %325 = vst.msk [vmem:[#allocation3] sm:$0xff] %vm279, 0.0
      %326 = vst.msk [vmem:[#allocation3 + $0x8] sm:$0xff] %vm279, 0.0
      %327 = vst.msk [vmem:[#allocation3 + $0x10] sm:$0x3] %vm282, 0.0
      %s328 = scalar_lea.vmem [#allocation3], 408
      %329 = vst.msk [vmem:[%s328] sm:$0xff] %vm279, 0.0
      %330 = vst.msk [vmem:[%s328 + $0x8] sm:$0xff] %vm279, 0.0
      %331 = vst.msk [vmem:[%s328 + $0x10] sm:$0x3] %vm282, 0.0
      %332 = vst.msk [vmem:[#allocation3] sm:$0x1] %vm288, 0.0
      %333 = vst.msk [vmem:[#allocation3 + $0x18] sm:$0x1] %vm288, 0.0
      %334 = vst.msk [vmem:[#allocation3 + $0x30] sm:$0x1] %vm288, 0.0
      %335 = vst.msk [vmem:[#allocation3 + $0x48] sm:$0x1] %vm288, 0.0
      %336 = vst.msk [vmem:[#allocation3 + $0x60] sm:$0x1] %vm288, 0.0
      %337 = vst.msk [vmem:[#allocation3 + $0x78] sm:$0x1] %vm288, 0.0
      %338 = vst.msk [vmem:[#allocation3 + $0x90] sm:$0x1] %vm288, 0.0
      %339 = vst.msk [vmem:[#allocation3 + $0xa8] sm:$0x1] %vm288, 0.0
      %340 = vst.msk [vmem:[#allocation3 + $0xc0] sm:$0x1] %vm288, 0.0
      %341 = vst.msk [vmem:[#allocation3 + $0xd8] sm:$0x1] %vm288, 0.0
      %342 = vst.msk [vmem:[#allocation3 + $0xf0] sm:$0x1] %vm288, 0.0
      %343 = vst.msk [vmem:[#allocation3 + $0x108] sm:$0x1] %vm288, 0.0
      %344 = vst.msk [vmem:[#allocation3 + $0x120] sm:$0x1] %vm288, 0.0
      %345 = vst.msk [vmem:[#allocation3 + $0x138] sm:$0x1] %vm288, 0.0
      %346 = vst.msk [vmem:[#allocation3 + $0x150] sm:$0x1] %vm288, 0.0
      %347 = vst.msk [vmem:[#allocation3 + $0x168] sm:$0x1] %vm288, 0.0
      %348 = vst.msk [vmem:[#allocation3 + $0x180] sm:$0x1] %vm288, 0.0
      %349 = vst.msk [vmem:[#allocation3 + $0x198] sm:$0x1] %vm288, 0.0
      %350 = vst.msk [vmem:[#allocation3 + $0x11] sm:$0x1] %vm288, 0.0
      %351 = vst.msk [vmem:[#allocation3 + $0x29] sm:$0x1] %vm288, 0.0
      %352 = vst.msk [vmem:[#allocation3 + $0x41] sm:$0x1] %vm288, 0.0
      %353 = vst.msk [vmem:[#allocation3 + $0x59] sm:$0x1] %vm288, 0.0
      %354 = vst.msk [vmem:[#allocation3 + $0x71] sm:$0x1] %vm288, 0.0
      %355 = vst.msk [vmem:[#allocation3 + $0x89] sm:$0x1] %vm288, 0.0
      %356 = vst.msk [vmem:[#allocation3 + $0xa1] sm:$0x1] %vm288, 0.0
      %357 = vst.msk [vmem:[#allocation3 + $0xb9] sm:$0x1] %vm288, 0.0
      %358 = vst.msk [vmem:[#allocation3 + $0xd1] sm:$0x1] %vm288, 0.0
      %359 = vst.msk [vmem:[#allocation3 + $0xe9] sm:$0x1] %vm288, 0.0
      %360 = vst.msk [vmem:[#allocation3 + $0x101] sm:$0x1] %vm288, 0.0
      %361 = vst.msk [vmem:[#allocation3 + $0x119] sm:$0x1] %vm288, 0.0
      %362 = vst.msk [vmem:[#allocation3 + $0x131] sm:$0x1] %vm288, 0.0
      %363 = vst.msk [vmem:[#allocation3 + $0x149] sm:$0x1] %vm288, 0.0
      %364 = vst.msk [vmem:[#allocation3 + $0x161] sm:$0x1] %vm288, 0.0
      %365 = vst.msk [vmem:[#allocation3 + $0x179] sm:$0x1] %vm288, 0.0
      %366 = vst.msk [vmem:[#allocation3 + $0x191] sm:$0x1] %vm288, 0.0
      %367 = vst.msk [vmem:[#allocation3 + $0x1a9] sm:$0x1] %vm288, 0.0
      %v368 = vld [vmem:[%s273] sm:$0xff]
      %v369 = vld [vmem:[%s273 + $0x8] sm:$0xff]
      %v370 = vld [vmem:[%s273 + $0x10] sm:$0xff]
      %v371 = vld [vmem:[%s273 + $0x18] sm:$0xff]
      %v372 = vld [vmem:[%s273 + $0x20] sm:$0xff]
      %v373 = vld [vmem:[%s273 + $0x28] sm:$0xff]
      %v374 = vld [vmem:[%s273 + $0x30] sm:$0xff]
      %v375 = vld [vmem:[%s273 + $0x38] sm:$0xff]
      %v376 = vld [vmem:[%s273 + $0x40] sm:$0xff]
      %v377 = vld [vmem:[%s273 + $0x48] sm:$0xff]
      %v378 = vld [vmem:[%s273 + $0x50] sm:$0xff]
      %v379 = vld [vmem:[%s273 + $0x58] sm:$0xff]
      %v380 = vld [vmem:[%s273 + $0x60] sm:$0xff]
      %v381 = vld [vmem:[%s273 + $0x68] sm:$0xff]
      %v382 = vld [vmem:[%s273 + $0x70] sm:$0xff]
      %v383 = vld [vmem:[%s273 + $0x78] sm:$0xff]
      %v384 = vld [vmem:[%s273 + $0x80] sm:$0xff]
      %v385 = vld [vmem:[%s273 + $0x88] sm:$0xff]
      %v386 = vld [vmem:[%s273 + $0x90] sm:$0xff]
      %v387 = vld [vmem:[%s273 + $0x98] sm:$0xff]
      %v388 = vld [vmem:[%s273 + $0xa0] sm:$0xff]
      %v389 = vld [vmem:[%s273 + $0xa8] sm:$0xff]
      %v390 = vld [vmem:[%s273 + $0xb0] sm:$0xff]
      %v391 = vld [vmem:[%s273 + $0xb8] sm:$0xff]
      %v392 = vld [vmem:[%s273 + $0xc0] sm:$0xff]
      %v393 = vld [vmem:[%s273 + $0xc8] sm:$0xff]
      %v394 = vld [vmem:[%s273 + $0xd0] sm:$0xff]
      %v395 = vld [vmem:[%s273 + $0xd8] sm:$0xff]
      %v396 = vld [vmem:[%s273 + $0xe0] sm:$0xff]
      %v397 = vld [vmem:[%s273 + $0xe8] sm:$0xff]
      %v398 = vld [vmem:[%s273 + $0xf0] sm:$0xff]
      %v399 = vld [vmem:[%s273 + $0xf8] sm:$0xff]
      %s400 = scalar_lea.vmem [#allocation2], 24
      %401 = vst.msk [vmem:[%s400 + $0x1] sm:$0xff] %vm279, %v368
      %402 = vst.msk [vmem:[%s400 + $0x9] sm:$0xff] %vm279, %v369
      %403 = vst.msk [vmem:[%s400 + $0x19] sm:$0xff] %vm279, %v370
      %404 = vst.msk [vmem:[%s400 + $0x21] sm:$0xff] %vm279, %v371
      %405 = vst.msk [vmem:[%s400 + $0x31] sm:$0xff] %vm279, %v372
      %406 = vst.msk [vmem:[%s400 + $0x39] sm:$0xff] %vm279, %v373
      %407 = vst.msk [vmem:[%s400 + $0x49] sm:$0xff] %vm279, %v374
      %408 = vst.msk [vmem:[%s400 + $0x51] sm:$0xff] %vm279, %v375
      %409 = vst.msk [vmem:[%s400 + $0x61] sm:$0xff] %vm279, %v376
      %410 = vst.msk [vmem:[%s400 + $0x69] sm:$0xff] %vm279, %v377
      %411 = vst.msk [vmem:[%s400 + $0x79] sm:$0xff] %vm279, %v378
      %412 = vst.msk [vmem:[%s400 + $0x81] sm:$0xff] %vm279, %v379
      %413 = vst.msk [vmem:[%s400 + $0x91] sm:$0xff] %vm279, %v380
      %414 = vst.msk [vmem:[%s400 + $0x99] sm:$0xff] %vm279, %v381
      %415 = vst.msk [vmem:[%s400 + $0xa9] sm:$0xff] %vm279, %v382
      %416 = vst.msk [vmem:[%s400 + $0xb1] sm:$0xff] %vm279, %v383
      %417 = vst.msk [vmem:[%s400 + $0xc1] sm:$0xff] %vm279, %v384
      %418 = vst.msk [vmem:[%s400 + $0xc9] sm:$0xff] %vm279, %v385
      %419 = vst.msk [vmem:[%s400 + $0xd9] sm:$0xff] %vm279, %v386
      %420 = vst.msk [vmem:[%s400 + $0xe1] sm:$0xff] %vm279, %v387
      %421 = vst.msk [vmem:[%s400 + $0xf1] sm:$0xff] %vm279, %v388
      %422 = vst.msk [vmem:[%s400 + $0xf9] sm:$0xff] %vm279, %v389
      %423 = vst.msk [vmem:[%s400 + $0x109] sm:$0xff] %vm279, %v390
      %424 = vst.msk [vmem:[%s400 + $0x111] sm:$0xff] %vm279, %v391
      %425 = vst.msk [vmem:[%s400 + $0x121] sm:$0xff] %vm279, %v392
      %426 = vst.msk [vmem:[%s400 + $0x129] sm:$0xff] %vm279, %v393
      %427 = vst.msk [vmem:[%s400 + $0x139] sm:$0xff] %vm279, %v394
      %428 = vst.msk [vmem:[%s400 + $0x141] sm:$0xff] %vm279, %v395
      %429 = vst.msk [vmem:[%s400 + $0x151] sm:$0xff] %vm279, %v396
      %430 = vst.msk [vmem:[%s400 + $0x159] sm:$0xff] %vm279, %v397
      %431 = vst.msk [vmem:[%s400 + $0x169] sm:$0xff] %vm279, %v398
      %432 = vst.msk [vmem:[%s400 + $0x171] sm:$0xff] %vm279, %v399
      %v433 = vld [vmem:[#allocation2] sm:$0xff]
      %v434 = vld [vmem:[#allocation2 + $0x8] sm:$0xff]
      %v435 = vld [vmem:[#allocation2 + $0x18] sm:$0xff]
      %v436 = vld [vmem:[#allocation2 + $0x20] sm:$0xff]
      %v437 = vld [vmem:[#allocation2 + $0x30] sm:$0xff]
      %v438 = vld [vmem:[#allocation2 + $0x38] sm:$0xff]
      %v439 = vld [vmem:[#allocation2 + $0x48] sm:$0xff]
      %v440 = vld [vmem:[#allocation2 + $0x50] sm:$0xff]
      %v441 = vld [vmem:[#allocation2 + $0x60] sm:$0xff]
      %v442 = vld [vmem:[#allocation2 + $0x68] sm:$0xff]
      %v443 = vld [vmem:[#allocation2 + $0x78] sm:$0xff]
      %v444 = vld [vmem:[#allocation2 + $0x80] sm:$0xff]
      %v445 = vld [vmem:[#allocation2 + $0x90] sm:$0xff]
      %v446 = vld [vmem:[#allocation2 + $0x98] sm:$0xff]
      %v447 = vld [vmem:[#allocation2 + $0xa8] sm:$0xff]
      %v448 = vld [vmem:[#allocation2 + $0xb0] sm:$0xff]
      %v449 = vld [vmem:[#allocation2 + $0xc0] sm:$0xff]
      %v450 = vld [vmem:[#allocation2 + $0xc8] sm:$0xff]
      %v451 = vld [vmem:[#allocation2 + $0xd8] sm:$0xff]
      %v452 = vld [vmem:[#allocation2 + $0xe0] sm:$0xff]
      %v453 = vld [vmem:[#allocation2 + $0xf0] sm:$0xff]
      %v454 = vld [vmem:[#allocation2 + $0xf8] sm:$0xff]
      %v455 = vld [vmem:[#allocation2 + $0x108] sm:$0xff]
      %v456 = vld [vmem:[#allocation2 + $0x110] sm:$0xff]
      %v457 = vld [vmem:[#allocation2 + $0x120] sm:$0xff]
      %v458 = vld [vmem:[#allocation2 + $0x128] sm:$0xff]
      %v459 = vld [vmem:[#allocation2 + $0x138] sm:$0xff]
      %v460 = vld [vmem:[#allocation2 + $0x140] sm:$0xff]
      %v461 = vld [vmem:[#allocation2 + $0x150] sm:$0xff]
      %v462 = vld [vmem:[#allocation2 + $0x158] sm:$0xff]
      %v463 = vld [vmem:[#allocation2 + $0x168] sm:$0xff]
      %v464 = vld [vmem:[#allocation2 + $0x170] sm:$0xff]
      %v465 = vld [vmem:[#allocation2 + $0x1] sm:$0xff]
      %v466 = vld [vmem:[#allocation2 + $0x9] sm:$0xff]
      %v467 = vld [vmem:[#allocation2 + $0x19] sm:$0xff]
      %v468 = vld [vmem:[#allocation2 + $0x21] sm:$0xff]
      %v469 = vld [vmem:[#allocation2 + $0x31] sm:$0xff]
      %v470 = vld [vmem:[#allocation2 + $0x39] sm:$0xff]
      %v471 = vld [vmem:[#allocation2 + $0x49] sm:$0xff]
      %v472 = vld [vmem:[#allocation2 + $0x51] sm:$0xff]
      %v473 = vld [vmem:[#allocation2 + $0x61] sm:$0xff]
      %v474 = vld [vmem:[#allocation2 + $0x69] sm:$0xff]
      %v475 = vld [vmem:[#allocation2 + $0x79] sm:$0xff]
      %v476 = vld [vmem:[#allocation2 + $0x81] sm:$0xff]
      %v477 = vld [vmem:[#allocation2 + $0x91] sm:$0xff]
      %v478 = vld [vmem:[#allocation2 + $0x99] sm:$0xff]
      %v479 = vld [vmem:[#allocation2 + $0xa9] sm:$0xff]
      %v480 = vld [vmem:[#allocation2 + $0xb1] sm:$0xff]
      %v481 = vld [vmem:[#allocation2 + $0xc1] sm:$0xff]
      %v482 = vld [vmem:[#allocation2 + $0xc9] sm:$0xff]
      %v483 = vld [vmem:[#allocation2 + $0xd9] sm:$0xff]
      %v484 = vld [vmem:[#allocation2 + $0xe1] sm:$0xff]
      %v485 = vld [vmem:[#allocation2 + $0xf1] sm:$0xff]
      %v486 = vld [vmem:[#allocation2 + $0xf9] sm:$0xff]
      %v487 = vld [vmem:[#allocation2 + $0x109] sm:$0xff]
      %v488 = vld [vmem:[#allocation2 + $0x111] sm:$0xff]
      %v489 = vld [vmem:[#allocation2 + $0x121] sm:$0xff]
      %v490 = vld [vmem:[#allocation2 + $0x129] sm:$0xff]
      %v491 = vld [vmem:[#allocation2 + $0x139] sm:$0xff]
      %v492 = vld [vmem:[#allocation2 + $0x141] sm:$0xff]
      %v493 = vld [vmem:[#allocation2 + $0x151] sm:$0xff]
      %v494 = vld [vmem:[#allocation2 + $0x159] sm:$0xff]
      %v495 = vld [vmem:[#allocation2 + $0x169] sm:$0xff]
      %v496 = vld [vmem:[#allocation2 + $0x171] sm:$0xff]
      %v497 = vld [vmem:[#allocation2 + $0x2] sm:$0xff]
      %v498 = vld [vmem:[#allocation2 + $0xa] sm:$0xff]
      %v499 = vld [vmem:[#allocation2 + $0x1a] sm:$0xff]
      %v500 = vld [vmem:[#allocation2 + $0x22] sm:$0xff]
      %v501 = vld [vmem:[#allocation2 + $0x32] sm:$0xff]
      %v502 = vld [vmem:[#allocation2 + $0x3a] sm:$0xff]
      %v503 = vld [vmem:[#allocation2 + $0x4a] sm:$0xff]
      %v504 = vld [vmem:[#allocation2 + $0x52] sm:$0xff]
      %v505 = vld [vmem:[#allocation2 + $0x62] sm:$0xff]
      %v506 = vld [vmem:[#allocation2 + $0x6a] sm:$0xff]
      %v507 = vld [vmem:[#allocation2 + $0x7a] sm:$0xff]
      %v508 = vld [vmem:[#allocation2 + $0x82] sm:$0xff]
      %v509 = vld [vmem:[#allocation2 + $0x92] sm:$0xff]
      %v510 = vld [vmem:[#allocation2 + $0x9a] sm:$0xff]
      %v511 = vld [vmem:[#allocation2 + $0xaa] sm:$0xff]
      %v512 = vld [vmem:[#allocation2 + $0xb2] sm:$0xff]
      %v513 = vld [vmem:[#allocation2 + $0xc2] sm:$0xff]
      %v514 = vld [vmem:[#allocation2 + $0xca] sm:$0xff]
      %v515 = vld [vmem:[#allocation2 + $0xda] sm:$0xff]
      %v516 = vld [vmem:[#allocation2 + $0xe2] sm:$0xff]
      %v517 = vld [vmem:[#allocation2 + $0xf2] sm:$0xff]
      %v518 = vld [vmem:[#allocation2 + $0xfa] sm:$0xff]
      %v519 = vld [vmem:[#allocation2 + $0x10a] sm:$0xff]
      %v520 = vld [vmem:[#allocation2 + $0x112] sm:$0xff]
      %v521 = vld [vmem:[#allocation2 + $0x122] sm:$0xff]
      %v522 = vld [vmem:[#allocation2 + $0x12a] sm:$0xff]
      %v523 = vld [vmem:[#allocation2 + $0x13a] sm:$0xff]
      %v524 = vld [vmem:[#allocation2 + $0x142] sm:$0xff]
      %v525 = vld [vmem:[#allocation2 + $0x152] sm:$0xff]
      %v526 = vld [vmem:[#allocation2 + $0x15a] sm:$0xff]
      %v527 = vld [vmem:[#allocation2 + $0x16a] sm:$0xff]
      %v528 = vld [vmem:[#allocation2 + $0x172] sm:$0xff]
      %v529 = vld [vmem:[%s400] sm:$0xff]
      %v530 = vld [vmem:[%s400 + $0x8] sm:$0xff]
      %v531 = vld [vmem:[%s400 + $0x18] sm:$0xff]
      %v532 = vld [vmem:[%s400 + $0x20] sm:$0xff]
      %v533 = vld [vmem:[%s400 + $0x30] sm:$0xff]
      %v534 = vld [vmem:[%s400 + $0x38] sm:$0xff]
      %v535 = vld [vmem:[%s400 + $0x48] sm:$0xff]
      %v536 = vld [vmem:[%s400 + $0x50] sm:$0xff]
      %v537 = vld [vmem:[%s400 + $0x60] sm:$0xff]
      %v538 = vld [vmem:[%s400 + $0x68] sm:$0xff]
      %v539 = vld [vmem:[%s400 + $0x78] sm:$0xff]
      %v540 = vld [vmem:[%s400 + $0x80] sm:$0xff]
      %v541 = vld [vmem:[%s400 + $0x90] sm:$0xff]
      %v542 = vld [vmem:[%s400 + $0x98] sm:$0xff]
      %v543 = vld [vmem:[%s400 + $0xa8] sm:$0xff]
      %v544 = vld [vmem:[%s400 + $0xb0] sm:$0xff]
      %v545 = vld [vmem:[%s400 + $0xc0] sm:$0xff]
      %v546 = vld [vmem:[%s400 + $0xc8] sm:$0xff]
      %v547 = vld [vmem:[%s400 + $0xd8] sm:$0xff]
      %v548 = vld [vmem:[%s400 + $0xe0] sm:$0xff]
      %v549 = vld [vmem:[%s400 + $0xf0] sm:$0xff]
      %v550 = vld [vmem:[%s400 + $0xf8] sm:$0xff]
      %v551 = vld [vmem:[%s400 + $0x108] sm:$0xff]
      %v552 = vld [vmem:[%s400 + $0x110] sm:$0xff]
      %v553 = vld [vmem:[%s400 + $0x120] sm:$0xff]
      %v554 = vld [vmem:[%s400 + $0x128] sm:$0xff]
      %v555 = vld [vmem:[%s400 + $0x138] sm:$0xff]
      %v556 = vld [vmem:[%s400 + $0x140] sm:$0xff]
      %v557 = vld [vmem:[%s400 + $0x150] sm:$0xff]
      %v558 = vld [vmem:[%s400 + $0x158] sm:$0xff]
      %v559 = vld [vmem:[%s400 + $0x168] sm:$0xff]
      %v560 = vld [vmem:[%s400 + $0x170] sm:$0xff]
      %v561 = vld [vmem:[%s400 + $0x1] sm:$0xff]
      %v562 = vld [vmem:[%s400 + $0x9] sm:$0xff]
      %v563 = vld [vmem:[%s400 + $0x19] sm:$0xff]
      %v564 = vld [vmem:[%s400 + $0x21] sm:$0xff]
      %v565 = vld [vmem:[%s400 + $0x31] sm:$0xff]
      %v566 = vld [vmem:[%s400 + $0x39] sm:$0xff]
      %v567 = vld [vmem:[%s400 + $0x49] sm:$0xff]
      %v568 = vld [vmem:[%s400 + $0x51] sm:$0xff]
      %v569 = vld [vmem:[%s400 + $0x61] sm:$0xff]
      %v570 = vld [vmem:[%s400 + $0x69] sm:$0xff]
      %v571 = vld [vmem:[%s400 + $0x79] sm:$0xff]
      %v572 = vld [vmem:[%s400 + $0x81] sm:$0xff]
      %v573 = vld [vmem:[%s400 + $0x91] sm:$0xff]
      %v574 = vld [vmem:[%s400 + $0x99] sm:$0xff]
      %v575 = vld [vmem:[%s400 + $0xa9] sm:$0xff]
      %v576 = vld [vmem:[%s400 + $0xb1] sm:$0xff]
      %v577 = vld [vmem:[%s400 + $0xc1] sm:$0xff]
      %v578 = vld [vmem:[%s400 + $0xc9] sm:$0xff]
      %v579 = vld [vmem:[%s400 + $0xd9] sm:$0xff]
      %v580 = vld [vmem:[%s400 + $0xe1] sm:$0xff]
      %v581 = vld [vmem:[%s400 + $0xf1] sm:$0xff]
      %v582 = vld [vmem:[%s400 + $0xf9] sm:$0xff]
      %v583 = vld [vmem:[%s400 + $0x109] sm:$0xff]
      %v584 = vld [vmem:[%s400 + $0x111] sm:$0xff]
      %v585 = vld [vmem:[%s400 + $0x121] sm:$0xff]
      %v586 = vld [vmem:[%s400 + $0x129] sm:$0xff]
      %v587 = vld [vmem:[%s400 + $0x139] sm:$0xff]
      %v588 = vld [vmem:[%s400 + $0x141] sm:$0xff]
      %v589 = vld [vmem:[%s400 + $0x151] sm:$0xff]
      %v590 = vld [vmem:[%s400 + $0x159] sm:$0xff]
      %v591 = vld [vmem:[%s400 + $0x169] sm:$0xff]
      %v592 = vld [vmem:[%s400 + $0x171] sm:$0xff]
      %v593 = vld [vmem:[%s400 + $0x2] sm:$0xff]
      %v594 = vld [vmem:[%s400 + $0xa] sm:$0xff]
      %v595 = vld [vmem:[%s400 + $0x1a] sm:$0xff]
      %v596 = vld [vmem:[%s400 + $0x22] sm:$0xff]
      %v597 = vld [vmem:[%s400 + $0x32] sm:$0xff]
      %v598 = vld [vmem:[%s400 + $0x3a] sm:$0xff]
      %v599 = vld [vmem:[%s400 + $0x4a] sm:$0xff]
      %v600 = vld [vmem:[%s400 + $0x52] sm:$0xff]
      %v601 = vld [vmem:[%s400 + $0x62] sm:$0xff]
      %v602 = vld [vmem:[%s400 + $0x6a] sm:$0xff]
      %v603 = vld [vmem:[%s400 + $0x7a] sm:$0xff]
      %v604 = vld [vmem:[%s400 + $0x82] sm:$0xff]
      %v605 = vld [vmem:[%s400 + $0x92] sm:$0xff]
      %v606 = vld [vmem:[%s400 + $0x9a] sm:$0xff]
      %v607 = vld [vmem:[%s400 + $0xaa] sm:$0xff]
      %v608 = vld [vmem:[%s400 + $0xb2] sm:$0xff]
      %v609 = vld [vmem:[%s400 + $0xc2] sm:$0xff]
      %v610 = vld [vmem:[%s400 + $0xca] sm:$0xff]
      %v611 = vld [vmem:[%s400 + $0xda] sm:$0xff]
      %v612 = vld [vmem:[%s400 + $0xe2] sm:$0xff]
      %v613 = vld [vmem:[%s400 + $0xf2] sm:$0xff]
      %v614 = vld [vmem:[%s400 + $0xfa] sm:$0xff]
      %v615 = vld [vmem:[%s400 + $0x10a] sm:$0xff]
      %v616 = vld [vmem:[%s400 + $0x112] sm:$0xff]
      %v617 = vld [vmem:[%s400 + $0x122] sm:$0xff]
      %v618 = vld [vmem:[%s400 + $0x12a] sm:$0xff]
      %v619 = vld [vmem:[%s400 + $0x13a] sm:$0xff]
      %v620 = vld [vmem:[%s400 + $0x142] sm:$0xff]
      %v621 = vld [vmem:[%s400 + $0x152] sm:$0xff]
      %v622 = vld [vmem:[%s400 + $0x15a] sm:$0xff]
      %v623 = vld [vmem:[%s400 + $0x16a] sm:$0xff]
      %v624 = vld [vmem:[%s400 + $0x172] sm:$0xff]
      %s625 = scalar_lea.vmem [#allocation2], 48
      %v626 = vld [vmem:[%s625] sm:$0xff]
      %v627 = vld [vmem:[%s625 + $0x8] sm:$0xff]
      %v628 = vld [vmem:[%s625 + $0x18] sm:$0xff]
      %v629 = vld [vmem:[%s625 + $0x20] sm:$0xff]
      %v630 = vld [vmem:[%s625 + $0x30] sm:$0xff]
      %v631 = vld [vmem:[%s625 + $0x38] sm:$0xff]
      %v632 = vld [vmem:[%s625 + $0x48] sm:$0xff]
      %v633 = vld [vmem:[%s625 + $0x50] sm:$0xff]
      %v634 = vld [vmem:[%s625 + $0x60] sm:$0xff]
      %v635 = vld [vmem:[%s625 + $0x68] sm:$0xff]
      %v636 = vld [vmem:[%s625 + $0x78] sm:$0xff]
      %v637 = vld [vmem:[%s625 + $0x80] sm:$0xff]
      %v638 = vld [vmem:[%s625 + $0x90] sm:$0xff]
      %v639 = vld [vmem:[%s625 + $0x98] sm:$0xff]
      %v640 = vld [vmem:[%s625 + $0xa8] sm:$0xff]
      %v641 = vld [vmem:[%s625 + $0xb0] sm:$0xff]
      %v642 = vld [vmem:[%s625 + $0xc0] sm:$0xff]
      %v643 = vld [vmem:[%s625 + $0xc8] sm:$0xff]
      %v644 = vld [vmem:[%s625 + $0xd8] sm:$0xff]
      %v645 = vld [vmem:[%s625 + $0xe0] sm:$0xff]
      %v646 = vld [vmem:[%s625 + $0xf0] sm:$0xff]
      %v647 = vld [vmem:[%s625 + $0xf8] sm:$0xff]
      %v648 = vld [vmem:[%s625 + $0x108] sm:$0xff]
      %v649 = vld [vmem:[%s625 + $0x110] sm:$0xff]
      %v650 = vld [vmem:[%s625 + $0x120] sm:$0xff]
      %v651 = vld [vmem:[%s625 + $0x128] sm:$0xff]
      %v652 = vld [vmem:[%s625 + $0x138] sm:$0xff]
      %v653 = vld [vmem:[%s625 + $0x140] sm:$0xff]
      %v654 = vld [vmem:[%s625 + $0x150] sm:$0xff]
      %v655 = vld [vmem:[%s625 + $0x158] sm:$0xff]
      %v656 = vld [vmem:[%s625 + $0x168] sm:$0xff]
      %v657 = vld [vmem:[%s625 + $0x170] sm:$0xff]
      %v658 = vld [vmem:[%s625 + $0x1] sm:$0xff]
      %v659 = vld [vmem:[%s625 + $0x9] sm:$0xff]
      %v660 = vld [vmem:[%s625 + $0x19] sm:$0xff]
      %v661 = vld [vmem:[%s625 + $0x21] sm:$0xff]
      %v662 = vld [vmem:[%s625 + $0x31] sm:$0xff]
      %v663 = vld [vmem:[%s625 + $0x39] sm:$0xff]
      %v664 = vld [vmem:[%s625 + $0x49] sm:$0xff]
      %v665 = vld [vmem:[%s625 + $0x51] sm:$0xff]
      %v666 = vld [vmem:[%s625 + $0x61] sm:$0xff]
      %v667 = vld [vmem:[%s625 + $0x69] sm:$0xff]
      %v668 = vld [vmem:[%s625 + $0x79] sm:$0xff]
      %v669 = vld [vmem:[%s625 + $0x81] sm:$0xff]
      %v670 = vld [vmem:[%s625 + $0x91] sm:$0xff]
      %v671 = vld [vmem:[%s625 + $0x99] sm:$0xff]
      %v672 = vld [vmem:[%s625 + $0xa9] sm:$0xff]
      %v673 = vld [vmem:[%s625 + $0xb1] sm:$0xff]
      %v674 = vld [vmem:[%s625 + $0xc1] sm:$0xff]
      %v675 = vld [vmem:[%s625 + $0xc9] sm:$0xff]
      %v676 = vld [vmem:[%s625 + $0xd9] sm:$0xff]
      %v677 = vld [vmem:[%s625 + $0xe1] sm:$0xff]
      %v678 = vld [vmem:[%s625 + $0xf1] sm:$0xff]
      %v679 = vld [vmem:[%s625 + $0xf9] sm:$0xff]
      %v680 = vld [vmem:[%s625 + $0x109] sm:$0xff]
      %v681 = vld [vmem:[%s625 + $0x111] sm:$0xff]
      %v682 = vld [vmem:[%s625 + $0x121] sm:$0xff]
      %v683 = vld [vmem:[%s625 + $0x129] sm:$0xff]
      %v684 = vld [vmem:[%s625 + $0x139] sm:$0xff]
      %v685 = vld [vmem:[%s625 + $0x141] sm:$0xff]
      %v686 = vld [vmem:[%s625 + $0x151] sm:$0xff]
      %v687 = vld [vmem:[%s625 + $0x159] sm:$0xff]
      %v688 = vld [vmem:[%s625 + $0x169] sm:$0xff]
      %v689 = vld [vmem:[%s625 + $0x171] sm:$0xff]
      %v690 = vld [vmem:[%s625 + $0x2] sm:$0xff]
      %v691 = vld [vmem:[%s625 + $0xa] sm:$0xff]
      %v692 = vld [vmem:[%s625 + $0x1a] sm:$0xff]
      %v693 = vld [vmem:[%s625 + $0x22] sm:$0xff]
      %v694 = vld [vmem:[%s625 + $0x32] sm:$0xff]
      %v695 = vld [vmem:[%s625 + $0x3a] sm:$0xff]
      %v696 = vld [vmem:[%s625 + $0x4a] sm:$0xff]
      %v697 = vld [vmem:[%s625 + $0x52] sm:$0xff]
      %v698 = vld [vmem:[%s625 + $0x62] sm:$0xff]
      %v699 = vld [vmem:[%s625 + $0x6a] sm:$0xff]
      %v700 = vld [vmem:[%s625 + $0x7a] sm:$0xff]
      %v701 = vld [vmem:[%s625 + $0x82] sm:$0xff]
      %v702 = vld [vmem:[%s625 + $0x92] sm:$0xff]
      %v703 = vld [vmem:[%s625 + $0x9a] sm:$0xff]
      %v704 = vld [vmem:[%s625 + $0xaa] sm:$0xff]
      %v705 = vld [vmem:[%s625 + $0xb2] sm:$0xff]
      %v706 = vld [vmem:[%s625 + $0xc2] sm:$0xff]
      %v707 = vld [vmem:[%s625 + $0xca] sm:$0xff]
      %v708 = vld [vmem:[%s625 + $0xda] sm:$0xff]
      %v709 = vld [vmem:[%s625 + $0xe2] sm:$0xff]
      %v710 = vld [vmem:[%s625 + $0xf2] sm:$0xff]
      %v711 = vld [vmem:[%s625 + $0xfa] sm:$0xff]
      %v712 = vld [vmem:[%s625 + $0x10a] sm:$0xff]
      %v713 = vld [vmem:[%s625 + $0x112] sm:$0xff]
      %v714 = vld [vmem:[%s625 + $0x122] sm:$0xff]
      %v715 = vld [vmem:[%s625 + $0x12a] sm:$0xff]
      %v716 = vld [vmem:[%s625 + $0x13a] sm:$0xff]
      %v717 = vld [vmem:[%s625 + $0x142] sm:$0xff]
      %v718 = vld [vmem:[%s625 + $0x152] sm:$0xff]
      %v719 = vld [vmem:[%s625 + $0x15a] sm:$0xff]
      %v720 = vld [vmem:[%s625 + $0x16a] sm:$0xff]
      %v721 = vld [vmem:[%s625 + $0x172] sm:$0xff]
      %754 = vrot.lane.b32.xlu0 %v465, 4
      %v755 = vpop.permute.xlu0 %754
      %756 = vrot.lane.b32.xlu0 %v466, 4
      %v757 = vpop.permute.xlu0 %756
      %758 = vrot.lane.b32.xlu0 %v467, 4
      %v759 = vpop.permute.xlu0 %758
      %760 = vrot.lane.b32.xlu0 %v468, 4
      %v761 = vpop.permute.xlu0 %760
      %762 = vrot.lane.b32.xlu0 %v469, 4
      %v763 = vpop.permute.xlu0 %762
      %764 = vrot.lane.b32.xlu0 %v470, 4
      %v765 = vpop.permute.xlu0 %764
      %766 = vrot.lane.b32.xlu0 %v471, 4
      %v767 = vpop.permute.xlu0 %766
      %768 = vrot.lane.b32.xlu0 %v472, 4
      %v769 = vpop.permute.xlu0 %768
      %770 = vrot.lane.b32.xlu0 %v473, 4
      %v771 = vpop.permute.xlu0 %770
      %772 = vrot.lane.b32.xlu0 %v474, 4
      %v773 = vpop.permute.xlu0 %772
      %774 = vrot.lane.b32.xlu0 %v475, 4
      %v775 = vpop.permute.xlu0 %774
      %776 = vrot.lane.b32.xlu0 %v476, 4
      %v777 = vpop.permute.xlu0 %776
      %778 = vrot.lane.b32.xlu0 %v477, 4
      %v779 = vpop.permute.xlu0 %778
      %780 = vrot.lane.b32.xlu0 %v478, 4
      %v781 = vpop.permute.xlu0 %780
      %782 = vrot.lane.b32.xlu0 %v479, 4
      %v783 = vpop.permute.xlu0 %782
      %784 = vrot.lane.b32.xlu0 %v480, 4
      %v785 = vpop.permute.xlu0 %784
      %786 = vrot.lane.b32.xlu0 %v481, 4
      %v787 = vpop.permute.xlu0 %786
      %788 = vrot.lane.b32.xlu0 %v482, 4
      %v789 = vpop.permute.xlu0 %788
      %790 = vrot.lane.b32.xlu0 %v483, 4
      %v791 = vpop.permute.xlu0 %790
      %792 = vrot.lane.b32.xlu0 %v484, 4
      %v793 = vpop.permute.xlu0 %792
      %794 = vrot.lane.b32.xlu0 %v485, 4
      %v795 = vpop.permute.xlu0 %794
      %796 = vrot.lane.b32.xlu0 %v486, 4
      %v797 = vpop.permute.xlu0 %796
      %798 = vrot.lane.b32.xlu0 %v487, 4
      %v799 = vpop.permute.xlu0 %798
      %800 = vrot.lane.b32.xlu0 %v488, 4
      %v801 = vpop.permute.xlu0 %800
      %802 = vrot.lane.b32.xlu0 %v489, 4
      %v803 = vpop.permute.xlu0 %802
      %804 = vrot.lane.b32.xlu0 %v490, 4
      %v805 = vpop.permute.xlu0 %804
      %806 = vrot.lane.b32.xlu0 %v491, 4
      %v807 = vpop.permute.xlu0 %806
      %808 = vrot.lane.b32.xlu0 %v492, 4
      %v809 = vpop.permute.xlu0 %808
      %810 = vrot.lane.b32.xlu0 %v493, 4
      %v811 = vpop.permute.xlu0 %810
      %812 = vrot.lane.b32.xlu0 %v494, 4
      %v813 = vpop.permute.xlu0 %812
      %814 = vrot.lane.b32.xlu0 %v495, 4
      %v815 = vpop.permute.xlu0 %814
      %816 = vrot.lane.b32.xlu0 %v496, 4
      %v817 = vpop.permute.xlu0 %816
      %882 = vrot.lane.b32.xlu0 %v497, 8
      %v883 = vpop.permute.xlu0 %882
      %884 = vrot.lane.b32.xlu0 %v498, 8
      %v885 = vpop.permute.xlu0 %884
      %886 = vrot.lane.b32.xlu0 %v499, 8
      %v887 = vpop.permute.xlu0 %886
      %888 = vrot.lane.b32.xlu0 %v500, 8
      %v889 = vpop.permute.xlu0 %888
      %890 = vrot.lane.b32.xlu0 %v501, 8
      %v891 = vpop.permute.xlu0 %890
      %892 = vrot.lane.b32.xlu0 %v502, 8
      %v893 = vpop.permute.xlu0 %892
      %894 = vrot.lane.b32.xlu0 %v503, 8
      %v895 = vpop.permute.xlu0 %894
      %896 = vrot.lane.b32.xlu0 %v504, 8
      %v897 = vpop.permute.xlu0 %896
      %898 = vrot.lane.b32.xlu0 %v505, 8
      %v899 = vpop.permute.xlu0 %898
      %900 = vrot.lane.b32.xlu0 %v506, 8
      %v901 = vpop.permute.xlu0 %900
      %902 = vrot.lane.b32.xlu0 %v507, 8
      %v903 = vpop.permute.xlu0 %902
      %904 = vrot.lane.b32.xlu0 %v508, 8
      %v905 = vpop.permute.xlu0 %904
      %906 = vrot.lane.b32.xlu0 %v509, 8
      %v907 = vpop.permute.xlu0 %906
      %908 = vrot.lane.b32.xlu0 %v510, 8
      %v909 = vpop.permute.xlu0 %908
      %910 = vrot.lane.b32.xlu0 %v511, 8
      %v911 = vpop.permute.xlu0 %910
      %912 = vrot.lane.b32.xlu0 %v512, 8
      %v913 = vpop.permute.xlu0 %912
      %914 = vrot.lane.b32.xlu0 %v513, 8
      %v915 = vpop.permute.xlu0 %914
      %916 = vrot.lane.b32.xlu0 %v514, 8
      %v917 = vpop.permute.xlu0 %916
      %918 = vrot.lane.b32.xlu0 %v515, 8
      %v919 = vpop.permute.xlu0 %918
      %920 = vrot.lane.b32.xlu0 %v516, 8
      %v921 = vpop.permute.xlu0 %920
      %922 = vrot.lane.b32.xlu0 %v517, 8
      %v923 = vpop.permute.xlu0 %922
      %924 = vrot.lane.b32.xlu0 %v518, 8
      %v925 = vpop.permute.xlu0 %924
      %926 = vrot.lane.b32.xlu0 %v519, 8
      %v927 = vpop.permute.xlu0 %926
      %928 = vrot.lane.b32.xlu0 %v520, 8
      %v929 = vpop.permute.xlu0 %928
      %930 = vrot.lane.b32.xlu0 %v521, 8
      %v931 = vpop.permute.xlu0 %930
      %932 = vrot.lane.b32.xlu0 %v522, 8
      %v933 = vpop.permute.xlu0 %932
      %934 = vrot.lane.b32.xlu0 %v523, 8
      %v935 = vpop.permute.xlu0 %934
      %936 = vrot.lane.b32.xlu0 %v524, 8
      %v937 = vpop.permute.xlu0 %936
      %938 = vrot.lane.b32.xlu0 %v525, 8
      %v939 = vpop.permute.xlu0 %938
      %940 = vrot.lane.b32.xlu0 %v526, 8
      %v941 = vpop.permute.xlu0 %940
      %942 = vrot.lane.b32.xlu0 %v527, 8
      %v943 = vpop.permute.xlu0 %942
      %944 = vrot.lane.b32.xlu0 %v528, 8
      %v945 = vpop.permute.xlu0 %944
      %1010 = vrot.lane.b32.xlu0 %v529, 12
      %v1011 = vpop.permute.xlu0 %1010
      %1012 = vrot.lane.b32.xlu0 %v530, 12
      %v1013 = vpop.permute.xlu0 %1012
      %1014 = vrot.lane.b32.xlu0 %v531, 12
      %v1015 = vpop.permute.xlu0 %1014
      %1016 = vrot.lane.b32.xlu0 %v532, 12
      %v1017 = vpop.permute.xlu0 %1016
      %1018 = vrot.lane.b32.xlu0 %v533, 12
      %v1019 = vpop.permute.xlu0 %1018
      %1020 = vrot.lane.b32.xlu0 %v534, 12
      %v1021 = vpop.permute.xlu0 %1020
      %1022 = vrot.lane.b32.xlu0 %v535, 12
      %v1023 = vpop.permute.xlu0 %1022
      %1024 = vrot.lane.b32.xlu0 %v536, 12
      %v1025 = vpop.permute.xlu0 %1024
      %1026 = vrot.lane.b32.xlu0 %v537, 12
      %v1027 = vpop.permute.xlu0 %1026
      %1028 = vrot.lane.b32.xlu0 %v538, 12
      %v1029 = vpop.permute.xlu0 %1028
      %1030 = vrot.lane.b32.xlu0 %v539, 12
      %v1031 = vpop.permute.xlu0 %1030
      %1032 = vrot.lane.b32.xlu0 %v540, 12
      %v1033 = vpop.permute.xlu0 %1032
      %1034 = vrot.lane.b32.xlu0 %v541, 12
      %v1035 = vpop.permute.xlu0 %1034
      %1036 = vrot.lane.b32.xlu0 %v542, 12
      %v1037 = vpop.permute.xlu0 %1036
      %1038 = vrot.lane.b32.xlu0 %v543, 12
      %v1039 = vpop.permute.xlu0 %1038
      %1040 = vrot.lane.b32.xlu0 %v544, 12
      %v1041 = vpop.permute.xlu0 %1040
      %1042 = vrot.lane.b32.xlu0 %v545, 12
      %v1043 = vpop.permute.xlu0 %1042
      %1044 = vrot.lane.b32.xlu0 %v546, 12
      %v1045 = vpop.permute.xlu0 %1044
      %1046 = vrot.lane.b32.xlu0 %v547, 12
      %v1047 = vpop.permute.xlu0 %1046
      %1048 = vrot.lane.b32.xlu0 %v548, 12
      %v1049 = vpop.permute.xlu0 %1048
      %1050 = vrot.lane.b32.xlu0 %v549, 12
      %v1051 = vpop.permute.xlu0 %1050
      %1052 = vrot.lane.b32.xlu0 %v550, 12
      %v1053 = vpop.permute.xlu0 %1052
      %1054 = vrot.lane.b32.xlu0 %v551, 12
      %v1055 = vpop.permute.xlu0 %1054
      %1056 = vrot.lane.b32.xlu0 %v552, 12
      %v1057 = vpop.permute.xlu0 %1056
      %1058 = vrot.lane.b32.xlu0 %v553, 12
      %v1059 = vpop.permute.xlu0 %1058
      %1060 = vrot.lane.b32.xlu0 %v554, 12
      %v1061 = vpop.permute.xlu0 %1060
      %1062 = vrot.lane.b32.xlu0 %v555, 12
      %v1063 = vpop.permute.xlu0 %1062
      %1064 = vrot.lane.b32.xlu0 %v556, 12
      %v1065 = vpop.permute.xlu0 %1064
      %1066 = vrot.lane.b32.xlu0 %v557, 12
      %v1067 = vpop.permute.xlu0 %1066
      %1068 = vrot.lane.b32.xlu0 %v558, 12
      %v1069 = vpop.permute.xlu0 %1068
      %1070 = vrot.lane.b32.xlu0 %v559, 12
      %v1071 = vpop.permute.xlu0 %1070
      %1072 = vrot.lane.b32.xlu0 %v560, 12
      %v1073 = vpop.permute.xlu0 %1072
      %1138 = vrot.lane.b32.xlu0 %v561, 16
      %v1139 = vpop.permute.xlu0 %1138
      %1140 = vrot.lane.b32.xlu0 %v562, 16
      %v1141 = vpop.permute.xlu0 %1140
      %1142 = vrot.lane.b32.xlu0 %v563, 16
      %v1143 = vpop.permute.xlu0 %1142
      %1144 = vrot.lane.b32.xlu0 %v564, 16
      %v1145 = vpop.permute.xlu0 %1144
      %1146 = vrot.lane.b32.xlu0 %v565, 16
      %v1147 = vpop.permute.xlu0 %1146
      %1148 = vrot.lane.b32.xlu0 %v566, 16
      %v1149 = vpop.permute.xlu0 %1148
      %1150 = vrot.lane.b32.xlu0 %v567, 16
      %v1151 = vpop.permute.xlu0 %1150
      %1152 = vrot.lane.b32.xlu0 %v568, 16
      %v1153 = vpop.permute.xlu0 %1152
      %1154 = vrot.lane.b32.xlu0 %v569, 16
      %v1155 = vpop.permute.xlu0 %1154
      %1156 = vrot.lane.b32.xlu0 %v570, 16
      %v1157 = vpop.permute.xlu0 %1156
      %1158 = vrot.lane.b32.xlu0 %v571, 16
      %v1159 = vpop.permute.xlu0 %1158
      %1160 = vrot.lane.b32.xlu0 %v572, 16
      %v1161 = vpop.permute.xlu0 %1160
      %1162 = vrot.lane.b32.xlu0 %v573, 16
      %v1163 = vpop.permute.xlu0 %1162
      %1164 = vrot.lane.b32.xlu0 %v574, 16
      %v1165 = vpop.permute.xlu0 %1164
      %1166 = vrot.lane.b32.xlu0 %v575, 16
      %v1167 = vpop.permute.xlu0 %1166
      %1168 = vrot.lane.b32.xlu0 %v576, 16
      %v1169 = vpop.permute.xlu0 %1168
      %1170 = vrot.lane.b32.xlu0 %v577, 16
      %v1171 = vpop.permute.xlu0 %1170
      %1172 = vrot.lane.b32.xlu0 %v578, 16
      %v1173 = vpop.permute.xlu0 %1172
      %1174 = vrot.lane.b32.xlu0 %v579, 16
      %v1175 = vpop.permute.xlu0 %1174
      %1176 = vrot.lane.b32.xlu0 %v580, 16
      %v1177 = vpop.permute.xlu0 %1176
      %1178 = vrot.lane.b32.xlu0 %v581, 16
      %v1179 = vpop.permute.xlu0 %1178
      %1180 = vrot.lane.b32.xlu0 %v582, 16
      %v1181 = vpop.permute.xlu0 %1180
      %1182 = vrot.lane.b32.xlu0 %v583, 16
      %v1183 = vpop.permute.xlu0 %1182
      %1184 = vrot.lane.b32.xlu0 %v584, 16
      %v1185 = vpop.permute.xlu0 %1184
      %1186 = vrot.lane.b32.xlu0 %v585, 16
      %v1187 = vpop.permute.xlu0 %1186
      %1188 = vrot.lane.b32.xlu0 %v586, 16
      %v1189 = vpop.permute.xlu0 %1188
      %1190 = vrot.lane.b32.xlu0 %v587, 16
      %v1191 = vpop.permute.xlu0 %1190
      %1192 = vrot.lane.b32.xlu0 %v588, 16
      %v1193 = vpop.permute.xlu0 %1192
      %1194 = vrot.lane.b32.xlu0 %v589, 16
      %v1195 = vpop.permute.xlu0 %1194
      %1196 = vrot.lane.b32.xlu0 %v590, 16
      %v1197 = vpop.permute.xlu0 %1196
      %1198 = vrot.lane.b32.xlu0 %v591, 16
      %v1199 = vpop.permute.xlu0 %1198
      %1200 = vrot.lane.b32.xlu0 %v592, 16
      %v1201 = vpop.permute.xlu0 %1200
      %1266 = vrot.lane.b32.xlu0 %v593, 20
      %v1267 = vpop.permute.xlu0 %1266
      %1268 = vrot.lane.b32.xlu0 %v594, 20
      %v1269 = vpop.permute.xlu0 %1268
      %1270 = vrot.lane.b32.xlu0 %v595, 20
      %v1271 = vpop.permute.xlu0 %1270
      %1272 = vrot.lane.b32.xlu0 %v596, 20
      %v1273 = vpop.permute.xlu0 %1272
      %1274 = vrot.lane.b32.xlu0 %v597, 20
      %v1275 = vpop.permute.xlu0 %1274
      %1276 = vrot.lane.b32.xlu0 %v598, 20
      %v1277 = vpop.permute.xlu0 %1276
      %1278 = vrot.lane.b32.xlu0 %v599, 20
      %v1279 = vpop.permute.xlu0 %1278
      %1280 = vrot.lane.b32.xlu0 %v600, 20
      %v1281 = vpop.permute.xlu0 %1280
      %1282 = vrot.lane.b32.xlu0 %v601, 20
      %v1283 = vpop.permute.xlu0 %1282
      %1284 = vrot.lane.b32.xlu0 %v602, 20
      %v1285 = vpop.permute.xlu0 %1284
      %1286 = vrot.lane.b32.xlu0 %v603, 20
      %v1287 = vpop.permute.xlu0 %1286
      %1288 = vrot.lane.b32.xlu0 %v604, 20
      %v1289 = vpop.permute.xlu0 %1288
      %1290 = vrot.lane.b32.xlu0 %v605, 20
      %v1291 = vpop.permute.xlu0 %1290
      %1292 = vrot.lane.b32.xlu0 %v606, 20
      %v1293 = vpop.permute.xlu0 %1292
      %1294 = vrot.lane.b32.xlu0 %v607, 20
      %v1295 = vpop.permute.xlu0 %1294
      %1296 = vrot.lane.b32.xlu0 %v608, 20
      %v1297 = vpop.permute.xlu0 %1296
      %1298 = vrot.lane.b32.xlu0 %v609, 20
      %v1299 = vpop.permute.xlu0 %1298
      %1300 = vrot.lane.b32.xlu0 %v610, 20
      %v1301 = vpop.permute.xlu0 %1300
      %1302 = vrot.lane.b32.xlu0 %v611, 20
      %v1303 = vpop.permute.xlu0 %1302
      %1304 = vrot.lane.b32.xlu0 %v612, 20
      %v1305 = vpop.permute.xlu0 %1304
      %1306 = vrot.lane.b32.xlu0 %v613, 20
      %v1307 = vpop.permute.xlu0 %1306
      %1308 = vrot.lane.b32.xlu0 %v614, 20
      %v1309 = vpop.permute.xlu0 %1308
      %1310 = vrot.lane.b32.xlu0 %v615, 20
      %v1311 = vpop.permute.xlu0 %1310
      %1312 = vrot.lane.b32.xlu0 %v616, 20
      %v1313 = vpop.permute.xlu0 %1312
      %1314 = vrot.lane.b32.xlu0 %v617, 20
      %v1315 = vpop.permute.xlu0 %1314
      %1316 = vrot.lane.b32.xlu0 %v618, 20
      %v1317 = vpop.permute.xlu0 %1316
      %1318 = vrot.lane.b32.xlu0 %v619, 20
      %v1319 = vpop.permute.xlu0 %1318
      %1320 = vrot.lane.b32.xlu0 %v620, 20
      %v1321 = vpop.permute.xlu0 %1320
      %1322 = vrot.lane.b32.xlu0 %v621, 20
      %v1323 = vpop.permute.xlu0 %1322
      %1324 = vrot.lane.b32.xlu0 %v622, 20
      %v1325 = vpop.permute.xlu0 %1324
      %1326 = vrot.lane.b32.xlu0 %v623, 20
      %v1327 = vpop.permute.xlu0 %1326
      %1328 = vrot.lane.b32.xlu0 %v624, 20
      %v1329 = vpop.permute.xlu0 %1328
      %1394 = vrot.lane.b32.xlu0 %v626, 24
      %v1395 = vpop.permute.xlu0 %1394
      %1396 = vrot.lane.b32.xlu0 %v627, 24
      %v1397 = vpop.permute.xlu0 %1396
      %1398 = vrot.lane.b32.xlu0 %v628, 24
      %v1399 = vpop.permute.xlu0 %1398
      %1400 = vrot.lane.b32.xlu0 %v629, 24
      %v1401 = vpop.permute.xlu0 %1400
      %1402 = vrot.lane.b32.xlu0 %v630, 24
      %v1403 = vpop.permute.xlu0 %1402
      %1404 = vrot.lane.b32.xlu0 %v631, 24
      %v1405 = vpop.permute.xlu0 %1404
      %1406 = vrot.lane.b32.xlu0 %v632, 24
      %v1407 = vpop.permute.xlu0 %1406
      %1408 = vrot.lane.b32.xlu0 %v633, 24
      %v1409 = vpop.permute.xlu0 %1408
      %1410 = vrot.lane.b32.xlu0 %v634, 24
      %v1411 = vpop.permute.xlu0 %1410
      %1412 = vrot.lane.b32.xlu0 %v635, 24
      %v1413 = vpop.permute.xlu0 %1412
      %1414 = vrot.lane.b32.xlu0 %v636, 24
      %v1415 = vpop.permute.xlu0 %1414
      %1416 = vrot.lane.b32.xlu0 %v637, 24
      %v1417 = vpop.permute.xlu0 %1416
      %1418 = vrot.lane.b32.xlu0 %v638, 24
      %v1419 = vpop.permute.xlu0 %1418
      %1420 = vrot.lane.b32.xlu0 %v639, 24
      %v1421 = vpop.permute.xlu0 %1420
      %1422 = vrot.lane.b32.xlu0 %v640, 24
      %v1423 = vpop.permute.xlu0 %1422
      %1424 = vrot.lane.b32.xlu0 %v641, 24
      %v1425 = vpop.permute.xlu0 %1424
      %1426 = vrot.lane.b32.xlu0 %v642, 24
      %v1427 = vpop.permute.xlu0 %1426
      %1428 = vrot.lane.b32.xlu0 %v643, 24
      %v1429 = vpop.permute.xlu0 %1428
      %1430 = vrot.lane.b32.xlu0 %v644, 24
      %v1431 = vpop.permute.xlu0 %1430
      %1432 = vrot.lane.b32.xlu0 %v645, 24
      %v1433 = vpop.permute.xlu0 %1432
      %1434 = vrot.lane.b32.xlu0 %v646, 24
      %v1435 = vpop.permute.xlu0 %1434
      %1436 = vrot.lane.b32.xlu0 %v647, 24
      %v1437 = vpop.permute.xlu0 %1436
      %1438 = vrot.lane.b32.xlu0 %v648, 24
      %v1439 = vpop.permute.xlu0 %1438
      %1440 = vrot.lane.b32.xlu0 %v649, 24
      %v1441 = vpop.permute.xlu0 %1440
      %1442 = vrot.lane.b32.xlu0 %v650, 24
      %v1443 = vpop.permute.xlu0 %1442
      %1444 = vrot.lane.b32.xlu0 %v651, 24
      %v1445 = vpop.permute.xlu0 %1444
      %1446 = vrot.lane.b32.xlu0 %v652, 24
      %v1447 = vpop.permute.xlu0 %1446
      %1448 = vrot.lane.b32.xlu0 %v653, 24
      %v1449 = vpop.permute.xlu0 %1448
      %1450 = vrot.lane.b32.xlu0 %v654, 24
      %v1451 = vpop.permute.xlu0 %1450
      %1452 = vrot.lane.b32.xlu0 %v655, 24
      %v1453 = vpop.permute.xlu0 %1452
      %1454 = vrot.lane.b32.xlu0 %v656, 24
      %v1455 = vpop.permute.xlu0 %1454
      %1456 = vrot.lane.b32.xlu0 %v657, 24
      %v1457 = vpop.permute.xlu0 %1456
      %1522 = vrot.lane.b32.xlu0 %v658, 28
      %v1523 = vpop.permute.xlu0 %1522
      %1524 = vrot.lane.b32.xlu0 %v659, 28
      %v1525 = vpop.permute.xlu0 %1524
      %1526 = vrot.lane.b32.xlu0 %v660, 28
      %v1527 = vpop.permute.xlu0 %1526
      %1528 = vrot.lane.b32.xlu0 %v661, 28
      %v1529 = vpop.permute.xlu0 %1528
      %1530 = vrot.lane.b32.xlu0 %v662, 28
      %v1531 = vpop.permute.xlu0 %1530
      %1532 = vrot.lane.b32.xlu0 %v663, 28
      %v1533 = vpop.permute.xlu0 %1532
      %1534 = vrot.lane.b32.xlu0 %v664, 28
      %v1535 = vpop.permute.xlu0 %1534
      %1536 = vrot.lane.b32.xlu0 %v665, 28
      %v1537 = vpop.permute.xlu0 %1536
      %1538 = vrot.lane.b32.xlu0 %v666, 28
      %v1539 = vpop.permute.xlu0 %1538
      %1540 = vrot.lane.b32.xlu0 %v667, 28
      %v1541 = vpop.permute.xlu0 %1540
      %1542 = vrot.lane.b32.xlu0 %v668, 28
      %v1543 = vpop.permute.xlu0 %1542
      %1544 = vrot.lane.b32.xlu0 %v669, 28
      %v1545 = vpop.permute.xlu0 %1544
      %1546 = vrot.lane.b32.xlu0 %v670, 28
      %v1547 = vpop.permute.xlu0 %1546
      %1548 = vrot.lane.b32.xlu0 %v671, 28
      %v1549 = vpop.permute.xlu0 %1548
      %1550 = vrot.lane.b32.xlu0 %v672, 28
      %v1551 = vpop.permute.xlu0 %1550
      %1552 = vrot.lane.b32.xlu0 %v673, 28
      %v1553 = vpop.permute.xlu0 %1552
      %1554 = vrot.lane.b32.xlu0 %v674, 28
      %v1555 = vpop.permute.xlu0 %1554
      %1556 = vrot.lane.b32.xlu0 %v675, 28
      %v1557 = vpop.permute.xlu0 %1556
      %1558 = vrot.lane.b32.xlu0 %v676, 28
      %v1559 = vpop.permute.xlu0 %1558
      %1560 = vrot.lane.b32.xlu0 %v677, 28
      %v1561 = vpop.permute.xlu0 %1560
      %1562 = vrot.lane.b32.xlu0 %v678, 28
      %v1563 = vpop.permute.xlu0 %1562
      %1564 = vrot.lane.b32.xlu0 %v679, 28
      %v1565 = vpop.permute.xlu0 %1564
      %1566 = vrot.lane.b32.xlu0 %v680, 28
      %v1567 = vpop.permute.xlu0 %1566
      %1568 = vrot.lane.b32.xlu0 %v681, 28
      %v1569 = vpop.permute.xlu0 %1568
      %1570 = vrot.lane.b32.xlu0 %v682, 28
      %v1571 = vpop.permute.xlu0 %1570
      %1572 = vrot.lane.b32.xlu0 %v683, 28
      %v1573 = vpop.permute.xlu0 %1572
      %1574 = vrot.lane.b32.xlu0 %v684, 28
      %v1575 = vpop.permute.xlu0 %1574
      %1576 = vrot.lane.b32.xlu0 %v685, 28
      %v1577 = vpop.permute.xlu0 %1576
      %1578 = vrot.lane.b32.xlu0 %v686, 28
      %v1579 = vpop.permute.xlu0 %1578
      %1580 = vrot.lane.b32.xlu0 %v687, 28
      %v1581 = vpop.permute.xlu0 %1580
      %1582 = vrot.lane.b32.xlu0 %v688, 28
      %v1583 = vpop.permute.xlu0 %1582
      %1584 = vrot.lane.b32.xlu0 %v689, 28
      %v1585 = vpop.permute.xlu0 %1584
      %1650 = vrot.lane.b32.xlu0 %v690, 32
      %v1651 = vpop.permute.xlu0 %1650
      %1652 = vrot.lane.b32.xlu0 %v691, 32
      %v1653 = vpop.permute.xlu0 %1652
      %1654 = vrot.lane.b32.xlu0 %v692, 32
      %v1655 = vpop.permute.xlu0 %1654
      %1656 = vrot.lane.b32.xlu0 %v693, 32
      %v1657 = vpop.permute.xlu0 %1656
      %1658 = vrot.lane.b32.xlu0 %v694, 32
      %v1659 = vpop.permute.xlu0 %1658
      %1660 = vrot.lane.b32.xlu0 %v695, 32
      %v1661 = vpop.permute.xlu0 %1660
      %1662 = vrot.lane.b32.xlu0 %v696, 32
      %v1663 = vpop.permute.xlu0 %1662
      %1664 = vrot.lane.b32.xlu0 %v697, 32
      %v1665 = vpop.permute.xlu0 %1664
      %1666 = vrot.lane.b32.xlu0 %v698, 32
      %v1667 = vpop.permute.xlu0 %1666
      %1668 = vrot.lane.b32.xlu0 %v699, 32
      %v1669 = vpop.permute.xlu0 %1668
      %1670 = vrot.lane.b32.xlu0 %v700, 32
      %v1671 = vpop.permute.xlu0 %1670
      %1672 = vrot.lane.b32.xlu0 %v701, 32
      %v1673 = vpop.permute.xlu0 %1672
      %1674 = vrot.lane.b32.xlu0 %v702, 32
      %v1675 = vpop.permute.xlu0 %1674
      %1676 = vrot.lane.b32.xlu0 %v703, 32
      %v1677 = vpop.permute.xlu0 %1676
      %1678 = vrot.lane.b32.xlu0 %v704, 32
      %v1679 = vpop.permute.xlu0 %1678
      %1680 = vrot.lane.b32.xlu0 %v705, 32
      %v1681 = vpop.permute.xlu0 %1680
      %1682 = vrot.lane.b32.xlu0 %v706, 32
      %v1683 = vpop.permute.xlu0 %1682
      %1684 = vrot.lane.b32.xlu0 %v707, 32
      %v1685 = vpop.permute.xlu0 %1684
      %1686 = vrot.lane.b32.xlu0 %v708, 32
      %v1687 = vpop.permute.xlu0 %1686
      %1688 = vrot.lane.b32.xlu0 %v709, 32
      %v1689 = vpop.permute.xlu0 %1688
      %1690 = vrot.lane.b32.xlu0 %v710, 32
      %v1691 = vpop.permute.xlu0 %1690
      %1692 = vrot.lane.b32.xlu0 %v711, 32
      %v1693 = vpop.permute.xlu0 %1692
      %1694 = vrot.lane.b32.xlu0 %v712, 32
      %v1695 = vpop.permute.xlu0 %1694
      %1696 = vrot.lane.b32.xlu0 %v713, 32
      %v1697 = vpop.permute.xlu0 %1696
      %1698 = vrot.lane.b32.xlu0 %v714, 32
      %v1699 = vpop.permute.xlu0 %1698
      %1700 = vrot.lane.b32.xlu0 %v715, 32
      %v1701 = vpop.permute.xlu0 %1700
      %1702 = vrot.lane.b32.xlu0 %v716, 32
      %v1703 = vpop.permute.xlu0 %1702
      %1704 = vrot.lane.b32.xlu0 %v717, 32
      %v1705 = vpop.permute.xlu0 %1704
      %1706 = vrot.lane.b32.xlu0 %v718, 32
      %v1707 = vpop.permute.xlu0 %1706
      %1708 = vrot.lane.b32.xlu0 %v719, 32
      %v1709 = vpop.permute.xlu0 %1708
      %1710 = vrot.lane.b32.xlu0 %v720, 32
      %v1711 = vpop.permute.xlu0 %1710
      %1712 = vrot.lane.b32.xlu0 %v721, 32
      %v1713 = vpop.permute.xlu0 %1712
      %v1746 = vsel %vm279, %v433, %v755
      %v1747 = vsel %vm279, %v434, %v757
      %v1748 = vsel %vm279, %v435, %v759
      %v1749 = vsel %vm279, %v436, %v761
      %v1750 = vsel %vm279, %v437, %v763
      %v1751 = vsel %vm279, %v438, %v765
      %v1752 = vsel %vm279, %v439, %v767
      %v1753 = vsel %vm279, %v440, %v769
      %v1754 = vsel %vm279, %v441, %v771
      %v1755 = vsel %vm279, %v442, %v773
      %v1756 = vsel %vm279, %v443, %v775
      %v1757 = vsel %vm279, %v444, %v777
      %v1758 = vsel %vm279, %v445, %v779
      %v1759 = vsel %vm279, %v446, %v781
      %v1760 = vsel %vm279, %v447, %v783
      %v1761 = vsel %vm279, %v448, %v785
      %v1762 = vsel %vm279, %v449, %v787
      %v1763 = vsel %vm279, %v450, %v789
      %v1764 = vsel %vm279, %v451, %v791
      %v1765 = vsel %vm279, %v452, %v793
      %v1766 = vsel %vm279, %v453, %v795
      %v1767 = vsel %vm279, %v454, %v797
      %v1768 = vsel %vm279, %v455, %v799
      %v1769 = vsel %vm279, %v456, %v801
      %v1770 = vsel %vm279, %v457, %v803
      %v1771 = vsel %vm279, %v458, %v805
      %v1772 = vsel %vm279, %v459, %v807
      %v1773 = vsel %vm279, %v460, %v809
      %v1774 = vsel %vm279, %v461, %v811
      %v1775 = vsel %vm279, %v462, %v813
      %v1776 = vsel %vm279, %v463, %v815
      %v1777 = vsel %vm279, %v464, %v817
      %vm1778 = vcmask 64512
      %v1779 = vsel %vm1778, %v1746, %v883
      %v1780 = vsel %vm1778, %v1747, %v885
      %v1781 = vsel %vm1778, %v1748, %v887
      %v1782 = vsel %vm1778, %v1749, %v889
      %v1783 = vsel %vm1778, %v1750, %v891
      %v1784 = vsel %vm1778, %v1751, %v893
      %v1785 = vsel %vm1778, %v1752, %v895
      %v1786 = vsel %vm1778, %v1753, %v897
      %v1787 = vsel %vm1778, %v1754, %v899
      %v1788 = vsel %vm1778, %v1755, %v901
      %v1789 = vsel %vm1778, %v1756, %v903
      %v1790 = vsel %vm1778, %v1757, %v905
      %v1791 = vsel %vm1778, %v1758, %v907
      %v1792 = vsel %vm1778, %v1759, %v909
      %v1793 = vsel %vm1778, %v1760, %v911
      %v1794 = vsel %vm1778, %v1761, %v913
      %v1795 = vsel %vm1778, %v1762, %v915
      %v1796 = vsel %vm1778, %v1763, %v917
      %v1797 = vsel %vm1778, %v1764, %v919
      %v1798 = vsel %vm1778, %v1765, %v921
      %v1799 = vsel %vm1778, %v1766, %v923
      %v1800 = vsel %vm1778, %v1767, %v925
      %v1801 = vsel %vm1778, %v1768, %v927
      %v1802 = vsel %vm1778, %v1769, %v929
      %v1803 = vsel %vm1778, %v1770, %v931
      %v1804 = vsel %vm1778, %v1771, %v933
      %v1805 = vsel %vm1778, %v1772, %v935
      %v1806 = vsel %vm1778, %v1773, %v937
      %v1807 = vsel %vm1778, %v1774, %v939
      %v1808 = vsel %vm1778, %v1775, %v941
      %v1809 = vsel %vm1778, %v1776, %v943
      %v1810 = vsel %vm1778, %v1777, %v945
      %vm1811 = vcmask 97280
      %v1812 = vsel %vm1811, %v1779, %v1011
      %v1813 = vsel %vm1811, %v1780, %v1013
      %v1814 = vsel %vm1811, %v1781, %v1015
      %v1815 = vsel %vm1811, %v1782, %v1017
      %v1816 = vsel %vm1811, %v1783, %v1019
      %v1817 = vsel %vm1811, %v1784, %v1021
      %v1818 = vsel %vm1811, %v1785, %v1023
      %v1819 = vsel %vm1811, %v1786, %v1025
      %v1820 = vsel %vm1811, %v1787, %v1027
      %v1821 = vsel %vm1811, %v1788, %v1029
      %v1822 = vsel %vm1811, %v1789, %v1031
      %v1823 = vsel %vm1811, %v1790, %v1033
      %v1824 = vsel %vm1811, %v1791, %v1035
      %v1825 = vsel %vm1811, %v1792, %v1037
      %v1826 = vsel %vm1811, %v1793, %v1039
      %v1827 = vsel %vm1811, %v1794, %v1041
      %v1828 = vsel %vm1811, %v1795, %v1043
      %v1829 = vsel %vm1811, %v1796, %v1045
      %v1830 = vsel %vm1811, %v1797, %v1047
      %v1831 = vsel %vm1811, %v1798, %v1049
      %v1832 = vsel %vm1811, %v1799, %v1051
      %v1833 = vsel %vm1811, %v1800, %v1053
      %v1834 = vsel %vm1811, %v1801, %v1055
      %v1835 = vsel %vm1811, %v1802, %v1057
      %v1836 = vsel %vm1811, %v1803, %v1059
      %v1837 = vsel %vm1811, %v1804, %v1061
      %v1838 = vsel %vm1811, %v1805, %v1063
      %v1839 = vsel %vm1811, %v1806, %v1065
      %v1840 = vsel %vm1811, %v1807, %v1067
      %v1841 = vsel %vm1811, %v1808, %v1069
      %v1842 = vsel %vm1811, %v1809, %v1071
      %v1843 = vsel %vm1811, %v1810, %v1073
      %vm1844 = vcmask 130048
      %v1845 = vsel %vm1844, %v1812, %v1139
      %v1846 = vsel %vm1844, %v1813, %v1141
      %v1847 = vsel %vm1844, %v1814, %v1143
      %v1848 = vsel %vm1844, %v1815, %v1145
      %v1849 = vsel %vm1844, %v1816, %v1147
      %v1850 = vsel %vm1844, %v1817, %v1149
      %v1851 = vsel %vm1844, %v1818, %v1151
      %v1852 = vsel %vm1844, %v1819, %v1153
      %v1853 = vsel %vm1844, %v1820, %v1155
      %v1854 = vsel %vm1844, %v1821, %v1157
      %v1855 = vsel %vm1844, %v1822, %v1159
      %v1856 = vsel %vm1844, %v1823, %v1161
      %v1857 = vsel %vm1844, %v1824, %v1163
      %v1858 = vsel %vm1844, %v1825, %v1165
      %v1859 = vsel %vm1844, %v1826, %v1167
      %v1860 = vsel %vm1844, %v1827, %v1169
      %v1861 = vsel %vm1844, %v1828, %v1171
      %v1862 = vsel %vm1844, %v1829, %v1173
      %v1863 = vsel %vm1844, %v1830, %v1175
      %v1864 = vsel %vm1844, %v1831, %v1177
      %v1865 = vsel %vm1844, %v1832, %v1179
      %v1866 = vsel %vm1844, %v1833, %v1181
      %v1867 = vsel %vm1844, %v1834, %v1183
      %v1868 = vsel %vm1844, %v1835, %v1185
      %v1869 = vsel %vm1844, %v1836, %v1187
      %v1870 = vsel %vm1844, %v1837, %v1189
      %v1871 = vsel %vm1844, %v1838, %v1191
      %v1872 = vsel %vm1844, %v1839, %v1193
      %v1873 = vsel %vm1844, %v1840, %v1195
      %v1874 = vsel %vm1844, %v1841, %v1197
      %v1875 = vsel %vm1844, %v1842, %v1199
      %v1876 = vsel %vm1844, %v1843, %v1201
      %vm1877 = vcmask 162816
      %v1878 = vsel %vm1877, %v1845, %v1267
      %v1879 = vsel %vm1877, %v1846, %v1269
      %v1880 = vsel %vm1877, %v1847, %v1271
      %v1881 = vsel %vm1877, %v1848, %v1273
      %v1882 = vsel %vm1877, %v1849, %v1275
      %v1883 = vsel %vm1877, %v1850, %v1277
      %v1884 = vsel %vm1877, %v1851, %v1279
      %v1885 = vsel %vm1877, %v1852, %v1281
      %v1886 = vsel %vm1877, %v1853, %v1283
      %v1887 = vsel %vm1877, %v1854, %v1285
      %v1888 = vsel %vm1877, %v1855, %v1287
      %v1889 = vsel %vm1877, %v1856, %v1289
      %v1890 = vsel %vm1877, %v1857, %v1291
      %v1891 = vsel %vm1877, %v1858, %v1293
      %v1892 = vsel %vm1877, %v1859, %v1295
      %v1893 = vsel %vm1877, %v1860, %v1297
      %v1894 = vsel %vm1877, %v1861, %v1299
      %v1895 = vsel %vm1877, %v1862, %v1301
      %v1896 = vsel %vm1877, %v1863, %v1303
      %v1897 = vsel %vm1877, %v1864, %v1305
      %v1898 = vsel %vm1877, %v1865, %v1307
      %v1899 = vsel %vm1877, %v1866, %v1309
      %v1900 = vsel %vm1877, %v1867, %v1311
      %v1901 = vsel %vm1877, %v1868, %v1313
      %v1902 = vsel %vm1877, %v1869, %v1315
      %v1903 = vsel %vm1877, %v1870, %v1317
      %v1904 = vsel %vm1877, %v1871, %v1319
      %v1905 = vsel %vm1877, %v1872, %v1321
      %v1906 = vsel %vm1877, %v1873, %v1323
      %v1907 = vsel %vm1877, %v1874, %v1325
      %v1908 = vsel %vm1877, %v1875, %v1327
      %v1909 = vsel %vm1877, %v1876, %v1329
      %vm1910 = vcmask 195584
      %v1911 = vsel %vm1910, %v1878, %v1395
      %v1912 = vsel %vm1910, %v1879, %v1397
      %v1913 = vsel %vm1910, %v1880, %v1399
      %v1914 = vsel %vm1910, %v1881, %v1401
      %v1915 = vsel %vm1910, %v1882, %v1403
      %v1916 = vsel %vm1910, %v1883, %v1405
      %v1917 = vsel %vm1910, %v1884, %v1407
      %v1918 = vsel %vm1910, %v1885, %v1409
      %v1919 = vsel %vm1910, %v1886, %v1411
      %v1920 = vsel %vm1910, %v1887, %v1413
      %v1921 = vsel %vm1910, %v1888, %v1415
      %v1922 = vsel %vm1910, %v1889, %v1417
      %v1923 = vsel %vm1910, %v1890, %v1419
      %v1924 = vsel %vm1910, %v1891, %v1421
      %v1925 = vsel %vm1910, %v1892, %v1423
      %v1926 = vsel %vm1910, %v1893, %v1425
      %v1927 = vsel %vm1910, %v1894, %v1427
      %v1928 = vsel %vm1910, %v1895, %v1429
      %v1929 = vsel %vm1910, %v1896, %v1431
      %v1930 = vsel %vm1910, %v1897, %v1433
      %v1931 = vsel %vm1910, %v1898, %v1435
      %v1932 = vsel %vm1910, %v1899, %v1437
      %v1933 = vsel %vm1910, %v1900, %v1439
      %v1934 = vsel %vm1910, %v1901, %v1441
      %v1935 = vsel %vm1910, %v1902, %v1443
      %v1936 = vsel %vm1910, %v1903, %v1445
      %v1937 = vsel %vm1910, %v1904, %v1447
      %v1938 = vsel %vm1910, %v1905, %v1449
      %v1939 = vsel %vm1910, %v1906, %v1451
      %v1940 = vsel %vm1910, %v1907, %v1453
      %v1941 = vsel %vm1910, %v1908, %v1455
      %v1942 = vsel %vm1910, %v1909, %v1457
      %vm1943 = vcmask 228352
      %v1944 = vsel %vm1943, %v1911, %v1523
      %v1945 = vsel %vm1943, %v1912, %v1525
      %v1946 = vsel %vm1943, %v1913, %v1527
      %v1947 = vsel %vm1943, %v1914, %v1529
      %v1948 = vsel %vm1943, %v1915, %v1531
      %v1949 = vsel %vm1943, %v1916, %v1533
      %v1950 = vsel %vm1943, %v1917, %v1535
      %v1951 = vsel %vm1943, %v1918, %v1537
      %v1952 = vsel %vm1943, %v1919, %v1539
      %v1953 = vsel %vm1943, %v1920, %v1541
      %v1954 = vsel %vm1943, %v1921, %v1543
      %v1955 = vsel %vm1943, %v1922, %v1545
      %v1956 = vsel %vm1943, %v1923, %v1547
      %v1957 = vsel %vm1943, %v1924, %v1549
      %v1958 = vsel %vm1943, %v1925, %v1551
      %v1959 = vsel %vm1943, %v1926, %v1553
      %v1960 = vsel %vm1943, %v1927, %v1555
      %v1961 = vsel %vm1943, %v1928, %v1557
      %v1962 = vsel %vm1943, %v1929, %v1559
      %v1963 = vsel %vm1943, %v1930, %v1561
      %v1964 = vsel %vm1943, %v1931, %v1563
      %v1965 = vsel %vm1943, %v1932, %v1565
      %v1966 = vsel %vm1943, %v1933, %v1567
      %v1967 = vsel %vm1943, %v1934, %v1569
      %v1968 = vsel %vm1943, %v1935, %v1571
      %v1969 = vsel %vm1943, %v1936, %v1573
      %v1970 = vsel %vm1943, %v1937, %v1575
      %v1971 = vsel %vm1943, %v1938, %v1577
      %v1972 = vsel %vm1943, %v1939, %v1579
      %v1973 = vsel %vm1943, %v1940, %v1581
      %v1974 = vsel %vm1943, %v1941, %v1583
      %v1975 = vsel %vm1943, %v1942, %v1585
      %vm1976 = vcmask 261120
      %v1977 = vsel %vm1976, %v1944, %v1651
      %v1978 = vsel %vm1976, %v1945, %v1653
      %v1979 = vsel %vm1976, %v1946, %v1655
      %v1980 = vsel %vm1976, %v1947, %v1657
      %v1981 = vsel %vm1976, %v1948, %v1659
      %v1982 = vsel %vm1976, %v1949, %v1661
      %v1983 = vsel %vm1976, %v1950, %v1663
      %v1984 = vsel %vm1976, %v1951, %v1665
      %v1985 = vsel %vm1976, %v1952, %v1667
      %v1986 = vsel %vm1976, %v1953, %v1669
      %v1987 = vsel %vm1976, %v1954, %v1671
      %v1988 = vsel %vm1976, %v1955, %v1673
      %v1989 = vsel %vm1976, %v1956, %v1675
      %v1990 = vsel %vm1976, %v1957, %v1677
      %v1991 = vsel %vm1976, %v1958, %v1679
      %v1992 = vsel %vm1976, %v1959, %v1681
      %v1993 = vsel %vm1976, %v1960, %v1683
      %v1994 = vsel %vm1976, %v1961, %v1685
      %v1995 = vsel %vm1976, %v1962, %v1687
      %v1996 = vsel %vm1976, %v1963, %v1689
      %v1997 = vsel %vm1976, %v1964, %v1691
      %v1998 = vsel %vm1976, %v1965, %v1693
      %v1999 = vsel %vm1976, %v1966, %v1695
      %v2000 = vsel %vm1976, %v1967, %v1697
      %v2001 = vsel %vm1976, %v1968, %v1699
      %v2002 = vsel %vm1976, %v1969, %v1701
      %v2003 = vsel %vm1976, %v1970, %v1703
      %v2004 = vsel %vm1976, %v1971, %v1705
      %v2005 = vsel %vm1976, %v1972, %v1707
      %v2006 = vsel %vm1976, %v1973, %v1709
      %v2007 = vsel %vm1976, %v1974, %v1711
      %v2008 = vsel %vm1976, %v1975, %v1713
      %v2009 = vld [vmem:[%s1] sm:$0xff]
      %v2010 = vld [vmem:[%s1 + $0x8] sm:$0xff]
      %v2011 = vld [vmem:[%s1 + $0x10] sm:$0xff]
      %v2012 = vld [vmem:[%s1 + $0x18] sm:$0xff]
      %v2013 = vld [vmem:[%s1 + $0x20] sm:$0xf]
      %vm2014 = vcmask 293888
      %v2016 = vsel %vm2014, %v1977, 0
      %v2019 = vsel %vm2014, %v1978, 0
      %v2022 = vsel %vm2014, %v1979, 0
      %v2025 = vsel %vm2014, %v1980, 0
      %v2028 = vsel %vm2014, %v1981, 0
      %v2031 = vsel %vm2014, %v1982, 0
      %v2034 = vsel %vm2014, %v1983, 0
      %v2037 = vsel %vm2014, %v1984, 0
      %v2040 = vsel %vm2014, %v1985, 0
      %v2043 = vsel %vm2014, %v1986, 0
      %v2046 = vsel %vm2014, %v1987, 0
      %v2049 = vsel %vm2014, %v1988, 0
      %v2052 = vsel %vm2014, %v1989, 0
      %v2055 = vsel %vm2014, %v1990, 0
      %v2058 = vsel %vm2014, %v1991, 0
      %v2061 = vsel %vm2014, %v1992, 0
      %v2064 = vsel %vm2014, %v1993, 0
      %v2067 = vsel %vm2014, %v1994, 0
      %v2070 = vsel %vm2014, %v1995, 0
      %v2073 = vsel %vm2014, %v1996, 0
      %v2076 = vsel %vm2014, %v1997, 0
      %v2079 = vsel %vm2014, %v1998, 0
      %v2082 = vsel %vm2014, %v1999, 0
      %v2085 = vsel %vm2014, %v2000, 0
      %v2088 = vsel %vm2014, %v2001, 0
      %v2091 = vsel %vm2014, %v2002, 0
      %v2094 = vsel %vm2014, %v2003, 0
      %v2097 = vsel %vm2014, %v2004, 0
      %v2100 = vsel %vm2014, %v2005, 0
      %v2103 = vsel %vm2014, %v2006, 0
      %v2106 = vsel %vm2014, %v2007, 0
      %v2109 = vsel %vm2014, %v2008, 0
      %vm2111 = vcmask 1043456
      %v2113 = vsel %vm2111, %v2013, 0
      %2115 = vmatpush.msra.mxu0 0.0
      %2116 = vmatpush.msra.mxu0 0.0
      %2117 = vmatpush.msra.mxu0 0.0
      %2118 = vmatpush.msra.mxu0 0.0
      %2119 = vmatpush.msra.mxu0 0.0
      %2120 = vmatpush.msra.mxu0 0.0
      %2121 = vmatpush.msra.mxu0 0.0
      %2122 = vmatpush.msra.mxu0 0.0
      %2123 = vmatpush.msra.mxu0 0.0
      %2124 = vmatpush.msra.mxu0 0.0
      %2125 = vmatpush.msra.mxu0 0.0
      %2126 = vmatpush.msra.mxu0 %v2113
      %2127 = vmatpush.msra.mxu0 %v2012
      %2128 = vmatpush.msra.mxu0 %v2011
      %2129 = vmatpush.msra.mxu0 %v2010
      %2130 = vmatpush.msra.mxu0 %v2009
      %2131 = vmatmul.f32.gmra.mxu0 %v2016
      %v2132 = vpop.f32.mrf.mxu0
      %v2133 = vadd.f32 0.0, %v2132
      %2134 = vmatmul.f32.gmra.mxu0 %v2019
      %v2135 = vpop.f32.mrf.mxu0
      %v2136 = vadd.f32 0.0, %v2135
      %2137 = vmatmul.f32.gmra.mxu0 %v2022
      %v2138 = vpop.f32.mrf.mxu0
      %v2139 = vadd.f32 0.0, %v2138
      %2140 = vmatmul.f32.gmra.mxu0 %v2025
      %v2141 = vpop.f32.mrf.mxu0
      %v2142 = vadd.f32 0.0, %v2141
      %2143 = vmatmul.f32.gmra.mxu0 %v2028
      %v2144 = vpop.f32.mrf.mxu0
      %v2145 = vadd.f32 0.0, %v2144
      %2146 = vmatmul.f32.gmra.mxu0 %v2031
      %v2147 = vpop.f32.mrf.mxu0
      %v2148 = vadd.f32 0.0, %v2147
      %2149 = vmatmul.f32.gmra.mxu0 %v2034
      %v2150 = vpop.f32.mrf.mxu0
      %v2151 = vadd.f32 0.0, %v2150
      %2152 = vmatmul.f32.gmra.mxu0 %v2037
      %v2153 = vpop.f32.mrf.mxu0
      %v2154 = vadd.f32 0.0, %v2153
      %2155 = vmatmul.f32.gmra.mxu0 %v2040
      %v2156 = vpop.f32.mrf.mxu0
      %v2157 = vadd.f32 0.0, %v2156
      %2158 = vmatmul.f32.gmra.mxu0 %v2043
      %v2159 = vpop.f32.mrf.mxu0
      %v2160 = vadd.f32 0.0, %v2159
      %2161 = vmatmul.f32.gmra.mxu0 %v2046
      %v2162 = vpop.f32.mrf.mxu0
      %v2163 = vadd.f32 0.0, %v2162
      %2164 = vmatmul.f32.gmra.mxu0 %v2049
      %v2165 = vpop.f32.mrf.mxu0
      %v2166 = vadd.f32 0.0, %v2165
      %2167 = vmatmul.f32.gmra.mxu0 %v2052
      %v2168 = vpop.f32.mrf.mxu0
      %v2169 = vadd.f32 0.0, %v2168
      %2170 = vmatmul.f32.gmra.mxu0 %v2055
      %v2171 = vpop.f32.mrf.mxu0
      %v2172 = vadd.f32 0.0, %v2171
      %2173 = vmatmul.f32.gmra.mxu0 %v2058
      %v2174 = vpop.f32.mrf.mxu0
      %v2175 = vadd.f32 0.0, %v2174
      %2176 = vmatmul.f32.gmra.mxu0 %v2061
      %v2177 = vpop.f32.mrf.mxu0
      %v2178 = vadd.f32 0.0, %v2177
      %2179 = vmatmul.f32.gmra.mxu0 %v2064
      %v2180 = vpop.f32.mrf.mxu0
      %v2181 = vadd.f32 0.0, %v2180
      %2182 = vmatmul.f32.gmra.mxu0 %v2067
      %v2183 = vpop.f32.mrf.mxu0
      %v2184 = vadd.f32 0.0, %v2183
      %2185 = vmatmul.f32.gmra.mxu0 %v2070
      %v2186 = vpop.f32.mrf.mxu0
      %v2187 = vadd.f32 0.0, %v2186
      %2188 = vmatmul.f32.gmra.mxu0 %v2073
      %v2189 = vpop.f32.mrf.mxu0
      %v2190 = vadd.f32 0.0, %v2189
      %2191 = vmatmul.f32.gmra.mxu0 %v2076
      %v2192 = vpop.f32.mrf.mxu0
      %v2193 = vadd.f32 0.0, %v2192
      %2194 = vmatmul.f32.gmra.mxu0 %v2079
      %v2195 = vpop.f32.mrf.mxu0
      %v2196 = vadd.f32 0.0, %v2195
      %2197 = vmatmul.f32.gmra.mxu0 %v2082
      %v2198 = vpop.f32.mrf.mxu0
      %v2199 = vadd.f32 0.0, %v2198
      %2200 = vmatmul.f32.gmra.mxu0 %v2085
      %v2201 = vpop.f32.mrf.mxu0
      %v2202 = vadd.f32 0.0, %v2201
      %2203 = vmatmul.f32.gmra.mxu0 %v2088
      %v2204 = vpop.f32.mrf.mxu0
      %v2205 = vadd.f32 0.0, %v2204
      %2206 = vmatmul.f32.gmra.mxu0 %v2091
      %v2207 = vpop.f32.mrf.mxu0
      %v2208 = vadd.f32 0.0, %v2207
      %2209 = vmatmul.f32.gmra.mxu0 %v2094
      %v2210 = vpop.f32.mrf.mxu0
      %v2211 = vadd.f32 0.0, %v2210
      %2212 = vmatmul.f32.gmra.mxu0 %v2097
      %v2213 = vpop.f32.mrf.mxu0
      %v2214 = vadd.f32 0.0, %v2213
      %2215 = vmatmul.f32.gmra.mxu0 %v2100
      %v2216 = vpop.f32.mrf.mxu0
      %v2217 = vadd.f32 0.0, %v2216
      %2218 = vmatmul.f32.gmra.mxu0 %v2103
      %v2219 = vpop.f32.mrf.mxu0
      %v2220 = vadd.f32 0.0, %v2219
      %2221 = vmatmul.f32.gmra.mxu0 %v2106
      %v2222 = vpop.f32.mrf.mxu0
      %v2223 = vadd.f32 0.0, %v2222
      %2224 = vmatmul.f32.gmra.mxu0 %v2109
      %v2225 = vpop.f32.mrf.mxu0
      %v2226 = vadd.f32 0.0, %v2225
      %2227 = vdwg.mxu0
      %v2228 = vld [vmem:[%s2] sm:$0x1]
      %v2230 = vperm.slane %v2228, 0
      %v2232 = vmul.f32 %v2133, %v2230
      %v2233 = vmul.f32 %v2136, %v2230
      %v2234 = vmul.f32 %v2139, %v2230
      %v2235 = vmul.f32 %v2142, %v2230
      %v2236 = vmul.f32 %v2145, %v2230
      %v2237 = vmul.f32 %v2148, %v2230
      %v2238 = vmul.f32 %v2151, %v2230
      %v2239 = vmul.f32 %v2154, %v2230
      %v2240 = vmul.f32 %v2157, %v2230
      %v2241 = vmul.f32 %v2160, %v2230
      %v2242 = vmul.f32 %v2163, %v2230
      %v2243 = vmul.f32 %v2166, %v2230
      %v2244 = vmul.f32 %v2169, %v2230
      %v2245 = vmul.f32 %v2172, %v2230
      %v2246 = vmul.f32 %v2175, %v2230
      %v2247 = vmul.f32 %v2178, %v2230
      %v2248 = vmul.f32 %v2181, %v2230
      %v2249 = vmul.f32 %v2184, %v2230
      %v2250 = vmul.f32 %v2187, %v2230
      %v2251 = vmul.f32 %v2190, %v2230
      %v2252 = vmul.f32 %v2193, %v2230
      %v2253 = vmul.f32 %v2196, %v2230
      %v2254 = vmul.f32 %v2199, %v2230
      %v2255 = vmul.f32 %v2202, %v2230
      %v2256 = vmul.f32 %v2205, %v2230
      %v2257 = vmul.f32 %v2208, %v2230
      %v2258 = vmul.f32 %v2211, %v2230
      %v2259 = vmul.f32 %v2214, %v2230
      %v2260 = vmul.f32 %v2217, %v2230
      %v2261 = vmul.f32 %v2220, %v2230
      %v2262 = vmul.f32 %v2223, %v2230
      %v2263 = vmul.f32 %v2226, %v2230
      %v2264 = vld [vmem:[%s3] sm:$0x1]
      %v2266 = vperm.slane %v2264, 0
      %v2268 = vadd.f32 %v2232, %v2266
      %v2269 = vadd.f32 %v2233, %v2266
      %v2270 = vadd.f32 %v2234, %v2266
      %v2271 = vadd.f32 %v2235, %v2266
      %v2272 = vadd.f32 %v2236, %v2266
      %v2273 = vadd.f32 %v2237, %v2266
      %v2274 = vadd.f32 %v2238, %v2266
      %v2275 = vadd.f32 %v2239, %v2266
      %v2276 = vadd.f32 %v2240, %v2266
      %v2277 = vadd.f32 %v2241, %v2266
      %v2278 = vadd.f32 %v2242, %v2266
      %v2279 = vadd.f32 %v2243, %v2266
      %v2280 = vadd.f32 %v2244, %v2266
      %v2281 = vadd.f32 %v2245, %v2266
      %v2282 = vadd.f32 %v2246, %v2266
      %v2283 = vadd.f32 %v2247, %v2266
      %v2284 = vadd.f32 %v2248, %v2266
      %v2285 = vadd.f32 %v2249, %v2266
      %v2286 = vadd.f32 %v2250, %v2266
      %v2287 = vadd.f32 %v2251, %v2266
      %v2288 = vadd.f32 %v2252, %v2266
      %v2289 = vadd.f32 %v2253, %v2266
      %v2290 = vadd.f32 %v2254, %v2266
      %v2291 = vadd.f32 %v2255, %v2266
      %v2292 = vadd.f32 %v2256, %v2266
      %v2293 = vadd.f32 %v2257, %v2266
      %v2294 = vadd.f32 %v2258, %v2266
      %v2295 = vadd.f32 %v2259, %v2266
      %v2296 = vadd.f32 %v2260, %v2266
      %v2297 = vadd.f32 %v2261, %v2266
      %v2298 = vadd.f32 %v2262, %v2266
      %v2299 = vadd.f32 %v2263, %v2266
      %v2300 = vmax.f32 %v2268, 0.0
      %v2301 = vmax.f32 %v2269, 0.0
      %v2302 = vmax.f32 %v2270, 0.0
      %v2303 = vmax.f32 %v2271, 0.0
      %v2304 = vmax.f32 %v2272, 0.0
      %v2305 = vmax.f32 %v2273, 0.0
      %v2306 = vmax.f32 %v2274, 0.0
      %v2307 = vmax.f32 %v2275, 0.0
      %v2308 = vmax.f32 %v2276, 0.0
      %v2309 = vmax.f32 %v2277, 0.0
      %v2310 = vmax.f32 %v2278, 0.0
      %v2311 = vmax.f32 %v2279, 0.0
      %v2312 = vmax.f32 %v2280, 0.0
      %v2313 = vmax.f32 %v2281, 0.0
      %v2314 = vmax.f32 %v2282, 0.0
      %v2315 = vmax.f32 %v2283, 0.0
      %v2316 = vmax.f32 %v2284, 0.0
      %v2317 = vmax.f32 %v2285, 0.0
      %v2318 = vmax.f32 %v2286, 0.0
      %v2319 = vmax.f32 %v2287, 0.0
      %v2320 = vmax.f32 %v2288, 0.0
      %v2321 = vmax.f32 %v2289, 0.0
      %v2322 = vmax.f32 %v2290, 0.0
      %v2323 = vmax.f32 %v2291, 0.0
      %v2324 = vmax.f32 %v2292, 0.0
      %v2325 = vmax.f32 %v2293, 0.0
      %v2326 = vmax.f32 %v2294, 0.0
      %v2327 = vmax.f32 %v2295, 0.0
      %v2328 = vmax.f32 %v2296, 0.0
      %v2329 = vmax.f32 %v2297, 0.0
      %v2330 = vmax.f32 %v2298, 0.0
      %v2331 = vmax.f32 %v2299, 0.0
      %s2332 = scalar_lea.vmem [#allocation3], 24
      %2333 = vst.msk [vmem:[%s2332 + $0x1] sm:$0xff] %vm279, %v2300
      %2334 = vst.msk [vmem:[%s2332 + $0x9] sm:$0xff] %vm279, %v2301
      %2335 = vst.msk [vmem:[%s2332 + $0x19] sm:$0xff] %vm279, %v2302
      %2336 = vst.msk [vmem:[%s2332 + $0x21] sm:$0xff] %vm279, %v2303
      %2337 = vst.msk [vmem:[%s2332 + $0x31] sm:$0xff] %vm279, %v2304
      %2338 = vst.msk [vmem:[%s2332 + $0x39] sm:$0xff] %vm279, %v2305
      %2339 = vst.msk [vmem:[%s2332 + $0x49] sm:$0xff] %vm279, %v2306
      %2340 = vst.msk [vmem:[%s2332 + $0x51] sm:$0xff] %vm279, %v2307
      %2341 = vst.msk [vmem:[%s2332 + $0x61] sm:$0xff] %vm279, %v2308
      %2342 = vst.msk [vmem:[%s2332 + $0x69] sm:$0xff] %vm279, %v2309
      %2343 = vst.msk [vmem:[%s2332 + $0x79] sm:$0xff] %vm279, %v2310
      %2344 = vst.msk [vmem:[%s2332 + $0x81] sm:$0xff] %vm279, %v2311
      %2345 = vst.msk [vmem:[%s2332 + $0x91] sm:$0xff] %vm279, %v2312
      %2346 = vst.msk [vmem:[%s2332 + $0x99] sm:$0xff] %vm279, %v2313
      %2347 = vst.msk [vmem:[%s2332 + $0xa9] sm:$0xff] %vm279, %v2314
      %2348 = vst.msk [vmem:[%s2332 + $0xb1] sm:$0xff] %vm279, %v2315
      %2349 = vst.msk [vmem:[%s2332 + $0xc1] sm:$0xff] %vm279, %v2316
      %2350 = vst.msk [vmem:[%s2332 + $0xc9] sm:$0xff] %vm279, %v2317
      %2351 = vst.msk [vmem:[%s2332 + $0xd9] sm:$0xff] %vm279, %v2318
      %2352 = vst.msk [vmem:[%s2332 + $0xe1] sm:$0xff] %vm279, %v2319
      %2353 = vst.msk [vmem:[%s2332 + $0xf1] sm:$0xff] %vm279, %v2320
      %2354 = vst.msk [vmem:[%s2332 + $0xf9] sm:$0xff] %vm279, %v2321
      %2355 = vst.msk [vmem:[%s2332 + $0x109] sm:$0xff] %vm279, %v2322
      %2356 = vst.msk [vmem:[%s2332 + $0x111] sm:$0xff] %vm279, %v2323
      %2357 = vst.msk [vmem:[%s2332 + $0x121] sm:$0xff] %vm279, %v2324
      %2358 = vst.msk [vmem:[%s2332 + $0x129] sm:$0xff] %vm279, %v2325
      %2359 = vst.msk [vmem:[%s2332 + $0x139] sm:$0xff] %vm279, %v2326
      %2360 = vst.msk [vmem:[%s2332 + $0x141] sm:$0xff] %vm279, %v2327
      %2361 = vst.msk [vmem:[%s2332 + $0x151] sm:$0xff] %vm279, %v2328
      %2362 = vst.msk [vmem:[%s2332 + $0x159] sm:$0xff] %vm279, %v2329
      %2363 = vst.msk [vmem:[%s2332 + $0x169] sm:$0xff] %vm279, %v2330
      %2364 = vst.msk [vmem:[%s2332 + $0x171] sm:$0xff] %vm279, %v2331
      %v2365 = vld [vmem:[#allocation3] sm:$0xff]
      %v2366 = vld [vmem:[#allocation3 + $0x8] sm:$0xff]
      %v2367 = vld [vmem:[#allocation3 + $0x18] sm:$0xff]
      %v2368 = vld [vmem:[#allocation3 + $0x20] sm:$0xff]
      %v2369 = vld [vmem:[#allocation3 + $0x30] sm:$0xff]
      %v2370 = vld [vmem:[#allocation3 + $0x38] sm:$0xff]
      %v2371 = vld [vmem:[#allocation3 + $0x48] sm:$0xff]
      %v2372 = vld [vmem:[#allocation3 + $0x50] sm:$0xff]
      %v2373 = vld [vmem:[#allocation3 + $0x60] sm:$0xff]
      %v2374 = vld [vmem:[#allocation3 + $0x68] sm:$0xff]
      %v2375 = vld [vmem:[#allocation3 + $0x78] sm:$0xff]
      %v2376 = vld [vmem:[#allocation3 + $0x80] sm:$0xff]
      %v2377 = vld [vmem:[#allocation3 + $0x90] sm:$0xff]
      %v2378 = vld [vmem:[#allocation3 + $0x98] sm:$0xff]
      %v2379 = vld [vmem:[#allocation3 + $0xa8] sm:$0xff]
      %v2380 = vld [vmem:[#allocation3 + $0xb0] sm:$0xff]
      %v2381 = vld [vmem:[#allocation3 + $0xc0] sm:$0xff]
      %v2382 = vld [vmem:[#allocation3 + $0xc8] sm:$0xff]
      %v2383 = vld [vmem:[#allocation3 + $0xd8] sm:$0xff]
      %v2384 = vld [vmem:[#allocation3 + $0xe0] sm:$0xff]
      %v2385 = vld [vmem:[#allocation3 + $0xf0] sm:$0xff]
      %v2386 = vld [vmem:[#allocation3 + $0xf8] sm:$0xff]
      %v2387 = vld [vmem:[#allocation3 + $0x108] sm:$0xff]
      %v2388 = vld [vmem:[#allocation3 + $0x110] sm:$0xff]
      %v2389 = vld [vmem:[#allocation3 + $0x120] sm:$0xff]
      %v2390 = vld [vmem:[#allocation3 + $0x128] sm:$0xff]
      %v2391 = vld [vmem:[#allocation3 + $0x138] sm:$0xff]
      %v2392 = vld [vmem:[#allocation3 + $0x140] sm:$0xff]
      %v2393 = vld [vmem:[#allocation3 + $0x150] sm:$0xff]
      %v2394 = vld [vmem:[#allocation3 + $0x158] sm:$0xff]
      %v2395 = vld [vmem:[#allocation3 + $0x168] sm:$0xff]
      %v2396 = vld [vmem:[#allocation3 + $0x170] sm:$0xff]
      %v2397 = vld [vmem:[#allocation3 + $0x1] sm:$0xff]
      %v2398 = vld [vmem:[#allocation3 + $0x9] sm:$0xff]
      %v2399 = vld [vmem:[#allocation3 + $0x19] sm:$0xff]
      %v2400 = vld [vmem:[#allocation3 + $0x21] sm:$0xff]
      %v2401 = vld [vmem:[#allocation3 + $0x31] sm:$0xff]
      %v2402 = vld [vmem:[#allocation3 + $0x39] sm:$0xff]
      %v2403 = vld [vmem:[#allocation3 + $0x49] sm:$0xff]
      %v2404 = vld [vmem:[#allocation3 + $0x51] sm:$0xff]
      %v2405 = vld [vmem:[#allocation3 + $0x61] sm:$0xff]
      %v2406 = vld [vmem:[#allocation3 + $0x69] sm:$0xff]
      %v2407 = vld [vmem:[#allocation3 + $0x79] sm:$0xff]
      %v2408 = vld [vmem:[#allocation3 + $0x81] sm:$0xff]
      %v2409 = vld [vmem:[#allocation3 + $0x91] sm:$0xff]
      %v2410 = vld [vmem:[#allocation3 + $0x99] sm:$0xff]
      %v2411 = vld [vmem:[#allocation3 + $0xa9] sm:$0xff]
      %v2412 = vld [vmem:[#allocation3 + $0xb1] sm:$0xff]
      %v2413 = vld [vmem:[#allocation3 + $0xc1] sm:$0xff]
      %v2414 = vld [vmem:[#allocation3 + $0xc9] sm:$0xff]
      %v2415 = vld [vmem:[#allocation3 + $0xd9] sm:$0xff]
      %v2416 = vld [vmem:[#allocation3 + $0xe1] sm:$0xff]
      %v2417 = vld [vmem:[#allocation3 + $0xf1] sm:$0xff]
      %v2418 = vld [vmem:[#allocation3 + $0xf9] sm:$0xff]
      %v2419 = vld [vmem:[#allocation3 + $0x109] sm:$0xff]
      %v2420 = vld [vmem:[#allocation3 + $0x111] sm:$0xff]
      %v2421 = vld [vmem:[#allocation3 + $0x121] sm:$0xff]
      %v2422 = vld [vmem:[#allocation3 + $0x129] sm:$0xff]
      %v2423 = vld [vmem:[#allocation3 + $0x139] sm:$0xff]
      %v2424 = vld [vmem:[#allocation3 + $0x141] sm:$0xff]
      %v2425 = vld [vmem:[#allocation3 + $0x151] sm:$0xff]
      %v2426 = vld [vmem:[#allocation3 + $0x159] sm:$0xff]
      %v2427 = vld [vmem:[#allocation3 + $0x169] sm:$0xff]
      %v2428 = vld [vmem:[#allocation3 + $0x171] sm:$0xff]
      %v2429 = vld [vmem:[#allocation3 + $0x2] sm:$0xff]
      %v2430 = vld [vmem:[#allocation3 + $0xa] sm:$0xff]
      %v2431 = vld [vmem:[#allocation3 + $0x1a] sm:$0xff]
      %v2432 = vld [vmem:[#allocation3 + $0x22] sm:$0xff]
      %v2433 = vld [vmem:[#allocation3 + $0x32] sm:$0xff]
      %v2434 = vld [vmem:[#allocation3 + $0x3a] sm:$0xff]
      %v2435 = vld [vmem:[#allocation3 + $0x4a] sm:$0xff]
      %v2436 = vld [vmem:[#allocation3 + $0x52] sm:$0xff]
      %v2437 = vld [vmem:[#allocation3 + $0x62] sm:$0xff]
      %v2438 = vld [vmem:[#allocation3 + $0x6a] sm:$0xff]
      %v2439 = vld [vmem:[#allocation3 + $0x7a] sm:$0xff]
      %v2440 = vld [vmem:[#allocation3 + $0x82] sm:$0xff]
      %v2441 = vld [vmem:[#allocation3 + $0x92] sm:$0xff]
      %v2442 = vld [vmem:[#allocation3 + $0x9a] sm:$0xff]
      %v2443 = vld [vmem:[#allocation3 + $0xaa] sm:$0xff]
      %v2444 = vld [vmem:[#allocation3 + $0xb2] sm:$0xff]
      %v2445 = vld [vmem:[#allocation3 + $0xc2] sm:$0xff]
      %v2446 = vld [vmem:[#allocation3 + $0xca] sm:$0xff]
      %v2447 = vld [vmem:[#allocation3 + $0xda] sm:$0xff]
      %v2448 = vld [vmem:[#allocation3 + $0xe2] sm:$0xff]
      %v2449 = vld [vmem:[#allocation3 + $0xf2] sm:$0xff]
      %v2450 = vld [vmem:[#allocation3 + $0xfa] sm:$0xff]
      %v2451 = vld [vmem:[#allocation3 + $0x10a] sm:$0xff]
      %v2452 = vld [vmem:[#allocation3 + $0x112] sm:$0xff]
      %v2453 = vld [vmem:[#allocation3 + $0x122] sm:$0xff]
      %v2454 = vld [vmem:[#allocation3 + $0x12a] sm:$0xff]
      %v2455 = vld [vmem:[#allocation3 + $0x13a] sm:$0xff]
      %v2456 = vld [vmem:[#allocation3 + $0x142] sm:$0xff]
      %v2457 = vld [vmem:[#allocation3 + $0x152] sm:$0xff]
      %v2458 = vld [vmem:[#allocation3 + $0x15a] sm:$0xff]
      %v2459 = vld [vmem:[#allocation3 + $0x16a] sm:$0xff]
      %v2460 = vld [vmem:[#allocation3 + $0x172] sm:$0xff]
      %v2461 = vld [vmem:[%s2332] sm:$0xff]
      %v2462 = vld [vmem:[%s2332 + $0x8] sm:$0xff]
      %v2463 = vld [vmem:[%s2332 + $0x18] sm:$0xff]
      %v2464 = vld [vmem:[%s2332 + $0x20] sm:$0xff]
      %v2465 = vld [vmem:[%s2332 + $0x30] sm:$0xff]
      %v2466 = vld [vmem:[%s2332 + $0x38] sm:$0xff]
      %v2467 = vld [vmem:[%s2332 + $0x48] sm:$0xff]
      %v2468 = vld [vmem:[%s2332 + $0x50] sm:$0xff]
      %v2469 = vld [vmem:[%s2332 + $0x60] sm:$0xff]
      %v2470 = vld [vmem:[%s2332 + $0x68] sm:$0xff]
      %v2471 = vld [vmem:[%s2332 + $0x78] sm:$0xff]
      %v2472 = vld [vmem:[%s2332 + $0x80] sm:$0xff]
      %v2473 = vld [vmem:[%s2332 + $0x90] sm:$0xff]
      %v2474 = vld [vmem:[%s2332 + $0x98] sm:$0xff]
      %v2475 = vld [vmem:[%s2332 + $0xa8] sm:$0xff]
      %v2476 = vld [vmem:[%s2332 + $0xb0] sm:$0xff]
      %v2477 = vld [vmem:[%s2332 + $0xc0] sm:$0xff]
      %v2478 = vld [vmem:[%s2332 + $0xc8] sm:$0xff]
      %v2479 = vld [vmem:[%s2332 + $0xd8] sm:$0xff]
      %v2480 = vld [vmem:[%s2332 + $0xe0] sm:$0xff]
      %v2481 = vld [vmem:[%s2332 + $0xf0] sm:$0xff]
      %v2482 = vld [vmem:[%s2332 + $0xf8] sm:$0xff]
      %v2483 = vld [vmem:[%s2332 + $0x108] sm:$0xff]
      %v2484 = vld [vmem:[%s2332 + $0x110] sm:$0xff]
      %v2485 = vld [vmem:[%s2332 + $0x120] sm:$0xff]
      %v2486 = vld [vmem:[%s2332 + $0x128] sm:$0xff]
      %v2487 = vld [vmem:[%s2332 + $0x138] sm:$0xff]
      %v2488 = vld [vmem:[%s2332 + $0x140] sm:$0xff]
      %v2489 = vld [vmem:[%s2332 + $0x150] sm:$0xff]
      %v2490 = vld [vmem:[%s2332 + $0x158] sm:$0xff]
      %v2491 = vld [vmem:[%s2332 + $0x168] sm:$0xff]
      %v2492 = vld [vmem:[%s2332 + $0x170] sm:$0xff]
      %v2493 = vld [vmem:[%s2332 + $0x1] sm:$0xff]
      %v2494 = vld [vmem:[%s2332 + $0x9] sm:$0xff]
      %v2495 = vld [vmem:[%s2332 + $0x19] sm:$0xff]
      %v2496 = vld [vmem:[%s2332 + $0x21] sm:$0xff]
      %v2497 = vld [vmem:[%s2332 + $0x31] sm:$0xff]
      %v2498 = vld [vmem:[%s2332 + $0x39] sm:$0xff]
      %v2499 = vld [vmem:[%s2332 + $0x49] sm:$0xff]
      %v2500 = vld [vmem:[%s2332 + $0x51] sm:$0xff]
      %v2501 = vld [vmem:[%s2332 + $0x61] sm:$0xff]
      %v2502 = vld [vmem:[%s2332 + $0x69] sm:$0xff]
      %v2503 = vld [vmem:[%s2332 + $0x79] sm:$0xff]
      %v2504 = vld [vmem:[%s2332 + $0x81] sm:$0xff]
      %v2505 = vld [vmem:[%s2332 + $0x91] sm:$0xff]
      %v2506 = vld [vmem:[%s2332 + $0x99] sm:$0xff]
      %v2507 = vld [vmem:[%s2332 + $0xa9] sm:$0xff]
      %v2508 = vld [vmem:[%s2332 + $0xb1] sm:$0xff]
      %v2509 = vld [vmem:[%s2332 + $0xc1] sm:$0xff]
      %v2510 = vld [vmem:[%s2332 + $0xc9] sm:$0xff]
      %v2511 = vld [vmem:[%s2332 + $0xd9] sm:$0xff]
      %v2512 = vld [vmem:[%s2332 + $0xe1] sm:$0xff]
      %v2513 = vld [vmem:[%s2332 + $0xf1] sm:$0xff]
      %v2514 = vld [vmem:[%s2332 + $0xf9] sm:$0xff]
      %v2515 = vld [vmem:[%s2332 + $0x109] sm:$0xff]
      %v2516 = vld [vmem:[%s2332 + $0x111] sm:$0xff]
      %v2517 = vld [vmem:[%s2332 + $0x121] sm:$0xff]
      %v2518 = vld [vmem:[%s2332 + $0x129] sm:$0xff]
      %v2519 = vld [vmem:[%s2332 + $0x139] sm:$0xff]
      %v2520 = vld [vmem:[%s2332 + $0x141] sm:$0xff]
      %v2521 = vld [vmem:[%s2332 + $0x151] sm:$0xff]
      %v2522 = vld [vmem:[%s2332 + $0x159] sm:$0xff]
      %v2523 = vld [vmem:[%s2332 + $0x169] sm:$0xff]
      %v2524 = vld [vmem:[%s2332 + $0x171] sm:$0xff]
      %v2525 = vld [vmem:[%s2332 + $0x2] sm:$0xff]
      %v2526 = vld [vmem:[%s2332 + $0xa] sm:$0xff]
      %v2527 = vld [vmem:[%s2332 + $0x1a] sm:$0xff]
      %v2528 = vld [vmem:[%s2332 + $0x22] sm:$0xff]
      %v2529 = vld [vmem:[%s2332 + $0x32] sm:$0xff]
      %v2530 = vld [vmem:[%s2332 + $0x3a] sm:$0xff]
      %v2531 = vld [vmem:[%s2332 + $0x4a] sm:$0xff]
      %v2532 = vld [vmem:[%s2332 + $0x52] sm:$0xff]
      %v2533 = vld [vmem:[%s2332 + $0x62] sm:$0xff]
      %v2534 = vld [vmem:[%s2332 + $0x6a] sm:$0xff]
      %v2535 = vld [vmem:[%s2332 + $0x7a] sm:$0xff]
      %v2536 = vld [vmem:[%s2332 + $0x82] sm:$0xff]
      %v2537 = vld [vmem:[%s2332 + $0x92] sm:$0xff]
      %v2538 = vld [vmem:[%s2332 + $0x9a] sm:$0xff]
      %v2539 = vld [vmem:[%s2332 + $0xaa] sm:$0xff]
      %v2540 = vld [vmem:[%s2332 + $0xb2] sm:$0xff]
      %v2541 = vld [vmem:[%s2332 + $0xc2] sm:$0xff]
      %v2542 = vld [vmem:[%s2332 + $0xca] sm:$0xff]
      %v2543 = vld [vmem:[%s2332 + $0xda] sm:$0xff]
      %v2544 = vld [vmem:[%s2332 + $0xe2] sm:$0xff]
      %v2545 = vld [vmem:[%s2332 + $0xf2] sm:$0xff]
      %v2546 = vld [vmem:[%s2332 + $0xfa] sm:$0xff]
      %v2547 = vld [vmem:[%s2332 + $0x10a] sm:$0xff]
      %v2548 = vld [vmem:[%s2332 + $0x112] sm:$0xff]
      %v2549 = vld [vmem:[%s2332 + $0x122] sm:$0xff]
      %v2550 = vld [vmem:[%s2332 + $0x12a] sm:$0xff]
      %v2551 = vld [vmem:[%s2332 + $0x13a] sm:$0xff]
      %v2552 = vld [vmem:[%s2332 + $0x142] sm:$0xff]
      %v2553 = vld [vmem:[%s2332 + $0x152] sm:$0xff]
      %v2554 = vld [vmem:[%s2332 + $0x15a] sm:$0xff]
      %v2555 = vld [vmem:[%s2332 + $0x16a] sm:$0xff]
      %v2556 = vld [vmem:[%s2332 + $0x172] sm:$0xff]
      %s2557 = scalar_lea.vmem [#allocation3], 48
      %v2558 = vld [vmem:[%s2557] sm:$0xff]
      %v2559 = vld [vmem:[%s2557 + $0x8] sm:$0xff]
      %v2560 = vld [vmem:[%s2557 + $0x18] sm:$0xff]
      %v2561 = vld [vmem:[%s2557 + $0x20] sm:$0xff]
      %v2562 = vld [vmem:[%s2557 + $0x30] sm:$0xff]
      %v2563 = vld [vmem:[%s2557 + $0x38] sm:$0xff]
      %v2564 = vld [vmem:[%s2557 + $0x48] sm:$0xff]
      %v2565 = vld [vmem:[%s2557 + $0x50] sm:$0xff]
      %v2566 = vld [vmem:[%s2557 + $0x60] sm:$0xff]
      %v2567 = vld [vmem:[%s2557 + $0x68] sm:$0xff]
      %v2568 = vld [vmem:[%s2557 + $0x78] sm:$0xff]
      %v2569 = vld [vmem:[%s2557 + $0x80] sm:$0xff]
      %v2570 = vld [vmem:[%s2557 + $0x90] sm:$0xff]
      %v2571 = vld [vmem:[%s2557 + $0x98] sm:$0xff]
      %v2572 = vld [vmem:[%s2557 + $0xa8] sm:$0xff]
      %v2573 = vld [vmem:[%s2557 + $0xb0] sm:$0xff]
      %v2574 = vld [vmem:[%s2557 + $0xc0] sm:$0xff]
      %v2575 = vld [vmem:[%s2557 + $0xc8] sm:$0xff]
      %v2576 = vld [vmem:[%s2557 + $0xd8] sm:$0xff]
      %v2577 = vld [vmem:[%s2557 + $0xe0] sm:$0xff]
      %v2578 = vld [vmem:[%s2557 + $0xf0] sm:$0xff]
      %v2579 = vld [vmem:[%s2557 + $0xf8] sm:$0xff]
      %v2580 = vld [vmem:[%s2557 + $0x108] sm:$0xff]
      %v2581 = vld [vmem:[%s2557 + $0x110] sm:$0xff]
      %v2582 = vld [vmem:[%s2557 + $0x120] sm:$0xff]
      %v2583 = vld [vmem:[%s2557 + $0x128] sm:$0xff]
      %v2584 = vld [vmem:[%s2557 + $0x138] sm:$0xff]
      %v2585 = vld [vmem:[%s2557 + $0x140] sm:$0xff]
      %v2586 = vld [vmem:[%s2557 + $0x150] sm:$0xff]
      %v2587 = vld [vmem:[%s2557 + $0x158] sm:$0xff]
      %v2588 = vld [vmem:[%s2557 + $0x168] sm:$0xff]
      %v2589 = vld [vmem:[%s2557 + $0x170] sm:$0xff]
      %v2590 = vld [vmem:[%s2557 + $0x1] sm:$0xff]
      %v2591 = vld [vmem:[%s2557 + $0x9] sm:$0xff]
      %v2592 = vld [vmem:[%s2557 + $0x19] sm:$0xff]
      %v2593 = vld [vmem:[%s2557 + $0x21] sm:$0xff]
      %v2594 = vld [vmem:[%s2557 + $0x31] sm:$0xff]
      %v2595 = vld [vmem:[%s2557 + $0x39] sm:$0xff]
      %v2596 = vld [vmem:[%s2557 + $0x49] sm:$0xff]
      %v2597 = vld [vmem:[%s2557 + $0x51] sm:$0xff]
      %v2598 = vld [vmem:[%s2557 + $0x61] sm:$0xff]
      %v2599 = vld [vmem:[%s2557 + $0x69] sm:$0xff]
      %v2600 = vld [vmem:[%s2557 + $0x79] sm:$0xff]
      %v2601 = vld [vmem:[%s2557 + $0x81] sm:$0xff]
      %v2602 = vld [vmem:[%s2557 + $0x91] sm:$0xff]
      %v2603 = vld [vmem:[%s2557 + $0x99] sm:$0xff]
      %v2604 = vld [vmem:[%s2557 + $0xa9] sm:$0xff]
      %v2605 = vld [vmem:[%s2557 + $0xb1] sm:$0xff]
      %v2606 = vld [vmem:[%s2557 + $0xc1] sm:$0xff]
      %v2607 = vld [vmem:[%s2557 + $0xc9] sm:$0xff]
      %v2608 = vld [vmem:[%s2557 + $0xd9] sm:$0xff]
      %v2609 = vld [vmem:[%s2557 + $0xe1] sm:$0xff]
      %v2610 = vld [vmem:[%s2557 + $0xf1] sm:$0xff]
      %v2611 = vld [vmem:[%s2557 + $0xf9] sm:$0xff]
      %v2612 = vld [vmem:[%s2557 + $0x109] sm:$0xff]
      %v2613 = vld [vmem:[%s2557 + $0x111] sm:$0xff]
      %v2614 = vld [vmem:[%s2557 + $0x121] sm:$0xff]
      %v2615 = vld [vmem:[%s2557 + $0x129] sm:$0xff]
      %v2616 = vld [vmem:[%s2557 + $0x139] sm:$0xff]
      %v2617 = vld [vmem:[%s2557 + $0x141] sm:$0xff]
      %v2618 = vld [vmem:[%s2557 + $0x151] sm:$0xff]
      %v2619 = vld [vmem:[%s2557 + $0x159] sm:$0xff]
      %v2620 = vld [vmem:[%s2557 + $0x169] sm:$0xff]
      %v2621 = vld [vmem:[%s2557 + $0x171] sm:$0xff]
      %v2622 = vld [vmem:[%s2557 + $0x2] sm:$0xff]
      %v2623 = vld [vmem:[%s2557 + $0xa] sm:$0xff]
      %v2624 = vld [vmem:[%s2557 + $0x1a] sm:$0xff]
      %v2625 = vld [vmem:[%s2557 + $0x22] sm:$0xff]
      %v2626 = vld [vmem:[%s2557 + $0x32] sm:$0xff]
      %v2627 = vld [vmem:[%s2557 + $0x3a] sm:$0xff]
      %v2628 = vld [vmem:[%s2557 + $0x4a] sm:$0xff]
      %v2629 = vld [vmem:[%s2557 + $0x52] sm:$0xff]
      %v2630 = vld [vmem:[%s2557 + $0x62] sm:$0xff]
      %v2631 = vld [vmem:[%s2557 + $0x6a] sm:$0xff]
      %v2632 = vld [vmem:[%s2557 + $0x7a] sm:$0xff]
      %v2633 = vld [vmem:[%s2557 + $0x82] sm:$0xff]
      %v2634 = vld [vmem:[%s2557 + $0x92] sm:$0xff]
      %v2635 = vld [vmem:[%s2557 + $0x9a] sm:$0xff]
      %v2636 = vld [vmem:[%s2557 + $0xaa] sm:$0xff]
      %v2637 = vld [vmem:[%s2557 + $0xb2] sm:$0xff]
      %v2638 = vld [vmem:[%s2557 + $0xc2] sm:$0xff]
      %v2639 = vld [vmem:[%s2557 + $0xca] sm:$0xff]
      %v2640 = vld [vmem:[%s2557 + $0xda] sm:$0xff]
      %v2641 = vld [vmem:[%s2557 + $0xe2] sm:$0xff]
      %v2642 = vld [vmem:[%s2557 + $0xf2] sm:$0xff]
      %v2643 = vld [vmem:[%s2557 + $0xfa] sm:$0xff]
      %v2644 = vld [vmem:[%s2557 + $0x10a] sm:$0xff]
      %v2645 = vld [vmem:[%s2557 + $0x112] sm:$0xff]
      %v2646 = vld [vmem:[%s2557 + $0x122] sm:$0xff]
      %v2647 = vld [vmem:[%s2557 + $0x12a] sm:$0xff]
      %v2648 = vld [vmem:[%s2557 + $0x13a] sm:$0xff]
      %v2649 = vld [vmem:[%s2557 + $0x142] sm:$0xff]
      %v2650 = vld [vmem:[%s2557 + $0x152] sm:$0xff]
      %v2651 = vld [vmem:[%s2557 + $0x15a] sm:$0xff]
      %v2652 = vld [vmem:[%s2557 + $0x16a] sm:$0xff]
      %v2653 = vld [vmem:[%s2557 + $0x172] sm:$0xff]
      %2686 = vrot.lane.b32.xlu0 %v2397, 4
      %v2687 = vpop.permute.xlu0 %2686
      %2688 = vrot.lane.b32.xlu0 %v2398, 4
      %v2689 = vpop.permute.xlu0 %2688
      %2690 = vrot.lane.b32.xlu0 %v2399, 4
      %v2691 = vpop.permute.xlu0 %2690
      %2692 = vrot.lane.b32.xlu0 %v2400, 4
      %v2693 = vpop.permute.xlu0 %2692
      %2694 = vrot.lane.b32.xlu0 %v2401, 4
      %v2695 = vpop.permute.xlu0 %2694
      %2696 = vrot.lane.b32.xlu0 %v2402, 4
      %v2697 = vpop.permute.xlu0 %2696
      %2698 = vrot.lane.b32.xlu0 %v2403, 4
      %v2699 = vpop.permute.xlu0 %2698
      %2700 = vrot.lane.b32.xlu0 %v2404, 4
      %v2701 = vpop.permute.xlu0 %2700
      %2702 = vrot.lane.b32.xlu0 %v2405, 4
      %v2703 = vpop.permute.xlu0 %2702
      %2704 = vrot.lane.b32.xlu0 %v2406, 4
      %v2705 = vpop.permute.xlu0 %2704
      %2706 = vrot.lane.b32.xlu0 %v2407, 4
      %v2707 = vpop.permute.xlu0 %2706
      %2708 = vrot.lane.b32.xlu0 %v2408, 4
      %v2709 = vpop.permute.xlu0 %2708
      %2710 = vrot.lane.b32.xlu0 %v2409, 4
      %v2711 = vpop.permute.xlu0 %2710
      %2712 = vrot.lane.b32.xlu0 %v2410, 4
      %v2713 = vpop.permute.xlu0 %2712
      %2714 = vrot.lane.b32.xlu0 %v2411, 4
      %v2715 = vpop.permute.xlu0 %2714
      %2716 = vrot.lane.b32.xlu0 %v2412, 4
      %v2717 = vpop.permute.xlu0 %2716
      %2718 = vrot.lane.b32.xlu0 %v2413, 4
      %v2719 = vpop.permute.xlu0 %2718
      %2720 = vrot.lane.b32.xlu0 %v2414, 4
      %v2721 = vpop.permute.xlu0 %2720
      %2722 = vrot.lane.b32.xlu0 %v2415, 4
      %v2723 = vpop.permute.xlu0 %2722
      %2724 = vrot.lane.b32.xlu0 %v2416, 4
      %v2725 = vpop.permute.xlu0 %2724
      %2726 = vrot.lane.b32.xlu0 %v2417, 4
      %v2727 = vpop.permute.xlu0 %2726
      %2728 = vrot.lane.b32.xlu0 %v2418, 4
      %v2729 = vpop.permute.xlu0 %2728
      %2730 = vrot.lane.b32.xlu0 %v2419, 4
      %v2731 = vpop.permute.xlu0 %2730
      %2732 = vrot.lane.b32.xlu0 %v2420, 4
      %v2733 = vpop.permute.xlu0 %2732
      %2734 = vrot.lane.b32.xlu0 %v2421, 4
      %v2735 = vpop.permute.xlu0 %2734
      %2736 = vrot.lane.b32.xlu0 %v2422, 4
      %v2737 = vpop.permute.xlu0 %2736
      %2738 = vrot.lane.b32.xlu0 %v2423, 4
      %v2739 = vpop.permute.xlu0 %2738
      %2740 = vrot.lane.b32.xlu0 %v2424, 4
      %v2741 = vpop.permute.xlu0 %2740
      %2742 = vrot.lane.b32.xlu0 %v2425, 4
      %v2743 = vpop.permute.xlu0 %2742
      %2744 = vrot.lane.b32.xlu0 %v2426, 4
      %v2745 = vpop.permute.xlu0 %2744
      %2746 = vrot.lane.b32.xlu0 %v2427, 4
      %v2747 = vpop.permute.xlu0 %2746
      %2748 = vrot.lane.b32.xlu0 %v2428, 4
      %v2749 = vpop.permute.xlu0 %2748
      %2814 = vrot.lane.b32.xlu0 %v2429, 8
      %v2815 = vpop.permute.xlu0 %2814
      %2816 = vrot.lane.b32.xlu0 %v2430, 8
      %v2817 = vpop.permute.xlu0 %2816
      %2818 = vrot.lane.b32.xlu0 %v2431, 8
      %v2819 = vpop.permute.xlu0 %2818
      %2820 = vrot.lane.b32.xlu0 %v2432, 8
      %v2821 = vpop.permute.xlu0 %2820
      %2822 = vrot.lane.b32.xlu0 %v2433, 8
      %v2823 = vpop.permute.xlu0 %2822
      %2824 = vrot.lane.b32.xlu0 %v2434, 8
      %v2825 = vpop.permute.xlu0 %2824
      %2826 = vrot.lane.b32.xlu0 %v2435, 8
      %v2827 = vpop.permute.xlu0 %2826
      %2828 = vrot.lane.b32.xlu0 %v2436, 8
      %v2829 = vpop.permute.xlu0 %2828
      %2830 = vrot.lane.b32.xlu0 %v2437, 8
      %v2831 = vpop.permute.xlu0 %2830
      %2832 = vrot.lane.b32.xlu0 %v2438, 8
      %v2833 = vpop.permute.xlu0 %2832
      %2834 = vrot.lane.b32.xlu0 %v2439, 8
      %v2835 = vpop.permute.xlu0 %2834
      %2836 = vrot.lane.b32.xlu0 %v2440, 8
      %v2837 = vpop.permute.xlu0 %2836
      %2838 = vrot.lane.b32.xlu0 %v2441, 8
      %v2839 = vpop.permute.xlu0 %2838
      %2840 = vrot.lane.b32.xlu0 %v2442, 8
      %v2841 = vpop.permute.xlu0 %2840
      %2842 = vrot.lane.b32.xlu0 %v2443, 8
      %v2843 = vpop.permute.xlu0 %2842
      %2844 = vrot.lane.b32.xlu0 %v2444, 8
      %v2845 = vpop.permute.xlu0 %2844
      %2846 = vrot.lane.b32.xlu0 %v2445, 8
      %v2847 = vpop.permute.xlu0 %2846
      %2848 = vrot.lane.b32.xlu0 %v2446, 8
      %v2849 = vpop.permute.xlu0 %2848
      %2850 = vrot.lane.b32.xlu0 %v2447, 8
      %v2851 = vpop.permute.xlu0 %2850
      %2852 = vrot.lane.b32.xlu0 %v2448, 8
      %v2853 = vpop.permute.xlu0 %2852
      %2854 = vrot.lane.b32.xlu0 %v2449, 8
      %v2855 = vpop.permute.xlu0 %2854
      %2856 = vrot.lane.b32.xlu0 %v2450, 8
      %v2857 = vpop.permute.xlu0 %2856
      %2858 = vrot.lane.b32.xlu0 %v2451, 8
      %v2859 = vpop.permute.xlu0 %2858
      %2860 = vrot.lane.b32.xlu0 %v2452, 8
      %v2861 = vpop.permute.xlu0 %2860
      %2862 = vrot.lane.b32.xlu0 %v2453, 8
      %v2863 = vpop.permute.xlu0 %2862
      %2864 = vrot.lane.b32.xlu0 %v2454, 8
      %v2865 = vpop.permute.xlu0 %2864
      %2866 = vrot.lane.b32.xlu0 %v2455, 8
      %v2867 = vpop.permute.xlu0 %2866
      %2868 = vrot.lane.b32.xlu0 %v2456, 8
      %v2869 = vpop.permute.xlu0 %2868
      %2870 = vrot.lane.b32.xlu0 %v2457, 8
      %v2871 = vpop.permute.xlu0 %2870
      %2872 = vrot.lane.b32.xlu0 %v2458, 8
      %v2873 = vpop.permute.xlu0 %2872
      %2874 = vrot.lane.b32.xlu0 %v2459, 8
      %v2875 = vpop.permute.xlu0 %2874
      %2876 = vrot.lane.b32.xlu0 %v2460, 8
      %v2877 = vpop.permute.xlu0 %2876
      %2942 = vrot.lane.b32.xlu0 %v2461, 12
      %v2943 = vpop.permute.xlu0 %2942
      %2944 = vrot.lane.b32.xlu0 %v2462, 12
      %v2945 = vpop.permute.xlu0 %2944
      %2946 = vrot.lane.b32.xlu0 %v2463, 12
      %v2947 = vpop.permute.xlu0 %2946
      %2948 = vrot.lane.b32.xlu0 %v2464, 12
      %v2949 = vpop.permute.xlu0 %2948
      %2950 = vrot.lane.b32.xlu0 %v2465, 12
      %v2951 = vpop.permute.xlu0 %2950
      %2952 = vrot.lane.b32.xlu0 %v2466, 12
      %v2953 = vpop.permute.xlu0 %2952
      %2954 = vrot.lane.b32.xlu0 %v2467, 12
      %v2955 = vpop.permute.xlu0 %2954
      %2956 = vrot.lane.b32.xlu0 %v2468, 12
      %v2957 = vpop.permute.xlu0 %2956
      %2958 = vrot.lane.b32.xlu0 %v2469, 12
      %v2959 = vpop.permute.xlu0 %2958
      %2960 = vrot.lane.b32.xlu0 %v2470, 12
      %v2961 = vpop.permute.xlu0 %2960
      %2962 = vrot.lane.b32.xlu0 %v2471, 12
      %v2963 = vpop.permute.xlu0 %2962
      %2964 = vrot.lane.b32.xlu0 %v2472, 12
      %v2965 = vpop.permute.xlu0 %2964
      %2966 = vrot.lane.b32.xlu0 %v2473, 12
      %v2967 = vpop.permute.xlu0 %2966
      %2968 = vrot.lane.b32.xlu0 %v2474, 12
      %v2969 = vpop.permute.xlu0 %2968
      %2970 = vrot.lane.b32.xlu0 %v2475, 12
      %v2971 = vpop.permute.xlu0 %2970
      %2972 = vrot.lane.b32.xlu0 %v2476, 12
      %v2973 = vpop.permute.xlu0 %2972
      %2974 = vrot.lane.b32.xlu0 %v2477, 12
      %v2975 = vpop.permute.xlu0 %2974
      %2976 = vrot.lane.b32.xlu0 %v2478, 12
      %v2977 = vpop.permute.xlu0 %2976
      %2978 = vrot.lane.b32.xlu0 %v2479, 12
      %v2979 = vpop.permute.xlu0 %2978
      %2980 = vrot.lane.b32.xlu0 %v2480, 12
      %v2981 = vpop.permute.xlu0 %2980
      %2982 = vrot.lane.b32.xlu0 %v2481, 12
      %v2983 = vpop.permute.xlu0 %2982
      %2984 = vrot.lane.b32.xlu0 %v2482, 12
      %v2985 = vpop.permute.xlu0 %2984
      %2986 = vrot.lane.b32.xlu0 %v2483, 12
      %v2987 = vpop.permute.xlu0 %2986
      %2988 = vrot.lane.b32.xlu0 %v2484, 12
      %v2989 = vpop.permute.xlu0 %2988
      %2990 = vrot.lane.b32.xlu0 %v2485, 12
      %v2991 = vpop.permute.xlu0 %2990
      %2992 = vrot.lane.b32.xlu0 %v2486, 12
      %v2993 = vpop.permute.xlu0 %2992
      %2994 = vrot.lane.b32.xlu0 %v2487, 12
      %v2995 = vpop.permute.xlu0 %2994
      %2996 = vrot.lane.b32.xlu0 %v2488, 12
      %v2997 = vpop.permute.xlu0 %2996
      %2998 = vrot.lane.b32.xlu0 %v2489, 12
      %v2999 = vpop.permute.xlu0 %2998
      %3000 = vrot.lane.b32.xlu0 %v2490, 12
      %v3001 = vpop.permute.xlu0 %3000
      %3002 = vrot.lane.b32.xlu0 %v2491, 12
      %v3003 = vpop.permute.xlu0 %3002
      %3004 = vrot.lane.b32.xlu0 %v2492, 12
      %v3005 = vpop.permute.xlu0 %3004
      %3070 = vrot.lane.b32.xlu0 %v2493, 16
      %v3071 = vpop.permute.xlu0 %3070
      %3072 = vrot.lane.b32.xlu0 %v2494, 16
      %v3073 = vpop.permute.xlu0 %3072
      %3074 = vrot.lane.b32.xlu0 %v2495, 16
      %v3075 = vpop.permute.xlu0 %3074
      %3076 = vrot.lane.b32.xlu0 %v2496, 16
      %v3077 = vpop.permute.xlu0 %3076
      %3078 = vrot.lane.b32.xlu0 %v2497, 16
      %v3079 = vpop.permute.xlu0 %3078
      %3080 = vrot.lane.b32.xlu0 %v2498, 16
      %v3081 = vpop.permute.xlu0 %3080
      %3082 = vrot.lane.b32.xlu0 %v2499, 16
      %v3083 = vpop.permute.xlu0 %3082
      %3084 = vrot.lane.b32.xlu0 %v2500, 16
      %v3085 = vpop.permute.xlu0 %3084
      %3086 = vrot.lane.b32.xlu0 %v2501, 16
      %v3087 = vpop.permute.xlu0 %3086
      %3088 = vrot.lane.b32.xlu0 %v2502, 16
      %v3089 = vpop.permute.xlu0 %3088
      %3090 = vrot.lane.b32.xlu0 %v2503, 16
      %v3091 = vpop.permute.xlu0 %3090
      %3092 = vrot.lane.b32.xlu0 %v2504, 16
      %v3093 = vpop.permute.xlu0 %3092
      %3094 = vrot.lane.b32.xlu0 %v2505, 16
      %v3095 = vpop.permute.xlu0 %3094
      %3096 = vrot.lane.b32.xlu0 %v2506, 16
      %v3097 = vpop.permute.xlu0 %3096
      %3098 = vrot.lane.b32.xlu0 %v2507, 16
      %v3099 = vpop.permute.xlu0 %3098
      %3100 = vrot.lane.b32.xlu0 %v2508, 16
      %v3101 = vpop.permute.xlu0 %3100
      %3102 = vrot.lane.b32.xlu0 %v2509, 16
      %v3103 = vpop.permute.xlu0 %3102
      %3104 = vrot.lane.b32.xlu0 %v2510, 16
      %v3105 = vpop.permute.xlu0 %3104
      %3106 = vrot.lane.b32.xlu0 %v2511, 16
      %v3107 = vpop.permute.xlu0 %3106
      %3108 = vrot.lane.b32.xlu0 %v2512, 16
      %v3109 = vpop.permute.xlu0 %3108
      %3110 = vrot.lane.b32.xlu0 %v2513, 16
      %v3111 = vpop.permute.xlu0 %3110
      %3112 = vrot.lane.b32.xlu0 %v2514, 16
      %v3113 = vpop.permute.xlu0 %3112
      %3114 = vrot.lane.b32.xlu0 %v2515, 16
      %v3115 = vpop.permute.xlu0 %3114
      %3116 = vrot.lane.b32.xlu0 %v2516, 16
      %v3117 = vpop.permute.xlu0 %3116
      %3118 = vrot.lane.b32.xlu0 %v2517, 16
      %v3119 = vpop.permute.xlu0 %3118
      %3120 = vrot.lane.b32.xlu0 %v2518, 16
      %v3121 = vpop.permute.xlu0 %3120
      %3122 = vrot.lane.b32.xlu0 %v2519, 16
      %v3123 = vpop.permute.xlu0 %3122
      %3124 = vrot.lane.b32.xlu0 %v2520, 16
      %v3125 = vpop.permute.xlu0 %3124
      %3126 = vrot.lane.b32.xlu0 %v2521, 16
      %v3127 = vpop.permute.xlu0 %3126
      %3128 = vrot.lane.b32.xlu0 %v2522, 16
      %v3129 = vpop.permute.xlu0 %3128
      %3130 = vrot.lane.b32.xlu0 %v2523, 16
      %v3131 = vpop.permute.xlu0 %3130
      %3132 = vrot.lane.b32.xlu0 %v2524, 16
      %v3133 = vpop.permute.xlu0 %3132
      %3198 = vrot.lane.b32.xlu0 %v2525, 20
      %v3199 = vpop.permute.xlu0 %3198
      %3200 = vrot.lane.b32.xlu0 %v2526, 20
      %v3201 = vpop.permute.xlu0 %3200
      %3202 = vrot.lane.b32.xlu0 %v2527, 20
      %v3203 = vpop.permute.xlu0 %3202
      %3204 = vrot.lane.b32.xlu0 %v2528, 20
      %v3205 = vpop.permute.xlu0 %3204
      %3206 = vrot.lane.b32.xlu0 %v2529, 20
      %v3207 = vpop.permute.xlu0 %3206
      %3208 = vrot.lane.b32.xlu0 %v2530, 20
      %v3209 = vpop.permute.xlu0 %3208
      %3210 = vrot.lane.b32.xlu0 %v2531, 20
      %v3211 = vpop.permute.xlu0 %3210
      %3212 = vrot.lane.b32.xlu0 %v2532, 20
      %v3213 = vpop.permute.xlu0 %3212
      %3214 = vrot.lane.b32.xlu0 %v2533, 20
      %v3215 = vpop.permute.xlu0 %3214
      %3216 = vrot.lane.b32.xlu0 %v2534, 20
      %v3217 = vpop.permute.xlu0 %3216
      %3218 = vrot.lane.b32.xlu0 %v2535, 20
      %v3219 = vpop.permute.xlu0 %3218
      %3220 = vrot.lane.b32.xlu0 %v2536, 20
      %v3221 = vpop.permute.xlu0 %3220
      %3222 = vrot.lane.b32.xlu0 %v2537, 20
      %v3223 = vpop.permute.xlu0 %3222
      %3224 = vrot.lane.b32.xlu0 %v2538, 20
      %v3225 = vpop.permute.xlu0 %3224
      %3226 = vrot.lane.b32.xlu0 %v2539, 20
      %v3227 = vpop.permute.xlu0 %3226
      %3228 = vrot.lane.b32.xlu0 %v2540, 20
      %v3229 = vpop.permute.xlu0 %3228
      %3230 = vrot.lane.b32.xlu0 %v2541, 20
      %v3231 = vpop.permute.xlu0 %3230
      %3232 = vrot.lane.b32.xlu0 %v2542, 20
      %v3233 = vpop.permute.xlu0 %3232
      %3234 = vrot.lane.b32.xlu0 %v2543, 20
      %v3235 = vpop.permute.xlu0 %3234
      %3236 = vrot.lane.b32.xlu0 %v2544, 20
      %v3237 = vpop.permute.xlu0 %3236
      %3238 = vrot.lane.b32.xlu0 %v2545, 20
      %v3239 = vpop.permute.xlu0 %3238
      %3240 = vrot.lane.b32.xlu0 %v2546, 20
      %v3241 = vpop.permute.xlu0 %3240
      %3242 = vrot.lane.b32.xlu0 %v2547, 20
      %v3243 = vpop.permute.xlu0 %3242
      %3244 = vrot.lane.b32.xlu0 %v2548, 20
      %v3245 = vpop.permute.xlu0 %3244
      %3246 = vrot.lane.b32.xlu0 %v2549, 20
      %v3247 = vpop.permute.xlu0 %3246
      %3248 = vrot.lane.b32.xlu0 %v2550, 20
      %v3249 = vpop.permute.xlu0 %3248
      %3250 = vrot.lane.b32.xlu0 %v2551, 20
      %v3251 = vpop.permute.xlu0 %3250
      %3252 = vrot.lane.b32.xlu0 %v2552, 20
      %v3253 = vpop.permute.xlu0 %3252
      %3254 = vrot.lane.b32.xlu0 %v2553, 20
      %v3255 = vpop.permute.xlu0 %3254
      %3256 = vrot.lane.b32.xlu0 %v2554, 20
      %v3257 = vpop.permute.xlu0 %3256
      %3258 = vrot.lane.b32.xlu0 %v2555, 20
      %v3259 = vpop.permute.xlu0 %3258
      %3260 = vrot.lane.b32.xlu0 %v2556, 20
      %v3261 = vpop.permute.xlu0 %3260
      %3326 = vrot.lane.b32.xlu0 %v2558, 24
      %v3327 = vpop.permute.xlu0 %3326
      %3328 = vrot.lane.b32.xlu0 %v2559, 24
      %v3329 = vpop.permute.xlu0 %3328
      %3330 = vrot.lane.b32.xlu0 %v2560, 24
      %v3331 = vpop.permute.xlu0 %3330
      %3332 = vrot.lane.b32.xlu0 %v2561, 24
      %v3333 = vpop.permute.xlu0 %3332
      %3334 = vrot.lane.b32.xlu0 %v2562, 24
      %v3335 = vpop.permute.xlu0 %3334
      %3336 = vrot.lane.b32.xlu0 %v2563, 24
      %v3337 = vpop.permute.xlu0 %3336
      %3338 = vrot.lane.b32.xlu0 %v2564, 24
      %v3339 = vpop.permute.xlu0 %3338
      %3340 = vrot.lane.b32.xlu0 %v2565, 24
      %v3341 = vpop.permute.xlu0 %3340
      %3342 = vrot.lane.b32.xlu0 %v2566, 24
      %v3343 = vpop.permute.xlu0 %3342
      %3344 = vrot.lane.b32.xlu0 %v2567, 24
      %v3345 = vpop.permute.xlu0 %3344
      %3346 = vrot.lane.b32.xlu0 %v2568, 24
      %v3347 = vpop.permute.xlu0 %3346
      %3348 = vrot.lane.b32.xlu0 %v2569, 24
      %v3349 = vpop.permute.xlu0 %3348
      %3350 = vrot.lane.b32.xlu0 %v2570, 24
      %v3351 = vpop.permute.xlu0 %3350
      %3352 = vrot.lane.b32.xlu0 %v2571, 24
      %v3353 = vpop.permute.xlu0 %3352
      %3354 = vrot.lane.b32.xlu0 %v2572, 24
      %v3355 = vpop.permute.xlu0 %3354
      %3356 = vrot.lane.b32.xlu0 %v2573, 24
      %v3357 = vpop.permute.xlu0 %3356
      %3358 = vrot.lane.b32.xlu0 %v2574, 24
      %v3359 = vpop.permute.xlu0 %3358
      %3360 = vrot.lane.b32.xlu0 %v2575, 24
      %v3361 = vpop.permute.xlu0 %3360
      %3362 = vrot.lane.b32.xlu0 %v2576, 24
      %v3363 = vpop.permute.xlu0 %3362
      %3364 = vrot.lane.b32.xlu0 %v2577, 24
      %v3365 = vpop.permute.xlu0 %3364
      %3366 = vrot.lane.b32.xlu0 %v2578, 24
      %v3367 = vpop.permute.xlu0 %3366
      %3368 = vrot.lane.b32.xlu0 %v2579, 24
      %v3369 = vpop.permute.xlu0 %3368
      %3370 = vrot.lane.b32.xlu0 %v2580, 24
      %v3371 = vpop.permute.xlu0 %3370
      %3372 = vrot.lane.b32.xlu0 %v2581, 24
      %v3373 = vpop.permute.xlu0 %3372
      %3374 = vrot.lane.b32.xlu0 %v2582, 24
      %v3375 = vpop.permute.xlu0 %3374
      %3376 = vrot.lane.b32.xlu0 %v2583, 24
      %v3377 = vpop.permute.xlu0 %3376
      %3378 = vrot.lane.b32.xlu0 %v2584, 24
      %v3379 = vpop.permute.xlu0 %3378
      %3380 = vrot.lane.b32.xlu0 %v2585, 24
      %v3381 = vpop.permute.xlu0 %3380
      %3382 = vrot.lane.b32.xlu0 %v2586, 24
      %v3383 = vpop.permute.xlu0 %3382
      %3384 = vrot.lane.b32.xlu0 %v2587, 24
      %v3385 = vpop.permute.xlu0 %3384
      %3386 = vrot.lane.b32.xlu0 %v2588, 24
      %v3387 = vpop.permute.xlu0 %3386
      %3388 = vrot.lane.b32.xlu0 %v2589, 24
      %v3389 = vpop.permute.xlu0 %3388
      %3454 = vrot.lane.b32.xlu0 %v2590, 28
      %v3455 = vpop.permute.xlu0 %3454
      %3456 = vrot.lane.b32.xlu0 %v2591, 28
      %v3457 = vpop.permute.xlu0 %3456
      %3458 = vrot.lane.b32.xlu0 %v2592, 28
      %v3459 = vpop.permute.xlu0 %3458
      %3460 = vrot.lane.b32.xlu0 %v2593, 28
      %v3461 = vpop.permute.xlu0 %3460
      %3462 = vrot.lane.b32.xlu0 %v2594, 28
      %v3463 = vpop.permute.xlu0 %3462
      %3464 = vrot.lane.b32.xlu0 %v2595, 28
      %v3465 = vpop.permute.xlu0 %3464
      %3466 = vrot.lane.b32.xlu0 %v2596, 28
      %v3467 = vpop.permute.xlu0 %3466
      %3468 = vrot.lane.b32.xlu0 %v2597, 28
      %v3469 = vpop.permute.xlu0 %3468
      %3470 = vrot.lane.b32.xlu0 %v2598, 28
      %v3471 = vpop.permute.xlu0 %3470
      %3472 = vrot.lane.b32.xlu0 %v2599, 28
      %v3473 = vpop.permute.xlu0 %3472
      %3474 = vrot.lane.b32.xlu0 %v2600, 28
      %v3475 = vpop.permute.xlu0 %3474
      %3476 = vrot.lane.b32.xlu0 %v2601, 28
      %v3477 = vpop.permute.xlu0 %3476
      %3478 = vrot.lane.b32.xlu0 %v2602, 28
      %v3479 = vpop.permute.xlu0 %3478
      %3480 = vrot.lane.b32.xlu0 %v2603, 28
      %v3481 = vpop.permute.xlu0 %3480
      %3482 = vrot.lane.b32.xlu0 %v2604, 28
      %v3483 = vpop.permute.xlu0 %3482
      %3484 = vrot.lane.b32.xlu0 %v2605, 28
      %v3485 = vpop.permute.xlu0 %3484
      %3486 = vrot.lane.b32.xlu0 %v2606, 28
      %v3487 = vpop.permute.xlu0 %3486
      %3488 = vrot.lane.b32.xlu0 %v2607, 28
      %v3489 = vpop.permute.xlu0 %3488
      %3490 = vrot.lane.b32.xlu0 %v2608, 28
      %v3491 = vpop.permute.xlu0 %3490
      %3492 = vrot.lane.b32.xlu0 %v2609, 28
      %v3493 = vpop.permute.xlu0 %3492
      %3494 = vrot.lane.b32.xlu0 %v2610, 28
      %v3495 = vpop.permute.xlu0 %3494
      %3496 = vrot.lane.b32.xlu0 %v2611, 28
      %v3497 = vpop.permute.xlu0 %3496
      %3498 = vrot.lane.b32.xlu0 %v2612, 28
      %v3499 = vpop.permute.xlu0 %3498
      %3500 = vrot.lane.b32.xlu0 %v2613, 28
      %v3501 = vpop.permute.xlu0 %3500
      %3502 = vrot.lane.b32.xlu0 %v2614, 28
      %v3503 = vpop.permute.xlu0 %3502
      %3504 = vrot.lane.b32.xlu0 %v2615, 28
      %v3505 = vpop.permute.xlu0 %3504
      %3506 = vrot.lane.b32.xlu0 %v2616, 28
      %v3507 = vpop.permute.xlu0 %3506
      %3508 = vrot.lane.b32.xlu0 %v2617, 28
      %v3509 = vpop.permute.xlu0 %3508
      %3510 = vrot.lane.b32.xlu0 %v2618, 28
      %v3511 = vpop.permute.xlu0 %3510
      %3512 = vrot.lane.b32.xlu0 %v2619, 28
      %v3513 = vpop.permute.xlu0 %3512
      %3514 = vrot.lane.b32.xlu0 %v2620, 28
      %v3515 = vpop.permute.xlu0 %3514
      %3516 = vrot.lane.b32.xlu0 %v2621, 28
      %v3517 = vpop.permute.xlu0 %3516
      %3582 = vrot.lane.b32.xlu0 %v2622, 32
      %v3583 = vpop.permute.xlu0 %3582
      %3584 = vrot.lane.b32.xlu0 %v2623, 32
      %v3585 = vpop.permute.xlu0 %3584
      %3586 = vrot.lane.b32.xlu0 %v2624, 32
      %v3587 = vpop.permute.xlu0 %3586
      %3588 = vrot.lane.b32.xlu0 %v2625, 32
      %v3589 = vpop.permute.xlu0 %3588
      %3590 = vrot.lane.b32.xlu0 %v2626, 32
      %v3591 = vpop.permute.xlu0 %3590
      %3592 = vrot.lane.b32.xlu0 %v2627, 32
      %v3593 = vpop.permute.xlu0 %3592
      %3594 = vrot.lane.b32.xlu0 %v2628, 32
      %v3595 = vpop.permute.xlu0 %3594
      %3596 = vrot.lane.b32.xlu0 %v2629, 32
      %v3597 = vpop.permute.xlu0 %3596
      %3598 = vrot.lane.b32.xlu0 %v2630, 32
      %v3599 = vpop.permute.xlu0 %3598
      %3600 = vrot.lane.b32.xlu0 %v2631, 32
      %v3601 = vpop.permute.xlu0 %3600
      %3602 = vrot.lane.b32.xlu0 %v2632, 32
      %v3603 = vpop.permute.xlu0 %3602
      %3604 = vrot.lane.b32.xlu0 %v2633, 32
      %v3605 = vpop.permute.xlu0 %3604
      %3606 = vrot.lane.b32.xlu0 %v2634, 32
      %v3607 = vpop.permute.xlu0 %3606
      %3608 = vrot.lane.b32.xlu0 %v2635, 32
      %v3609 = vpop.permute.xlu0 %3608
      %3610 = vrot.lane.b32.xlu0 %v2636, 32
      %v3611 = vpop.permute.xlu0 %3610
      %3612 = vrot.lane.b32.xlu0 %v2637, 32
      %v3613 = vpop.permute.xlu0 %3612
      %3614 = vrot.lane.b32.xlu0 %v2638, 32
      %v3615 = vpop.permute.xlu0 %3614
      %3616 = vrot.lane.b32.xlu0 %v2639, 32
      %v3617 = vpop.permute.xlu0 %3616
      %3618 = vrot.lane.b32.xlu0 %v2640, 32
      %v3619 = vpop.permute.xlu0 %3618
      %3620 = vrot.lane.b32.xlu0 %v2641, 32
      %v3621 = vpop.permute.xlu0 %3620
      %3622 = vrot.lane.b32.xlu0 %v2642, 32
      %v3623 = vpop.permute.xlu0 %3622
      %3624 = vrot.lane.b32.xlu0 %v2643, 32
      %v3625 = vpop.permute.xlu0 %3624
      %3626 = vrot.lane.b32.xlu0 %v2644, 32
      %v3627 = vpop.permute.xlu0 %3626
      %3628 = vrot.lane.b32.xlu0 %v2645, 32
      %v3629 = vpop.permute.xlu0 %3628
      %3630 = vrot.lane.b32.xlu0 %v2646, 32
      %v3631 = vpop.permute.xlu0 %3630
      %3632 = vrot.lane.b32.xlu0 %v2647, 32
      %v3633 = vpop.permute.xlu0 %3632
      %3634 = vrot.lane.b32.xlu0 %v2648, 32
      %v3635 = vpop.permute.xlu0 %3634
      %3636 = vrot.lane.b32.xlu0 %v2649, 32
      %v3637 = vpop.permute.xlu0 %3636
      %3638 = vrot.lane.b32.xlu0 %v2650, 32
      %v3639 = vpop.permute.xlu0 %3638
      %3640 = vrot.lane.b32.xlu0 %v2651, 32
      %v3641 = vpop.permute.xlu0 %3640
      %3642 = vrot.lane.b32.xlu0 %v2652, 32
      %v3643 = vpop.permute.xlu0 %3642
      %3644 = vrot.lane.b32.xlu0 %v2653, 32
      %v3645 = vpop.permute.xlu0 %3644
      %v3678 = vsel %vm279, %v2365, %v2687
      %v3679 = vsel %vm279, %v2366, %v2689
      %v3680 = vsel %vm279, %v2367, %v2691
      %v3681 = vsel %vm279, %v2368, %v2693
      %v3682 = vsel %vm279, %v2369, %v2695
      %v3683 = vsel %vm279, %v2370, %v2697
      %v3684 = vsel %vm279, %v2371, %v2699
      %v3685 = vsel %vm279, %v2372, %v2701
      %v3686 = vsel %vm279, %v2373, %v2703
      %v3687 = vsel %vm279, %v2374, %v2705
      %v3688 = vsel %vm279, %v2375, %v2707
      %v3689 = vsel %vm279, %v2376, %v2709
      %v3690 = vsel %vm279, %v2377, %v2711
      %v3691 = vsel %vm279, %v2378, %v2713
      %v3692 = vsel %vm279, %v2379, %v2715
      %v3693 = vsel %vm279, %v2380, %v2717
      %v3694 = vsel %vm279, %v2381, %v2719
      %v3695 = vsel %vm279, %v2382, %v2721
      %v3696 = vsel %vm279, %v2383, %v2723
      %v3697 = vsel %vm279, %v2384, %v2725
      %v3698 = vsel %vm279, %v2385, %v2727
      %v3699 = vsel %vm279, %v2386, %v2729
      %v3700 = vsel %vm279, %v2387, %v2731
      %v3701 = vsel %vm279, %v2388, %v2733
      %v3702 = vsel %vm279, %v2389, %v2735
      %v3703 = vsel %vm279, %v2390, %v2737
      %v3704 = vsel %vm279, %v2391, %v2739
      %v3705 = vsel %vm279, %v2392, %v2741
      %v3706 = vsel %vm279, %v2393, %v2743
      %v3707 = vsel %vm279, %v2394, %v2745
      %v3708 = vsel %vm279, %v2395, %v2747
      %v3709 = vsel %vm279, %v2396, %v2749
      %v3710 = vsel %vm1778, %v3678, %v2815
      %v3711 = vsel %vm1778, %v3679, %v2817
      %v3712 = vsel %vm1778, %v3680, %v2819
      %v3713 = vsel %vm1778, %v3681, %v2821
      %v3714 = vsel %vm1778, %v3682, %v2823
      %v3715 = vsel %vm1778, %v3683, %v2825
      %v3716 = vsel %vm1778, %v3684, %v2827
      %v3717 = vsel %vm1778, %v3685, %v2829
      %v3718 = vsel %vm1778, %v3686, %v2831
      %v3719 = vsel %vm1778, %v3687, %v2833
      %v3720 = vsel %vm1778, %v3688, %v2835
      %v3721 = vsel %vm1778, %v3689, %v2837
      %v3722 = vsel %vm1778, %v3690, %v2839
      %v3723 = vsel %vm1778, %v3691, %v2841
      %v3724 = vsel %vm1778, %v3692, %v2843
      %v3725 = vsel %vm1778, %v3693, %v2845
      %v3726 = vsel %vm1778, %v3694, %v2847
      %v3727 = vsel %vm1778, %v3695, %v2849
      %v3728 = vsel %vm1778, %v3696, %v2851
      %v3729 = vsel %vm1778, %v3697, %v2853
      %v3730 = vsel %vm1778, %v3698, %v2855
      %v3731 = vsel %vm1778, %v3699, %v2857
      %v3732 = vsel %vm1778, %v3700, %v2859
      %v3733 = vsel %vm1778, %v3701, %v2861
      %v3734 = vsel %vm1778, %v3702, %v2863
      %v3735 = vsel %vm1778, %v3703, %v2865
      %v3736 = vsel %vm1778, %v3704, %v2867
      %v3737 = vsel %vm1778, %v3705, %v2869
      %v3738 = vsel %vm1778, %v3706, %v2871
      %v3739 = vsel %vm1778, %v3707, %v2873
      %v3740 = vsel %vm1778, %v3708, %v2875
      %v3741 = vsel %vm1778, %v3709, %v2877
      %v3742 = vsel %vm1811, %v3710, %v2943
      %v3743 = vsel %vm1811, %v3711, %v2945
      %v3744 = vsel %vm1811, %v3712, %v2947
      %v3745 = vsel %vm1811, %v3713, %v2949
      %v3746 = vsel %vm1811, %v3714, %v2951
      %v3747 = vsel %vm1811, %v3715, %v2953
      %v3748 = vsel %vm1811, %v3716, %v2955
      %v3749 = vsel %vm1811, %v3717, %v2957
      %v3750 = vsel %vm1811, %v3718, %v2959
      %v3751 = vsel %vm1811, %v3719, %v2961
      %v3752 = vsel %vm1811, %v3720, %v2963
      %v3753 = vsel %vm1811, %v3721, %v2965
      %v3754 = vsel %vm1811, %v3722, %v2967
      %v3755 = vsel %vm1811, %v3723, %v2969
      %v3756 = vsel %vm1811, %v3724, %v2971
      %v3757 = vsel %vm1811, %v3725, %v2973
      %v3758 = vsel %vm1811, %v3726, %v2975
      %v3759 = vsel %vm1811, %v3727, %v2977
      %v3760 = vsel %vm1811, %v3728, %v2979
      %v3761 = vsel %vm1811, %v3729, %v2981
      %v3762 = vsel %vm1811, %v3730, %v2983
      %v3763 = vsel %vm1811, %v3731, %v2985
      %v3764 = vsel %vm1811, %v3732, %v2987
      %v3765 = vsel %vm1811, %v3733, %v2989
      %v3766 = vsel %vm1811, %v3734, %v2991
      %v3767 = vsel %vm1811, %v3735, %v2993
      %v3768 = vsel %vm1811, %v3736, %v2995
      %v3769 = vsel %vm1811, %v3737, %v2997
      %v3770 = vsel %vm1811, %v3738, %v2999
      %v3771 = vsel %vm1811, %v3739, %v3001
      %v3772 = vsel %vm1811, %v3740, %v3003
      %v3773 = vsel %vm1811, %v3741, %v3005
      %v3774 = vsel %vm1844, %v3742, %v3071
      %v3775 = vsel %vm1844, %v3743, %v3073
      %v3776 = vsel %vm1844, %v3744, %v3075
      %v3777 = vsel %vm1844, %v3745, %v3077
      %v3778 = vsel %vm1844, %v3746, %v3079
      %v3779 = vsel %vm1844, %v3747, %v3081
      %v3780 = vsel %vm1844, %v3748, %v3083
      %v3781 = vsel %vm1844, %v3749, %v3085
      %v3782 = vsel %vm1844, %v3750, %v3087
      %v3783 = vsel %vm1844, %v3751, %v3089
      %v3784 = vsel %vm1844, %v3752, %v3091
      %v3785 = vsel %vm1844, %v3753, %v3093
      %v3786 = vsel %vm1844, %v3754, %v3095
      %v3787 = vsel %vm1844, %v3755, %v3097
      %v3788 = vsel %vm1844, %v3756, %v3099
      %v3789 = vsel %vm1844, %v3757, %v3101
      %v3790 = vsel %vm1844, %v3758, %v3103
      %v3791 = vsel %vm1844, %v3759, %v3105
      %v3792 = vsel %vm1844, %v3760, %v3107
      %v3793 = vsel %vm1844, %v3761, %v3109
      %v3794 = vsel %vm1844, %v3762, %v3111
      %v3795 = vsel %vm1844, %v3763, %v3113
      %v3796 = vsel %vm1844, %v3764, %v3115
      %v3797 = vsel %vm1844, %v3765, %v3117
      %v3798 = vsel %vm1844, %v3766, %v3119
      %v3799 = vsel %vm1844, %v3767, %v3121
      %v3800 = vsel %vm1844, %v3768, %v3123
      %v3801 = vsel %vm1844, %v3769, %v3125
      %v3802 = vsel %vm1844, %v3770, %v3127
      %v3803 = vsel %vm1844, %v3771, %v3129
      %v3804 = vsel %vm1844, %v3772, %v3131
      %v3805 = vsel %vm1844, %v3773, %v3133
      %v3806 = vsel %vm1877, %v3774, %v3199
      %v3807 = vsel %vm1877, %v3775, %v3201
      %v3808 = vsel %vm1877, %v3776, %v3203
      %v3809 = vsel %vm1877, %v3777, %v3205
      %v3810 = vsel %vm1877, %v3778, %v3207
      %v3811 = vsel %vm1877, %v3779, %v3209
      %v3812 = vsel %vm1877, %v3780, %v3211
      %v3813 = vsel %vm1877, %v3781, %v3213
      %v3814 = vsel %vm1877, %v3782, %v3215
      %v3815 = vsel %vm1877, %v3783, %v3217
      %v3816 = vsel %vm1877, %v3784, %v3219
      %v3817 = vsel %vm1877, %v3785, %v3221
      %v3818 = vsel %vm1877, %v3786, %v3223
      %v3819 = vsel %vm1877, %v3787, %v3225
      %v3820 = vsel %vm1877, %v3788, %v3227
      %v3821 = vsel %vm1877, %v3789, %v3229
      %v3822 = vsel %vm1877, %v3790, %v3231
      %v3823 = vsel %vm1877, %v3791, %v3233
      %v3824 = vsel %vm1877, %v3792, %v3235
      %v3825 = vsel %vm1877, %v3793, %v3237
      %v3826 = vsel %vm1877, %v3794, %v3239
      %v3827 = vsel %vm1877, %v3795, %v3241
      %v3828 = vsel %vm1877, %v3796, %v3243
      %v3829 = vsel %vm1877, %v3797, %v3245
      %v3830 = vsel %vm1877, %v3798, %v3247
      %v3831 = vsel %vm1877, %v3799, %v3249
      %v3832 = vsel %vm1877, %v3800, %v3251
      %v3833 = vsel %vm1877, %v3801, %v3253
      %v3834 = vsel %vm1877, %v3802, %v3255
      %v3835 = vsel %vm1877, %v3803, %v3257
      %v3836 = vsel %vm1877, %v3804, %v3259
      %v3837 = vsel %vm1877, %v3805, %v3261
      %v3838 = vsel %vm1910, %v3806, %v3327
      %v3839 = vsel %vm1910, %v3807, %v3329
      %v3840 = vsel %vm1910, %v3808, %v3331
      %v3841 = vsel %vm1910, %v3809, %v3333
      %v3842 = vsel %vm1910, %v3810, %v3335
      %v3843 = vsel %vm1910, %v3811, %v3337
      %v3844 = vsel %vm1910, %v3812, %v3339
      %v3845 = vsel %vm1910, %v3813, %v3341
      %v3846 = vsel %vm1910, %v3814, %v3343
      %v3847 = vsel %vm1910, %v3815, %v3345
      %v3848 = vsel %vm1910, %v3816, %v3347
      %v3849 = vsel %vm1910, %v3817, %v3349
      %v3850 = vsel %vm1910, %v3818, %v3351
      %v3851 = vsel %vm1910, %v3819, %v3353
      %v3852 = vsel %vm1910, %v3820, %v3355
      %v3853 = vsel %vm1910, %v3821, %v3357
      %v3854 = vsel %vm1910, %v3822, %v3359
      %v3855 = vsel %vm1910, %v3823, %v3361
      %v3856 = vsel %vm1910, %v3824, %v3363
      %v3857 = vsel %vm1910, %v3825, %v3365
      %v3858 = vsel %vm1910, %v3826, %v3367
      %v3859 = vsel %vm1910, %v3827, %v3369
      %v3860 = vsel %vm1910, %v3828, %v3371
      %v3861 = vsel %vm1910, %v3829, %v3373
      %v3862 = vsel %vm1910, %v3830, %v3375
      %v3863 = vsel %vm1910, %v3831, %v3377
      %v3864 = vsel %vm1910, %v3832, %v3379
      %v3865 = vsel %vm1910, %v3833, %v3381
      %v3866 = vsel %vm1910, %v3834, %v3383
      %v3867 = vsel %vm1910, %v3835, %v3385
      %v3868 = vsel %vm1910, %v3836, %v3387
      %v3869 = vsel %vm1910, %v3837, %v3389
      %v3870 = vsel %vm1943, %v3838, %v3455
      %v3871 = vsel %vm1943, %v3839, %v3457
      %v3872 = vsel %vm1943, %v3840, %v3459
      %v3873 = vsel %vm1943, %v3841, %v3461
      %v3874 = vsel %vm1943, %v3842, %v3463
      %v3875 = vsel %vm1943, %v3843, %v3465
      %v3876 = vsel %vm1943, %v3844, %v3467
      %v3877 = vsel %vm1943, %v3845, %v3469
      %v3878 = vsel %vm1943, %v3846, %v3471
      %v3879 = vsel %vm1943, %v3847, %v3473
      %v3880 = vsel %vm1943, %v3848, %v3475
      %v3881 = vsel %vm1943, %v3849, %v3477
      %v3882 = vsel %vm1943, %v3850, %v3479
      %v3883 = vsel %vm1943, %v3851, %v3481
      %v3884 = vsel %vm1943, %v3852, %v3483
      %v3885 = vsel %vm1943, %v3853, %v3485
      %v3886 = vsel %vm1943, %v3854, %v3487
      %v3887 = vsel %vm1943, %v3855, %v3489
      %v3888 = vsel %vm1943, %v3856, %v3491
      %v3889 = vsel %vm1943, %v3857, %v3493
      %v3890 = vsel %vm1943, %v3858, %v3495
      %v3891 = vsel %vm1943, %v3859, %v3497
      %v3892 = vsel %vm1943, %v3860, %v3499
      %v3893 = vsel %vm1943, %v3861, %v3501
      %v3894 = vsel %vm1943, %v3862, %v3503
      %v3895 = vsel %vm1943, %v3863, %v3505
      %v3896 = vsel %vm1943, %v3864, %v3507
      %v3897 = vsel %vm1943, %v3865, %v3509
      %v3898 = vsel %vm1943, %v3866, %v3511
      %v3899 = vsel %vm1943, %v3867, %v3513
      %v3900 = vsel %vm1943, %v3868, %v3515
      %v3901 = vsel %vm1943, %v3869, %v3517
      %v3902 = vsel %vm1976, %v3870, %v3583
      %v3903 = vsel %vm1976, %v3871, %v3585
      %v3904 = vsel %vm1976, %v3872, %v3587
      %v3905 = vsel %vm1976, %v3873, %v3589
      %v3906 = vsel %vm1976, %v3874, %v3591
      %v3907 = vsel %vm1976, %v3875, %v3593
      %v3908 = vsel %vm1976, %v3876, %v3595
      %v3909 = vsel %vm1976, %v3877, %v3597
      %v3910 = vsel %vm1976, %v3878, %v3599
      %v3911 = vsel %vm1976, %v3879, %v3601
      %v3912 = vsel %vm1976, %v3880, %v3603
      %v3913 = vsel %vm1976, %v3881, %v3605
      %v3914 = vsel %vm1976, %v3882, %v3607
      %v3915 = vsel %vm1976, %v3883, %v3609
      %v3916 = vsel %vm1976, %v3884, %v3611
      %v3917 = vsel %vm1976, %v3885, %v3613
      %v3918 = vsel %vm1976, %v3886, %v3615
      %v3919 = vsel %vm1976, %v3887, %v3617
      %v3920 = vsel %vm1976, %v3888, %v3619
      %v3921 = vsel %vm1976, %v3889, %v3621
      %v3922 = vsel %vm1976, %v3890, %v3623
      %v3923 = vsel %vm1976, %v3891, %v3625
      %v3924 = vsel %vm1976, %v3892, %v3627
      %v3925 = vsel %vm1976, %v3893, %v3629
      %v3926 = vsel %vm1976, %v3894, %v3631
      %v3927 = vsel %vm1976, %v3895, %v3633
      %v3928 = vsel %vm1976, %v3896, %v3635
      %v3929 = vsel %vm1976, %v3897, %v3637
      %v3930 = vsel %vm1976, %v3898, %v3639
      %v3931 = vsel %vm1976, %v3899, %v3641
      %v3932 = vsel %vm1976, %v3900, %v3643
      %v3933 = vsel %vm1976, %v3901, %v3645
      %v3934 = vld [vmem:[%s4] sm:$0xff]
      %v3935 = vld [vmem:[%s4 + $0x8] sm:$0xff]
      %v3936 = vld [vmem:[%s4 + $0x10] sm:$0xff]
      %v3937 = vld [vmem:[%s4 + $0x18] sm:$0xff]
      %v3938 = vld [vmem:[%s4 + $0x20] sm:$0xf]
      %v3940 = vsel %vm2014, %v3902, 0
      %v3943 = vsel %vm2014, %v3903, 0
      %v3946 = vsel %vm2014, %v3904, 0
      %v3949 = vsel %vm2014, %v3905, 0
      %v3952 = vsel %vm2014, %v3906, 0
      %v3955 = vsel %vm2014, %v3907, 0
      %v3958 = vsel %vm2014, %v3908, 0
      %v3961 = vsel %vm2014, %v3909, 0
      %v3964 = vsel %vm2014, %v3910, 0
      %v3967 = vsel %vm2014, %v3911, 0
      %v3970 = vsel %vm2014, %v3912, 0
      %v3973 = vsel %vm2014, %v3913, 0
      %v3976 = vsel %vm2014, %v3914, 0
      %v3979 = vsel %vm2014, %v3915, 0
      %v3982 = vsel %vm2014, %v3916, 0
      %v3985 = vsel %vm2014, %v3917, 0
      %v3988 = vsel %vm2014, %v3918, 0
      %v3991 = vsel %vm2014, %v3919, 0
      %v3994 = vsel %vm2014, %v3920, 0
      %v3997 = vsel %vm2014, %v3921, 0
      %v4000 = vsel %vm2014, %v3922, 0
      %v4003 = vsel %vm2014, %v3923, 0
      %v4006 = vsel %vm2014, %v3924, 0
      %v4009 = vsel %vm2014, %v3925, 0
      %v4012 = vsel %vm2014, %v3926, 0
      %v4015 = vsel %vm2014, %v3927, 0
      %v4018 = vsel %vm2014, %v3928, 0
      %v4021 = vsel %vm2014, %v3929, 0
      %v4024 = vsel %vm2014, %v3930, 0
      %v4027 = vsel %vm2014, %v3931, 0
      %v4030 = vsel %vm2014, %v3932, 0
      %v4033 = vsel %vm2014, %v3933, 0
      %v4036 = vsel %vm2111, %v3938, 0
      %4038 = vmatpush.msra.mxu0 0.0
      %4039 = vmatpush.msra.mxu0 0.0
      %4040 = vmatpush.msra.mxu0 0.0
      %4041 = vmatpush.msra.mxu0 0.0
      %4042 = vmatpush.msra.mxu0 0.0
      %4043 = vmatpush.msra.mxu0 0.0
      %4044 = vmatpush.msra.mxu0 0.0
      %4045 = vmatpush.msra.mxu0 0.0
      %4046 = vmatpush.msra.mxu0 0.0
      %4047 = vmatpush.msra.mxu0 0.0
      %4048 = vmatpush.msra.mxu0 0.0
      %4049 = vmatpush.msra.mxu0 %v4036
      %4050 = vmatpush.msra.mxu0 %v3937
      %4051 = vmatpush.msra.mxu0 %v3936
      %4052 = vmatpush.msra.mxu0 %v3935
      %4053 = vmatpush.msra.mxu0 %v3934
      %4054 = vmatmul.f32.gmra.mxu0 %v3940
      %v4055 = vpop.f32.mrf.mxu0
      %v4056 = vadd.f32 0.0, %v4055
      %4057 = vmatmul.f32.gmra.mxu0 %v3943
      %v4058 = vpop.f32.mrf.mxu0
      %v4059 = vadd.f32 0.0, %v4058
      %4060 = vmatmul.f32.gmra.mxu0 %v3946
      %v4061 = vpop.f32.mrf.mxu0
      %v4062 = vadd.f32 0.0, %v4061
      %4063 = vmatmul.f32.gmra.mxu0 %v3949
      %v4064 = vpop.f32.mrf.mxu0
      %v4065 = vadd.f32 0.0, %v4064
      %4066 = vmatmul.f32.gmra.mxu0 %v3952
      %v4067 = vpop.f32.mrf.mxu0
      %v4068 = vadd.f32 0.0, %v4067
      %4069 = vmatmul.f32.gmra.mxu0 %v3955
      %v4070 = vpop.f32.mrf.mxu0
      %v4071 = vadd.f32 0.0, %v4070
      %4072 = vmatmul.f32.gmra.mxu0 %v3958
      %v4073 = vpop.f32.mrf.mxu0
      %v4074 = vadd.f32 0.0, %v4073
      %4075 = vmatmul.f32.gmra.mxu0 %v3961
      %v4076 = vpop.f32.mrf.mxu0
      %v4077 = vadd.f32 0.0, %v4076
      %4078 = vmatmul.f32.gmra.mxu0 %v3964
      %v4079 = vpop.f32.mrf.mxu0
      %v4080 = vadd.f32 0.0, %v4079
      %4081 = vmatmul.f32.gmra.mxu0 %v3967
      %v4082 = vpop.f32.mrf.mxu0
      %v4083 = vadd.f32 0.0, %v4082
      %4084 = vmatmul.f32.gmra.mxu0 %v3970
      %v4085 = vpop.f32.mrf.mxu0
      %v4086 = vadd.f32 0.0, %v4085
      %4087 = vmatmul.f32.gmra.mxu0 %v3973
      %v4088 = vpop.f32.mrf.mxu0
      %v4089 = vadd.f32 0.0, %v4088
      %4090 = vmatmul.f32.gmra.mxu0 %v3976
      %v4091 = vpop.f32.mrf.mxu0
      %v4092 = vadd.f32 0.0, %v4091
      %4093 = vmatmul.f32.gmra.mxu0 %v3979
      %v4094 = vpop.f32.mrf.mxu0
      %v4095 = vadd.f32 0.0, %v4094
      %4096 = vmatmul.f32.gmra.mxu0 %v3982
      %v4097 = vpop.f32.mrf.mxu0
      %v4098 = vadd.f32 0.0, %v4097
      %4099 = vmatmul.f32.gmra.mxu0 %v3985
      %v4100 = vpop.f32.mrf.mxu0
      %v4101 = vadd.f32 0.0, %v4100
      %4102 = vmatmul.f32.gmra.mxu0 %v3988
      %v4103 = vpop.f32.mrf.mxu0
      %v4104 = vadd.f32 0.0, %v4103
      %4105 = vmatmul.f32.gmra.mxu0 %v3991
      %v4106 = vpop.f32.mrf.mxu0
      %v4107 = vadd.f32 0.0, %v4106
      %4108 = vmatmul.f32.gmra.mxu0 %v3994
      %v4109 = vpop.f32.mrf.mxu0
      %v4110 = vadd.f32 0.0, %v4109
      %4111 = vmatmul.f32.gmra.mxu0 %v3997
      %v4112 = vpop.f32.mrf.mxu0
      %v4113 = vadd.f32 0.0, %v4112
      %4114 = vmatmul.f32.gmra.mxu0 %v4000
      %v4115 = vpop.f32.mrf.mxu0
      %v4116 = vadd.f32 0.0, %v4115
      %4117 = vmatmul.f32.gmra.mxu0 %v4003
      %v4118 = vpop.f32.mrf.mxu0
      %v4119 = vadd.f32 0.0, %v4118
      %4120 = vmatmul.f32.gmra.mxu0 %v4006
      %v4121 = vpop.f32.mrf.mxu0
      %v4122 = vadd.f32 0.0, %v4121
      %4123 = vmatmul.f32.gmra.mxu0 %v4009
      %v4124 = vpop.f32.mrf.mxu0
      %v4125 = vadd.f32 0.0, %v4124
      %4126 = vmatmul.f32.gmra.mxu0 %v4012
      %v4127 = vpop.f32.mrf.mxu0
      %v4128 = vadd.f32 0.0, %v4127
      %4129 = vmatmul.f32.gmra.mxu0 %v4015
      %v4130 = vpop.f32.mrf.mxu0
      %v4131 = vadd.f32 0.0, %v4130
      %4132 = vmatmul.f32.gmra.mxu0 %v4018
      %v4133 = vpop.f32.mrf.mxu0
      %v4134 = vadd.f32 0.0, %v4133
      %4135 = vmatmul.f32.gmra.mxu0 %v4021
      %v4136 = vpop.f32.mrf.mxu0
      %v4137 = vadd.f32 0.0, %v4136
      %4138 = vmatmul.f32.gmra.mxu0 %v4024
      %v4139 = vpop.f32.mrf.mxu0
      %v4140 = vadd.f32 0.0, %v4139
      %4141 = vmatmul.f32.gmra.mxu0 %v4027
      %v4142 = vpop.f32.mrf.mxu0
      %v4143 = vadd.f32 0.0, %v4142
      %4144 = vmatmul.f32.gmra.mxu0 %v4030
      %v4145 = vpop.f32.mrf.mxu0
      %v4146 = vadd.f32 0.0, %v4145
      %4147 = vmatmul.f32.gmra.mxu0 %v4033
      %v4148 = vpop.f32.mrf.mxu0
      %v4149 = vadd.f32 0.0, %v4148
      %4150 = vdwg.mxu0
      %v4151 = vld [vmem:[%s5] sm:$0x1]
      %v4153 = vperm.slane %v4151, 0
      %v4155 = vmul.f32 %v4056, %v4153
      %v4156 = vmul.f32 %v4059, %v4153
      %v4157 = vmul.f32 %v4062, %v4153
      %v4158 = vmul.f32 %v4065, %v4153
      %v4159 = vmul.f32 %v4068, %v4153
      %v4160 = vmul.f32 %v4071, %v4153
      %v4161 = vmul.f32 %v4074, %v4153
      %v4162 = vmul.f32 %v4077, %v4153
      %v4163 = vmul.f32 %v4080, %v4153
      %v4164 = vmul.f32 %v4083, %v4153
      %v4165 = vmul.f32 %v4086, %v4153
      %v4166 = vmul.f32 %v4089, %v4153
      %v4167 = vmul.f32 %v4092, %v4153
      %v4168 = vmul.f32 %v4095, %v4153
      %v4169 = vmul.f32 %v4098, %v4153
      %v4170 = vmul.f32 %v4101, %v4153
      %v4171 = vmul.f32 %v4104, %v4153
      %v4172 = vmul.f32 %v4107, %v4153
      %v4173 = vmul.f32 %v4110, %v4153
      %v4174 = vmul.f32 %v4113, %v4153
      %v4175 = vmul.f32 %v4116, %v4153
      %v4176 = vmul.f32 %v4119, %v4153
      %v4177 = vmul.f32 %v4122, %v4153
      %v4178 = vmul.f32 %v4125, %v4153
      %v4179 = vmul.f32 %v4128, %v4153
      %v4180 = vmul.f32 %v4131, %v4153
      %v4181 = vmul.f32 %v4134, %v4153
      %v4182 = vmul.f32 %v4137, %v4153
      %v4183 = vmul.f32 %v4140, %v4153
      %v4184 = vmul.f32 %v4143, %v4153
      %v4185 = vmul.f32 %v4146, %v4153
      %v4186 = vmul.f32 %v4149, %v4153
      %v4187 = vld [vmem:[%s6] sm:$0x1]
      %v4189 = vperm.slane %v4187, 0
      %v4191 = vadd.f32 %v4155, %v4189
      %v4192 = vadd.f32 %v4156, %v4189
      %v4193 = vadd.f32 %v4157, %v4189
      %v4194 = vadd.f32 %v4158, %v4189
      %v4195 = vadd.f32 %v4159, %v4189
      %v4196 = vadd.f32 %v4160, %v4189
      %v4197 = vadd.f32 %v4161, %v4189
      %v4198 = vadd.f32 %v4162, %v4189
      %v4199 = vadd.f32 %v4163, %v4189
      %v4200 = vadd.f32 %v4164, %v4189
      %v4201 = vadd.f32 %v4165, %v4189
      %v4202 = vadd.f32 %v4166, %v4189
      %v4203 = vadd.f32 %v4167, %v4189
      %v4204 = vadd.f32 %v4168, %v4189
      %v4205 = vadd.f32 %v4169, %v4189
      %v4206 = vadd.f32 %v4170, %v4189
      %v4207 = vadd.f32 %v4171, %v4189
      %v4208 = vadd.f32 %v4172, %v4189
      %v4209 = vadd.f32 %v4173, %v4189
      %v4210 = vadd.f32 %v4174, %v4189
      %v4211 = vadd.f32 %v4175, %v4189
      %v4212 = vadd.f32 %v4176, %v4189
      %v4213 = vadd.f32 %v4177, %v4189
      %v4214 = vadd.f32 %v4178, %v4189
      %v4215 = vadd.f32 %v4179, %v4189
      %v4216 = vadd.f32 %v4180, %v4189
      %v4217 = vadd.f32 %v4181, %v4189
      %v4218 = vadd.f32 %v4182, %v4189
      %v4219 = vadd.f32 %v4183, %v4189
      %v4220 = vadd.f32 %v4184, %v4189
      %v4221 = vadd.f32 %v4185, %v4189
      %v4222 = vadd.f32 %v4186, %v4189
      %v4223 = vmax.f32 %v4191, 0.0
      %v4224 = vmax.f32 %v4192, 0.0
      %v4225 = vmax.f32 %v4193, 0.0
      %v4226 = vmax.f32 %v4194, 0.0
      %v4227 = vmax.f32 %v4195, 0.0
      %v4228 = vmax.f32 %v4196, 0.0
      %v4229 = vmax.f32 %v4197, 0.0
      %v4230 = vmax.f32 %v4198, 0.0
      %v4231 = vmax.f32 %v4199, 0.0
      %v4232 = vmax.f32 %v4200, 0.0
      %v4233 = vmax.f32 %v4201, 0.0
      %v4234 = vmax.f32 %v4202, 0.0
      %v4235 = vmax.f32 %v4203, 0.0
      %v4236 = vmax.f32 %v4204, 0.0
      %v4237 = vmax.f32 %v4205, 0.0
      %v4238 = vmax.f32 %v4206, 0.0
      %v4239 = vmax.f32 %v4207, 0.0
      %v4240 = vmax.f32 %v4208, 0.0
      %v4241 = vmax.f32 %v4209, 0.0
      %v4242 = vmax.f32 %v4210, 0.0
      %v4243 = vmax.f32 %v4211, 0.0
      %v4244 = vmax.f32 %v4212, 0.0
      %v4245 = vmax.f32 %v4213, 0.0
      %v4246 = vmax.f32 %v4214, 0.0
      %v4247 = vmax.f32 %v4215, 0.0
      %v4248 = vmax.f32 %v4216, 0.0
      %v4249 = vmax.f32 %v4217, 0.0
      %v4250 = vmax.f32 %v4218, 0.0
      %v4251 = vmax.f32 %v4219, 0.0
      %v4252 = vmax.f32 %v4220, 0.0
      %v4253 = vmax.f32 %v4221, 0.0
      %v4254 = vmax.f32 %v4222, 0.0
      %4255 = vst.msk [vmem:[%s278] sm:$0xff] %vm1778, %v4223
      %4256 = vst.msk [vmem:[%s278 + $0x8] sm:$0xff] %vm1778, %v4224
      %4257 = vst.msk [vmem:[%s278 + $0x10] sm:$0xff] %vm1778, %v4225
      %4258 = vst.msk [vmem:[%s278 + $0x18] sm:$0xff] %vm1778, %v4226
      %4259 = vst.msk [vmem:[%s278 + $0x20] sm:$0xff] %vm1778, %v4227
      %4260 = vst.msk [vmem:[%s278 + $0x28] sm:$0xff] %vm1778, %v4228
      %4261 = vst.msk [vmem:[%s278 + $0x30] sm:$0xff] %vm1778, %v4229
      %4262 = vst.msk [vmem:[%s278 + $0x38] sm:$0xff] %vm1778, %v4230
      %4263 = vst.msk [vmem:[%s278 + $0x40] sm:$0xff] %vm1778, %v4231
      %4264 = vst.msk [vmem:[%s278 + $0x48] sm:$0xff] %vm1778, %v4232
      %4265 = vst.msk [vmem:[%s278 + $0x50] sm:$0xff] %vm1778, %v4233
      %4266 = vst.msk [vmem:[%s278 + $0x58] sm:$0xff] %vm1778, %v4234
      %4267 = vst.msk [vmem:[%s278 + $0x60] sm:$0xff] %vm1778, %v4235
      %4268 = vst.msk [vmem:[%s278 + $0x68] sm:$0xff] %vm1778, %v4236
      %4269 = vst.msk [vmem:[%s278 + $0x70] sm:$0xff] %vm1778, %v4237
      %4270 = vst.msk [vmem:[%s278 + $0x78] sm:$0xff] %vm1778, %v4238
      %4271 = vst.msk [vmem:[%s278 + $0x80] sm:$0xff] %vm1778, %v4239
      %4272 = vst.msk [vmem:[%s278 + $0x88] sm:$0xff] %vm1778, %v4240
      %4273 = vst.msk [vmem:[%s278 + $0x90] sm:$0xff] %vm1778, %v4241
      %4274 = vst.msk [vmem:[%s278 + $0x98] sm:$0xff] %vm1778, %v4242
      %4275 = vst.msk [vmem:[%s278 + $0xa0] sm:$0xff] %vm1778, %v4243
      %4276 = vst.msk [vmem:[%s278 + $0xa8] sm:$0xff] %vm1778, %v4244
      %4277 = vst.msk [vmem:[%s278 + $0xb0] sm:$0xff] %vm1778, %v4245
      %4278 = vst.msk [vmem:[%s278 + $0xb8] sm:$0xff] %vm1778, %v4246
      %4279 = vst.msk [vmem:[%s278 + $0xc0] sm:$0xff] %vm1778, %v4247
      %4280 = vst.msk [vmem:[%s278 + $0xc8] sm:$0xff] %vm1778, %v4248
      %4281 = vst.msk [vmem:[%s278 + $0xd0] sm:$0xff] %vm1778, %v4249
      %4282 = vst.msk [vmem:[%s278 + $0xd8] sm:$0xff] %vm1778, %v4250
      %4283 = vst.msk [vmem:[%s278 + $0xe0] sm:$0xff] %vm1778, %v4251
      %4284 = vst.msk [vmem:[%s278 + $0xe8] sm:$0xff] %vm1778, %v4252
      %4285 = vst.msk [vmem:[%s278 + $0xf0] sm:$0xff] %vm1778, %v4253
      %4286 = vst.msk [vmem:[%s278 + $0xf8] sm:$0xff] %vm1778, %v4254
      %p4287 = scmp.lt.s32.totalorder %s18, 1
      %s4288 = scalar_select %p4287, %s18, 1
      %s4289 = smul.addr %s4288, 32
      %s4290 = smul.addr %s4289, 8
      %s4291 = scalar_lea.vmem %s7, %s4290
      // Predicated region
      $region49: #{tpu_custom_call.1} parent=47 // pred_check
        %p4292 = pneg %p188
      $region50: #{tpu_custom_call.1} parent=47 // pred_check_branch
        %4294 = sbr.rel (%p4292) target = $region52
      $region51: #{tpu_custom_call.1} parent=47 // pred_region
        _
      $region52: #{tpu_custom_call.1} parent=47 // pred_fallthru
        _
    $region48: #{tpu_custom_call.1} parent=5 // pred_fallthru
      _
    %p4295 = scmp.le.s32.totalorder 2, %s13
    // Predicated region
    $region53: #{tpu_custom_call.1} parent=5 // pred_check
      %p4296 = pneg %p4295
    $region54: #{tpu_custom_call.1} parent=5 // pred_check_branch
      %4298 = sbr.rel (%p4296) target = $region56
    $region55: #{tpu_custom_call.1} parent=5 // pred_region
      %s4299 = ssub.s32 %s13, 2
      // Predicated region
      $region57: #{tpu_custom_call.1} parent=55 // pred_check
        %p4300 = pneg %p194
      $region58: #{tpu_custom_call.1} parent=55 // pred_check_branch
        %4302 = sbr.rel (%p4300) target = $region60
      $region59: #{tpu_custom_call.1} parent=55 // pred_region
        %p4303 = scmp.lt.s32.totalorder %s19, 1
        %s4304 = scalar_select %p4303, %s19, 1
        %s4305 = smul.addr %s4304, 32
        %s4306 = smul.addr %s4305, 8
        %s4307 = scalar_lea.vmem %s7, %s4306
      $region60: #{tpu_custom_call.1} parent=55 // pred_fallthru
        _
    $region56: #{tpu_custom_call.1} parent=5 // pred_fallthru
      _
  $region6: #{tpu_custom_call.1} parent=0 // loop_footer
    %s17 = sadd.s32 1, %s13
  $region7: #{tpu_custom_call.1} parent=0 // loop_footer_branch
    %12 = sbr.rel target = $region3
  $region8: #{tpu_custom_call.1} parent=0 // loop_exit
    _

// kernel: tpu_custom_call.1
$region0: #{tpu_custom_call.1}
  #allocation0 [shape = 'u32[]', space=smem, size = 0x4, offset = 0x4, fixed_abs, tag = 'smem constant byte address 0x4 - core index']
  #allocation1 [shape = 'u32[72,128]{1,0:T(1,128)}', space=vmem, size = 0x9000, scoped, tag = 'internal scratch']
  #allocation2 [shape = 'f32[18,18,4]{2,1,0:T(8,128)}', space=vmem, size = 0x36000, scoped, tag = 'scratch operand']
  #allocation3 [shape = 'f32[18,18,4]{2,1,0:T(8,128)}', space=vmem, size = 0x36000, scoped, tag = 'scratch operand']
  %s0 = inlined_call_operand.vmem [shape: f32[2,16,16,4], index: 0, kind: input, shape index: {}]
  %s1 = inlined_call_operand.vmem [shape: f32[36,4], index: 1, kind: input, shape index: {}]
  %s2 = inlined_call_operand.vmem [shape: f32[1,4], index: 2, kind: input, shape index: {}]
  %s3 = inlined_call_operand.vmem [shape: f32[1,4], index: 3, kind: input, shape index: {}]
  %s4 = inlined_call_operand.vmem [shape: f32[36,8], index: 4, kind: input, shape index: {}]
  %s5 = inlined_call_operand.vmem [shape: f32[1,8], index: 5, kind: input, shape index: {}]
  %s6 = inlined_call_operand.vmem [shape: f32[1,8], index: 6, kind: input, shape index: {}]
  %s7 = inlined_call_operand.vmem [shape: f32[2,16,16,8], index: 7, kind: output, shape index: {}]
  %s8 = sld [smem:[#allocation0]]
  $region61: #{tpu_custom_call.1} parent=0
    _
  %s10 = ssub.s32 1, %s8
  %s11 = scalar_select 0, %s10, %s8
  loop: start=0, step=1, limit=4
  $region2: #{tpu_custom_call.1} parent=0 // loop_pre_header
    _
  $region3: #{tpu_custom_call.1} parent=0 // loop_header
    %s13 = sphi 0, %s17
    %p14 = scmp.ge.s32.totalorder %s13, 4
    %s23 = sphi 0, %s25
    %s26 = sphi 0, %s23
    %s27 = sphi 0, %s26
    %s43 = sphi 0, %s27
    %s47 = sphi 0, %s47
    %s49 = sphi 0, %s47
    %s50 = sphi 0, %s49
    %s64 = sphi 0, %s50
    %s68 = sphi 0, %s68
    %s70 = sphi 0, %s68
    %s71 = sphi 0, %s70
    %s85 = sphi 0, %s71
    %s89 = sphi 0, %s89
    %s91 = sphi 0, %s89
    %s92 = sphi 0, %s91
    %s106 = sphi 0, %s92
    %s110 = sphi 0, %s110
    %s112 = sphi 0, %s110
    %s113 = sphi 0, %s112
    %s127 = sphi 0, %s113
    %s131 = sphi 0, %s131
    %s133 = sphi 0, %s131
    %s134 = sphi 0, %s133
    %s148 = sphi 0, %s134
    %s152 = sphi 0, %s152
    %s154 = sphi 0, %s152
    %s155 = sphi 0, %s154
    %s169 = sphi 0, %s155
    %s175 = sphi 0, %s177
    %s178 = sphi 0, %s175
    %s179 = sphi 0, %s178
    %s195 = sphi 0, %s179
  $region4: #{tpu_custom_call.1} parent=0 // loop_header_branch
    %16 = sbr.rel (%p14) target = $region8
  $region5: #{tpu_custom_call.1} parent=0 // loop_body
    %s18 = ssub.s32 %s13, 1
    %s19 = ssub.s32 %s13, 2
    %s20 = sadd.s32 %s13, 1
    %s21 = ssub.s32 %s13, %s20
    %p22 = scmp.eq.s32.totalorder %s21, 0
    %s24 = sadd.s32 %s23, 1
    %s25 = scalar_select %p22, %s23, %s24
    %p28 = pneg %p22
    %p29 = scmp.eq.s32.totalorder %s13, 1
    %p30 = por %p28, %p29
    %p31 = scmp.ne.s32.totalorder %s23, %s26
    %p32 = scmp.eq.s32.totalorder %s13, 0
    %p33 = por %p31, %p32
    %p34 = scmp.ne.s32.totalorder %s23, %s26
    %p35 = scmp.eq.s32.totalorder %s18, 1
    %p36 = por %p34, %p35
    %p37 = scmp.ne.s32.totalorder %s26, %s27
    %p38 = scmp.eq.s32.totalorder %s18, 0
    %p39 = por %p37, %p38
    %p40 = scmp.ne.s32.totalorder %s26, %s27
    %p41 = scmp.eq.s32.totalorder %s19, 1
    %p42 = por %p40, %p41
    %p44 = scmp.ne.s32.totalorder %s27, %s43
    %p45 = scmp.eq.s32.totalorder %s19, 0
    %p46 = por %p44, %p45
    %s48 = sadd.s32 %s47, 1
    %p51 = scmp.eq.s32.totalorder %s13, 1
    %p52 = scmp.ne.s32.totalorder %s47, %s49
    %p53 = scmp.eq.s32.totalorder %s13, 0
    %p54 = por %p52, %p53
    %p55 = scmp.ne.s32.totalorder %s47, %s49
    %p56 = scmp.eq.s32.totalorder %s18, 1
    %p57 = por %p55, %p56
    %p58 = scmp.ne.s32.totalorder %s49, %s50
    %p59 = scmp.eq.s32.totalorder %s18, 0
    %p60 = por %p58, %p59
    %p61 = scmp.ne.s32.totalorder %s49, %s50
    %p62 = scmp.eq.s32.totalorder %s19, 1
    %p63 = por %p61, %p62
    %p65 = scmp.ne.s32.totalorder %s50, %s64
    %p66 = scmp.eq.s32.totalorder %s19, 0
    %p67 = por %p65, %p66
    %s69 = sadd.s32 %s68, 1
    %p72 = scmp.eq.s32.totalorder %s13, 1
    %p73 = scmp.ne.s32.totalorder %s68, %s70
    %p74 = scmp.eq.s32.totalorder %s13, 0
    %p75 = por %p73, %p74
    %p76 = scmp.ne.s32.totalorder %s68, %s70
    %p77 = scmp.eq.s32.totalorder %s18, 1
    %p78 = por %p76, %p77
    %p79 = scmp.ne.s32.totalorder %s70, %s71
    %p80 = scmp.eq.s32.totalorder %s18, 0
    %p81 = por %p79, %p80
    %p82 = scmp.ne.s32.totalorder %s70, %s71
    %p83 = scmp.eq.s32.totalorder %s19, 1
    %p84 = por %p82, %p83
    %p86 = scmp.ne.s32.totalorder %s71, %s85
    %p87 = scmp.eq.s32.totalorder %s19, 0
    %p88 = por %p86, %p87
    %s90 = sadd.s32 %s89, 1
    %p93 = scmp.eq.s32.totalorder %s13, 1
    %p94 = scmp.ne.s32.totalorder %s89, %s91
    %p95 = scmp.eq.s32.totalorder %s13, 0
    %p96 = por %p94, %p95
    %p97 = scmp.ne.s32.totalorder %s89, %s91
    %p98 = scmp.eq.s32.totalorder %s18, 1
    %p99 = por %p97, %p98
    %p100 = scmp.ne.s32.totalorder %s91, %s92
    %p101 = scmp.eq.s32.totalorder %s18, 0
    %p102 = por %p100, %p101
    %p103 = scmp.ne.s32.totalorder %s91, %s92
    %p104 = scmp.eq.s32.totalorder %s19, 1
    %p105 = por %p103, %p104
    %p107 = scmp.ne.s32.totalorder %s92, %s106
    %p108 = scmp.eq.s32.totalorder %s19, 0
    %p109 = por %p107, %p108
    %s111 = sadd.s32 %s110, 1
    %p114 = scmp.eq.s32.totalorder %s13, 1
    %p115 = scmp.ne.s32.totalorder %s110, %s112
    %p116 = scmp.eq.s32.totalorder %s13, 0
    %p117 = por %p115, %p116
    %p118 = scmp.ne.s32.totalorder %s110, %s112
    %p119 = scmp.eq.s32.totalorder %s18, 1
    %p120 = por %p118, %p119
    %p121 = scmp.ne.s32.totalorder %s112, %s113
    %p122 = scmp.eq.s32.totalorder %s18, 0
    %p123 = por %p121, %p122
    %p124 = scmp.ne.s32.totalorder %s112, %s113
    %p125 = scmp.eq.s32.totalorder %s19, 1
    %p126 = por %p124, %p125
    %p128 = scmp.ne.s32.totalorder %s113, %s127
    %p129 = scmp.eq.s32.totalorder %s19, 0
    %p130 = por %p128, %p129
    %s132 = sadd.s32 %s131, 1
    %p135 = scmp.eq.s32.totalorder %s13, 1
    %p136 = scmp.ne.s32.totalorder %s131, %s133
    %p137 = scmp.eq.s32.totalorder %s13, 0
    %p138 = por %p136, %p137
    %p139 = scmp.ne.s32.totalorder %s131, %s133
    %p140 = scmp.eq.s32.totalorder %s18, 1
    %p141 = por %p139, %p140
    %p142 = scmp.ne.s32.totalorder %s133, %s134
    %p143 = scmp.eq.s32.totalorder %s18, 0
    %p144 = por %p142, %p143
    %p145 = scmp.ne.s32.totalorder %s133, %s134
    %p146 = scmp.eq.s32.totalorder %s19, 1
    %p147 = por %p145, %p146
    %p149 = scmp.ne.s32.totalorder %s134, %s148
    %p150 = scmp.eq.s32.totalorder %s19, 0
    %p151 = por %p149, %p150
    %s153 = sadd.s32 %s152, 1
    %p156 = scmp.eq.s32.totalorder %s13, 1
    %p157 = scmp.ne.s32.totalorder %s152, %s154
    %p158 = scmp.eq.s32.totalorder %s13, 0
    %p159 = por %p157, %p158
    %p160 = scmp.ne.s32.totalorder %s152, %s154
    %p161 = scmp.eq.s32.totalorder %s18, 1
    %p162 = por %p160, %p161
    %p163 = scmp.ne.s32.totalorder %s154, %s155
    %p164 = scmp.eq.s32.totalorder %s18, 0
    %p165 = por %p163, %p164
    %p166 = scmp.ne.s32.totalorder %s154, %s155
    %p167 = scmp.eq.s32.totalorder %s19, 1
    %p168 = por %p166, %p167
    %p170 = scmp.ne.s32.totalorder %s155, %s169
    %p171 = scmp.eq.s32.totalorder %s19, 0
    %p172 = por %p170, %p171
    %s173 = ssub.s32 %s13, %s20
    %p174 = scmp.eq.s32.totalorder %s173, 0
    %s176 = sadd.s32 %s175, 1
    %s177 = scalar_select %p174, %s175, %s176
    %p180 = pneg %p174
    %p181 = scmp.eq.s32.totalorder %s13, 1
    %p182 = por %p180, %p181
    %p183 = scmp.ne.s32.totalorder %s175, %s178
    %p184 = scmp.eq.s32.totalorder %s13, 0
    %p185 = por %p183, %p184
    %p186 = scmp.ne.s32.totalorder %s175, %s178
    %p187 = scmp.eq.s32.totalorder %s18, 1
    %p188 = por %p186, %p187
    %p189 = scmp.ne.s32.totalorder %s178, %s179
    %p190 = scmp.eq.s32.totalorder %s18, 0
    %p191 = por %p189, %p190
    %p192 = scmp.ne.s32.totalorder %s178, %s179
    %p193 = scmp.eq.s32.totalorder %s19, 1
    %p194 = por %p192, %p193
    %p196 = scmp.ne.s32.totalorder %s179, %s195
    %p197 = scmp.eq.s32.totalorder %s19, 0
    %p198 = por %p196, %p197
    %p199 = scmp.le.s32.totalorder 1, %s13
    %p200 = scmp.lt.s32.totalorder %s13, 3
    %p201 = pnand %p199, %p200
    %p202 = pneg %p201
    // Predicated region
    $region9: #{tpu_custom_call.1} parent=5 // pred_check
      _
    $region10: #{tpu_custom_call.1} parent=5 // pred_check_branch
      %204 = sbr.rel (%p201) target = $region12
    $region11: #{tpu_custom_call.1} parent=5 // pred_region
      %s205 = ssub.s32 %s13, 1
      // Predicated region
      $region13: #{tpu_custom_call.1} parent=11 // pred_check
        %p206 = pneg %p60
      $region14: #{tpu_custom_call.1} parent=11 // pred_check_branch
        %208 = sbr.rel (%p206) target = $region16
      $region15: #{tpu_custom_call.1} parent=11 // pred_region
        _
      $region16: #{tpu_custom_call.1} parent=11 // pred_fallthru
        _
      // Predicated region
      $region17: #{tpu_custom_call.1} parent=11 // pred_check
        %p209 = pneg %p81
      $region18: #{tpu_custom_call.1} parent=11 // pred_check_branch
        %211 = sbr.rel (%p209) target = $region20
      $region19: #{tpu_custom_call.1} parent=11 // pred_region
        _
      $region20: #{tpu_custom_call.1} parent=11 // pred_fallthru
        _
      // Predicated region
      $region21: #{tpu_custom_call.1} parent=11 // pred_check
        %p212 = pneg %p102
      $region22: #{tpu_custom_call.1} parent=11 // pred_check_branch
        %214 = sbr.rel (%p212) target = $region24
      $region23: #{tpu_custom_call.1} parent=11 // pred_region
        _
      $region24: #{tpu_custom_call.1} parent=11 // pred_fallthru
        _
      // Predicated region
      $region25: #{tpu_custom_call.1} parent=11 // pred_check
        %p215 = pneg %p123
      $region26: #{tpu_custom_call.1} parent=11 // pred_check_branch
        %217 = sbr.rel (%p215) target = $region28
      $region27: #{tpu_custom_call.1} parent=11 // pred_region
        _
      $region28: #{tpu_custom_call.1} parent=11 // pred_fallthru
        _
      // Predicated region
      $region29: #{tpu_custom_call.1} parent=11 // pred_check
        %p218 = pneg %p144
      $region30: #{tpu_custom_call.1} parent=11 // pred_check_branch
        %220 = sbr.rel (%p218) target = $region32
      $region31: #{tpu_custom_call.1} parent=11 // pred_region
        _
      $region32: #{tpu_custom_call.1} parent=11 // pred_fallthru
        _
      // Predicated region
      $region33: #{tpu_custom_call.1} parent=11 // pred_check
        %p221 = pneg %p165
      $region34: #{tpu_custom_call.1} parent=11 // pred_check_branch
        %223 = sbr.rel (%p221) target = $region36
      $region35: #{tpu_custom_call.1} parent=11 // pred_region
        _
      $region36: #{tpu_custom_call.1} parent=11 // pred_fallthru
        _
    $region12: #{tpu_custom_call.1} parent=5 // pred_fallthru
      _
    %p224 = scmp.lt.s32.totalorder %s13, 2
    // Predicated region
    $region37: #{tpu_custom_call.1} parent=5 // pred_check
      %p225 = pneg %p224
    $region38: #{tpu_custom_call.1} parent=5 // pred_check_branch
      %227 = sbr.rel (%p225) target = $region40
    $region39: #{tpu_custom_call.1} parent=5 // pred_region
      // Predicated region
      $region41: #{tpu_custom_call.1} parent=39 // pred_check
        %p228 = pneg %p33
      $region42: #{tpu_custom_call.1} parent=39 // pred_check_branch
        %230 = sbr.rel (%p228) target = $region44
      $region43: #{tpu_custom_call.1} parent=39 // pred_region
        %p231 = scmp.lt.s32.totalorder %s13, 1
        %s232 = scalar_select %p231, %s13, 1
        %s233 = smul.addr %s232, 32
        %s234 = smul.addr %s233, 8
        %s235 = scalar_lea.vmem %s0, %s234
      $region44: #{tpu_custom_call.1} parent=39 // pred_fallthru
        _
    $region40: #{tpu_custom_call.1} parent=5 // pred_fallthru
      _
    %p236 = scmp.le.s32.totalorder 1, %s13
    %p237 = scmp.lt.s32.totalorder %s13, 3
    %p238 = pnand %p236, %p237
    %p239 = pneg %p238
    // Predicated region
    $region45: #{tpu_custom_call.1} parent=5 // pred_check
      _
    $region46: #{tpu_custom_call.1} parent=5 // pred_check_branch
      %241 = sbr.rel (%p238) target = $region48
    $region47: #{tpu_custom_call.1} parent=5 // pred_region
      %s242 = ssub.s32 %s13, 1
      %p243 = scmp.lt.s32.totalorder %s18, 1
      %s244 = scalar_select %p243, %s18, 1
      %s245 = smul.addr %s244, 32
      %s246 = smul.addr %s245, 8
      %s247 = scalar_lea.vmem %s0, %s246
      %p248 = pneg %p39
      %p249 = pneg %p36
      %p250 = pneg %p60
      %p251 = pneg %p57
      %p252 = pneg %p81
      %p253 = pneg %p78
      %p254 = pneg %p102
      %p255 = pneg %p99
      %p256 = pneg %p123
      %p257 = pneg %p120
      %p258 = pneg %p144
      %p259 = pneg %p141
      %p260 = pneg %p165
      %p261 = pneg %p162
      %p262 = pneg %p191
      %p263 = pneg %p188
      %p264 = scmp.lt.s32.totalorder %s18, 1
      %s265 = scalar_select %p264, %s18, 1
      %s266 = smul.addr %s265, 32
      %s267 = smul.addr %s266, 8
      %s268 = scalar_lea.vmem %s7, %s267
      %p269 = scmp.lt.s32.totalorder %s18, 1
      %s270 = scalar_select %p269, %s18, 1
      %s271 = smul.addr %s270, 32
      %s272 = smul.addr %s271, 8
      %s273 = scalar_lea.vmem %s0, %s272
      %p274 = scmp.lt.s32.totalorder %s18, 1
      %s275 = scalar_select %p274, %s18, 1
      %s276 = smul.addr %s275, 32
      %s277 = smul.addr %s276, 8
      %s278 = scalar_lea.vmem %s7, %s277
      %vm279 = vcmask 31744
      %280 = vst.msk [vmem:[#allocation2] sm:$0xff] %vm279, 0.0
      %281 = vst.msk [vmem:[#allocation2 + $0x8] sm:$0xff] %vm279, 0.0
      %vm282 = vcmask 25600
      %283 = vst.msk [vmem:[#allocation2 + $0x10] sm:$0x3] %vm282, 0.0
      %s284 = scalar_lea.vmem [#allocation2], 408
      %285 = vst.msk [vmem:[%s284] sm:$0xff] %vm279, 0.0
      %286 = vst.msk [vmem:[%s284 + $0x8] sm:$0xff] %vm279, 0.0
      %287 = vst.msk [vmem:[%s284 + $0x10] sm:$0x3] %vm282, 0.0
      %vm288 = vcmask 24576
      %289 = vst.msk [vmem:[#allocation2] sm:$0x1] %vm288, 0.0
      %290 = vst.msk [vmem:[#allocation2 + $0x18] sm:$0x1] %vm288, 0.0
      %291 = vst.msk [vmem:[#allocation2 + $0x30] sm:$0x1] %vm288, 0.0
      %292 = vst.msk [vmem:[#allocation2 + $0x48] sm:$0x1] %vm288, 0.0
      %293 = vst.msk [vmem:[#allocation2 + $0x60] sm:$0x1] %vm288, 0.0
      %294 = vst.msk [vmem:[#allocation2 + $0x78] sm:$0x1] %vm288, 0.0
      %295 = vst.msk [vmem:[#allocation2 + $0x90] sm:$0x1] %vm288, 0.0
      %296 = vst.msk [vmem:[#allocation2 + $0xa8] sm:$0x1] %vm288, 0.0
      %297 = vst.msk [vmem:[#allocation2 + $0xc0] sm:$0x1] %vm288, 0.0
      %298 = vst.msk [vmem:[#allocation2 + $0xd8] sm:$0x1] %vm288, 0.0
      %299 = vst.msk [vmem:[#allocation2 + $0xf0] sm:$0x1] %vm288, 0.0
      %300 = vst.msk [vmem:[#allocation2 + $0x108] sm:$0x1] %vm288, 0.0
      %301 = vst.msk [vmem:[#allocation2 + $0x120] sm:$0x1] %vm288, 0.0
      %302 = vst.msk [vmem:[#allocation2 + $0x138] sm:$0x1] %vm288, 0.0
      %303 = vst.msk [vmem:[#allocation2 + $0x150] sm:$0x1] %vm288, 0.0
      %304 = vst.msk [vmem:[#allocation2 + $0x168] sm:$0x1] %vm288, 0.0
      %305 = vst.msk [vmem:[#allocation2 + $0x180] sm:$0x1] %vm288, 0.0
      %306 = vst.msk [vmem:[#allocation2 + $0x198] sm:$0x1] %vm288, 0.0
      %307 = vst.msk [vmem:[#allocation2 + $0x11] sm:$0x1] %vm288, 0.0
      %308 = vst.msk [vmem:[#allocation2 + $0x29] sm:$0x1] %vm288, 0.0
      %309 = vst.msk [vmem:[#allocation2 + $0x41] sm:$0x1] %vm288, 0.0
      %310 = vst.msk [vmem:[#allocation2 + $0x59] sm:$0x1] %vm288, 0.0
      %311 = vst.msk [vmem:[#allocation2 + $0x71] sm:$0x1] %vm288, 0.0
      %312 = vst.msk [vmem:[#allocation2 + $0x89] sm:$0x1] %vm288, 0.0
      %313 = vst.msk [vmem:[#allocation2 + $0xa1] sm:$0x1] %vm288, 0.0
      %314 = vst.msk [vmem:[#allocation2 + $0xb9] sm:$0x1] %vm288, 0.0
      %315 = vst.msk [vmem:[#allocation2 + $0xd1] sm:$0x1] %vm288, 0.0
      %316 = vst.msk [vmem:[#allocation2 + $0xe9] sm:$0x1] %vm288, 0.0
      %317 = vst.msk [vmem:[#allocation2 + $0x101] sm:$0x1] %vm288, 0.0
      %318 = vst.msk [vmem:[#allocation2 + $0x119] sm:$0x1] %vm288, 0.0
      %319 = vst.msk [vmem:[#allocation2 + $0x131] sm:$0x1] %vm288, 0.0
      %320 = vst.msk [vmem:[#allocation2 + $0x149] sm:$0x1] %vm288, 0.0
      %321 = vst.msk [vmem:[#allocation2 + $0x161] sm:$0x1] %vm288, 0.0
      %322 = vst.msk [vmem:[#allocation2 + $0x179] sm:$0x1] %vm288, 0.0
      %323 = vst.msk [vmem:[#allocation2 + $0x191] sm:$0x1] %vm288, 0.0
      %324 = vst.msk [vmem:[#allocation2 + $0x1a9] sm:$0x1] %vm288, 0.0
      %325 = vst.msk [vmem:[#allocation3] sm:$0xff] %vm279, 0.0
      %326 = vst.msk [vmem:[#allocation3 + $0x8] sm:$0xff] %vm279, 0.0
      %327 = vst.msk [vmem:[#allocation3 + $0x10] sm:$0x3] %vm282, 0.0
      %s328 = scalar_lea.vmem [#allocation3], 408
      %329 = vst.msk [vmem:[%s328] sm:$0xff] %vm279, 0.0
      %330 = vst.msk [vmem:[%s328 + $0x8] sm:$0xff] %vm279, 0.0
      %331 = vst.msk [vmem:[%s328 + $0x10] sm:$0x3] %vm282, 0.0
      %332 = vst.msk [vmem:[#allocation3] sm:$0x1] %vm288, 0.0
      %333 = vst.msk [vmem:[#allocation3 + $0x18] sm:$0x1] %vm288, 0.0
      %334 = vst.msk [vmem:[#allocation3 + $0x30] sm:$0x1] %vm288, 0.0
      %335 = vst.msk [vmem:[#allocation3 + $0x48] sm:$0x1] %vm288, 0.0
      %336 = vst.msk [vmem:[#allocation3 + $0x60] sm:$0x1] %vm288, 0.0
      %337 = vst.msk [vmem:[#allocation3 + $0x78] sm:$0x1] %vm288, 0.0
      %338 = vst.msk [vmem:[#allocation3 + $0x90] sm:$0x1] %vm288, 0.0
      %339 = vst.msk [vmem:[#allocation3 + $0xa8] sm:$0x1] %vm288, 0.0
      %340 = vst.msk [vmem:[#allocation3 + $0xc0] sm:$0x1] %vm288, 0.0
      %341 = vst.msk [vmem:[#allocation3 + $0xd8] sm:$0x1] %vm288, 0.0
      %342 = vst.msk [vmem:[#allocation3 + $0xf0] sm:$0x1] %vm288, 0.0
      %343 = vst.msk [vmem:[#allocation3 + $0x108] sm:$0x1] %vm288, 0.0
      %344 = vst.msk [vmem:[#allocation3 + $0x120] sm:$0x1] %vm288, 0.0
      %345 = vst.msk [vmem:[#allocation3 + $0x138] sm:$0x1] %vm288, 0.0
      %346 = vst.msk [vmem:[#allocation3 + $0x150] sm:$0x1] %vm288, 0.0
      %347 = vst.msk [vmem:[#allocation3 + $0x168] sm:$0x1] %vm288, 0.0
      %348 = vst.msk [vmem:[#allocation3 + $0x180] sm:$0x1] %vm288, 0.0
      %349 = vst.msk [vmem:[#allocation3 + $0x198] sm:$0x1] %vm288, 0.0
      %350 = vst.msk [vmem:[#allocation3 + $0x11] sm:$0x1] %vm288, 0.0
      %351 = vst.msk [vmem:[#allocation3 + $0x29] sm:$0x1] %vm288, 0.0
      %352 = vst.msk [vmem:[#allocation3 + $0x41] sm:$0x1] %vm288, 0.0
      %353 = vst.msk [vmem:[#allocation3 + $0x59] sm:$0x1] %vm288, 0.0
      %354 = vst.msk [vmem:[#allocation3 + $0x71] sm:$0x1] %vm288, 0.0
      %355 = vst.msk [vmem:[#allocation3 + $0x89] sm:$0x1] %vm288, 0.0
      %356 = vst.msk [vmem:[#allocation3 + $0xa1] sm:$0x1] %vm288, 0.0
      %357 = vst.msk [vmem:[#allocation3 + $0xb9] sm:$0x1] %vm288, 0.0
      %358 = vst.msk [vmem:[#allocation3 + $0xd1] sm:$0x1] %vm288, 0.0
      %359 = vst.msk [vmem:[#allocation3 + $0xe9] sm:$0x1] %vm288, 0.0
      %360 = vst.msk [vmem:[#allocation3 + $0x101] sm:$0x1] %vm288, 0.0
      %361 = vst.msk [vmem:[#allocation3 + $0x119] sm:$0x1] %vm288, 0.0
      %362 = vst.msk [vmem:[#allocation3 + $0x131] sm:$0x1] %vm288, 0.0
      %363 = vst.msk [vmem:[#allocation3 + $0x149] sm:$0x1] %vm288, 0.0
      %364 = vst.msk [vmem:[#allocation3 + $0x161] sm:$0x1] %vm288, 0.0
      %365 = vst.msk [vmem:[#allocation3 + $0x179] sm:$0x1] %vm288, 0.0
      %366 = vst.msk [vmem:[#allocation3 + $0x191] sm:$0x1] %vm288, 0.0
      %367 = vst.msk [vmem:[#allocation3 + $0x1a9] sm:$0x1] %vm288, 0.0
      %v368 = vld [vmem:[%s273] sm:$0xff]
      %v369 = vld [vmem:[%s273 + $0x8] sm:$0xff]
      %v370 = vld [vmem:[%s273 + $0x10] sm:$0xff]
      %v371 = vld [vmem:[%s273 + $0x18] sm:$0xff]
      %v372 = vld [vmem:[%s273 + $0x20] sm:$0xff]
      %v373 = vld [vmem:[%s273 + $0x28] sm:$0xff]
      %v374 = vld [vmem:[%s273 + $0x30] sm:$0xff]
      %v375 = vld [vmem:[%s273 + $0x38] sm:$0xff]
      %v376 = vld [vmem:[%s273 + $0x40] sm:$0xff]
      %v377 = vld [vmem:[%s273 + $0x48] sm:$0xff]
      %v378 = vld [vmem:[%s273 + $0x50] sm:$0xff]
      %v379 = vld [vmem:[%s273 + $0x58] sm:$0xff]
      %v380 = vld [vmem:[%s273 + $0x60] sm:$0xff]
      %v381 = vld [vmem:[%s273 + $0x68] sm:$0xff]
      %v382 = vld [vmem:[%s273 + $0x70] sm:$0xff]
      %v383 = vld [vmem:[%s273 + $0x78] sm:$0xff]
      %v384 = vld [vmem:[%s273 + $0x80] sm:$0xff]
      %v385 = vld [vmem:[%s273 + $0x88] sm:$0xff]
      %v386 = vld [vmem:[%s273 + $0x90] sm:$0xff]
      %v387 = vld [vmem:[%s273 + $0x98] sm:$0xff]
      %v388 = vld [vmem:[%s273 + $0xa0] sm:$0xff]
      %v389 = vld [vmem:[%s273 + $0xa8] sm:$0xff]
      %v390 = vld [vmem:[%s273 + $0xb0] sm:$0xff]
      %v391 = vld [vmem:[%s273 + $0xb8] sm:$0xff]
      %v392 = vld [vmem:[%s273 + $0xc0] sm:$0xff]
      %v393 = vld [vmem:[%s273 + $0xc8] sm:$0xff]
      %v394 = vld [vmem:[%s273 + $0xd0] sm:$0xff]
      %v395 = vld [vmem:[%s273 + $0xd8] sm:$0xff]
      %v396 = vld [vmem:[%s273 + $0xe0] sm:$0xff]
      %v397 = vld [vmem:[%s273 + $0xe8] sm:$0xff]
      %v398 = vld [vmem:[%s273 + $0xf0] sm:$0xff]
      %v399 = vld [vmem:[%s273 + $0xf8] sm:$0xff]
      %s400 = scalar_lea.vmem [#allocation2], 24
      %401 = vst.msk [vmem:[%s400 + $0x1] sm:$0xff] %vm279, %v368
      %402 = vst.msk [vmem:[%s400 + $0x9] sm:$0xff] %vm279, %v369
      %403 = vst.msk [vmem:[%s400 + $0x19] sm:$0xff] %vm279, %v370
      %404 = vst.msk [vmem:[%s400 + $0x21] sm:$0xff] %vm279, %v371
      %405 = vst.msk [vmem:[%s400 + $0x31] sm:$0xff] %vm279, %v372
      %406 = vst.msk [vmem:[%s400 + $0x39] sm:$0xff] %vm279, %v373
      %407 = vst.msk [vmem:[%s400 + $0x49] sm:$0xff] %vm279, %v374
      %408 = vst.msk [vmem:[%s400 + $0x51] sm:$0xff] %vm279, %v375
      %409 = vst.msk [vmem:[%s400 + $0x61] sm:$0xff] %vm279, %v376
      %410 = vst.msk [vmem:[%s400 + $0x69] sm:$0xff] %vm279, %v377
      %411 = vst.msk [vmem:[%s400 + $0x79] sm:$0xff] %vm279, %v378
      %412 = vst.msk [vmem:[%s400 + $0x81] sm:$0xff] %vm279, %v379
      %413 = vst.msk [vmem:[%s400 + $0x91] sm:$0xff] %vm279, %v380
      %414 = vst.msk [vmem:[%s400 + $0x99] sm:$0xff] %vm279, %v381
      %415 = vst.msk [vmem:[%s400 + $0xa9] sm:$0xff] %vm279, %v382
      %416 = vst.msk [vmem:[%s400 + $0xb1] sm:$0xff] %vm279, %v383
      %417 = vst.msk [vmem:[%s400 + $0xc1] sm:$0xff] %vm279, %v384
      %418 = vst.msk [vmem:[%s400 + $0xc9] sm:$0xff] %vm279, %v385
      %419 = vst.msk [vmem:[%s400 + $0xd9] sm:$0xff] %vm279, %v386
      %420 = vst.msk [vmem:[%s400 + $0xe1] sm:$0xff] %vm279, %v387
      %421 = vst.msk [vmem:[%s400 + $0xf1] sm:$0xff] %vm279, %v388
      %422 = vst.msk [vmem:[%s400 + $0xf9] sm:$0xff] %vm279, %v389
      %423 = vst.msk [vmem:[%s400 + $0x109] sm:$0xff] %vm279, %v390
      %424 = vst.msk [vmem:[%s400 + $0x111] sm:$0xff] %vm279, %v391
      %425 = vst.msk [vmem:[%s400 + $0x121] sm:$0xff] %vm279, %v392
      %426 = vst.msk [vmem:[%s400 + $0x129] sm:$0xff] %vm279, %v393
      %427 = vst.msk [vmem:[%s400 + $0x139] sm:$0xff] %vm279, %v394
      %428 = vst.msk [vmem:[%s400 + $0x141] sm:$0xff] %vm279, %v395
      %429 = vst.msk [vmem:[%s400 + $0x151] sm:$0xff] %vm279, %v396
      %430 = vst.msk [vmem:[%s400 + $0x159] sm:$0xff] %vm279, %v397
      %431 = vst.msk [vmem:[%s400 + $0x169] sm:$0xff] %vm279, %v398
      %432 = vst.msk [vmem:[%s400 + $0x171] sm:$0xff] %vm279, %v399
      %v433 = vld [vmem:[#allocation2] sm:$0xff]
      %v434 = vld [vmem:[#allocation2 + $0x8] sm:$0xff]
      %v435 = vld [vmem:[#allocation2 + $0x18] sm:$0xff]
      %v436 = vld [vmem:[#allocation2 + $0x20] sm:$0xff]
      %v437 = vld [vmem:[#allocation2 + $0x30] sm:$0xff]
      %v438 = vld [vmem:[#allocation2 + $0x38] sm:$0xff]
      %v439 = vld [vmem:[#allocation2 + $0x48] sm:$0xff]
      %v440 = vld [vmem:[#allocation2 + $0x50] sm:$0xff]
      %v441 = vld [vmem:[#allocation2 + $0x60] sm:$0xff]
      %v442 = vld [vmem:[#allocation2 + $0x68] sm:$0xff]
      %v443 = vld [vmem:[#allocation2 + $0x78] sm:$0xff]
      %v444 = vld [vmem:[#allocation2 + $0x80] sm:$0xff]
      %v445 = vld [vmem:[#allocation2 + $0x90] sm:$0xff]
      %v446 = vld [vmem:[#allocation2 + $0x98] sm:$0xff]
      %v447 = vld [vmem:[#allocation2 + $0xa8] sm:$0xff]
      %v448 = vld [vmem:[#allocation2 + $0xb0] sm:$0xff]
      %v449 = vld [vmem:[#allocation2 + $0xc0] sm:$0xff]
      %v450 = vld [vmem:[#allocation2 + $0xc8] sm:$0xff]
      %v451 = vld [vmem:[#allocation2 + $0xd8] sm:$0xff]
      %v452 = vld [vmem:[#allocation2 + $0xe0] sm:$0xff]
      %v453 = vld [vmem:[#allocation2 + $0xf0] sm:$0xff]
      %v454 = vld [vmem:[#allocation2 + $0xf8] sm:$0xff]
      %v455 = vld [vmem:[#allocation2 + $0x108] sm:$0xff]
      %v456 = vld [vmem:[#allocation2 + $0x110] sm:$0xff]
      %v457 = vld [vmem:[#allocation2 + $0x120] sm:$0xff]
      %v458 = vld [vmem:[#allocation2 + $0x128] sm:$0xff]
      %v459 = vld [vmem:[#allocation2 + $0x138] sm:$0xff]
      %v460 = vld [vmem:[#allocation2 + $0x140] sm:$0xff]
      %v461 = vld [vmem:[#allocation2 + $0x150] sm:$0xff]
      %v462 = vld [vmem:[#allocation2 + $0x158] sm:$0xff]
      %v463 = vld [vmem:[#allocation2 + $0x168] sm:$0xff]
      %v464 = vld [vmem:[#allocation2 + $0x170] sm:$0xff]
      %v465 = vld [vmem:[%s1] sm:$0xf]
      %v466 = vld [vmem:[#allocation2 + $0x1] sm:$0xff]
      %v467 = vld [vmem:[#allocation2 + $0x9] sm:$0xff]
      %v468 = vld [vmem:[#allocation2 + $0x19] sm:$0xff]
      %v469 = vld [vmem:[#allocation2 + $0x21] sm:$0xff]
      %v470 = vld [vmem:[#allocation2 + $0x31] sm:$0xff]
      %v471 = vld [vmem:[#allocation2 + $0x39] sm:$0xff]
      %v472 = vld [vmem:[#allocation2 + $0x49] sm:$0xff]
      %v473 = vld [vmem:[#allocation2 + $0x51] sm:$0xff]
      %v474 = vld [vmem:[#allocation2 + $0x61] sm:$0xff]
      %v475 = vld [vmem:[#allocation2 + $0x69] sm:$0xff]
      %v476 = vld [vmem:[#allocation2 + $0x79] sm:$0xff]
      %v477 = vld [vmem:[#allocation2 + $0x81] sm:$0xff]
      %v478 = vld [vmem:[#allocation2 + $0x91] sm:$0xff]
      %v479 = vld [vmem:[#allocation2 + $0x99] sm:$0xff]
      %v480 = vld [vmem:[#allocation2 + $0xa9] sm:$0xff]
      %v481 = vld [vmem:[#allocation2 + $0xb1] sm:$0xff]
      %v482 = vld [vmem:[#allocation2 + $0xc1] sm:$0xff]
      %v483 = vld [vmem:[#allocation2 + $0xc9] sm:$0xff]
      %v484 = vld [vmem:[#allocation2 + $0xd9] sm:$0xff]
      %v485 = vld [vmem:[#allocation2 + $0xe1] sm:$0xff]
      %v486 = vld [vmem:[#allocation2 + $0xf1] sm:$0xff]
      %v487 = vld [vmem:[#allocation2 + $0xf9] sm:$0xff]
      %v488 = vld [vmem:[#allocation2 + $0x109] sm:$0xff]
      %v489 = vld [vmem:[#allocation2 + $0x111] sm:$0xff]
      %v490 = vld [vmem:[#allocation2 + $0x121] sm:$0xff]
      %v491 = vld [vmem:[#allocation2 + $0x129] sm:$0xff]
      %v492 = vld [vmem:[#allocation2 + $0x139] sm:$0xff]
      %v493 = vld [vmem:[#allocation2 + $0x141] sm:$0xff]
      %v494 = vld [vmem:[#allocation2 + $0x151] sm:$0xff]
      %v495 = vld [vmem:[#allocation2 + $0x159] sm:$0xff]
      %v496 = vld [vmem:[#allocation2 + $0x169] sm:$0xff]
      %v497 = vld [vmem:[#allocation2 + $0x171] sm:$0xff]
      %v498 = vld [vmem:[%s1 + $0x4] sm:$0xf]
      %v500 = vsel %vm279, %v466, 0
      %v503 = vsel %vm279, %v467, 0
      %v506 = vsel %vm279, %v468, 0
      %v509 = vsel %vm279, %v469, 0
      %v512 = vsel %vm279, %v470, 0
      %v515 = vsel %vm279, %v471, 0
      %v518 = vsel %vm279, %v472, 0
      %v521 = vsel %vm279, %v473, 0
      %v524 = vsel %vm279, %v474, 0
      %v527 = vsel %vm279, %v475, 0
      %v530 = vsel %vm279, %v476, 0
      %v533 = vsel %vm279, %v477, 0
      %v536 = vsel %vm279, %v478, 0
      %v539 = vsel %vm279, %v479, 0
      %v542 = vsel %vm279, %v480, 0
      %v545 = vsel %vm279, %v481, 0
      %v548 = vsel %vm279, %v482, 0
      %v551 = vsel %vm279, %v483, 0
      %v554 = vsel %vm279, %v484, 0
      %v557 = vsel %vm279, %v485, 0
      %v560 = vsel %vm279, %v486, 0
      %v563 = vsel %vm279, %v487, 0
      %v566 = vsel %vm279, %v488, 0
      %v569 = vsel %vm279, %v489, 0
      %v572 = vsel %vm279, %v490, 0
      %v575 = vsel %vm279, %v491, 0
      %v578 = vsel %vm279, %v492, 0
      %v581 = vsel %vm279, %v493, 0
      %v584 = vsel %vm279, %v494, 0
      %v587 = vsel %vm279, %v495, 0
      %v590 = vsel %vm279, %v496, 0
      %v593 = vsel %vm279, %v497, 0
      %vm595 = vcmask 1043456
      %v597 = vsel %vm595, %v498, 0
      %599 = vmatpush.msra.mxu0 0.0
      %600 = vmatpush.msra.mxu0 0.0
      %601 = vmatpush.msra.mxu0 0.0
      %602 = vmatpush.msra.mxu0 0.0
      %603 = vmatpush.msra.mxu0 0.0
      %604 = vmatpush.msra.mxu0 0.0
      %605 = vmatpush.msra.mxu0 0.0
      %606 = vmatpush.msra.mxu0 0.0
      %607 = vmatpush.msra.mxu0 0.0
      %608 = vmatpush.msra.mxu0 0.0
      %609 = vmatpush.msra.mxu0 0.0
      %610 = vmatpush.msra.mxu0 0.0
      %611 = vmatpush.msra.mxu0 0.0
      %612 = vmatpush.msra.mxu0 0.0
      %613 = vmatpush.msra.mxu0 0.0
      %614 = vmatpush.msra.mxu0 %v597
      %615 = vmatmul.f32.gmra.mxu0 %v500
      %v616 = vpop.f32.mrf.mxu0
      %v617 = vadd.f32 0.0, %v616
      %618 = vmatmul.f32.gmra.mxu0 %v503
      %v619 = vpop.f32.mrf.mxu0
      %v620 = vadd.f32 0.0, %v619
      %621 = vmatmul.f32.gmra.mxu0 %v506
      %v622 = vpop.f32.mrf.mxu0
      %v623 = vadd.f32 0.0, %v622
      %624 = vmatmul.f32.gmra.mxu0 %v509
      %v625 = vpop.f32.mrf.mxu0
      %v626 = vadd.f32 0.0, %v625
      %627 = vmatmul.f32.gmra.mxu0 %v512
      %v628 = vpop.f32.mrf.mxu0
      %v629 = vadd.f32 0.0, %v628
      %630 = vmatmul.f32.gmra.mxu0 %v515
      %v631 = vpop.f32.mrf.mxu0
      %v632 = vadd.f32 0.0, %v631
      %633 = vmatmul.f32.gmra.mxu0 %v518
      %v634 = vpop.f32.mrf.mxu0
      %v635 = vadd.f32 0.0, %v634
      %636 = vmatmul.f32.gmra.mxu0 %v521
      %v637 = vpop.f32.mrf.mxu0
      %v638 = vadd.f32 0.0, %v637
      %639 = vmatmul.f32.gmra.mxu0 %v524
      %v640 = vpop.f32.mrf.mxu0
      %v641 = vadd.f32 0.0, %v640
      %642 = vmatmul.f32.gmra.mxu0 %v527
      %v643 = vpop.f32.mrf.mxu0
      %v644 = vadd.f32 0.0, %v643
      %645 = vmatmul.f32.gmra.mxu0 %v530
      %v646 = vpop.f32.mrf.mxu0
      %v647 = vadd.f32 0.0, %v646
      %648 = vmatmul.f32.gmra.mxu0 %v533
      %v649 = vpop.f32.mrf.mxu0
      %v650 = vadd.f32 0.0, %v649
      %651 = vmatmul.f32.gmra.mxu0 %v536
      %v652 = vpop.f32.mrf.mxu0
      %v653 = vadd.f32 0.0, %v652
      %654 = vmatmul.f32.gmra.mxu0 %v539
      %v655 = vpop.f32.mrf.mxu0
      %v656 = vadd.f32 0.0, %v655
      %657 = vmatmul.f32.gmra.mxu0 %v542
      %v658 = vpop.f32.mrf.mxu0
      %v659 = vadd.f32 0.0, %v658
      %660 = vmatmul.f32.gmra.mxu0 %v545
      %v661 = vpop.f32.mrf.mxu0
      %v662 = vadd.f32 0.0, %v661
      %663 = vmatmul.f32.gmra.mxu0 %v548
      %v664 = vpop.f32.mrf.mxu0
      %v665 = vadd.f32 0.0, %v664
      %666 = vmatmul.f32.gmra.mxu0 %v551
      %v667 = vpop.f32.mrf.mxu0
      %v668 = vadd.f32 0.0, %v667
      %669 = vmatmul.f32.gmra.mxu0 %v554
      %v670 = vpop.f32.mrf.mxu0
      %v671 = vadd.f32 0.0, %v670
      %672 = vmatmul.f32.gmra.mxu0 %v557
      %v673 = vpop.f32.mrf.mxu0
      %v674 = vadd.f32 0.0, %v673
      %675 = vmatmul.f32.gmra.mxu0 %v560
      %v676 = vpop.f32.mrf.mxu0
      %v677 = vadd.f32 0.0, %v676
      %678 = vmatmul.f32.gmra.mxu0 %v563
      %v679 = vpop.f32.mrf.mxu0
      %v680 = vadd.f32 0.0, %v679
      %681 = vmatmul.f32.gmra.mxu0 %v566
      %v682 = vpop.f32.mrf.mxu0
      %v683 = vadd.f32 0.0, %v682
      %684 = vmatmul.f32.gmra.mxu0 %v569
      %v685 = vpop.f32.mrf.mxu0
      %v686 = vadd.f32 0.0, %v685
      %687 = vmatmul.f32.gmra.mxu0 %v572
      %v688 = vpop.f32.mrf.mxu0
      %v689 = vadd.f32 0.0, %v688
      %690 = vmatmul.f32.gmra.mxu0 %v575
      %v691 = vpop.f32.mrf.mxu0
      %v692 = vadd.f32 0.0, %v691
      %693 = vmatmul.f32.gmra.mxu0 %v578
      %v694 = vpop.f32.mrf.mxu0
      %v695 = vadd.f32 0.0, %v694
      %696 = vmatmul.f32.gmra.mxu0 %v581
      %v697 = vpop.f32.mrf.mxu0
      %v698 = vadd.f32 0.0, %v697
      %699 = vmatmul.f32.gmra.mxu0 %v584
      %v700 = vpop.f32.mrf.mxu0
      %v701 = vadd.f32 0.0, %v700
      %702 = vmatmul.f32.gmra.mxu0 %v587
      %v703 = vpop.f32.mrf.mxu0
      %v704 = vadd.f32 0.0, %v703
      %705 = vmatmul.f32.gmra.mxu0 %v590
      %v706 = vpop.f32.mrf.mxu0
      %v707 = vadd.f32 0.0, %v706
      %708 = vmatmul.f32.gmra.mxu0 %v593
      %v709 = vpop.f32.mrf.mxu0
      %v710 = vadd.f32 0.0, %v709
      %711 = vdwg.mxu0
      %v713 = vsel %vm279, %v433, 0
      %v716 = vsel %vm279, %v434, 0
      %v719 = vsel %vm279, %v435, 0
      %v722 = vsel %vm279, %v436, 0
      %v725 = vsel %vm279, %v437, 0
      %v728 = vsel %vm279, %v438, 0
      %v731 = vsel %vm279, %v439, 0
      %v734 = vsel %vm279, %v440, 0
      %v737 = vsel %vm279, %v441, 0
      %v740 = vsel %vm279, %v442, 0
      %v743 = vsel %vm279, %v443, 0
      %v746 = vsel %vm279, %v444, 0
      %v749 = vsel %vm279, %v445, 0
      %v752 = vsel %vm279, %v446, 0
      %v755 = vsel %vm279, %v447, 0
      %v758 = vsel %vm279, %v448, 0
      %v761 = vsel %vm279, %v449, 0
      %v764 = vsel %vm279, %v450, 0
      %v767 = vsel %vm279, %v451, 0
      %v770 = vsel %vm279, %v452, 0
      %v773 = vsel %vm279, %v453, 0
      %v776 = vsel %vm279, %v454, 0
      %v779 = vsel %vm279, %v455, 0
      %v782 = vsel %vm279, %v456, 0
      %v785 = vsel %vm279, %v457, 0
      %v788 = vsel %vm279, %v458, 0
      %v791 = vsel %vm279, %v459, 0
      %v794 = vsel %vm279, %v460, 0
      %v797 = vsel %vm279, %v461, 0
      %v800 = vsel %vm279, %v462, 0
      %v803 = vsel %vm279, %v463, 0
      %v806 = vsel %vm279, %v464, 0
      %v809 = vsel %vm595, %v465, 0
      %811 = vmatpush.msra.mxu0 0.0
      %812 = vmatpush.msra.mxu0 0.0
      %813 = vmatpush.msra.mxu0 0.0
      %814 = vmatpush.msra.mxu0 0.0
      %815 = vmatpush.msra.mxu0 0.0
      %816 = vmatpush.msra.mxu0 0.0
      %817 = vmatpush.msra.mxu0 0.0
      %818 = vmatpush.msra.mxu0 0.0
      %819 = vmatpush.msra.mxu0 0.0
      %820 = vmatpush.msra.mxu0 0.0
      %821 = vmatpush.msra.mxu0 0.0
      %822 = vmatpush.msra.mxu0 0.0
      %823 = vmatpush.msra.mxu0 0.0
      %824 = vmatpush.msra.mxu0 0.0
      %825 = vmatpush.msra.mxu0 0.0
      %826 = vmatpush.msra.mxu0 %v809
      %827 = vmatmul.f32.gmra.mxu0 %v713
      %v828 = vpop.f32.mrf.mxu0
      %v829 = vadd.f32 %v617, %v828
      %830 = vmatmul.f32.gmra.mxu0 %v716
      %v831 = vpop.f32.mrf.mxu0
      %v832 = vadd.f32 %v620, %v831
      %833 = vmatmul.f32.gmra.mxu0 %v719
      %v834 = vpop.f32.mrf.mxu0
      %v835 = vadd.f32 %v623, %v834
      %836 = vmatmul.f32.gmra.mxu0 %v722
      %v837 = vpop.f32.mrf.mxu0
      %v838 = vadd.f32 %v626, %v837
      %839 = vmatmul.f32.gmra.mxu0 %v725
      %v840 = vpop.f32.mrf.mxu0
      %v841 = vadd.f32 %v629, %v840
      %842 = vmatmul.f32.gmra.mxu0 %v728
      %v843 = vpop.f32.mrf.mxu0
      %v844 = vadd.f32 %v632, %v843
      %845 = vmatmul.f32.gmra.mxu0 %v731
      %v846 = vpop.f32.mrf.mxu0
      %v847 = vadd.f32 %v635, %v846
      %848 = vmatmul.f32.gmra.mxu0 %v734
      %v849 = vpop.f32.mrf.mxu0
      %v850 = vadd.f32 %v638, %v849
      %851 = vmatmul.f32.gmra.mxu0 %v737
      %v852 = vpop.f32.mrf.mxu0
      %v853 = vadd.f32 %v641, %v852
      %854 = vmatmul.f32.gmra.mxu0 %v740
      %v855 = vpop.f32.mrf.mxu0
      %v856 = vadd.f32 %v644, %v855
      %857 = vmatmul.f32.gmra.mxu0 %v743
      %v858 = vpop.f32.mrf.mxu0
      %v859 = vadd.f32 %v647, %v858
      %860 = vmatmul.f32.gmra.mxu0 %v746
      %v861 = vpop.f32.mrf.mxu0
      %v862 = vadd.f32 %v650, %v861
      %863 = vmatmul.f32.gmra.mxu0 %v749
      %v864 = vpop.f32.mrf.mxu0
      %v865 = vadd.f32 %v653, %v864
      %866 = vmatmul.f32.gmra.mxu0 %v752
      %v867 = vpop.f32.mrf.mxu0
      %v868 = vadd.f32 %v656, %v867
      %869 = vmatmul.f32.gmra.mxu0 %v755
      %v870 = vpop.f32.mrf.mxu0
      %v871 = vadd.f32 %v659, %v870
      %872 = vmatmul.f32.gmra.mxu0 %v758
      %v873 = vpop.f32.mrf.mxu0
      %v874 = vadd.f32 %v662, %v873
      %875 = vmatmul.f32.gmra.mxu0 %v761
      %v876 = vpop.f32.mrf.mxu0
      %v877 = vadd.f32 %v665, %v876
      %878 = vmatmul.f32.gmra.mxu0 %v764
      %v879 = vpop.f32.mrf.mxu0
      %v880 = vadd.f32 %v668, %v879
      %881 = vmatmul.f32.gmra.mxu0 %v767
      %v882 = vpop.f32.mrf.mxu0
      %v883 = vadd.f32 %v671, %v882
      %884 = vmatmul.f32.gmra.mxu0 %v770
      %v885 = vpop.f32.mrf.mxu0
      %v886 = vadd.f32 %v674, %v885
      %887 = vmatmul.f32.gmra.mxu0 %v773
      %v888 = vpop.f32.mrf.mxu0
      %v889 = vadd.f32 %v677, %v888
      %890 = vmatmul.f32.gmra.mxu0 %v776
      %v891 = vpop.f32.mrf.mxu0
      %v892 = vadd.f32 %v680, %v891
      %893 = vmatmul.f32.gmra.mxu0 %v779
      %v894 = vpop.f32.mrf.mxu0
      %v895 = vadd.f32 %v683, %v894
      %896 = vmatmul.f32.gmra.mxu0 %v782
      %v897 = vpop.f32.mrf.mxu0
      %v898 = vadd.f32 %v686, %v897
      %899 = vmatmul.f32.gmra.mxu0 %v785
      %v900 = vpop.f32.mrf.mxu0
      %v901 = vadd.f32 %v689, %v900
      %902 = vmatmul.f32.gmra.mxu0 %v788
      %v903 = vpop.f32.mrf.mxu0
      %v904 = vadd.f32 %v692, %v903
      %905 = vmatmul.f32.gmra.mxu0 %v791
      %v906 = vpop.f32.mrf.mxu0
      %v907 = vadd.f32 %v695, %v906
      %908 = vmatmul.f32.gmra.mxu0 %v794
      %v909 = vpop.f32.mrf.mxu0
      %v910 = vadd.f32 %v698, %v909
      %911 = vmatmul.f32.gmra.mxu0 %v797
      %v912 = vpop.f32.mrf.mxu0
      %v913 = vadd.f32 %v701, %v912
      %914 = vmatmul.f32.gmra.mxu0 %v800
      %v915 = vpop.f32.mrf.mxu0
      %v916 = vadd.f32 %v704, %v915
      %917 = vmatmul.f32.gmra.mxu0 %v803
      %v918 = vpop.f32.mrf.mxu0
      %v919 = vadd.f32 %v707, %v918
      %920 = vmatmul.f32.gmra.mxu0 %v806
      %v921 = vpop.f32.mrf.mxu0
      %v922 = vadd.f32 %v710, %v921
      %923 = vdwg.mxu0
      %v924 = vld [vmem:[#allocation2 + $0x2] sm:$0xff]
      %v925 = vld [vmem:[#allocation2 + $0xa] sm:$0xff]
      %v926 = vld [vmem:[#allocation2 + $0x1a] sm:$0xff]
      %v927 = vld [vmem:[#allocation2 + $0x22] sm:$0xff]
      %v928 = vld [vmem:[#allocation2 + $0x32] sm:$0xff]
      %v929 = vld [vmem:[#allocation2 + $0x3a] sm:$0xff]
      %v930 = vld [vmem:[#allocation2 + $0x4a] sm:$0xff]
      %v931 = vld [vmem:[#allocation2 + $0x52] sm:$0xff]
      %v932 = vld [vmem:[#allocation2 + $0x62] sm:$0xff]
      %v933 = vld [vmem:[#allocation2 + $0x6a] sm:$0xff]
      %v934 = vld [vmem:[#allocation2 + $0x7a] sm:$0xff]
      %v935 = vld [vmem:[#allocation2 + $0x82] sm:$0xff]
      %v936 = vld [vmem:[#allocation2 + $0x92] sm:$0xff]
      %v937 = vld [vmem:[#allocation2 + $0x9a] sm:$0xff]
      %v938 = vld [vmem:[#allocation2 + $0xaa] sm:$0xff]
      %v939 = vld [vmem:[#allocation2 + $0xb2] sm:$0xff]
      %v940 = vld [vmem:[#allocation2 + $0xc2] sm:$0xff]
      %v941 = vld [vmem:[#allocation2 + $0xca] sm:$0xff]
      %v942 = vld [vmem:[#allocation2 + $0xda] sm:$0xff]
      %v943 = vld [vmem:[#allocation2 + $0xe2] sm:$0xff]
      %v944 = vld [vmem:[#allocation2 + $0xf2] sm:$0xff]
      %v945 = vld [vmem:[#allocation2 + $0xfa] sm:$0xff]
      %v946 = vld [vmem:[#allocation2 + $0x10a] sm:$0xff]
      %v947 = vld [vmem:[#allocation2 + $0x112] sm:$0xff]
      %v948 = vld [vmem:[#allocation2 + $0x122] sm:$0xff]
      %v949 = vld [vmem:[#allocation2 + $0x12a] sm:$0xff]
      %v950 = vld [vmem:[#allocation2 + $0x13a] sm:$0xff]
      %v951 = vld [vmem:[#allocation2 + $0x142] sm:$0xff]
      %v952 = vld [vmem:[#allocation2 + $0x152] sm:$0xff]
      %v953 = vld [vmem:[#allocation2 + $0x15a] sm:$0xff]
      %v954 = vld [vmem:[#allocation2 + $0x16a] sm:$0xff]
      %v955 = vld [vmem:[#allocation2 + $0x172] sm:$0xff]
      %v956 = vld [vmem:[%s1 + $0x8] sm:$0xf]
      %v958 = vsel %vm279, %v924, 0
      %v961 = vsel %vm279, %v925, 0
      %v964 = vsel %vm279, %v926, 0
      %v967 = vsel %vm279, %v927, 0
      %v970 = vsel %vm279, %v928, 0
      %v973 = vsel %vm279, %v929, 0
      %v976 = vsel %vm279, %v930, 0
      %v979 = vsel %vm279, %v931, 0
      %v982 = vsel %vm279, %v932, 0
      %v985 = vsel %vm279, %v933, 0
      %v988 = vsel %vm279, %v934, 0
      %v991 = vsel %vm279, %v935, 0
      %v994 = vsel %vm279, %v936, 0
      %v997 = vsel %vm279, %v937, 0
      %v1000 = vsel %vm279, %v938, 0
      %v1003 = vsel %vm279, %v939, 0
      %v1006 = vsel %vm279, %v940, 0
      %v1009 = vsel %vm279, %v941, 0
      %v1012 = vsel %vm279, %v942, 0
      %v1015 = vsel %vm279, %v943, 0
      %v1018 = vsel %vm279, %v944, 0
      %v1021 = vsel %vm279, %v945, 0
      %v1024 = vsel %vm279, %v946, 0
      %v1027 = vsel %vm279, %v947, 0
      %v1030 = vsel %vm279, %v948, 0
      %v1033 = vsel %vm279, %v949, 0
      %v1036 = vsel %vm279, %v950, 0
      %v1039 = vsel %vm279, %v951, 0
      %v1042 = vsel %vm279, %v952, 0
      %v1045 = vsel %vm279, %v953, 0
      %v1048 = vsel %vm279, %v954, 0
      %v1051 = vsel %vm279, %v955, 0
      %v1054 = vsel %vm595, %v956, 0
      %1056 = vmatpush.msra.mxu0 0.0
      %1057 = vmatpush.msra.mxu0 0.0
      %1058 = vmatpush.msra.mxu0 0.0
      %1059 = vmatpush.msra.mxu0 0.0
      %1060 = vmatpush.msra.mxu0 0.0
      %1061 = vmatpush.msra.mxu0 0.0
      %1062 = vmatpush.msra.mxu0 0.0
      %1063 = vmatpush.msra.mxu0 0.0
      %1064 = vmatpush.msra.mxu0 0.0
      %1065 = vmatpush.msra.mxu0 0.0
      %1066 = vmatpush.msra.mxu0 0.0
      %1067 = vmatpush.msra.mxu0 0.0
      %1068 = vmatpush.msra.mxu0 0.0
      %1069 = vmatpush.msra.mxu0 0.0
      %1070 = vmatpush.msra.mxu0 0.0
      %1071 = vmatpush.msra.mxu0 %v1054
      %1072 = vmatmul.f32.gmra.mxu0 %v958
      %v1073 = vpop.f32.mrf.mxu0
      %v1074 = vadd.f32 0.0, %v1073
      %1075 = vmatmul.f32.gmra.mxu0 %v961
      %v1076 = vpop.f32.mrf.mxu0
      %v1077 = vadd.f32 0.0, %v1076
      %1078 = vmatmul.f32.gmra.mxu0 %v964
      %v1079 = vpop.f32.mrf.mxu0
      %v1080 = vadd.f32 0.0, %v1079
      %1081 = vmatmul.f32.gmra.mxu0 %v967
      %v1082 = vpop.f32.mrf.mxu0
      %v1083 = vadd.f32 0.0, %v1082
      %1084 = vmatmul.f32.gmra.mxu0 %v970
      %v1085 = vpop.f32.mrf.mxu0
      %v1086 = vadd.f32 0.0, %v1085
      %1087 = vmatmul.f32.gmra.mxu0 %v973
      %v1088 = vpop.f32.mrf.mxu0
      %v1089 = vadd.f32 0.0, %v1088
      %1090 = vmatmul.f32.gmra.mxu0 %v976
      %v1091 = vpop.f32.mrf.mxu0
      %v1092 = vadd.f32 0.0, %v1091
      %1093 = vmatmul.f32.gmra.mxu0 %v979
      %v1094 = vpop.f32.mrf.mxu0
      %v1095 = vadd.f32 0.0, %v1094
      %1096 = vmatmul.f32.gmra.mxu0 %v982
      %v1097 = vpop.f32.mrf.mxu0
      %v1098 = vadd.f32 0.0, %v1097
      %1099 = vmatmul.f32.gmra.mxu0 %v985
      %v1100 = vpop.f32.mrf.mxu0
      %v1101 = vadd.f32 0.0, %v1100
      %1102 = vmatmul.f32.gmra.mxu0 %v988
      %v1103 = vpop.f32.mrf.mxu0
      %v1104 = vadd.f32 0.0, %v1103
      %1105 = vmatmul.f32.gmra.mxu0 %v991
      %v1106 = vpop.f32.mrf.mxu0
      %v1107 = vadd.f32 0.0, %v1106
      %1108 = vmatmul.f32.gmra.mxu0 %v994
      %v1109 = vpop.f32.mrf.mxu0
      %v1110 = vadd.f32 0.0, %v1109
      %1111 = vmatmul.f32.gmra.mxu0 %v997
      %v1112 = vpop.f32.mrf.mxu0
      %v1113 = vadd.f32 0.0, %v1112
      %1114 = vmatmul.f32.gmra.mxu0 %v1000
      %v1115 = vpop.f32.mrf.mxu0
      %v1116 = vadd.f32 0.0, %v1115
      %1117 = vmatmul.f32.gmra.mxu0 %v1003
      %v1118 = vpop.f32.mrf.mxu0
      %v1119 = vadd.f32 0.0, %v1118
      %1120 = vmatmul.f32.gmra.mxu0 %v1006
      %v1121 = vpop.f32.mrf.mxu0
      %v1122 = vadd.f32 0.0, %v1121
      %1123 = vmatmul.f32.gmra.mxu0 %v1009
      %v1124 = vpop.f32.mrf.mxu0
      %v1125 = vadd.f32 0.0, %v1124
      %1126 = vmatmul.f32.gmra.mxu0 %v1012
      %v1127 = vpop.f32.mrf.mxu0
      %v1128 = vadd.f32 0.0, %v1127
      %1129 = vmatmul.f32.gmra.mxu0 %v1015
      %v1130 = vpop.f32.mrf.mxu0
      %v1131 = vadd.f32 0.0, %v1130
      %1132 = vmatmul.f32.gmra.mxu0 %v1018
      %v1133 = vpop.f32.mrf.mxu0
      %v1134 = vadd.f32 0.0, %v1133
      %1135 = vmatmul.f32.gmra.mxu0 %v1021
      %v1136 = vpop.f32.mrf.mxu0
      %v1137 = vadd.f32 0.0, %v1136
      %1138 = vmatmul.f32.gmra.mxu0 %v1024
      %v1139 = vpop.f32.mrf.mxu0
      %v1140 = vadd.f32 0.0, %v1139
      %1141 = vmatmul.f32.gmra.mxu0 %v1027
      %v1142 = vpop.f32.mrf.mxu0
      %v1143 = vadd.f32 0.0, %v1142
      %1144 = vmatmul.f32.gmra.mxu0 %v1030
      %v1145 = vpop.f32.mrf.mxu0
      %v1146 = vadd.f32 0.0, %v1145
      %1147 = vmatmul.f32.gmra.mxu0 %v1033
      %v1148 = vpop.f32.mrf.mxu0
      %v1149 = vadd.f32 0.0, %v1148
      %1150 = vmatmul.f32.gmra.mxu0 %v1036
      %v1151 = vpop.f32.mrf.mxu0
      %v1152 = vadd.f32 0.0, %v1151
      %1153 = vmatmul.f32.gmra.mxu0 %v1039
      %v1154 = vpop.f32.mrf.mxu0
      %v1155 = vadd.f32 0.0, %v1154
      %1156 = vmatmul.f32.gmra.mxu0 %v1042
      %v1157 = vpop.f32.mrf.mxu0
      %v1158 = vadd.f32 0.0, %v1157
      %1159 = vmatmul.f32.gmra.mxu0 %v1045
      %v1160 = vpop.f32.mrf.mxu0
      %v1161 = vadd.f32 0.0, %v1160
      %1162 = vmatmul.f32.gmra.mxu0 %v1048
      %v1163 = vpop.f32.mrf.mxu0
      %v1164 = vadd.f32 0.0, %v1163
      %1165 = vmatmul.f32.gmra.mxu0 %v1051
      %v1166 = vpop.f32.mrf.mxu0
      %v1167 = vadd.f32 0.0, %v1166
      %1168 = vdwg.mxu0
      %v1169 = vadd.f32 %v829, %v1074
      %v1170 = vadd.f32 %v832, %v1077
      %v1171 = vadd.f32 %v835, %v1080
      %v1172 = vadd.f32 %v838, %v1083
      %v1173 = vadd.f32 %v841, %v1086
      %v1174 = vadd.f32 %v844, %v1089
      %v1175 = vadd.f32 %v847, %v1092
      %v1176 = vadd.f32 %v850, %v1095
      %v1177 = vadd.f32 %v853, %v1098
      %v1178 = vadd.f32 %v856, %v1101
      %v1179 = vadd.f32 %v859, %v1104
      %v1180 = vadd.f32 %v862, %v1107
      %v1181 = vadd.f32 %v865, %v1110
      %v1182 = vadd.f32 %v868, %v1113
      %v1183 = vadd.f32 %v871, %v1116
      %v1184 = vadd.f32 %v874, %v1119
      %v1185 = vadd.f32 %v877, %v1122
      %v1186 = vadd.f32 %v880, %v1125
      %v1187 = vadd.f32 %v883, %v1128
      %v1188 = vadd.f32 %v886, %v1131
      %v1189 = vadd.f32 %v889, %v1134
      %v1190 = vadd.f32 %v892, %v1137
      %v1191 = vadd.f32 %v895, %v1140
      %v1192 = vadd.f32 %v898, %v1143
      %v1193 = vadd.f32 %v901, %v1146
      %v1194 = vadd.f32 %v904, %v1149
      %v1195 = vadd.f32 %v907, %v1152
      %v1196 = vadd.f32 %v910, %v1155
      %v1197 = vadd.f32 %v913, %v1158
      %v1198 = vadd.f32 %v916, %v1161
      %v1199 = vadd.f32 %v919, %v1164
      %v1200 = vadd.f32 %v922, %v1167
      %v1201 = vld [vmem:[%s400] sm:$0xff]
      %v1202 = vld [vmem:[%s400 + $0x8] sm:$0xff]
      %v1203 = vld [vmem:[%s400 + $0x18] sm:$0xff]
      %v1204 = vld [vmem:[%s400 + $0x20] sm:$0xff]
      %v1205 = vld [vmem:[%s400 + $0x30] sm:$0xff]
      %v1206 = vld [vmem:[%s400 + $0x38] sm:$0xff]
      %v1207 = vld [vmem:[%s400 + $0x48] sm:$0xff]
      %v1208 = vld [vmem:[%s400 + $0x50] sm:$0xff]
      %v1209 = vld [vmem:[%s400 + $0x60] sm:$0xff]
      %v1210 = vld [vmem:[%s400 + $0x68] sm:$0xff]
      %v1211 = vld [vmem:[%s400 + $0x78] sm:$0xff]
      %v1212 = vld [vmem:[%s400 + $0x80] sm:$0xff]
      %v1213 = vld [vmem:[%s400 + $0x90] sm:$0xff]
      %v1214 = vld [vmem:[%s400 + $0x98] sm:$0xff]
      %v1215 = vld [vmem:[%s400 + $0xa8] sm:$0xff]
      %v1216 = vld [vmem:[%s400 + $0xb0] sm:$0xff]
      %v1217 = vld [vmem:[%s400 + $0xc0] sm:$0xff]
      %v1218 = vld [vmem:[%s400 + $0xc8] sm:$0xff]
      %v1219 = vld [vmem:[%s400 + $0xd8] sm:$0xff]
      %v1220 = vld [vmem:[%s400 + $0xe0] sm:$0xff]
      %v1221 = vld [vmem:[%s400 + $0xf0] sm:$0xff]
      %v1222 = vld [vmem:[%s400 + $0xf8] sm:$0xff]
      %v1223 = vld [vmem:[%s400 + $0x108] sm:$0xff]
      %v1224 = vld [vmem:[%s400 + $0x110] sm:$0xff]
      %v1225 = vld [vmem:[%s400 + $0x120] sm:$0xff]
      %v1226 = vld [vmem:[%s400 + $0x128] sm:$0xff]
      %v1227 = vld [vmem:[%s400 + $0x138] sm:$0xff]
      %v1228 = vld [vmem:[%s400 + $0x140] sm:$0xff]
      %v1229 = vld [vmem:[%s400 + $0x150] sm:$0xff]
      %v1230 = vld [vmem:[%s400 + $0x158] sm:$0xff]
      %v1231 = vld [vmem:[%s400 + $0x168] sm:$0xff]
      %v1232 = vld [vmem:[%s400 + $0x170] sm:$0xff]
      %v1233 = vld [vmem:[%s1 + $0xc] sm:$0xf]
      %v1235 = vsel %vm279, %v1201, 0
      %v1238 = vsel %vm279, %v1202, 0
      %v1241 = vsel %vm279, %v1203, 0
      %v1244 = vsel %vm279, %v1204, 0
      %v1247 = vsel %vm279, %v1205, 0
      %v1250 = vsel %vm279, %v1206, 0
      %v1253 = vsel %vm279, %v1207, 0
      %v1256 = vsel %vm279, %v1208, 0
      %v1259 = vsel %vm279, %v1209, 0
      %v1262 = vsel %vm279, %v1210, 0
      %v1265 = vsel %vm279, %v1211, 0
      %v1268 = vsel %vm279, %v1212, 0
      %v1271 = vsel %vm279, %v1213, 0
      %v1274 = vsel %vm279, %v1214, 0
      %v1277 = vsel %vm279, %v1215, 0
      %v1280 = vsel %vm279, %v1216, 0
      %v1283 = vsel %vm279, %v1217, 0
      %v1286 = vsel %vm279, %v1218, 0
      %v1289 = vsel %vm279, %v1219, 0
      %v1292 = vsel %vm279, %v1220, 0
      %v1295 = vsel %vm279, %v1221, 0
      %v1298 = vsel %vm279, %v1222, 0
      %v1301 = vsel %vm279, %v1223, 0
      %v1304 = vsel %vm279, %v1224, 0
      %v1307 = vsel %vm279, %v1225, 0
      %v1310 = vsel %vm279, %v1226, 0
      %v1313 = vsel %vm279, %v1227, 0
      %v1316 = vsel %vm279, %v1228, 0
      %v1319 = vsel %vm279, %v1229, 0
      %v1322 = vsel %vm279, %v1230, 0
      %v1325 = vsel %vm279, %v1231, 0
      %v1328 = vsel %vm279, %v1232, 0
      %v1331 = vsel %vm595, %v1233, 0
      %1333 = vmatpush.msra.mxu0 0.0
      %1334 = vmatpush.msra.mxu0 0.0
      %1335 = vmatpush.msra.mxu0 0.0
      %1336 = vmatpush.msra.mxu0 0.0
      %1337 = vmatpush.msra.mxu0 0.0
      %1338 = vmatpush.msra.mxu0 0.0
      %1339 = vmatpush.msra.mxu0 0.0
      %1340 = vmatpush.msra.mxu0 0.0
      %1341 = vmatpush.msra.mxu0 0.0
      %1342 = vmatpush.msra.mxu0 0.0
      %1343 = vmatpush.msra.mxu0 0.0
      %1344 = vmatpush.msra.mxu0 0.0
      %1345 = vmatpush.msra.mxu0 0.0
      %1346 = vmatpush.msra.mxu0 0.0
      %1347 = vmatpush.msra.mxu0 0.0
      %1348 = vmatpush.msra.mxu0 %v1331
      %1349 = vmatmul.f32.gmra.mxu0 %v1235
      %v1350 = vpop.f32.mrf.mxu0
      %v1351 = vadd.f32 0.0, %v1350
      %1352 = vmatmul.f32.gmra.mxu0 %v1238
      %v1353 = vpop.f32.mrf.mxu0
      %v1354 = vadd.f32 0.0, %v1353
      %1355 = vmatmul.f32.gmra.mxu0 %v1241
      %v1356 = vpop.f32.mrf.mxu0
      %v1357 = vadd.f32 0.0, %v1356
      %1358 = vmatmul.f32.gmra.mxu0 %v1244
      %v1359 = vpop.f32.mrf.mxu0
      %v1360 = vadd.f32 0.0, %v1359
      %1361 = vmatmul.f32.gmra.mxu0 %v1247
      %v1362 = vpop.f32.mrf.mxu0
      %v1363 = vadd.f32 0.0, %v1362
      %1364 = vmatmul.f32.gmra.mxu0 %v1250
      %v1365 = vpop.f32.mrf.mxu0
      %v1366 = vadd.f32 0.0, %v1365
      %1367 = vmatmul.f32.gmra.mxu0 %v1253
      %v1368 = vpop.f32.mrf.mxu0
      %v1369 = vadd.f32 0.0, %v1368
      %1370 = vmatmul.f32.gmra.mxu0 %v1256
      %v1371 = vpop.f32.mrf.mxu0
      %v1372 = vadd.f32 0.0, %v1371
      %1373 = vmatmul.f32.gmra.mxu0 %v1259
      %v1374 = vpop.f32.mrf.mxu0
      %v1375 = vadd.f32 0.0, %v1374
      %1376 = vmatmul.f32.gmra.mxu0 %v1262
      %v1377 = vpop.f32.mrf.mxu0
      %v1378 = vadd.f32 0.0, %v1377
      %1379 = vmatmul.f32.gmra.mxu0 %v1265
      %v1380 = vpop.f32.mrf.mxu0
      %v1381 = vadd.f32 0.0, %v1380
      %1382 = vmatmul.f32.gmra.mxu0 %v1268
      %v1383 = vpop.f32.mrf.mxu0
      %v1384 = vadd.f32 0.0, %v1383
      %1385 = vmatmul.f32.gmra.mxu0 %v1271
      %v1386 = vpop.f32.mrf.mxu0
      %v1387 = vadd.f32 0.0, %v1386
      %1388 = vmatmul.f32.gmra.mxu0 %v1274
      %v1389 = vpop.f32.mrf.mxu0
      %v1390 = vadd.f32 0.0, %v1389
      %1391 = vmatmul.f32.gmra.mxu0 %v1277
      %v1392 = vpop.f32.mrf.mxu0
      %v1393 = vadd.f32 0.0, %v1392
      %1394 = vmatmul.f32.gmra.mxu0 %v1280
      %v1395 = vpop.f32.mrf.mxu0
      %v1396 = vadd.f32 0.0, %v1395
      %1397 = vmatmul.f32.gmra.mxu0 %v1283
      %v1398 = vpop.f32.mrf.mxu0
      %v1399 = vadd.f32 0.0, %v1398
      %1400 = vmatmul.f32.gmra.mxu0 %v1286
      %v1401 = vpop.f32.mrf.mxu0
      %v1402 = vadd.f32 0.0, %v1401
      %1403 = vmatmul.f32.gmra.mxu0 %v1289
      %v1404 = vpop.f32.mrf.mxu0
      %v1405 = vadd.f32 0.0, %v1404
      %1406 = vmatmul.f32.gmra.mxu0 %v1292
      %v1407 = vpop.f32.mrf.mxu0
      %v1408 = vadd.f32 0.0, %v1407
      %1409 = vmatmul.f32.gmra.mxu0 %v1295
      %v1410 = vpop.f32.mrf.mxu0
      %v1411 = vadd.f32 0.0, %v1410
      %1412 = vmatmul.f32.gmra.mxu0 %v1298
      %v1413 = vpop.f32.mrf.mxu0
      %v1414 = vadd.f32 0.0, %v1413
      %1415 = vmatmul.f32.gmra.mxu0 %v1301
      %v1416 = vpop.f32.mrf.mxu0
      %v1417 = vadd.f32 0.0, %v1416
      %1418 = vmatmul.f32.gmra.mxu0 %v1304
      %v1419 = vpop.f32.mrf.mxu0
      %v1420 = vadd.f32 0.0, %v1419
      %1421 = vmatmul.f32.gmra.mxu0 %v1307
      %v1422 = vpop.f32.mrf.mxu0
      %v1423 = vadd.f32 0.0, %v1422
      %1424 = vmatmul.f32.gmra.mxu0 %v1310
      %v1425 = vpop.f32.mrf.mxu0
      %v1426 = vadd.f32 0.0, %v1425
      %1427 = vmatmul.f32.gmra.mxu0 %v1313
      %v1428 = vpop.f32.mrf.mxu0
      %v1429 = vadd.f32 0.0, %v1428
      %1430 = vmatmul.f32.gmra.mxu0 %v1316
      %v1431 = vpop.f32.mrf.mxu0
      %v1432 = vadd.f32 0.0, %v1431
      %1433 = vmatmul.f32.gmra.mxu0 %v1319
      %v1434 = vpop.f32.mrf.mxu0
      %v1435 = vadd.f32 0.0, %v1434
      %1436 = vmatmul.f32.gmra.mxu0 %v1322
      %v1437 = vpop.f32.mrf.mxu0
      %v1438 = vadd.f32 0.0, %v1437
      %1439 = vmatmul.f32.gmra.mxu0 %v1325
      %v1440 = vpop.f32.mrf.mxu0
      %v1441 = vadd.f32 0.0, %v1440
      %1442 = vmatmul.f32.gmra.mxu0 %v1328
      %v1443 = vpop.f32.mrf.mxu0
      %v1444 = vadd.f32 0.0, %v1443
      %1445 = vdwg.mxu0
      %v1446 = vadd.f32 %v1169, %v1351
      %v1447 = vadd.f32 %v1170, %v1354
      %v1448 = vadd.f32 %v1171, %v1357
      %v1449 = vadd.f32 %v1172, %v1360
      %v1450 = vadd.f32 %v1173, %v1363
      %v1451 = vadd.f32 %v1174, %v1366
      %v1452 = vadd.f32 %v1175, %v1369
      %v1453 = vadd.f32 %v1176, %v1372
      %v1454 = vadd.f32 %v1177, %v1375
      %v1455 = vadd.f32 %v1178, %v1378
      %v1456 = vadd.f32 %v1179, %v1381
      %v1457 = vadd.f32 %v1180, %v1384
      %v1458 = vadd.f32 %v1181, %v1387
      %v1459 = vadd.f32 %v1182, %v1390
      %v1460 = vadd.f32 %v1183, %v1393
      %v1461 = vadd.f32 %v1184, %v1396
      %v1462 = vadd.f32 %v1185, %v1399
      %v1463 = vadd.f32 %v1186, %v1402
      %v1464 = vadd.f32 %v1187, %v1405
      %v1465 = vadd.f32 %v1188, %v1408
      %v1466 = vadd.f32 %v1189, %v1411
      %v1467 = vadd.f32 %v1190, %v1414
      %v1468 = vadd.f32 %v1191, %v1417
      %v1469 = vadd.f32 %v1192, %v1420
      %v1470 = vadd.f32 %v1193, %v1423
      %v1471 = vadd.f32 %v1194, %v1426
      %v1472 = vadd.f32 %v1195, %v1429
      %v1473 = vadd.f32 %v1196, %v1432
      %v1474 = vadd.f32 %v1197, %v1435
      %v1475 = vadd.f32 %v1198, %v1438
      %v1476 = vadd.f32 %v1199, %v1441
      %v1477 = vadd.f32 %v1200, %v1444
      %v1478 = vld [vmem:[%s400 + $0x1] sm:$0xff]
      %v1479 = vld [vmem:[%s400 + $0x9] sm:$0xff]
      %v1480 = vld [vmem:[%s400 + $0x19] sm:$0xff]
      %v1481 = vld [vmem:[%s400 + $0x21] sm:$0xff]
      %v1482 = vld [vmem:[%s400 + $0x31] sm:$0xff]
      %v1483 = vld [vmem:[%s400 + $0x39] sm:$0xff]
      %v1484 = vld [vmem:[%s400 + $0x49] sm:$0xff]
      %v1485 = vld [vmem:[%s400 + $0x51] sm:$0xff]
      %v1486 = vld [vmem:[%s400 + $0x61] sm:$0xff]
      %v1487 = vld [vmem:[%s400 + $0x69] sm:$0xff]
      %v1488 = vld [vmem:[%s400 + $0x79] sm:$0xff]
      %v1489 = vld [vmem:[%s400 + $0x81] sm:$0xff]
      %v1490 = vld [vmem:[%s400 + $0x91] sm:$0xff]
      %v1491 = vld [vmem:[%s400 + $0x99] sm:$0xff]
      %v1492 = vld [vmem:[%s400 + $0xa9] sm:$0xff]
      %v1493 = vld [vmem:[%s400 + $0xb1] sm:$0xff]
      %v1494 = vld [vmem:[%s400 + $0xc1] sm:$0xff]
      %v1495 = vld [vmem:[%s400 + $0xc9] sm:$0xff]
      %v1496 = vld [vmem:[%s400 + $0xd9] sm:$0xff]
      %v1497 = vld [vmem:[%s400 + $0xe1] sm:$0xff]
      %v1498 = vld [vmem:[%s400 + $0xf1] sm:$0xff]
      %v1499 = vld [vmem:[%s400 + $0xf9] sm:$0xff]
      %v1500 = vld [vmem:[%s400 + $0x109] sm:$0xff]
      %v1501 = vld [vmem:[%s400 + $0x111] sm:$0xff]
      %v1502 = vld [vmem:[%s400 + $0x121] sm:$0xff]
      %v1503 = vld [vmem:[%s400 + $0x129] sm:$0xff]
      %v1504 = vld [vmem:[%s400 + $0x139] sm:$0xff]
      %v1505 = vld [vmem:[%s400 + $0x141] sm:$0xff]
      %v1506 = vld [vmem:[%s400 + $0x151] sm:$0xff]
      %v1507 = vld [vmem:[%s400 + $0x159] sm:$0xff]
      %v1508 = vld [vmem:[%s400 + $0x169] sm:$0xff]
      %v1509 = vld [vmem:[%s400 + $0x171] sm:$0xff]
      %v1510 = vld [vmem:[%s1 + $0x10] sm:$0xf]
      %v1512 = vsel %vm279, %v1478, 0
      %v1515 = vsel %vm279, %v1479, 0
      %v1518 = vsel %vm279, %v1480, 0
      %v1521 = vsel %vm279, %v1481, 0
      %v1524 = vsel %vm279, %v1482, 0
      %v1527 = vsel %vm279, %v1483, 0
      %v1530 = vsel %vm279, %v1484, 0
      %v1533 = vsel %vm279, %v1485, 0
      %v1536 = vsel %vm279, %v1486, 0
      %v1539 = vsel %vm279, %v1487, 0
      %v1542 = vsel %vm279, %v1488, 0
      %v1545 = vsel %vm279, %v1489, 0
      %v1548 = vsel %vm279, %v1490, 0
      %v1551 = vsel %vm279, %v1491, 0
      %v1554 = vsel %vm279, %v1492, 0
      %v1557 = vsel %vm279, %v1493, 0
      %v1560 = vsel %vm279, %v1494, 0
      %v1563 = vsel %vm279, %v1495, 0
      %v1566 = vsel %vm279, %v1496, 0
      %v1569 = vsel %vm279, %v1497, 0
      %v1572 = vsel %vm279, %v1498, 0
      %v1575 = vsel %vm279, %v1499, 0
      %v1578 = vsel %vm279, %v1500, 0
      %v1581 = vsel %vm279, %v1501, 0
      %v1584 = vsel %vm279, %v1502, 0
      %v1587 = vsel %vm279, %v1503, 0
      %v1590 = vsel %vm279, %v1504, 0
      %v1593 = vsel %vm279, %v1505, 0
      %v1596 = vsel %vm279, %v1506, 0
      %v1599 = vsel %vm279, %v1507, 0
      %v1602 = vsel %vm279, %v1508, 0
      %v1605 = vsel %vm279, %v1509, 0
      %v1608 = vsel %vm595, %v1510, 0
      %1610 = vmatpush.msra.mxu0 0.0
      %1611 = vmatpush.msra.mxu0 0.0
      %1612 = vmatpush.msra.mxu0 0.0
      %1613 = vmatpush.msra.mxu0 0.0
      %1614 = vmatpush.msra.mxu0 0.0
      %1615 = vmatpush.msra.mxu0 0.0
      %1616 = vmatpush.msra.mxu0 0.0
      %1617 = vmatpush.msra.mxu0 0.0
      %1618 = vmatpush.msra.mxu0 0.0
      %1619 = vmatpush.msra.mxu0 0.0
      %1620 = vmatpush.msra.mxu0 0.0
      %1621 = vmatpush.msra.mxu0 0.0
      %1622 = vmatpush.msra.mxu0 0.0
      %1623 = vmatpush.msra.mxu0 0.0
      %1624 = vmatpush.msra.mxu0 0.0
      %1625 = vmatpush.msra.mxu0 %v1608
      %1626 = vmatmul.f32.gmra.mxu0 %v1512
      %v1627 = vpop.f32.mrf.mxu0
      %v1628 = vadd.f32 0.0, %v1627
      %1629 = vmatmul.f32.gmra.mxu0 %v1515
      %v1630 = vpop.f32.mrf.mxu0
      %v1631 = vadd.f32 0.0, %v1630
      %1632 = vmatmul.f32.gmra.mxu0 %v1518
      %v1633 = vpop.f32.mrf.mxu0
      %v1634 = vadd.f32 0.0, %v1633
      %1635 = vmatmul.f32.gmra.mxu0 %v1521
      %v1636 = vpop.f32.mrf.mxu0
      %v1637 = vadd.f32 0.0, %v1636
      %1638 = vmatmul.f32.gmra.mxu0 %v1524
      %v1639 = vpop.f32.mrf.mxu0
      %v1640 = vadd.f32 0.0, %v1639
      %1641 = vmatmul.f32.gmra.mxu0 %v1527
      %v1642 = vpop.f32.mrf.mxu0
      %v1643 = vadd.f32 0.0, %v1642
      %1644 = vmatmul.f32.gmra.mxu0 %v1530
      %v1645 = vpop.f32.mrf.mxu0
      %v1646 = vadd.f32 0.0, %v1645
      %1647 = vmatmul.f32.gmra.mxu0 %v1533
      %v1648 = vpop.f32.mrf.mxu0
      %v1649 = vadd.f32 0.0, %v1648
      %1650 = vmatmul.f32.gmra.mxu0 %v1536
      %v1651 = vpop.f32.mrf.mxu0
      %v1652 = vadd.f32 0.0, %v1651
      %1653 = vmatmul.f32.gmra.mxu0 %v1539
      %v1654 = vpop.f32.mrf.mxu0
      %v1655 = vadd.f32 0.0, %v1654
      %1656 = vmatmul.f32.gmra.mxu0 %v1542
      %v1657 = vpop.f32.mrf.mxu0
      %v1658 = vadd.f32 0.0, %v1657
      %1659 = vmatmul.f32.gmra.mxu0 %v1545
      %v1660 = vpop.f32.mrf.mxu0
      %v1661 = vadd.f32 0.0, %v1660
      %1662 = vmatmul.f32.gmra.mxu0 %v1548
      %v1663 = vpop.f32.mrf.mxu0
      %v1664 = vadd.f32 0.0, %v1663
      %1665 = vmatmul.f32.gmra.mxu0 %v1551
      %v1666 = vpop.f32.mrf.mxu0
      %v1667 = vadd.f32 0.0, %v1666
      %1668 = vmatmul.f32.gmra.mxu0 %v1554
      %v1669 = vpop.f32.mrf.mxu0
      %v1670 = vadd.f32 0.0, %v1669
      %1671 = vmatmul.f32.gmra.mxu0 %v1557
      %v1672 = vpop.f32.mrf.mxu0
      %v1673 = vadd.f32 0.0, %v1672
      %1674 = vmatmul.f32.gmra.mxu0 %v1560
      %v1675 = vpop.f32.mrf.mxu0
      %v1676 = vadd.f32 0.0, %v1675
      %1677 = vmatmul.f32.gmra.mxu0 %v1563
      %v1678 = vpop.f32.mrf.mxu0
      %v1679 = vadd.f32 0.0, %v1678
      %1680 = vmatmul.f32.gmra.mxu0 %v1566
      %v1681 = vpop.f32.mrf.mxu0
      %v1682 = vadd.f32 0.0, %v1681
      %1683 = vmatmul.f32.gmra.mxu0 %v1569
      %v1684 = vpop.f32.mrf.mxu0
      %v1685 = vadd.f32 0.0, %v1684
      %1686 = vmatmul.f32.gmra.mxu0 %v1572
      %v1687 = vpop.f32.mrf.mxu0
      %v1688 = vadd.f32 0.0, %v1687
      %1689 = vmatmul.f32.gmra.mxu0 %v1575
      %v1690 = vpop.f32.mrf.mxu0
      %v1691 = vadd.f32 0.0, %v1690
      %1692 = vmatmul.f32.gmra.mxu0 %v1578
      %v1693 = vpop.f32.mrf.mxu0
      %v1694 = vadd.f32 0.0, %v1693
      %1695 = vmatmul.f32.gmra.mxu0 %v1581
      %v1696 = vpop.f32.mrf.mxu0
      %v1697 = vadd.f32 0.0, %v1696
      %1698 = vmatmul.f32.gmra.mxu0 %v1584
      %v1699 = vpop.f32.mrf.mxu0
      %v1700 = vadd.f32 0.0, %v1699
      %1701 = vmatmul.f32.gmra.mxu0 %v1587
      %v1702 = vpop.f32.mrf.mxu0
      %v1703 = vadd.f32 0.0, %v1702
      %1704 = vmatmul.f32.gmra.mxu0 %v1590
      %v1705 = vpop.f32.mrf.mxu0
      %v1706 = vadd.f32 0.0, %v1705
      %1707 = vmatmul.f32.gmra.mxu0 %v1593
      %v1708 = vpop.f32.mrf.mxu0
      %v1709 = vadd.f32 0.0, %v1708
      %1710 = vmatmul.f32.gmra.mxu0 %v1596
      %v1711 = vpop.f32.mrf.mxu0
      %v1712 = vadd.f32 0.0, %v1711
      %1713 = vmatmul.f32.gmra.mxu0 %v1599
      %v1714 = vpop.f32.mrf.mxu0
      %v1715 = vadd.f32 0.0, %v1714
      %1716 = vmatmul.f32.gmra.mxu0 %v1602
      %v1717 = vpop.f32.mrf.mxu0
      %v1718 = vadd.f32 0.0, %v1717
      %1719 = vmatmul.f32.gmra.mxu0 %v1605
      %v1720 = vpop.f32.mrf.mxu0
      %v1721 = vadd.f32 0.0, %v1720
      %1722 = vdwg.mxu0
      %v1723 = vadd.f32 %v1446, %v1628
      %v1724 = vadd.f32 %v1447, %v1631
      %v1725 = vadd.f32 %v1448, %v1634
      %v1726 = vadd.f32 %v1449, %v1637
      %v1727 = vadd.f32 %v1450, %v1640
      %v1728 = vadd.f32 %v1451, %v1643
      %v1729 = vadd.f32 %v1452, %v1646
      %v1730 = vadd.f32 %v1453, %v1649
      %v1731 = vadd.f32 %v1454, %v1652
      %v1732 = vadd.f32 %v1455, %v1655
      %v1733 = vadd.f32 %v1456, %v1658
      %v1734 = vadd.f32 %v1457, %v1661
      %v1735 = vadd.f32 %v1458, %v1664
      %v1736 = vadd.f32 %v1459, %v1667
      %v1737 = vadd.f32 %v1460, %v1670
      %v1738 = vadd.f32 %v1461, %v1673
      %v1739 = vadd.f32 %v1462, %v1676
      %v1740 = vadd.f32 %v1463, %v1679
      %v1741 = vadd.f32 %v1464, %v1682
      %v1742 = vadd.f32 %v1465, %v1685
      %v1743 = vadd.f32 %v1466, %v1688
      %v1744 = vadd.f32 %v1467, %v1691
      %v1745 = vadd.f32 %v1468, %v1694
      %v1746 = vadd.f32 %v1469, %v1697
      %v1747 = vadd.f32 %v1470, %v1700
      %v1748 = vadd.f32 %v1471, %v1703
      %v1749 = vadd.f32 %v1472, %v1706
      %v1750 = vadd.f32 %v1473, %v1709
      %v1751 = vadd.f32 %v1474, %v1712
      %v1752 = vadd.f32 %v1475, %v1715
      %v1753 = vadd.f32 %v1476, %v1718
      %v1754 = vadd.f32 %v1477, %v1721
      %v1755 = vld [vmem:[%s400 + $0x2] sm:$0xff]
      %v1756 = vld [vmem:[%s400 + $0xa] sm:$0xff]
      %v1757 = vld [vmem:[%s400 + $0x1a] sm:$0xff]
      %v1758 = vld [vmem:[%s400 + $0x22] sm:$0xff]
      %v1759 = vld [vmem:[%s400 + $0x32] sm:$0xff]
      %v1760 = vld [vmem:[%s400 + $0x3a] sm:$0xff]
      %v1761 = vld [vmem:[%s400 + $0x4a] sm:$0xff]
      %v1762 = vld [vmem:[%s400 + $0x52] sm:$0xff]
      %v1763 = vld [vmem:[%s400 + $0x62] sm:$0xff]
      %v1764 = vld [vmem:[%s400 + $0x6a] sm:$0xff]
      %v1765 = vld [vmem:[%s400 + $0x7a] sm:$0xff]
      %v1766 = vld [vmem:[%s400 + $0x82] sm:$0xff]
      %v1767 = vld [vmem:[%s400 + $0x92] sm:$0xff]
      %v1768 = vld [vmem:[%s400 + $0x9a] sm:$0xff]
      %v1769 = vld [vmem:[%s400 + $0xaa] sm:$0xff]
      %v1770 = vld [vmem:[%s400 + $0xb2] sm:$0xff]
      %v1771 = vld [vmem:[%s400 + $0xc2] sm:$0xff]
      %v1772 = vld [vmem:[%s400 + $0xca] sm:$0xff]
      %v1773 = vld [vmem:[%s400 + $0xda] sm:$0xff]
      %v1774 = vld [vmem:[%s400 + $0xe2] sm:$0xff]
      %v1775 = vld [vmem:[%s400 + $0xf2] sm:$0xff]
      %v1776 = vld [vmem:[%s400 + $0xfa] sm:$0xff]
      %v1777 = vld [vmem:[%s400 + $0x10a] sm:$0xff]
      %v1778 = vld [vmem:[%s400 + $0x112] sm:$0xff]
      %v1779 = vld [vmem:[%s400 + $0x122] sm:$0xff]
      %v1780 = vld [vmem:[%s400 + $0x12a] sm:$0xff]
      %v1781 = vld [vmem:[%s400 + $0x13a] sm:$0xff]
      %v1782 = vld [vmem:[%s400 + $0x142] sm:$0xff]
      %v1783 = vld [vmem:[%s400 + $0x152] sm:$0xff]
      %v1784 = vld [vmem:[%s400 + $0x15a] sm:$0xff]
      %v1785 = vld [vmem:[%s400 + $0x16a] sm:$0xff]
      %v1786 = vld [vmem:[%s400 + $0x172] sm:$0xff]
      %v1787 = vld [vmem:[%s1 + $0x14] sm:$0xf]
      %v1789 = vsel %vm279, %v1755, 0
      %v1792 = vsel %vm279, %v1756, 0
      %v1795 = vsel %vm279, %v1757, 0
      %v1798 = vsel %vm279, %v1758, 0
      %v1801 = vsel %vm279, %v1759, 0
      %v1804 = vsel %vm279, %v1760, 0
      %v1807 = vsel %vm279, %v1761, 0
      %v1810 = vsel %vm279, %v1762, 0
      %v1813 = vsel %vm279, %v1763, 0
      %v1816 = vsel %vm279, %v1764, 0
      %v1819 = vsel %vm279, %v1765, 0
      %v1822 = vsel %vm279, %v1766, 0
      %v1825 = vsel %vm279, %v1767, 0
      %v1828 = vsel %vm279, %v1768, 0
      %v1831 = vsel %vm279, %v1769, 0
      %v1834 = vsel %vm279, %v1770, 0
      %v1837 = vsel %vm279, %v1771, 0
      %v1840 = vsel %vm279, %v1772, 0
      %v1843 = vsel %vm279, %v1773, 0
      %v1846 = vsel %vm279, %v1774, 0
      %v1849 = vsel %vm279, %v1775, 0
      %v1852 = vsel %vm279, %v1776, 0
      %v1855 = vsel %vm279, %v1777, 0
      %v1858 = vsel %vm279, %v1778, 0
      %v1861 = vsel %vm279, %v1779, 0
      %v1864 = vsel %vm279, %v1780, 0
      %v1867 = vsel %vm279, %v1781, 0
      %v1870 = vsel %vm279, %v1782, 0
      %v1873 = vsel %vm279, %v1783, 0
      %v1876 = vsel %vm279, %v1784, 0
      %v1879 = vsel %vm279, %v1785, 0
      %v1882 = vsel %vm279, %v1786, 0
      %v1885 = vsel %vm595, %v1787, 0
      %1887 = vmatpush.msra.mxu0 0.0
      %1888 = vmatpush.msra.mxu0 0.0
      %1889 = vmatpush.msra.mxu0 0.0
      %1890 = vmatpush.msra.mxu0 0.0
      %1891 = vmatpush.msra.mxu0 0.0
      %1892 = vmatpush.msra.mxu0 0.0
      %1893 = vmatpush.msra.mxu0 0.0
      %1894 = vmatpush.msra.mxu0 0.0
      %1895 = vmatpush.msra.mxu0 0.0
      %1896 = vmatpush.msra.mxu0 0.0
      %1897 = vmatpush.msra.mxu0 0.0
      %1898 = vmatpush.msra.mxu0 0.0
      %1899 = vmatpush.msra.mxu0 0.0
      %1900 = vmatpush.msra.mxu0 0.0
      %1901 = vmatpush.msra.mxu0 0.0
      %1902 = vmatpush.msra.mxu0 %v1885
      %1903 = vmatmul.f32.gmra.mxu0 %v1789
      %v1904 = vpop.f32.mrf.mxu0
      %v1905 = vadd.f32 0.0, %v1904
      %1906 = vmatmul.f32.gmra.mxu0 %v1792
      %v1907 = vpop.f32.mrf.mxu0
      %v1908 = vadd.f32 0.0, %v1907
      %1909 = vmatmul.f32.gmra.mxu0 %v1795
      %v1910 = vpop.f32.mrf.mxu0
      %v1911 = vadd.f32 0.0, %v1910
      %1912 = vmatmul.f32.gmra.mxu0 %v1798
      %v1913 = vpop.f32.mrf.mxu0
      %v1914 = vadd.f32 0.0, %v1913
      %1915 = vmatmul.f32.gmra.mxu0 %v1801
      %v1916 = vpop.f32.mrf.mxu0
      %v1917 = vadd.f32 0.0, %v1916
      %1918 = vmatmul.f32.gmra.mxu0 %v1804
      %v1919 = vpop.f32.mrf.mxu0
      %v1920 = vadd.f32 0.0, %v1919
      %1921 = vmatmul.f32.gmra.mxu0 %v1807
      %v1922 = vpop.f32.mrf.mxu0
      %v1923 = vadd.f32 0.0, %v1922
      %1924 = vmatmul.f32.gmra.mxu0 %v1810
      %v1925 = vpop.f32.mrf.mxu0
      %v1926 = vadd.f32 0.0, %v1925
      %1927 = vmatmul.f32.gmra.mxu0 %v1813
      %v1928 = vpop.f32.mrf.mxu0
      %v1929 = vadd.f32 0.0, %v1928
      %1930 = vmatmul.f32.gmra.mxu0 %v1816
      %v1931 = vpop.f32.mrf.mxu0
      %v1932 = vadd.f32 0.0, %v1931
      %1933 = vmatmul.f32.gmra.mxu0 %v1819
      %v1934 = vpop.f32.mrf.mxu0
      %v1935 = vadd.f32 0.0, %v1934
      %1936 = vmatmul.f32.gmra.mxu0 %v1822
      %v1937 = vpop.f32.mrf.mxu0
      %v1938 = vadd.f32 0.0, %v1937
      %1939 = vmatmul.f32.gmra.mxu0 %v1825
      %v1940 = vpop.f32.mrf.mxu0
      %v1941 = vadd.f32 0.0, %v1940
      %1942 = vmatmul.f32.gmra.mxu0 %v1828
      %v1943 = vpop.f32.mrf.mxu0
      %v1944 = vadd.f32 0.0, %v1943
      %1945 = vmatmul.f32.gmra.mxu0 %v1831
      %v1946 = vpop.f32.mrf.mxu0
      %v1947 = vadd.f32 0.0, %v1946
      %1948 = vmatmul.f32.gmra.mxu0 %v1834
      %v1949 = vpop.f32.mrf.mxu0
      %v1950 = vadd.f32 0.0, %v1949
      %1951 = vmatmul.f32.gmra.mxu0 %v1837
      %v1952 = vpop.f32.mrf.mxu0
      %v1953 = vadd.f32 0.0, %v1952
      %1954 = vmatmul.f32.gmra.mxu0 %v1840
      %v1955 = vpop.f32.mrf.mxu0
      %v1956 = vadd.f32 0.0, %v1955
      %1957 = vmatmul.f32.gmra.mxu0 %v1843
      %v1958 = vpop.f32.mrf.mxu0
      %v1959 = vadd.f32 0.0, %v1958
      %1960 = vmatmul.f32.gmra.mxu0 %v1846
      %v1961 = vpop.f32.mrf.mxu0
      %v1962 = vadd.f32 0.0, %v1961
      %1963 = vmatmul.f32.gmra.mxu0 %v1849
      %v1964 = vpop.f32.mrf.mxu0
      %v1965 = vadd.f32 0.0, %v1964
      %1966 = vmatmul.f32.gmra.mxu0 %v1852
      %v1967 = vpop.f32.mrf.mxu0
      %v1968 = vadd.f32 0.0, %v1967
      %1969 = vmatmul.f32.gmra.mxu0 %v1855
      %v1970 = vpop.f32.mrf.mxu0
      %v1971 = vadd.f32 0.0, %v1970
      %1972 = vmatmul.f32.gmra.mxu0 %v1858
      %v1973 = vpop.f32.mrf.mxu0
      %v1974 = vadd.f32 0.0, %v1973
      %1975 = vmatmul.f32.gmra.mxu0 %v1861
      %v1976 = vpop.f32.mrf.mxu0
      %v1977 = vadd.f32 0.0, %v1976
      %1978 = vmatmul.f32.gmra.mxu0 %v1864
      %v1979 = vpop.f32.mrf.mxu0
      %v1980 = vadd.f32 0.0, %v1979
      %1981 = vmatmul.f32.gmra.mxu0 %v1867
      %v1982 = vpop.f32.mrf.mxu0
      %v1983 = vadd.f32 0.0, %v1982
      %1984 = vmatmul.f32.gmra.mxu0 %v1870
      %v1985 = vpop.f32.mrf.mxu0
      %v1986 = vadd.f32 0.0, %v1985
      %1987 = vmatmul.f32.gmra.mxu0 %v1873
      %v1988 = vpop.f32.mrf.mxu0
      %v1989 = vadd.f32 0.0, %v1988
      %1990 = vmatmul.f32.gmra.mxu0 %v1876
      %v1991 = vpop.f32.mrf.mxu0
      %v1992 = vadd.f32 0.0, %v1991
      %1993 = vmatmul.f32.gmra.mxu0 %v1879
      %v1994 = vpop.f32.mrf.mxu0
      %v1995 = vadd.f32 0.0, %v1994
      %1996 = vmatmul.f32.gmra.mxu0 %v1882
      %v1997 = vpop.f32.mrf.mxu0
      %v1998 = vadd.f32 0.0, %v1997
      %1999 = vdwg.mxu0
      %v2000 = vadd.f32 %v1723, %v1905
      %v2001 = vadd.f32 %v1724, %v1908
      %v2002 = vadd.f32 %v1725, %v1911
      %v2003 = vadd.f32 %v1726, %v1914
      %v2004 = vadd.f32 %v1727, %v1917
      %v2005 = vadd.f32 %v1728, %v1920
      %v2006 = vadd.f32 %v1729, %v1923
      %v2007 = vadd.f32 %v1730, %v1926
      %v2008 = vadd.f32 %v1731, %v1929
      %v2009 = vadd.f32 %v1732, %v1932
      %v2010 = vadd.f32 %v1733, %v1935
      %v2011 = vadd.f32 %v1734, %v1938
      %v2012 = vadd.f32 %v1735, %v1941
      %v2013 = vadd.f32 %v1736, %v1944
      %v2014 = vadd.f32 %v1737, %v1947
      %v2015 = vadd.f32 %v1738, %v1950
      %v2016 = vadd.f32 %v1739, %v1953
      %v2017 = vadd.f32 %v1740, %v1956
      %v2018 = vadd.f32 %v1741, %v1959
      %v2019 = vadd.f32 %v1742, %v1962
      %v2020 = vadd.f32 %v1743, %v1965
      %v2021 = vadd.f32 %v1744, %v1968
      %v2022 = vadd.f32 %v1745, %v1971
      %v2023 = vadd.f32 %v1746, %v1974
      %v2024 = vadd.f32 %v1747, %v1977
      %v2025 = vadd.f32 %v1748, %v1980
      %v2026 = vadd.f32 %v1749, %v1983
      %v2027 = vadd.f32 %v1750, %v1986
      %v2028 = vadd.f32 %v1751, %v1989
      %v2029 = vadd.f32 %v1752, %v1992
      %v2030 = vadd.f32 %v1753, %v1995
      %v2031 = vadd.f32 %v1754, %v1998
      %s2032 = scalar_lea.vmem [#allocation2], 48
      %v2033 = vld [vmem:[%s2032] sm:$0xff]
      %v2034 = vld [vmem:[%s2032 + $0x8] sm:$0xff]
      %v2035 = vld [vmem:[%s2032 + $0x18] sm:$0xff]
      %v2036 = vld [vmem:[%s2032 + $0x20] sm:$0xff]
      %v2037 = vld [vmem:[%s2032 + $0x30] sm:$0xff]
      %v2038 = vld [vmem:[%s2032 + $0x38] sm:$0xff]
      %v2039 = vld [vmem:[%s2032 + $0x48] sm:$0xff]
      %v2040 = vld [vmem:[%s2032 + $0x50] sm:$0xff]
      %v2041 = vld [vmem:[%s2032 + $0x60] sm:$0xff]
      %v2042 = vld [vmem:[%s2032 + $0x68] sm:$0xff]
      %v2043 = vld [vmem:[%s2032 + $0x78] sm:$0xff]
      %v2044 = vld [vmem:[%s2032 + $0x80] sm:$0xff]
      %v2045 = vld [vmem:[%s2032 + $0x90] sm:$0xff]
      %v2046 = vld [vmem:[%s2032 + $0x98] sm:$0xff]
      %v2047 = vld [vmem:[%s2032 + $0xa8] sm:$0xff]
      %v2048 = vld [vmem:[%s2032 + $0xb0] sm:$0xff]
      %v2049 = vld [vmem:[%s2032 + $0xc0] sm:$0xff]
      %v2050 = vld [vmem:[%s2032 + $0xc8] sm:$0xff]
      %v2051 = vld [vmem:[%s2032 + $0xd8] sm:$0xff]
      %v2052 = vld [vmem:[%s2032 + $0xe0] sm:$0xff]
      %v2053 = vld [vmem:[%s2032 + $0xf0] sm:$0xff]
      %v2054 = vld [vmem:[%s2032 + $0xf8] sm:$0xff]
      %v2055 = vld [vmem:[%s2032 + $0x108] sm:$0xff]
      %v2056 = vld [vmem:[%s2032 + $0x110] sm:$0xff]
      %v2057 = vld [vmem:[%s2032 + $0x120] sm:$0xff]
      %v2058 = vld [vmem:[%s2032 + $0x128] sm:$0xff]
      %v2059 = vld [vmem:[%s2032 + $0x138] sm:$0xff]
      %v2060 = vld [vmem:[%s2032 + $0x140] sm:$0xff]
      %v2061 = vld [vmem:[%s2032 + $0x150] sm:$0xff]
      %v2062 = vld [vmem:[%s2032 + $0x158] sm:$0xff]
      %v2063 = vld [vmem:[%s2032 + $0x168] sm:$0xff]
      %v2064 = vld [vmem:[%s2032 + $0x170] sm:$0xff]
      %v2065 = vld [vmem:[%s1 + $0x18] sm:$0xf]
      %v2067 = vsel %vm279, %v2033, 0
      %v2070 = vsel %vm279, %v2034, 0
      %v2073 = vsel %vm279, %v2035, 0
      %v2076 = vsel %vm279, %v2036, 0
      %v2079 = vsel %vm279, %v2037, 0
      %v2082 = vsel %vm279, %v2038, 0
      %v2085 = vsel %vm279, %v2039, 0
      %v2088 = vsel %vm279, %v2040, 0
      %v2091 = vsel %vm279, %v2041, 0
      %v2094 = vsel %vm279, %v2042, 0
      %v2097 = vsel %vm279, %v2043, 0
      %v2100 = vsel %vm279, %v2044, 0
      %v2103 = vsel %vm279, %v2045, 0
      %v2106 = vsel %vm279, %v2046, 0
      %v2109 = vsel %vm279, %v2047, 0
      %v2112 = vsel %vm279, %v2048, 0
      %v2115 = vsel %vm279, %v2049, 0
      %v2118 = vsel %vm279, %v2050, 0
      %v2121 = vsel %vm279, %v2051, 0
      %v2124 = vsel %vm279, %v2052, 0
      %v2127 = vsel %vm279, %v2053, 0
      %v2130 = vsel %vm279, %v2054, 0
      %v2133 = vsel %vm279, %v2055, 0
      %v2136 = vsel %vm279, %v2056, 0
      %v2139 = vsel %vm279, %v2057, 0
      %v2142 = vsel %vm279, %v2058, 0
      %v2145 = vsel %vm279, %v2059, 0
      %v2148 = vsel %vm279, %v2060, 0
      %v2151 = vsel %vm279, %v2061, 0
      %v2154 = vsel %vm279, %v2062, 0
      %v2157 = vsel %vm279, %v2063, 0
      %v2160 = vsel %vm279, %v2064, 0
      %v2163 = vsel %vm595, %v2065, 0
      %2165 = vmatpush.msra.mxu0 0.0
      %2166 = vmatpush.msra.mxu0 0.0
      %2167 = vmatpush.msra.mxu0 0.0
      %2168 = vmatpush.msra.mxu0 0.0
      %2169 = vmatpush.msra.mxu0 0.0
      %2170 = vmatpush.msra.mxu0 0.0
      %2171 = vmatpush.msra.mxu0 0.0
      %2172 = vmatpush.msra.mxu0 0.0
      %2173 = vmatpush.msra.mxu0 0.0
      %2174 = vmatpush.msra.mxu0 0.0
      %2175 = vmatpush.msra.mxu0 0.0
      %2176 = vmatpush.msra.mxu0 0.0
      %2177 = vmatpush.msra.mxu0 0.0
      %2178 = vmatpush.msra.mxu0 0.0
      %2179 = vmatpush.msra.mxu0 0.0
      %2180 = vmatpush.msra.mxu0 %v2163
      %2181 = vmatmul.f32.gmra.mxu0 %v2067
      %v2182 = vpop.f32.mrf.mxu0
      %v2183 = vadd.f32 0.0, %v2182
      %2184 = vmatmul.f32.gmra.mxu0 %v2070
      %v2185 = vpop.f32.mrf.mxu0
      %v2186 = vadd.f32 0.0, %v2185
      %2187 = vmatmul.f32.gmra.mxu0 %v2073
      %v2188 = vpop.f32.mrf.mxu0
      %v2189 = vadd.f32 0.0, %v2188
      %2190 = vmatmul.f32.gmra.mxu0 %v2076
      %v2191 = vpop.f32.mrf.mxu0
      %v2192 = vadd.f32 0.0, %v2191
      %2193 = vmatmul.f32.gmra.mxu0 %v2079
      %v2194 = vpop.f32.mrf.mxu0
      %v2195 = vadd.f32 0.0, %v2194
      %2196 = vmatmul.f32.gmra.mxu0 %v2082
      %v2197 = vpop.f32.mrf.mxu0
      %v2198 = vadd.f32 0.0, %v2197
      %2199 = vmatmul.f32.gmra.mxu0 %v2085
      %v2200 = vpop.f32.mrf.mxu0
      %v2201 = vadd.f32 0.0, %v2200
      %2202 = vmatmul.f32.gmra.mxu0 %v2088
      %v2203 = vpop.f32.mrf.mxu0
      %v2204 = vadd.f32 0.0, %v2203
      %2205 = vmatmul.f32.gmra.mxu0 %v2091
      %v2206 = vpop.f32.mrf.mxu0
      %v2207 = vadd.f32 0.0, %v2206
      %2208 = vmatmul.f32.gmra.mxu0 %v2094
      %v2209 = vpop.f32.mrf.mxu0
      %v2210 = vadd.f32 0.0, %v2209
      %2211 = vmatmul.f32.gmra.mxu0 %v2097
      %v2212 = vpop.f32.mrf.mxu0
      %v2213 = vadd.f32 0.0, %v2212
      %2214 = vmatmul.f32.gmra.mxu0 %v2100
      %v2215 = vpop.f32.mrf.mxu0
      %v2216 = vadd.f32 0.0, %v2215
      %2217 = vmatmul.f32.gmra.mxu0 %v2103
      %v2218 = vpop.f32.mrf.mxu0
      %v2219 = vadd.f32 0.0, %v2218
      %2220 = vmatmul.f32.gmra.mxu0 %v2106
      %v2221 = vpop.f32.mrf.mxu0
      %v2222 = vadd.f32 0.0, %v2221
      %2223 = vmatmul.f32.gmra.mxu0 %v2109
      %v2224 = vpop.f32.mrf.mxu0
      %v2225 = vadd.f32 0.0, %v2224
      %2226 = vmatmul.f32.gmra.mxu0 %v2112
      %v2227 = vpop.f32.mrf.mxu0
      %v2228 = vadd.f32 0.0, %v2227
      %2229 = vmatmul.f32.gmra.mxu0 %v2115
      %v2230 = vpop.f32.mrf.mxu0
      %v2231 = vadd.f32 0.0, %v2230
      %2232 = vmatmul.f32.gmra.mxu0 %v2118
      %v2233 = vpop.f32.mrf.mxu0
      %v2234 = vadd.f32 0.0, %v2233
      %2235 = vmatmul.f32.gmra.mxu0 %v2121
      %v2236 = vpop.f32.mrf.mxu0
      %v2237 = vadd.f32 0.0, %v2236
      %2238 = vmatmul.f32.gmra.mxu0 %v2124
      %v2239 = vpop.f32.mrf.mxu0
      %v2240 = vadd.f32 0.0, %v2239
      %2241 = vmatmul.f32.gmra.mxu0 %v2127
      %v2242 = vpop.f32.mrf.mxu0
      %v2243 = vadd.f32 0.0, %v2242
      %2244 = vmatmul.f32.gmra.mxu0 %v2130
      %v2245 = vpop.f32.mrf.mxu0
      %v2246 = vadd.f32 0.0, %v2245
      %2247 = vmatmul.f32.gmra.mxu0 %v2133
      %v2248 = vpop.f32.mrf.mxu0
      %v2249 = vadd.f32 0.0, %v2248
      %2250 = vmatmul.f32.gmra.mxu0 %v2136
      %v2251 = vpop.f32.mrf.mxu0
      %v2252 = vadd.f32 0.0, %v2251
      %2253 = vmatmul.f32.gmra.mxu0 %v2139
      %v2254 = vpop.f32.mrf.mxu0
      %v2255 = vadd.f32 0.0, %v2254
      %2256 = vmatmul.f32.gmra.mxu0 %v2142
      %v2257 = vpop.f32.mrf.mxu0
      %v2258 = vadd.f32 0.0, %v2257
      %2259 = vmatmul.f32.gmra.mxu0 %v2145
      %v2260 = vpop.f32.mrf.mxu0
      %v2261 = vadd.f32 0.0, %v2260
      %2262 = vmatmul.f32.gmra.mxu0 %v2148
      %v2263 = vpop.f32.mrf.mxu0
      %v2264 = vadd.f32 0.0, %v2263
      %2265 = vmatmul.f32.gmra.mxu0 %v2151
      %v2266 = vpop.f32.mrf.mxu0
      %v2267 = vadd.f32 0.0, %v2266
      %2268 = vmatmul.f32.gmra.mxu0 %v2154
      %v2269 = vpop.f32.mrf.mxu0
      %v2270 = vadd.f32 0.0, %v2269
      %2271 = vmatmul.f32.gmra.mxu0 %v2157
      %v2272 = vpop.f32.mrf.mxu0
      %v2273 = vadd.f32 0.0, %v2272
      %2274 = vmatmul.f32.gmra.mxu0 %v2160
      %v2275 = vpop.f32.mrf.mxu0
      %v2276 = vadd.f32 0.0, %v2275
      %2277 = vdwg.mxu0
      %v2278 = vadd.f32 %v2000, %v2183
      %v2279 = vadd.f32 %v2001, %v2186
      %v2280 = vadd.f32 %v2002, %v2189
      %v2281 = vadd.f32 %v2003, %v2192
      %v2282 = vadd.f32 %v2004, %v2195
      %v2283 = vadd.f32 %v2005, %v2198
      %v2284 = vadd.f32 %v2006, %v2201
      %v2285 = vadd.f32 %v2007, %v2204
      %v2286 = vadd.f32 %v2008, %v2207
      %v2287 = vadd.f32 %v2009, %v2210
      %v2288 = vadd.f32 %v2010, %v2213
      %v2289 = vadd.f32 %v2011, %v2216
      %v2290 = vadd.f32 %v2012, %v2219
      %v2291 = vadd.f32 %v2013, %v2222
      %v2292 = vadd.f32 %v2014, %v2225
      %v2293 = vadd.f32 %v2015, %v2228
      %v2294 = vadd.f32 %v2016, %v2231
      %v2295 = vadd.f32 %v2017, %v2234
      %v2296 = vadd.f32 %v2018, %v2237
      %v2297 = vadd.f32 %v2019, %v2240
      %v2298 = vadd.f32 %v2020, %v2243
      %v2299 = vadd.f32 %v2021, %v2246
      %v2300 = vadd.f32 %v2022, %v2249
      %v2301 = vadd.f32 %v2023, %v2252
      %v2302 = vadd.f32 %v2024, %v2255
      %v2303 = vadd.f32 %v2025, %v2258
      %v2304 = vadd.f32 %v2026, %v2261
      %v2305 = vadd.f32 %v2027, %v2264
      %v2306 = vadd.f32 %v2028, %v2267
      %v2307 = vadd.f32 %v2029, %v2270
      %v2308 = vadd.f32 %v2030, %v2273
      %v2309 = vadd.f32 %v2031, %v2276
      %v2310 = vld [vmem:[%s2032 + $0x1] sm:$0xff]
      %v2311 = vld [vmem:[%s2032 + $0x9] sm:$0xff]
      %v2312 = vld [vmem:[%s2032 + $0x19] sm:$0xff]
      %v2313 = vld [vmem:[%s2032 + $0x21] sm:$0xff]
      %v2314 = vld [vmem:[%s2032 + $0x31] sm:$0xff]
      %v2315 = vld [vmem:[%s2032 + $0x39] sm:$0xff]
      %v2316 = vld [vmem:[%s2032 + $0x49] sm:$0xff]
      %v2317 = vld [vmem:[%s2032 + $0x51] sm:$0xff]
      %v2318 = vld [vmem:[%s2032 + $0x61] sm:$0xff]
      %v2319 = vld [vmem:[%s2032 + $0x69] sm:$0xff]
      %v2320 = vld [vmem:[%s2032 + $0x79] sm:$0xff]
      %v2321 = vld [vmem:[%s2032 + $0x81] sm:$0xff]
      %v2322 = vld [vmem:[%s2032 + $0x91] sm:$0xff]
      %v2323 = vld [vmem:[%s2032 + $0x99] sm:$0xff]
      %v2324 = vld [vmem:[%s2032 + $0xa9] sm:$0xff]
      %v2325 = vld [vmem:[%s2032 + $0xb1] sm:$0xff]
      %v2326 = vld [vmem:[%s2032 + $0xc1] sm:$0xff]
      %v2327 = vld [vmem:[%s2032 + $0xc9] sm:$0xff]
      %v2328 = vld [vmem:[%s2032 + $0xd9] sm:$0xff]
      %v2329 = vld [vmem:[%s2032 + $0xe1] sm:$0xff]
      %v2330 = vld [vmem:[%s2032 + $0xf1] sm:$0xff]
      %v2331 = vld [vmem:[%s2032 + $0xf9] sm:$0xff]
      %v2332 = vld [vmem:[%s2032 + $0x109] sm:$0xff]
      %v2333 = vld [vmem:[%s2032 + $0x111] sm:$0xff]
      %v2334 = vld [vmem:[%s2032 + $0x121] sm:$0xff]
      %v2335 = vld [vmem:[%s2032 + $0x129] sm:$0xff]
      %v2336 = vld [vmem:[%s2032 + $0x139] sm:$0xff]
      %v2337 = vld [vmem:[%s2032 + $0x141] sm:$0xff]
      %v2338 = vld [vmem:[%s2032 + $0x151] sm:$0xff]
      %v2339 = vld [vmem:[%s2032 + $0x159] sm:$0xff]
      %v2340 = vld [vmem:[%s2032 + $0x169] sm:$0xff]
      %v2341 = vld [vmem:[%s2032 + $0x171] sm:$0xff]
      %v2342 = vld [vmem:[%s1 + $0x1c] sm:$0xf]
      %v2344 = vsel %vm279, %v2310, 0
      %v2347 = vsel %vm279, %v2311, 0
      %v2350 = vsel %vm279, %v2312, 0
      %v2353 = vsel %vm279, %v2313, 0
      %v2356 = vsel %vm279, %v2314, 0
      %v2359 = vsel %vm279, %v2315, 0
      %v2362 = vsel %vm279, %v2316, 0
      %v2365 = vsel %vm279, %v2317, 0
      %v2368 = vsel %vm279, %v2318, 0
      %v2371 = vsel %vm279, %v2319, 0
      %v2374 = vsel %vm279, %v2320, 0
      %v2377 = vsel %vm279, %v2321, 0
      %v2380 = vsel %vm279, %v2322, 0
      %v2383 = vsel %vm279, %v2323, 0
      %v2386 = vsel %vm279, %v2324, 0
      %v2389 = vsel %vm279, %v2325, 0
      %v2392 = vsel %vm279, %v2326, 0
      %v2395 = vsel %vm279, %v2327, 0
      %v2398 = vsel %vm279, %v2328, 0
      %v2401 = vsel %vm279, %v2329, 0
      %v2404 = vsel %vm279, %v2330, 0
      %v2407 = vsel %vm279, %v2331, 0
      %v2410 = vsel %vm279, %v2332, 0
      %v2413 = vsel %vm279, %v2333, 0
      %v2416 = vsel %vm279, %v2334, 0
      %v2419 = vsel %vm279, %v2335, 0
      %v2422 = vsel %vm279, %v2336, 0
      %v2425 = vsel %vm279, %v2337, 0
      %v2428 = vsel %vm279, %v2338, 0
      %v2431 = vsel %vm279, %v2339, 0
      %v2434 = vsel %vm279, %v2340, 0
      %v2437 = vsel %vm279, %v2341, 0
      %v2440 = vsel %vm595, %v2342, 0
      %2442 = vmatpush.msra.mxu0 0.0
      %2443 = vmatpush.msra.mxu0 0.0
      %2444 = vmatpush.msra.mxu0 0.0
      %2445 = vmatpush.msra.mxu0 0.0
      %2446 = vmatpush.msra.mxu0 0.0
      %2447 = vmatpush.msra.mxu0 0.0
      %2448 = vmatpush.msra.mxu0 0.0
      %2449 = vmatpush.msra.mxu0 0.0
      %2450 = vmatpush.msra.mxu0 0.0
      %2451 = vmatpush.msra.mxu0 0.0
      %2452 = vmatpush.msra.mxu0 0.0
      %2453 = vmatpush.msra.mxu0 0.0
      %2454 = vmatpush.msra.mxu0 0.0
      %2455 = vmatpush.msra.mxu0 0.0
      %2456 = vmatpush.msra.mxu0 0.0
      %2457 = vmatpush.msra.mxu0 %v2440
      %2458 = vmatmul.f32.gmra.mxu0 %v2344
      %v2459 = vpop.f32.mrf.mxu0
      %v2460 = vadd.f32 0.0, %v2459
      %2461 = vmatmul.f32.gmra.mxu0 %v2347
      %v2462 = vpop.f32.mrf.mxu0
      %v2463 = vadd.f32 0.0, %v2462
      %2464 = vmatmul.f32.gmra.mxu0 %v2350
      %v2465 = vpop.f32.mrf.mxu0
      %v2466 = vadd.f32 0.0, %v2465
      %2467 = vmatmul.f32.gmra.mxu0 %v2353
      %v2468 = vpop.f32.mrf.mxu0
      %v2469 = vadd.f32 0.0, %v2468
      %2470 = vmatmul.f32.gmra.mxu0 %v2356
      %v2471 = vpop.f32.mrf.mxu0
      %v2472 = vadd.f32 0.0, %v2471
      %2473 = vmatmul.f32.gmra.mxu0 %v2359
      %v2474 = vpop.f32.mrf.mxu0
      %v2475 = vadd.f32 0.0, %v2474
      %2476 = vmatmul.f32.gmra.mxu0 %v2362
      %v2477 = vpop.f32.mrf.mxu0
      %v2478 = vadd.f32 0.0, %v2477
      %2479 = vmatmul.f32.gmra.mxu0 %v2365
      %v2480 = vpop.f32.mrf.mxu0
      %v2481 = vadd.f32 0.0, %v2480
      %2482 = vmatmul.f32.gmra.mxu0 %v2368
      %v2483 = vpop.f32.mrf.mxu0
      %v2484 = vadd.f32 0.0, %v2483
      %2485 = vmatmul.f32.gmra.mxu0 %v2371
      %v2486 = vpop.f32.mrf.mxu0
      %v2487 = vadd.f32 0.0, %v2486
      %2488 = vmatmul.f32.gmra.mxu0 %v2374
      %v2489 = vpop.f32.mrf.mxu0
      %v2490 = vadd.f32 0.0, %v2489
      %2491 = vmatmul.f32.gmra.mxu0 %v2377
      %v2492 = vpop.f32.mrf.mxu0
      %v2493 = vadd.f32 0.0, %v2492
      %2494 = vmatmul.f32.gmra.mxu0 %v2380
      %v2495 = vpop.f32.mrf.mxu0
      %v2496 = vadd.f32 0.0, %v2495
      %2497 = vmatmul.f32.gmra.mxu0 %v2383
      %v2498 = vpop.f32.mrf.mxu0
      %v2499 = vadd.f32 0.0, %v2498
      %2500 = vmatmul.f32.gmra.mxu0 %v2386
      %v2501 = vpop.f32.mrf.mxu0
      %v2502 = vadd.f32 0.0, %v2501
      %2503 = vmatmul.f32.gmra.mxu0 %v2389
      %v2504 = vpop.f32.mrf.mxu0
      %v2505 = vadd.f32 0.0, %v2504
      %2506 = vmatmul.f32.gmra.mxu0 %v2392
      %v2507 = vpop.f32.mrf.mxu0
      %v2508 = vadd.f32 0.0, %v2507
      %2509 = vmatmul.f32.gmra.mxu0 %v2395
      %v2510 = vpop.f32.mrf.mxu0
      %v2511 = vadd.f32 0.0, %v2510
      %2512 = vmatmul.f32.gmra.mxu0 %v2398
      %v2513 = vpop.f32.mrf.mxu0
      %v2514 = vadd.f32 0.0, %v2513
      %2515 = vmatmul.f32.gmra.mxu0 %v2401
      %v2516 = vpop.f32.mrf.mxu0
      %v2517 = vadd.f32 0.0, %v2516
      %2518 = vmatmul.f32.gmra.mxu0 %v2404
      %v2519 = vpop.f32.mrf.mxu0
      %v2520 = vadd.f32 0.0, %v2519
      %2521 = vmatmul.f32.gmra.mxu0 %v2407
      %v2522 = vpop.f32.mrf.mxu0
      %v2523 = vadd.f32 0.0, %v2522
      %2524 = vmatmul.f32.gmra.mxu0 %v2410
      %v2525 = vpop.f32.mrf.mxu0
      %v2526 = vadd.f32 0.0, %v2525
      %2527 = vmatmul.f32.gmra.mxu0 %v2413
      %v2528 = vpop.f32.mrf.mxu0
      %v2529 = vadd.f32 0.0, %v2528
      %2530 = vmatmul.f32.gmra.mxu0 %v2416
      %v2531 = vpop.f32.mrf.mxu0
      %v2532 = vadd.f32 0.0, %v2531
      %2533 = vmatmul.f32.gmra.mxu0 %v2419
      %v2534 = vpop.f32.mrf.mxu0
      %v2535 = vadd.f32 0.0, %v2534
      %2536 = vmatmul.f32.gmra.mxu0 %v2422
      %v2537 = vpop.f32.mrf.mxu0
      %v2538 = vadd.f32 0.0, %v2537
      %2539 = vmatmul.f32.gmra.mxu0 %v2425
      %v2540 = vpop.f32.mrf.mxu0
      %v2541 = vadd.f32 0.0, %v2540
      %2542 = vmatmul.f32.gmra.mxu0 %v2428
      %v2543 = vpop.f32.mrf.mxu0
      %v2544 = vadd.f32 0.0, %v2543
      %2545 = vmatmul.f32.gmra.mxu0 %v2431
      %v2546 = vpop.f32.mrf.mxu0
      %v2547 = vadd.f32 0.0, %v2546
      %2548 = vmatmul.f32.gmra.mxu0 %v2434
      %v2549 = vpop.f32.mrf.mxu0
      %v2550 = vadd.f32 0.0, %v2549
      %2551 = vmatmul.f32.gmra.mxu0 %v2437
      %v2552 = vpop.f32.mrf.mxu0
      %v2553 = vadd.f32 0.0, %v2552
      %2554 = vdwg.mxu0
      %v2555 = vadd.f32 %v2278, %v2460
      %v2556 = vadd.f32 %v2279, %v2463
      %v2557 = vadd.f32 %v2280, %v2466
      %v2558 = vadd.f32 %v2281, %v2469
      %v2559 = vadd.f32 %v2282, %v2472
      %v2560 = vadd.f32 %v2283, %v2475
      %v2561 = vadd.f32 %v2284, %v2478
      %v2562 = vadd.f32 %v2285, %v2481
      %v2563 = vadd.f32 %v2286, %v2484
      %v2564 = vadd.f32 %v2287, %v2487
      %v2565 = vadd.f32 %v2288, %v2490
      %v2566 = vadd.f32 %v2289, %v2493
      %v2567 = vadd.f32 %v2290, %v2496
      %v2568 = vadd.f32 %v2291, %v2499
      %v2569 = vadd.f32 %v2292, %v2502
      %v2570 = vadd.f32 %v2293, %v2505
      %v2571 = vadd.f32 %v2294, %v2508
      %v2572 = vadd.f32 %v2295, %v2511
      %v2573 = vadd.f32 %v2296, %v2514
      %v2574 = vadd.f32 %v2297, %v2517
      %v2575 = vadd.f32 %v2298, %v2520
      %v2576 = vadd.f32 %v2299, %v2523
      %v2577 = vadd.f32 %v2300, %v2526
      %v2578 = vadd.f32 %v2301, %v2529
      %v2579 = vadd.f32 %v2302, %v2532
      %v2580 = vadd.f32 %v2303, %v2535
      %v2581 = vadd.f32 %v2304, %v2538
      %v2582 = vadd.f32 %v2305, %v2541
      %v2583 = vadd.f32 %v2306, %v2544
      %v2584 = vadd.f32 %v2307, %v2547
      %v2585 = vadd.f32 %v2308, %v2550
      %v2586 = vadd.f32 %v2309, %v2553
      %v2587 = vld [vmem:[%s2032 + $0x2] sm:$0xff]
      %v2588 = vld [vmem:[%s2032 + $0xa] sm:$0xff]
      %v2589 = vld [vmem:[%s2032 + $0x1a] sm:$0xff]
      %v2590 = vld [vmem:[%s2032 + $0x22] sm:$0xff]
      %v2591 = vld [vmem:[%s2032 + $0x32] sm:$0xff]
      %v2592 = vld [vmem:[%s2032 + $0x3a] sm:$0xff]
      %v2593 = vld [vmem:[%s2032 + $0x4a] sm:$0xff]
      %v2594 = vld [vmem:[%s2032 + $0x52] sm:$0xff]
      %v2595 = vld [vmem:[%s2032 + $0x62] sm:$0xff]
      %v2596 = vld [vmem:[%s2032 + $0x6a] sm:$0xff]
      %v2597 = vld [vmem:[%s2032 + $0x7a] sm:$0xff]
      %v2598 = vld [vmem:[%s2032 + $0x82] sm:$0xff]
      %v2599 = vld [vmem:[%s2032 + $0x92] sm:$0xff]
      %v2600 = vld [vmem:[%s2032 + $0x9a] sm:$0xff]
      %v2601 = vld [vmem:[%s2032 + $0xaa] sm:$0xff]
      %v2602 = vld [vmem:[%s2032 + $0xb2] sm:$0xff]
      %v2603 = vld [vmem:[%s2032 + $0xc2] sm:$0xff]
      %v2604 = vld [vmem:[%s2032 + $0xca] sm:$0xff]
      %v2605 = vld [vmem:[%s2032 + $0xda] sm:$0xff]
      %v2606 = vld [vmem:[%s2032 + $0xe2] sm:$0xff]
      %v2607 = vld [vmem:[%s2032 + $0xf2] sm:$0xff]
      %v2608 = vld [vmem:[%s2032 + $0xfa] sm:$0xff]
      %v2609 = vld [vmem:[%s2032 + $0x10a] sm:$0xff]
      %v2610 = vld [vmem:[%s2032 + $0x112] sm:$0xff]
      %v2611 = vld [vmem:[%s2032 + $0x122] sm:$0xff]
      %v2612 = vld [vmem:[%s2032 + $0x12a] sm:$0xff]
      %v2613 = vld [vmem:[%s2032 + $0x13a] sm:$0xff]
      %v2614 = vld [vmem:[%s2032 + $0x142] sm:$0xff]
      %v2615 = vld [vmem:[%s2032 + $0x152] sm:$0xff]
      %v2616 = vld [vmem:[%s2032 + $0x15a] sm:$0xff]
      %v2617 = vld [vmem:[%s2032 + $0x16a] sm:$0xff]
      %v2618 = vld [vmem:[%s2032 + $0x172] sm:$0xff]
      %v2619 = vld [vmem:[%s1 + $0x20] sm:$0xf]
      %v2621 = vsel %vm279, %v2587, 0
      %v2624 = vsel %vm279, %v2588, 0
      %v2627 = vsel %vm279, %v2589, 0
      %v2630 = vsel %vm279, %v2590, 0
      %v2633 = vsel %vm279, %v2591, 0
      %v2636 = vsel %vm279, %v2592, 0
      %v2639 = vsel %vm279, %v2593, 0
      %v2642 = vsel %vm279, %v2594, 0
      %v2645 = vsel %vm279, %v2595, 0
      %v2648 = vsel %vm279, %v2596, 0
      %v2651 = vsel %vm279, %v2597, 0
      %v2654 = vsel %vm279, %v2598, 0
      %v2657 = vsel %vm279, %v2599, 0
      %v2660 = vsel %vm279, %v2600, 0
      %v2663 = vsel %vm279, %v2601, 0
      %v2666 = vsel %vm279, %v2602, 0
      %v2669 = vsel %vm279, %v2603, 0
      %v2672 = vsel %vm279, %v2604, 0
      %v2675 = vsel %vm279, %v2605, 0
      %v2678 = vsel %vm279, %v2606, 0
      %v2681 = vsel %vm279, %v2607, 0
      %v2684 = vsel %vm279, %v2608, 0
      %v2687 = vsel %vm279, %v2609, 0
      %v2690 = vsel %vm279, %v2610, 0
      %v2693 = vsel %vm279, %v2611, 0
      %v2696 = vsel %vm279, %v2612, 0
      %v2699 = vsel %vm279, %v2613, 0
      %v2702 = vsel %vm279, %v2614, 0
      %v2705 = vsel %vm279, %v2615, 0
      %v2708 = vsel %vm279, %v2616, 0
      %v2711 = vsel %vm279, %v2617, 0
      %v2714 = vsel %vm279, %v2618, 0
      %v2717 = vsel %vm595, %v2619, 0
      %2719 = vmatpush.msra.mxu0 0.0
      %2720 = vmatpush.msra.mxu0 0.0
      %2721 = vmatpush.msra.mxu0 0.0
      %2722 = vmatpush.msra.mxu0 0.0
      %2723 = vmatpush.msra.mxu0 0.0
      %2724 = vmatpush.msra.mxu0 0.0
      %2725 = vmatpush.msra.mxu0 0.0
      %2726 = vmatpush.msra.mxu0 0.0
      %2727 = vmatpush.msra.mxu0 0.0
      %2728 = vmatpush.msra.mxu0 0.0
      %2729 = vmatpush.msra.mxu0 0.0
      %2730 = vmatpush.msra.mxu0 0.0
      %2731 = vmatpush.msra.mxu0 0.0
      %2732 = vmatpush.msra.mxu0 0.0
      %2733 = vmatpush.msra.mxu0 0.0
      %2734 = vmatpush.msra.mxu0 %v2717
      %2735 = vmatmul.f32.gmra.mxu0 %v2621
      %v2736 = vpop.f32.mrf.mxu0
      %v2737 = vadd.f32 0.0, %v2736
      %2738 = vmatmul.f32.gmra.mxu0 %v2624
      %v2739 = vpop.f32.mrf.mxu0
      %v2740 = vadd.f32 0.0, %v2739
      %2741 = vmatmul.f32.gmra.mxu0 %v2627
      %v2742 = vpop.f32.mrf.mxu0
      %v2743 = vadd.f32 0.0, %v2742
      %2744 = vmatmul.f32.gmra.mxu0 %v2630
      %v2745 = vpop.f32.mrf.mxu0
      %v2746 = vadd.f32 0.0, %v2745
      %2747 = vmatmul.f32.gmra.mxu0 %v2633
      %v2748 = vpop.f32.mrf.mxu0
      %v2749 = vadd.f32 0.0, %v2748
      %2750 = vmatmul.f32.gmra.mxu0 %v2636
      %v2751 = vpop.f32.mrf.mxu0
      %v2752 = vadd.f32 0.0, %v2751
      %2753 = vmatmul.f32.gmra.mxu0 %v2639
      %v2754 = vpop.f32.mrf.mxu0
      %v2755 = vadd.f32 0.0, %v2754
      %2756 = vmatmul.f32.gmra.mxu0 %v2642
      %v2757 = vpop.f32.mrf.mxu0
      %v2758 = vadd.f32 0.0, %v2757
      %2759 = vmatmul.f32.gmra.mxu0 %v2645
      %v2760 = vpop.f32.mrf.mxu0
      %v2761 = vadd.f32 0.0, %v2760
      %2762 = vmatmul.f32.gmra.mxu0 %v2648
      %v2763 = vpop.f32.mrf.mxu0
      %v2764 = vadd.f32 0.0, %v2763
      %2765 = vmatmul.f32.gmra.mxu0 %v2651
      %v2766 = vpop.f32.mrf.mxu0
      %v2767 = vadd.f32 0.0, %v2766
      %2768 = vmatmul.f32.gmra.mxu0 %v2654
      %v2769 = vpop.f32.mrf.mxu0
      %v2770 = vadd.f32 0.0, %v2769
      %2771 = vmatmul.f32.gmra.mxu0 %v2657
      %v2772 = vpop.f32.mrf.mxu0
      %v2773 = vadd.f32 0.0, %v2772
      %2774 = vmatmul.f32.gmra.mxu0 %v2660
      %v2775 = vpop.f32.mrf.mxu0
      %v2776 = vadd.f32 0.0, %v2775
      %2777 = vmatmul.f32.gmra.mxu0 %v2663
      %v2778 = vpop.f32.mrf.mxu0
      %v2779 = vadd.f32 0.0, %v2778
      %2780 = vmatmul.f32.gmra.mxu0 %v2666
      %v2781 = vpop.f32.mrf.mxu0
      %v2782 = vadd.f32 0.0, %v2781
      %2783 = vmatmul.f32.gmra.mxu0 %v2669
      %v2784 = vpop.f32.mrf.mxu0
      %v2785 = vadd.f32 0.0, %v2784
      %2786 = vmatmul.f32.gmra.mxu0 %v2672
      %v2787 = vpop.f32.mrf.mxu0
      %v2788 = vadd.f32 0.0, %v2787
      %2789 = vmatmul.f32.gmra.mxu0 %v2675
      %v2790 = vpop.f32.mrf.mxu0
      %v2791 = vadd.f32 0.0, %v2790
      %2792 = vmatmul.f32.gmra.mxu0 %v2678
      %v2793 = vpop.f32.mrf.mxu0
      %v2794 = vadd.f32 0.0, %v2793
      %2795 = vmatmul.f32.gmra.mxu0 %v2681
      %v2796 = vpop.f32.mrf.mxu0
      %v2797 = vadd.f32 0.0, %v2796
      %2798 = vmatmul.f32.gmra.mxu0 %v2684
      %v2799 = vpop.f32.mrf.mxu0
      %v2800 = vadd.f32 0.0, %v2799
      %2801 = vmatmul.f32.gmra.mxu0 %v2687
      %v2802 = vpop.f32.mrf.mxu0
      %v2803 = vadd.f32 0.0, %v2802
      %2804 = vmatmul.f32.gmra.mxu0 %v2690
      %v2805 = vpop.f32.mrf.mxu0
      %v2806 = vadd.f32 0.0, %v2805
      %2807 = vmatmul.f32.gmra.mxu0 %v2693
      %v2808 = vpop.f32.mrf.mxu0
      %v2809 = vadd.f32 0.0, %v2808
      %2810 = vmatmul.f32.gmra.mxu0 %v2696
      %v2811 = vpop.f32.mrf.mxu0
      %v2812 = vadd.f32 0.0, %v2811
      %2813 = vmatmul.f32.gmra.mxu0 %v2699
      %v2814 = vpop.f32.mrf.mxu0
      %v2815 = vadd.f32 0.0, %v2814
      %2816 = vmatmul.f32.gmra.mxu0 %v2702
      %v2817 = vpop.f32.mrf.mxu0
      %v2818 = vadd.f32 0.0, %v2817
      %2819 = vmatmul.f32.gmra.mxu0 %v2705
      %v2820 = vpop.f32.mrf.mxu0
      %v2821 = vadd.f32 0.0, %v2820
      %2822 = vmatmul.f32.gmra.mxu0 %v2708
      %v2823 = vpop.f32.mrf.mxu0
      %v2824 = vadd.f32 0.0, %v2823
      %2825 = vmatmul.f32.gmra.mxu0 %v2711
      %v2826 = vpop.f32.mrf.mxu0
      %v2827 = vadd.f32 0.0, %v2826
      %2828 = vmatmul.f32.gmra.mxu0 %v2714
      %v2829 = vpop.f32.mrf.mxu0
      %v2830 = vadd.f32 0.0, %v2829
      %2831 = vdwg.mxu0
      %v2832 = vadd.f32 %v2555, %v2737
      %v2833 = vadd.f32 %v2556, %v2740
      %v2834 = vadd.f32 %v2557, %v2743
      %v2835 = vadd.f32 %v2558, %v2746
      %v2836 = vadd.f32 %v2559, %v2749
      %v2837 = vadd.f32 %v2560, %v2752
      %v2838 = vadd.f32 %v2561, %v2755
      %v2839 = vadd.f32 %v2562, %v2758
      %v2840 = vadd.f32 %v2563, %v2761
      %v2841 = vadd.f32 %v2564, %v2764
      %v2842 = vadd.f32 %v2565, %v2767
      %v2843 = vadd.f32 %v2566, %v2770
      %v2844 = vadd.f32 %v2567, %v2773
      %v2845 = vadd.f32 %v2568, %v2776
      %v2846 = vadd.f32 %v2569, %v2779
      %v2847 = vadd.f32 %v2570, %v2782
      %v2848 = vadd.f32 %v2571, %v2785
      %v2849 = vadd.f32 %v2572, %v2788
      %v2850 = vadd.f32 %v2573, %v2791
      %v2851 = vadd.f32 %v2574, %v2794
      %v2852 = vadd.f32 %v2575, %v2797
      %v2853 = vadd.f32 %v2576, %v2800
      %v2854 = vadd.f32 %v2577, %v2803
      %v2855 = vadd.f32 %v2578, %v2806
      %v2856 = vadd.f32 %v2579, %v2809
      %v2857 = vadd.f32 %v2580, %v2812
      %v2858 = vadd.f32 %v2581, %v2815
      %v2859 = vadd.f32 %v2582, %v2818
      %v2860 = vadd.f32 %v2583, %v2821
      %v2861 = vadd.f32 %v2584, %v2824
      %v2862 = vadd.f32 %v2585, %v2827
      %v2863 = vadd.f32 %v2586, %v2830
      %v2864 = vld [vmem:[%s2] sm:$0x1]
      %v2866 = vperm.slane %v2864, 0
      %v2868 = vmul.f32 %v2832, %v2866
      %v2869 = vmul.f32 %v2833, %v2866
      %v2870 = vmul.f32 %v2834, %v2866
      %v2871 = vmul.f32 %v2835, %v2866
      %v2872 = vmul.f32 %v2836, %v2866
      %v2873 = vmul.f32 %v2837, %v2866
      %v2874 = vmul.f32 %v2838, %v2866
      %v2875 = vmul.f32 %v2839, %v2866
      %v2876 = vmul.f32 %v2840, %v2866
      %v2877 = vmul.f32 %v2841, %v2866
      %v2878 = vmul.f32 %v2842, %v2866
      %v2879 = vmul.f32 %v2843, %v2866
      %v2880 = vmul.f32 %v2844, %v2866
      %v2881 = vmul.f32 %v2845, %v2866
      %v2882 = vmul.f32 %v2846, %v2866
      %v2883 = vmul.f32 %v2847, %v2866
      %v2884 = vmul.f32 %v2848, %v2866
      %v2885 = vmul.f32 %v2849, %v2866
      %v2886 = vmul.f32 %v2850, %v2866
      %v2887 = vmul.f32 %v2851, %v2866
      %v2888 = vmul.f32 %v2852, %v2866
      %v2889 = vmul.f32 %v2853, %v2866
      %v2890 = vmul.f32 %v2854, %v2866
      %v2891 = vmul.f32 %v2855, %v2866
      %v2892 = vmul.f32 %v2856, %v2866
      %v2893 = vmul.f32 %v2857, %v2866
      %v2894 = vmul.f32 %v2858, %v2866
      %v2895 = vmul.f32 %v2859, %v2866
      %v2896 = vmul.f32 %v2860, %v2866
      %v2897 = vmul.f32 %v2861, %v2866
      %v2898 = vmul.f32 %v2862, %v2866
      %v2899 = vmul.f32 %v2863, %v2866
      %v2900 = vld [vmem:[%s3] sm:$0x1]
      %v2902 = vperm.slane %v2900, 0
      %v2904 = vadd.f32 %v2868, %v2902
      %v2905 = vadd.f32 %v2869, %v2902
      %v2906 = vadd.f32 %v2870, %v2902
      %v2907 = vadd.f32 %v2871, %v2902
      %v2908 = vadd.f32 %v2872, %v2902
      %v2909 = vadd.f32 %v2873, %v2902
      %v2910 = vadd.f32 %v2874, %v2902
      %v2911 = vadd.f32 %v2875, %v2902
      %v2912 = vadd.f32 %v2876, %v2902
      %v2913 = vadd.f32 %v2877, %v2902
      %v2914 = vadd.f32 %v2878, %v2902
      %v2915 = vadd.f32 %v2879, %v2902
      %v2916 = vadd.f32 %v2880, %v2902
      %v2917 = vadd.f32 %v2881, %v2902
      %v2918 = vadd.f32 %v2882, %v2902
      %v2919 = vadd.f32 %v2883, %v2902
      %v2920 = vadd.f32 %v2884, %v2902
      %v2921 = vadd.f32 %v2885, %v2902
      %v2922 = vadd.f32 %v2886, %v2902
      %v2923 = vadd.f32 %v2887, %v2902
      %v2924 = vadd.f32 %v2888, %v2902
      %v2925 = vadd.f32 %v2889, %v2902
      %v2926 = vadd.f32 %v2890, %v2902
      %v2927 = vadd.f32 %v2891, %v2902
      %v2928 = vadd.f32 %v2892, %v2902
      %v2929 = vadd.f32 %v2893, %v2902
      %v2930 = vadd.f32 %v2894, %v2902
      %v2931 = vadd.f32 %v2895, %v2902
      %v2932 = vadd.f32 %v2896, %v2902
      %v2933 = vadd.f32 %v2897, %v2902
      %v2934 = vadd.f32 %v2898, %v2902
      %v2935 = vadd.f32 %v2899, %v2902
      %v2936 = vmax.f32 %v2904, 0.0
      %v2937 = vmax.f32 %v2905, 0.0
      %v2938 = vmax.f32 %v2906, 0.0
      %v2939 = vmax.f32 %v2907, 0.0
      %v2940 = vmax.f32 %v2908, 0.0
      %v2941 = vmax.f32 %v2909, 0.0
      %v2942 = vmax.f32 %v2910, 0.0
      %v2943 = vmax.f32 %v2911, 0.0
      %v2944 = vmax.f32 %v2912, 0.0
      %v2945 = vmax.f32 %v2913, 0.0
      %v2946 = vmax.f32 %v2914, 0.0
      %v2947 = vmax.f32 %v2915, 0.0
      %v2948 = vmax.f32 %v2916, 0.0
      %v2949 = vmax.f32 %v2917, 0.0
      %v2950 = vmax.f32 %v2918, 0.0
      %v2951 = vmax.f32 %v2919, 0.0
      %v2952 = vmax.f32 %v2920, 0.0
      %v2953 = vmax.f32 %v2921, 0.0
      %v2954 = vmax.f32 %v2922, 0.0
      %v2955 = vmax.f32 %v2923, 0.0
      %v2956 = vmax.f32 %v2924, 0.0
      %v2957 = vmax.f32 %v2925, 0.0
      %v2958 = vmax.f32 %v2926, 0.0
      %v2959 = vmax.f32 %v2927, 0.0
      %v2960 = vmax.f32 %v2928, 0.0
      %v2961 = vmax.f32 %v2929, 0.0
      %v2962 = vmax.f32 %v2930, 0.0
      %v2963 = vmax.f32 %v2931, 0.0
      %v2964 = vmax.f32 %v2932, 0.0
      %v2965 = vmax.f32 %v2933, 0.0
      %v2966 = vmax.f32 %v2934, 0.0
      %v2967 = vmax.f32 %v2935, 0.0
      %s2968 = scalar_lea.vmem [#allocation3], 24
      %2969 = vst.msk [vmem:[%s2968 + $0x1] sm:$0xff] %vm279, %v2936
      %2970 = vst.msk [vmem:[%s2968 + $0x9] sm:$0xff] %vm279, %v2937
      %2971 = vst.msk [vmem:[%s2968 + $0x19] sm:$0xff] %vm279, %v2938
      %2972 = vst.msk [vmem:[%s2968 + $0x21] sm:$0xff] %vm279, %v2939
      %2973 = vst.msk [vmem:[%s2968 + $0x31] sm:$0xff] %vm279, %v2940
      %2974 = vst.msk [vmem:[%s2968 + $0x39] sm:$0xff] %vm279, %v2941
      %2975 = vst.msk [vmem:[%s2968 + $0x49] sm:$0xff] %vm279, %v2942
      %2976 = vst.msk [vmem:[%s2968 + $0x51] sm:$0xff] %vm279, %v2943
      %2977 = vst.msk [vmem:[%s2968 + $0x61] sm:$0xff] %vm279, %v2944
      %2978 = vst.msk [vmem:[%s2968 + $0x69] sm:$0xff] %vm279, %v2945
      %2979 = vst.msk [vmem:[%s2968 + $0x79] sm:$0xff] %vm279, %v2946
      %2980 = vst.msk [vmem:[%s2968 + $0x81] sm:$0xff] %vm279, %v2947
      %2981 = vst.msk [vmem:[%s2968 + $0x91] sm:$0xff] %vm279, %v2948
      %2982 = vst.msk [vmem:[%s2968 + $0x99] sm:$0xff] %vm279, %v2949
      %2983 = vst.msk [vmem:[%s2968 + $0xa9] sm:$0xff] %vm279, %v2950
      %2984 = vst.msk [vmem:[%s2968 + $0xb1] sm:$0xff] %vm279, %v2951
      %2985 = vst.msk [vmem:[%s2968 + $0xc1] sm:$0xff] %vm279, %v2952
      %2986 = vst.msk [vmem:[%s2968 + $0xc9] sm:$0xff] %vm279, %v2953
      %2987 = vst.msk [vmem:[%s2968 + $0xd9] sm:$0xff] %vm279, %v2954
      %2988 = vst.msk [vmem:[%s2968 + $0xe1] sm:$0xff] %vm279, %v2955
      %2989 = vst.msk [vmem:[%s2968 + $0xf1] sm:$0xff] %vm279, %v2956
      %2990 = vst.msk [vmem:[%s2968 + $0xf9] sm:$0xff] %vm279, %v2957
      %2991 = vst.msk [vmem:[%s2968 + $0x109] sm:$0xff] %vm279, %v2958
      %2992 = vst.msk [vmem:[%s2968 + $0x111] sm:$0xff] %vm279, %v2959
      %2993 = vst.msk [vmem:[%s2968 + $0x121] sm:$0xff] %vm279, %v2960
      %2994 = vst.msk [vmem:[%s2968 + $0x129] sm:$0xff] %vm279, %v2961
      %2995 = vst.msk [vmem:[%s2968 + $0x139] sm:$0xff] %vm279, %v2962
      %2996 = vst.msk [vmem:[%s2968 + $0x141] sm:$0xff] %vm279, %v2963
      %2997 = vst.msk [vmem:[%s2968 + $0x151] sm:$0xff] %vm279, %v2964
      %2998 = vst.msk [vmem:[%s2968 + $0x159] sm:$0xff] %vm279, %v2965
      %2999 = vst.msk [vmem:[%s2968 + $0x169] sm:$0xff] %vm279, %v2966
      %3000 = vst.msk [vmem:[%s2968 + $0x171] sm:$0xff] %vm279, %v2967
      %v3001 = vld [vmem:[#allocation3] sm:$0xff]
      %v3002 = vld [vmem:[#allocation3 + $0x8] sm:$0xff]
      %v3003 = vld [vmem:[#allocation3 + $0x18] sm:$0xff]
      %v3004 = vld [vmem:[#allocation3 + $0x20] sm:$0xff]
      %v3005 = vld [vmem:[#allocation3 + $0x30] sm:$0xff]
      %v3006 = vld [vmem:[#allocation3 + $0x38] sm:$0xff]
      %v3007 = vld [vmem:[#allocation3 + $0x48] sm:$0xff]
      %v3008 = vld [vmem:[#allocation3 + $0x50] sm:$0xff]
      %v3009 = vld [vmem:[#allocation3 + $0x60] sm:$0xff]
      %v3010 = vld [vmem:[#allocation3 + $0x68] sm:$0xff]
      %v3011 = vld [vmem:[#allocation3 + $0x78] sm:$0xff]
      %v3012 = vld [vmem:[#allocation3 + $0x80] sm:$0xff]
      %v3013 = vld [vmem:[#allocation3 + $0x90] sm:$0xff]
      %v3014 = vld [vmem:[#allocation3 + $0x98] sm:$0xff]
      %v3015 = vld [vmem:[#allocation3 + $0xa8] sm:$0xff]
      %v3016 = vld [vmem:[#allocation3 + $0xb0] sm:$0xff]
      %v3017 = vld [vmem:[#allocation3 + $0xc0] sm:$0xff]
      %v3018 = vld [vmem:[#allocation3 + $0xc8] sm:$0xff]
      %v3019 = vld [vmem:[#allocation3 + $0xd8] sm:$0xff]
      %v3020 = vld [vmem:[#allocation3 + $0xe0] sm:$0xff]
      %v3021 = vld [vmem:[#allocation3 + $0xf0] sm:$0xff]
      %v3022 = vld [vmem:[#allocation3 + $0xf8] sm:$0xff]
      %v3023 = vld [vmem:[#allocation3 + $0x108] sm:$0xff]
      %v3024 = vld [vmem:[#allocation3 + $0x110] sm:$0xff]
      %v3025 = vld [vmem:[#allocation3 + $0x120] sm:$0xff]
      %v3026 = vld [vmem:[#allocation3 + $0x128] sm:$0xff]
      %v3027 = vld [vmem:[#allocation3 + $0x138] sm:$0xff]
      %v3028 = vld [vmem:[#allocation3 + $0x140] sm:$0xff]
      %v3029 = vld [vmem:[#allocation3 + $0x150] sm:$0xff]
      %v3030 = vld [vmem:[#allocation3 + $0x158] sm:$0xff]
      %v3031 = vld [vmem:[#allocation3 + $0x168] sm:$0xff]
      %v3032 = vld [vmem:[#allocation3 + $0x170] sm:$0xff]
      %v3033 = vld [vmem:[%s4] sm:$0xf]
      %v3034 = vld [vmem:[#allocation3 + $0x1] sm:$0xff]
      %v3035 = vld [vmem:[#allocation3 + $0x9] sm:$0xff]
      %v3036 = vld [vmem:[#allocation3 + $0x19] sm:$0xff]
      %v3037 = vld [vmem:[#allocation3 + $0x21] sm:$0xff]
      %v3038 = vld [vmem:[#allocation3 + $0x31] sm:$0xff]
      %v3039 = vld [vmem:[#allocation3 + $0x39] sm:$0xff]
      %v3040 = vld [vmem:[#allocation3 + $0x49] sm:$0xff]
      %v3041 = vld [vmem:[#allocation3 + $0x51] sm:$0xff]
      %v3042 = vld [vmem:[#allocation3 + $0x61] sm:$0xff]
      %v3043 = vld [vmem:[#allocation3 + $0x69] sm:$0xff]
      %v3044 = vld [vmem:[#allocation3 + $0x79] sm:$0xff]
      %v3045 = vld [vmem:[#allocation3 + $0x81] sm:$0xff]
      %v3046 = vld [vmem:[#allocation3 + $0x91] sm:$0xff]
      %v3047 = vld [vmem:[#allocation3 + $0x99] sm:$0xff]
      %v3048 = vld [vmem:[#allocation3 + $0xa9] sm:$0xff]
      %v3049 = vld [vmem:[#allocation3 + $0xb1] sm:$0xff]
      %v3050 = vld [vmem:[#allocation3 + $0xc1] sm:$0xff]
      %v3051 = vld [vmem:[#allocation3 + $0xc9] sm:$0xff]
      %v3052 = vld [vmem:[#allocation3 + $0xd9] sm:$0xff]
      %v3053 = vld [vmem:[#allocation3 + $0xe1] sm:$0xff]
      %v3054 = vld [vmem:[#allocation3 + $0xf1] sm:$0xff]
      %v3055 = vld [vmem:[#allocation3 + $0xf9] sm:$0xff]
      %v3056 = vld [vmem:[#allocation3 + $0x109] sm:$0xff]
      %v3057 = vld [vmem:[#allocation3 + $0x111] sm:$0xff]
      %v3058 = vld [vmem:[#allocation3 + $0x121] sm:$0xff]
      %v3059 = vld [vmem:[#allocation3 + $0x129] sm:$0xff]
      %v3060 = vld [vmem:[#allocation3 + $0x139] sm:$0xff]
      %v3061 = vld [vmem:[#allocation3 + $0x141] sm:$0xff]
      %v3062 = vld [vmem:[#allocation3 + $0x151] sm:$0xff]
      %v3063 = vld [vmem:[#allocation3 + $0x159] sm:$0xff]
      %v3064 = vld [vmem:[#allocation3 + $0x169] sm:$0xff]
      %v3065 = vld [vmem:[#allocation3 + $0x171] sm:$0xff]
      %v3066 = vld [vmem:[%s4 + $0x4] sm:$0xf]
      %v3068 = vsel %vm279, %v3034, 0
      %v3071 = vsel %vm279, %v3035, 0
      %v3074 = vsel %vm279, %v3036, 0
      %v3077 = vsel %vm279, %v3037, 0
      %v3080 = vsel %vm279, %v3038, 0
      %v3083 = vsel %vm279, %v3039, 0
      %v3086 = vsel %vm279, %v3040, 0
      %v3089 = vsel %vm279, %v3041, 0
      %v3092 = vsel %vm279, %v3042, 0
      %v3095 = vsel %vm279, %v3043, 0
      %v3098 = vsel %vm279, %v3044, 0
      %v3101 = vsel %vm279, %v3045, 0
      %v3104 = vsel %vm279, %v3046, 0
      %v3107 = vsel %vm279, %v3047, 0
      %v3110 = vsel %vm279, %v3048, 0
      %v3113 = vsel %vm279, %v3049, 0
      %v3116 = vsel %vm279, %v3050, 0
      %v3119 = vsel %vm279, %v3051, 0
      %v3122 = vsel %vm279, %v3052, 0
      %v3125 = vsel %vm279, %v3053, 0
      %v3128 = vsel %vm279, %v3054, 0
      %v3131 = vsel %vm279, %v3055, 0
      %v3134 = vsel %vm279, %v3056, 0
      %v3137 = vsel %vm279, %v3057, 0
      %v3140 = vsel %vm279, %v3058, 0
      %v3143 = vsel %vm279, %v3059, 0
      %v3146 = vsel %vm279, %v3060, 0
      %v3149 = vsel %vm279, %v3061, 0
      %v3152 = vsel %vm279, %v3062, 0
      %v3155 = vsel %vm279, %v3063, 0
      %v3158 = vsel %vm279, %v3064, 0
      %v3161 = vsel %vm279, %v3065, 0
      %v3164 = vsel %vm595, %v3066, 0
      %3166 = vmatpush.msra.mxu0 0.0
      %3167 = vmatpush.msra.mxu0 0.0
      %3168 = vmatpush.msra.mxu0 0.0
      %3169 = vmatpush.msra.mxu0 0.0
      %3170 = vmatpush.msra.mxu0 0.0
      %3171 = vmatpush.msra.mxu0 0.0
      %3172 = vmatpush.msra.mxu0 0.0
      %3173 = vmatpush.msra.mxu0 0.0
      %3174 = vmatpush.msra.mxu0 0.0
      %3175 = vmatpush.msra.mxu0 0.0
      %3176 = vmatpush.msra.mxu0 0.0
      %3177 = vmatpush.msra.mxu0 0.0
      %3178 = vmatpush.msra.mxu0 0.0
      %3179 = vmatpush.msra.mxu0 0.0
      %3180 = vmatpush.msra.mxu0 0.0
      %3181 = vmatpush.msra.mxu0 %v3164
      %3182 = vmatmul.f32.gmra.mxu0 %v3068
      %v3183 = vpop.f32.mrf.mxu0
      %v3184 = vadd.f32 0.0, %v3183
      %3185 = vmatmul.f32.gmra.mxu0 %v3071
      %v3186 = vpop.f32.mrf.mxu0
      %v3187 = vadd.f32 0.0, %v3186
      %3188 = vmatmul.f32.gmra.mxu0 %v3074
      %v3189 = vpop.f32.mrf.mxu0
      %v3190 = vadd.f32 0.0, %v3189
      %3191 = vmatmul.f32.gmra.mxu0 %v3077
      %v3192 = vpop.f32.mrf.mxu0
      %v3193 = vadd.f32 0.0, %v3192
      %3194 = vmatmul.f32.gmra.mxu0 %v3080
      %v3195 = vpop.f32.mrf.mxu0
      %v3196 = vadd.f32 0.0, %v3195
      %3197 = vmatmul.f32.gmra.mxu0 %v3083
      %v3198 = vpop.f32.mrf.mxu0
      %v3199 = vadd.f32 0.0, %v3198
      %3200 = vmatmul.f32.gmra.mxu0 %v3086
      %v3201 = vpop.f32.mrf.mxu0
      %v3202 = vadd.f32 0.0, %v3201
      %3203 = vmatmul.f32.gmra.mxu0 %v3089
      %v3204 = vpop.f32.mrf.mxu0
      %v3205 = vadd.f32 0.0, %v3204
      %3206 = vmatmul.f32.gmra.mxu0 %v3092
      %v3207 = vpop.f32.mrf.mxu0
      %v3208 = vadd.f32 0.0, %v3207
      %3209 = vmatmul.f32.gmra.mxu0 %v3095
      %v3210 = vpop.f32.mrf.mxu0
      %v3211 = vadd.f32 0.0, %v3210
      %3212 = vmatmul.f32.gmra.mxu0 %v3098
      %v3213 = vpop.f32.mrf.mxu0
      %v3214 = vadd.f32 0.0, %v3213
      %3215 = vmatmul.f32.gmra.mxu0 %v3101
      %v3216 = vpop.f32.mrf.mxu0
      %v3217 = vadd.f32 0.0, %v3216
      %3218 = vmatmul.f32.gmra.mxu0 %v3104
      %v3219 = vpop.f32.mrf.mxu0
      %v3220 = vadd.f32 0.0, %v3219
      %3221 = vmatmul.f32.gmra.mxu0 %v3107
      %v3222 = vpop.f32.mrf.mxu0
      %v3223 = vadd.f32 0.0, %v3222
      %3224 = vmatmul.f32.gmra.mxu0 %v3110
      %v3225 = vpop.f32.mrf.mxu0
      %v3226 = vadd.f32 0.0, %v3225
      %3227 = vmatmul.f32.gmra.mxu0 %v3113
      %v3228 = vpop.f32.mrf.mxu0
      %v3229 = vadd.f32 0.0, %v3228
      %3230 = vmatmul.f32.gmra.mxu0 %v3116
      %v3231 = vpop.f32.mrf.mxu0
      %v3232 = vadd.f32 0.0, %v3231
      %3233 = vmatmul.f32.gmra.mxu0 %v3119
      %v3234 = vpop.f32.mrf.mxu0
      %v3235 = vadd.f32 0.0, %v3234
      %3236 = vmatmul.f32.gmra.mxu0 %v3122
      %v3237 = vpop.f32.mrf.mxu0
      %v3238 = vadd.f32 0.0, %v3237
      %3239 = vmatmul.f32.gmra.mxu0 %v3125
      %v3240 = vpop.f32.mrf.mxu0
      %v3241 = vadd.f32 0.0, %v3240
      %3242 = vmatmul.f32.gmra.mxu0 %v3128
      %v3243 = vpop.f32.mrf.mxu0
      %v3244 = vadd.f32 0.0, %v3243
      %3245 = vmatmul.f32.gmra.mxu0 %v3131
      %v3246 = vpop.f32.mrf.mxu0
      %v3247 = vadd.f32 0.0, %v3246
      %3248 = vmatmul.f32.gmra.mxu0 %v3134
      %v3249 = vpop.f32.mrf.mxu0
      %v3250 = vadd.f32 0.0, %v3249
      %3251 = vmatmul.f32.gmra.mxu0 %v3137
      %v3252 = vpop.f32.mrf.mxu0
      %v3253 = vadd.f32 0.0, %v3252
      %3254 = vmatmul.f32.gmra.mxu0 %v3140
      %v3255 = vpop.f32.mrf.mxu0
      %v3256 = vadd.f32 0.0, %v3255
      %3257 = vmatmul.f32.gmra.mxu0 %v3143
      %v3258 = vpop.f32.mrf.mxu0
      %v3259 = vadd.f32 0.0, %v3258
      %3260 = vmatmul.f32.gmra.mxu0 %v3146
      %v3261 = vpop.f32.mrf.mxu0
      %v3262 = vadd.f32 0.0, %v3261
      %3263 = vmatmul.f32.gmra.mxu0 %v3149
      %v3264 = vpop.f32.mrf.mxu0
      %v3265 = vadd.f32 0.0, %v3264
      %3266 = vmatmul.f32.gmra.mxu0 %v3152
      %v3267 = vpop.f32.mrf.mxu0
      %v3268 = vadd.f32 0.0, %v3267
      %3269 = vmatmul.f32.gmra.mxu0 %v3155
      %v3270 = vpop.f32.mrf.mxu0
      %v3271 = vadd.f32 0.0, %v3270
      %3272 = vmatmul.f32.gmra.mxu0 %v3158
      %v3273 = vpop.f32.mrf.mxu0
      %v3274 = vadd.f32 0.0, %v3273
      %3275 = vmatmul.f32.gmra.mxu0 %v3161
      %v3276 = vpop.f32.mrf.mxu0
      %v3277 = vadd.f32 0.0, %v3276
      %3278 = vdwg.mxu0
      %v3280 = vsel %vm279, %v3001, 0
      %v3283 = vsel %vm279, %v3002, 0
      %v3286 = vsel %vm279, %v3003, 0
      %v3289 = vsel %vm279, %v3004, 0
      %v3292 = vsel %vm279, %v3005, 0
      %v3295 = vsel %vm279, %v3006, 0
      %v3298 = vsel %vm279, %v3007, 0
      %v3301 = vsel %vm279, %v3008, 0
      %v3304 = vsel %vm279, %v3009, 0
      %v3307 = vsel %vm279, %v3010, 0
      %v3310 = vsel %vm279, %v3011, 0
      %v3313 = vsel %vm279, %v3012, 0
      %v3316 = vsel %vm279, %v3013, 0
      %v3319 = vsel %vm279, %v3014, 0
      %v3322 = vsel %vm279, %v3015, 0
      %v3325 = vsel %vm279, %v3016, 0
      %v3328 = vsel %vm279, %v3017, 0
      %v3331 = vsel %vm279, %v3018, 0
      %v3334 = vsel %vm279, %v3019, 0
      %v3337 = vsel %vm279, %v3020, 0
      %v3340 = vsel %vm279, %v3021, 0
      %v3343 = vsel %vm279, %v3022, 0
      %v3346 = vsel %vm279, %v3023, 0
      %v3349 = vsel %vm279, %v3024, 0
      %v3352 = vsel %vm279, %v3025, 0
      %v3355 = vsel %vm279, %v3026, 0
      %v3358 = vsel %vm279, %v3027, 0
      %v3361 = vsel %vm279, %v3028, 0
      %v3364 = vsel %vm279, %v3029, 0
      %v3367 = vsel %vm279, %v3030, 0
      %v3370 = vsel %vm279, %v3031, 0
      %v3373 = vsel %vm279, %v3032, 0
      %v3376 = vsel %vm595, %v3033, 0
      %3378 = vmatpush.msra.mxu0 0.0
      %3379 = vmatpush.msra.mxu0 0.0
      %3380 = vmatpush.msra.mxu0 0.0
      %3381 = vmatpush.msra.mxu0 0.0
      %3382 = vmatpush.msra.mxu0 0.0
      %3383 = vmatpush.msra.mxu0 0.0
      %3384 = vmatpush.msra.mxu0 0.0
      %3385 = vmatpush.msra.mxu0 0.0
      %3386 = vmatpush.msra.mxu0 0.0
      %3387 = vmatpush.msra.mxu0 0.0
      %3388 = vmatpush.msra.mxu0 0.0
      %3389 = vmatpush.msra.mxu0 0.0
      %3390 = vmatpush.msra.mxu0 0.0
      %3391 = vmatpush.msra.mxu0 0.0
      %3392 = vmatpush.msra.mxu0 0.0
      %3393 = vmatpush.msra.mxu0 %v3376
      %3394 = vmatmul.f32.gmra.mxu0 %v3280
      %v3395 = vpop.f32.mrf.mxu0
      %v3396 = vadd.f32 %v3184, %v3395
      %3397 = vmatmul.f32.gmra.mxu0 %v3283
      %v3398 = vpop.f32.mrf.mxu0
      %v3399 = vadd.f32 %v3187, %v3398
      %3400 = vmatmul.f32.gmra.mxu0 %v3286
      %v3401 = vpop.f32.mrf.mxu0
      %v3402 = vadd.f32 %v3190, %v3401
      %3403 = vmatmul.f32.gmra.mxu0 %v3289
      %v3404 = vpop.f32.mrf.mxu0
      %v3405 = vadd.f32 %v3193, %v3404
      %3406 = vmatmul.f32.gmra.mxu0 %v3292
      %v3407 = vpop.f32.mrf.mxu0
      %v3408 = vadd.f32 %v3196, %v3407
      %3409 = vmatmul.f32.gmra.mxu0 %v3295
      %v3410 = vpop.f32.mrf.mxu0
      %v3411 = vadd.f32 %v3199, %v3410
      %3412 = vmatmul.f32.gmra.mxu0 %v3298
      %v3413 = vpop.f32.mrf.mxu0
      %v3414 = vadd.f32 %v3202, %v3413
      %3415 = vmatmul.f32.gmra.mxu0 %v3301
      %v3416 = vpop.f32.mrf.mxu0
      %v3417 = vadd.f32 %v3205, %v3416
      %3418 = vmatmul.f32.gmra.mxu0 %v3304
      %v3419 = vpop.f32.mrf.mxu0
      %v3420 = vadd.f32 %v3208, %v3419
      %3421 = vmatmul.f32.gmra.mxu0 %v3307
      %v3422 = vpop.f32.mrf.mxu0
      %v3423 = vadd.f32 %v3211, %v3422
      %3424 = vmatmul.f32.gmra.mxu0 %v3310
      %v3425 = vpop.f32.mrf.mxu0
      %v3426 = vadd.f32 %v3214, %v3425
      %3427 = vmatmul.f32.gmra.mxu0 %v3313
      %v3428 = vpop.f32.mrf.mxu0
      %v3429 = vadd.f32 %v3217, %v3428
      %3430 = vmatmul.f32.gmra.mxu0 %v3316
      %v3431 = vpop.f32.mrf.mxu0
      %v3432 = vadd.f32 %v3220, %v3431
      %3433 = vmatmul.f32.gmra.mxu0 %v3319
      %v3434 = vpop.f32.mrf.mxu0
      %v3435 = vadd.f32 %v3223, %v3434
      %3436 = vmatmul.f32.gmra.mxu0 %v3322
      %v3437 = vpop.f32.mrf.mxu0
      %v3438 = vadd.f32 %v3226, %v3437
      %3439 = vmatmul.f32.gmra.mxu0 %v3325
      %v3440 = vpop.f32.mrf.mxu0
      %v3441 = vadd.f32 %v3229, %v3440
      %3442 = vmatmul.f32.gmra.mxu0 %v3328
      %v3443 = vpop.f32.mrf.mxu0
      %v3444 = vadd.f32 %v3232, %v3443
      %3445 = vmatmul.f32.gmra.mxu0 %v3331
      %v3446 = vpop.f32.mrf.mxu0
      %v3447 = vadd.f32 %v3235, %v3446
      %3448 = vmatmul.f32.gmra.mxu0 %v3334
      %v3449 = vpop.f32.mrf.mxu0
      %v3450 = vadd.f32 %v3238, %v3449
      %3451 = vmatmul.f32.gmra.mxu0 %v3337
      %v3452 = vpop.f32.mrf.mxu0
      %v3453 = vadd.f32 %v3241, %v3452
      %3454 = vmatmul.f32.gmra.mxu0 %v3340
      %v3455 = vpop.f32.mrf.mxu0
      %v3456 = vadd.f32 %v3244, %v3455
      %3457 = vmatmul.f32.gmra.mxu0 %v3343
      %v3458 = vpop.f32.mrf.mxu0
      %v3459 = vadd.f32 %v3247, %v3458
      %3460 = vmatmul.f32.gmra.mxu0 %v3346
      %v3461 = vpop.f32.mrf.mxu0
      %v3462 = vadd.f32 %v3250, %v3461
      %3463 = vmatmul.f32.gmra.mxu0 %v3349
      %v3464 = vpop.f32.mrf.mxu0
      %v3465 = vadd.f32 %v3253, %v3464
      %3466 = vmatmul.f32.gmra.mxu0 %v3352
      %v3467 = vpop.f32.mrf.mxu0
      %v3468 = vadd.f32 %v3256, %v3467
      %3469 = vmatmul.f32.gmra.mxu0 %v3355
      %v3470 = vpop.f32.mrf.mxu0
      %v3471 = vadd.f32 %v3259, %v3470
      %3472 = vmatmul.f32.gmra.mxu0 %v3358
      %v3473 = vpop.f32.mrf.mxu0
      %v3474 = vadd.f32 %v3262, %v3473
      %3475 = vmatmul.f32.gmra.mxu0 %v3361
      %v3476 = vpop.f32.mrf.mxu0
      %v3477 = vadd.f32 %v3265, %v3476
      %3478 = vmatmul.f32.gmra.mxu0 %v3364
      %v3479 = vpop.f32.mrf.mxu0
      %v3480 = vadd.f32 %v3268, %v3479
      %3481 = vmatmul.f32.gmra.mxu0 %v3367
      %v3482 = vpop.f32.mrf.mxu0
      %v3483 = vadd.f32 %v3271, %v3482
      %3484 = vmatmul.f32.gmra.mxu0 %v3370
      %v3485 = vpop.f32.mrf.mxu0
      %v3486 = vadd.f32 %v3274, %v3485
      %3487 = vmatmul.f32.gmra.mxu0 %v3373
      %v3488 = vpop.f32.mrf.mxu0
      %v3489 = vadd.f32 %v3277, %v3488
      %3490 = vdwg.mxu0
      %v3491 = vld [vmem:[#allocation3 + $0x2] sm:$0xff]
      %v3492 = vld [vmem:[#allocation3 + $0xa] sm:$0xff]
      %v3493 = vld [vmem:[#allocation3 + $0x1a] sm:$0xff]
      %v3494 = vld [vmem:[#allocation3 + $0x22] sm:$0xff]
      %v3495 = vld [vmem:[#allocation3 + $0x32] sm:$0xff]
      %v3496 = vld [vmem:[#allocation3 + $0x3a] sm:$0xff]
      %v3497 = vld [vmem:[#allocation3 + $0x4a] sm:$0xff]
      %v3498 = vld [vmem:[#allocation3 + $0x52] sm:$0xff]
      %v3499 = vld [vmem:[#allocation3 + $0x62] sm:$0xff]
      %v3500 = vld [vmem:[#allocation3 + $0x6a] sm:$0xff]
      %v3501 = vld [vmem:[#allocation3 + $0x7a] sm:$0xff]
      %v3502 = vld [vmem:[#allocation3 + $0x82] sm:$0xff]
      %v3503 = vld [vmem:[#allocation3 + $0x92] sm:$0xff]
      %v3504 = vld [vmem:[#allocation3 + $0x9a] sm:$0xff]
      %v3505 = vld [vmem:[#allocation3 + $0xaa] sm:$0xff]
      %v3506 = vld [vmem:[#allocation3 + $0xb2] sm:$0xff]
      %v3507 = vld [vmem:[#allocation3 + $0xc2] sm:$0xff]
      %v3508 = vld [vmem:[#allocation3 + $0xca] sm:$0xff]
      %v3509 = vld [vmem:[#allocation3 + $0xda] sm:$0xff]
      %v3510 = vld [vmem:[#allocation3 + $0xe2] sm:$0xff]
      %v3511 = vld [vmem:[#allocation3 + $0xf2] sm:$0xff]
      %v3512 = vld [vmem:[#allocation3 + $0xfa] sm:$0xff]
      %v3513 = vld [vmem:[#allocation3 + $0x10a] sm:$0xff]
      %v3514 = vld [vmem:[#allocation3 + $0x112] sm:$0xff]
      %v3515 = vld [vmem:[#allocation3 + $0x122] sm:$0xff]
      %v3516 = vld [vmem:[#allocation3 + $0x12a] sm:$0xff]
      %v3517 = vld [vmem:[#allocation3 + $0x13a] sm:$0xff]
      %v3518 = vld [vmem:[#allocation3 + $0x142] sm:$0xff]
      %v3519 = vld [vmem:[#allocation3 + $0x152] sm:$0xff]
      %v3520 = vld [vmem:[#allocation3 + $0x15a] sm:$0xff]
      %v3521 = vld [vmem:[#allocation3 + $0x16a] sm:$0xff]
      %v3522 = vld [vmem:[#allocation3 + $0x172] sm:$0xff]
      %v3523 = vld [vmem:[%s4 + $0x8] sm:$0xf]
      %v3525 = vsel %vm279, %v3491, 0
      %v3528 = vsel %vm279, %v3492, 0
      %v3531 = vsel %vm279, %v3493, 0
      %v3534 = vsel %vm279, %v3494, 0
      %v3537 = vsel %vm279, %v3495, 0
      %v3540 = vsel %vm279, %v3496, 0
      %v3543 = vsel %vm279, %v3497, 0
      %v3546 = vsel %vm279, %v3498, 0
      %v3549 = vsel %vm279, %v3499, 0
      %v3552 = vsel %vm279, %v3500, 0
      %v3555 = vsel %vm279, %v3501, 0
      %v3558 = vsel %vm279, %v3502, 0
      %v3561 = vsel %vm279, %v3503, 0
      %v3564 = vsel %vm279, %v3504, 0
      %v3567 = vsel %vm279, %v3505, 0
      %v3570 = vsel %vm279, %v3506, 0
      %v3573 = vsel %vm279, %v3507, 0
      %v3576 = vsel %vm279, %v3508, 0
      %v3579 = vsel %vm279, %v3509, 0
      %v3582 = vsel %vm279, %v3510, 0
      %v3585 = vsel %vm279, %v3511, 0
      %v3588 = vsel %vm279, %v3512, 0
      %v3591 = vsel %vm279, %v3513, 0
      %v3594 = vsel %vm279, %v3514, 0
      %v3597 = vsel %vm279, %v3515, 0
      %v3600 = vsel %vm279, %v3516, 0
      %v3603 = vsel %vm279, %v3517, 0
      %v3606 = vsel %vm279, %v3518, 0
      %v3609 = vsel %vm279, %v3519, 0
      %v3612 = vsel %vm279, %v3520, 0
      %v3615 = vsel %vm279, %v3521, 0
      %v3618 = vsel %vm279, %v3522, 0
      %v3621 = vsel %vm595, %v3523, 0
      %3623 = vmatpush.msra.mxu0 0.0
      %3624 = vmatpush.msra.mxu0 0.0
      %3625 = vmatpush.msra.mxu0 0.0
      %3626 = vmatpush.msra.mxu0 0.0
      %3627 = vmatpush.msra.mxu0 0.0
      %3628 = vmatpush.msra.mxu0 0.0
      %3629 = vmatpush.msra.mxu0 0.0
      %3630 = vmatpush.msra.mxu0 0.0
      %3631 = vmatpush.msra.mxu0 0.0
      %3632 = vmatpush.msra.mxu0 0.0
      %3633 = vmatpush.msra.mxu0 0.0
      %3634 = vmatpush.msra.mxu0 0.0
      %3635 = vmatpush.msra.mxu0 0.0
      %3636 = vmatpush.msra.mxu0 0.0
      %3637 = vmatpush.msra.mxu0 0.0
      %3638 = vmatpush.msra.mxu0 %v3621
      %3639 = vmatmul.f32.gmra.mxu0 %v3525
      %v3640 = vpop.f32.mrf.mxu0
      %v3641 = vadd.f32 0.0, %v3640
      %3642 = vmatmul.f32.gmra.mxu0 %v3528
      %v3643 = vpop.f32.mrf.mxu0
      %v3644 = vadd.f32 0.0, %v3643
      %3645 = vmatmul.f32.gmra.mxu0 %v3531
      %v3646 = vpop.f32.mrf.mxu0
      %v3647 = vadd.f32 0.0, %v3646
      %3648 = vmatmul.f32.gmra.mxu0 %v3534
      %v3649 = vpop.f32.mrf.mxu0
      %v3650 = vadd.f32 0.0, %v3649
      %3651 = vmatmul.f32.gmra.mxu0 %v3537
      %v3652 = vpop.f32.mrf.mxu0
      %v3653 = vadd.f32 0.0, %v3652
      %3654 = vmatmul.f32.gmra.mxu0 %v3540
      %v3655 = vpop.f32.mrf.mxu0
      %v3656 = vadd.f32 0.0, %v3655
      %3657 = vmatmul.f32.gmra.mxu0 %v3543
      %v3658 = vpop.f32.mrf.mxu0
      %v3659 = vadd.f32 0.0, %v3658
      %3660 = vmatmul.f32.gmra.mxu0 %v3546
      %v3661 = vpop.f32.mrf.mxu0
      %v3662 = vadd.f32 0.0, %v3661
      %3663 = vmatmul.f32.gmra.mxu0 %v3549
      %v3664 = vpop.f32.mrf.mxu0
      %v3665 = vadd.f32 0.0, %v3664
      %3666 = vmatmul.f32.gmra.mxu0 %v3552
      %v3667 = vpop.f32.mrf.mxu0
      %v3668 = vadd.f32 0.0, %v3667
      %3669 = vmatmul.f32.gmra.mxu0 %v3555
      %v3670 = vpop.f32.mrf.mxu0
      %v3671 = vadd.f32 0.0, %v3670
      %3672 = vmatmul.f32.gmra.mxu0 %v3558
      %v3673 = vpop.f32.mrf.mxu0
      %v3674 = vadd.f32 0.0, %v3673
      %3675 = vmatmul.f32.gmra.mxu0 %v3561
      %v3676 = vpop.f32.mrf.mxu0
      %v3677 = vadd.f32 0.0, %v3676
      %3678 = vmatmul.f32.gmra.mxu0 %v3564
      %v3679 = vpop.f32.mrf.mxu0
      %v3680 = vadd.f32 0.0, %v3679
      %3681 = vmatmul.f32.gmra.mxu0 %v3567
      %v3682 = vpop.f32.mrf.mxu0
      %v3683 = vadd.f32 0.0, %v3682
      %3684 = vmatmul.f32.gmra.mxu0 %v3570
      %v3685 = vpop.f32.mrf.mxu0
      %v3686 = vadd.f32 0.0, %v3685
      %3687 = vmatmul.f32.gmra.mxu0 %v3573
      %v3688 = vpop.f32.mrf.mxu0
      %v3689 = vadd.f32 0.0, %v3688
      %3690 = vmatmul.f32.gmra.mxu0 %v3576
      %v3691 = vpop.f32.mrf.mxu0
      %v3692 = vadd.f32 0.0, %v3691
      %3693 = vmatmul.f32.gmra.mxu0 %v3579
      %v3694 = vpop.f32.mrf.mxu0
      %v3695 = vadd.f32 0.0, %v3694
      %3696 = vmatmul.f32.gmra.mxu0 %v3582
      %v3697 = vpop.f32.mrf.mxu0
      %v3698 = vadd.f32 0.0, %v3697
      %3699 = vmatmul.f32.gmra.mxu0 %v3585
      %v3700 = vpop.f32.mrf.mxu0
      %v3701 = vadd.f32 0.0, %v3700
      %3702 = vmatmul.f32.gmra.mxu0 %v3588
      %v3703 = vpop.f32.mrf.mxu0
      %v3704 = vadd.f32 0.0, %v3703
      %3705 = vmatmul.f32.gmra.mxu0 %v3591
      %v3706 = vpop.f32.mrf.mxu0
      %v3707 = vadd.f32 0.0, %v3706
      %3708 = vmatmul.f32.gmra.mxu0 %v3594
      %v3709 = vpop.f32.mrf.mxu0
      %v3710 = vadd.f32 0.0, %v3709
      %3711 = vmatmul.f32.gmra.mxu0 %v3597
      %v3712 = vpop.f32.mrf.mxu0
      %v3713 = vadd.f32 0.0, %v3712
      %3714 = vmatmul.f32.gmra.mxu0 %v3600
      %v3715 = vpop.f32.mrf.mxu0
      %v3716 = vadd.f32 0.0, %v3715
      %3717 = vmatmul.f32.gmra.mxu0 %v3603
      %v3718 = vpop.f32.mrf.mxu0
      %v3719 = vadd.f32 0.0, %v3718
      %3720 = vmatmul.f32.gmra.mxu0 %v3606
      %v3721 = vpop.f32.mrf.mxu0
      %v3722 = vadd.f32 0.0, %v3721
      %3723 = vmatmul.f32.gmra.mxu0 %v3609
      %v3724 = vpop.f32.mrf.mxu0
      %v3725 = vadd.f32 0.0, %v3724
      %3726 = vmatmul.f32.gmra.mxu0 %v3612
      %v3727 = vpop.f32.mrf.mxu0
      %v3728 = vadd.f32 0.0, %v3727
      %3729 = vmatmul.f32.gmra.mxu0 %v3615
      %v3730 = vpop.f32.mrf.mxu0
      %v3731 = vadd.f32 0.0, %v3730
      %3732 = vmatmul.f32.gmra.mxu0 %v3618
      %v3733 = vpop.f32.mrf.mxu0
      %v3734 = vadd.f32 0.0, %v3733
      %3735 = vdwg.mxu0
      %v3736 = vadd.f32 %v3396, %v3641
      %v3737 = vadd.f32 %v3399, %v3644
      %v3738 = vadd.f32 %v3402, %v3647
      %v3739 = vadd.f32 %v3405, %v3650
      %v3740 = vadd.f32 %v3408, %v3653
      %v3741 = vadd.f32 %v3411, %v3656
      %v3742 = vadd.f32 %v3414, %v3659
      %v3743 = vadd.f32 %v3417, %v3662
      %v3744 = vadd.f32 %v3420, %v3665
      %v3745 = vadd.f32 %v3423, %v3668
      %v3746 = vadd.f32 %v3426, %v3671
      %v3747 = vadd.f32 %v3429, %v3674
      %v3748 = vadd.f32 %v3432, %v3677
      %v3749 = vadd.f32 %v3435, %v3680
      %v3750 = vadd.f32 %v3438, %v3683
      %v3751 = vadd.f32 %v3441, %v3686
      %v3752 = vadd.f32 %v3444, %v3689
      %v3753 = vadd.f32 %v3447, %v3692
      %v3754 = vadd.f32 %v3450, %v3695
      %v3755 = vadd.f32 %v3453, %v3698
      %v3756 = vadd.f32 %v3456, %v3701
      %v3757 = vadd.f32 %v3459, %v3704
      %v3758 = vadd.f32 %v3462, %v3707
      %v3759 = vadd.f32 %v3465, %v3710
      %v3760 = vadd.f32 %v3468, %v3713
      %v3761 = vadd.f32 %v3471, %v3716
      %v3762 = vadd.f32 %v3474, %v3719
      %v3763 = vadd.f32 %v3477, %v3722
      %v3764 = vadd.f32 %v3480, %v3725
      %v3765 = vadd.f32 %v3483, %v3728
      %v3766 = vadd.f32 %v3486, %v3731
      %v3767 = vadd.f32 %v3489, %v3734
      %v3768 = vld [vmem:[%s2968] sm:$0xff]
      %v3769 = vld [vmem:[%s2968 + $0x8] sm:$0xff]
      %v3770 = vld [vmem:[%s2968 + $0x18] sm:$0xff]
      %v3771 = vld [vmem:[%s2968 + $0x20] sm:$0xff]
      %v3772 = vld [vmem:[%s2968 + $0x30] sm:$0xff]
      %v3773 = vld [vmem:[%s2968 + $0x38] sm:$0xff]
      %v3774 = vld [vmem:[%s2968 + $0x48] sm:$0xff]
      %v3775 = vld [vmem:[%s2968 + $0x50] sm:$0xff]
      %v3776 = vld [vmem:[%s2968 + $0x60] sm:$0xff]
      %v3777 = vld [vmem:[%s2968 + $0x68] sm:$0xff]
      %v3778 = vld [vmem:[%s2968 + $0x78] sm:$0xff]
      %v3779 = vld [vmem:[%s2968 + $0x80] sm:$0xff]
      %v3780 = vld [vmem:[%s2968 + $0x90] sm:$0xff]
      %v3781 = vld [vmem:[%s2968 + $0x98] sm:$0xff]
      %v3782 = vld [vmem:[%s2968 + $0xa8] sm:$0xff]
      %v3783 = vld [vmem:[%s2968 + $0xb0] sm:$0xff]
      %v3784 = vld [vmem:[%s2968 + $0xc0] sm:$0xff]
      %v3785 = vld [vmem:[%s2968 + $0xc8] sm:$0xff]
      %v3786 = vld [vmem:[%s2968 + $0xd8] sm:$0xff]
      %v3787 = vld [vmem:[%s2968 + $0xe0] sm:$0xff]
      %v3788 = vld [vmem:[%s2968 + $0xf0] sm:$0xff]
      %v3789 = vld [vmem:[%s2968 + $0xf8] sm:$0xff]
      %v3790 = vld [vmem:[%s2968 + $0x108] sm:$0xff]
      %v3791 = vld [vmem:[%s2968 + $0x110] sm:$0xff]
      %v3792 = vld [vmem:[%s2968 + $0x120] sm:$0xff]
      %v3793 = vld [vmem:[%s2968 + $0x128] sm:$0xff]
      %v3794 = vld [vmem:[%s2968 + $0x138] sm:$0xff]
      %v3795 = vld [vmem:[%s2968 + $0x140] sm:$0xff]
      %v3796 = vld [vmem:[%s2968 + $0x150] sm:$0xff]
      %v3797 = vld [vmem:[%s2968 + $0x158] sm:$0xff]
      %v3798 = vld [vmem:[%s2968 + $0x168] sm:$0xff]
      %v3799 = vld [vmem:[%s2968 + $0x170] sm:$0xff]
      %v3800 = vld [vmem:[%s4 + $0xc] sm:$0xf]
      %v3802 = vsel %vm279, %v3768, 0
      %v3805 = vsel %vm279, %v3769, 0
      %v3808 = vsel %vm279, %v3770, 0
      %v3811 = vsel %vm279, %v3771, 0
      %v3814 = vsel %vm279, %v3772, 0
      %v3817 = vsel %vm279, %v3773, 0
      %v3820 = vsel %vm279, %v3774, 0
      %v3823 = vsel %vm279, %v3775, 0
      %v3826 = vsel %vm279, %v3776, 0
      %v3829 = vsel %vm279, %v3777, 0
      %v3832 = vsel %vm279, %v3778, 0
      %v3835 = vsel %vm279, %v3779, 0
      %v3838 = vsel %vm279, %v3780, 0
      %v3841 = vsel %vm279, %v3781, 0
      %v3844 = vsel %vm279, %v3782, 0
      %v3847 = vsel %vm279, %v3783, 0
      %v3850 = vsel %vm279, %v3784, 0
      %v3853 = vsel %vm279, %v3785, 0
      %v3856 = vsel %vm279, %v3786, 0
      %v3859 = vsel %vm279, %v3787, 0
      %v3862 = vsel %vm279, %v3788, 0
      %v3865 = vsel %vm279, %v3789, 0
      %v3868 = vsel %vm279, %v3790, 0
      %v3871 = vsel %vm279, %v3791, 0
      %v3874 = vsel %vm279, %v3792, 0
      %v3877 = vsel %vm279, %v3793, 0
      %v3880 = vsel %vm279, %v3794, 0
      %v3883 = vsel %vm279, %v3795, 0
      %v3886 = vsel %vm279, %v3796, 0
      %v3889 = vsel %vm279, %v3797, 0
      %v3892 = vsel %vm279, %v3798, 0
      %v3895 = vsel %vm279, %v3799, 0
      %v3898 = vsel %vm595, %v3800, 0
      %3900 = vmatpush.msra.mxu0 0.0
      %3901 = vmatpush.msra.mxu0 0.0
      %3902 = vmatpush.msra.mxu0 0.0
      %3903 = vmatpush.msra.mxu0 0.0
      %3904 = vmatpush.msra.mxu0 0.0
      %3905 = vmatpush.msra.mxu0 0.0
      %3906 = vmatpush.msra.mxu0 0.0
      %3907 = vmatpush.msra.mxu0 0.0
      %3908 = vmatpush.msra.mxu0 0.0
      %3909 = vmatpush.msra.mxu0 0.0
      %3910 = vmatpush.msra.mxu0 0.0
      %3911 = vmatpush.msra.mxu0 0.0
      %3912 = vmatpush.msra.mxu0 0.0
      %3913 = vmatpush.msra.mxu0 0.0
      %3914 = vmatpush.msra.mxu0 0.0
      %3915 = vmatpush.msra.mxu0 %v3898
      %3916 = vmatmul.f32.gmra.mxu0 %v3802
      %v3917 = vpop.f32.mrf.mxu0
      %v3918 = vadd.f32 0.0, %v3917
      %3919 = vmatmul.f32.gmra.mxu0 %v3805
      %v3920 = vpop.f32.mrf.mxu0
      %v3921 = vadd.f32 0.0, %v3920
      %3922 = vmatmul.f32.gmra.mxu0 %v3808
      %v3923 = vpop.f32.mrf.mxu0
      %v3924 = vadd.f32 0.0, %v3923
      %3925 = vmatmul.f32.gmra.mxu0 %v3811
      %v3926 = vpop.f32.mrf.mxu0
      %v3927 = vadd.f32 0.0, %v3926
      %3928 = vmatmul.f32.gmra.mxu0 %v3814
      %v3929 = vpop.f32.mrf.mxu0
      %v3930 = vadd.f32 0.0, %v3929
      %3931 = vmatmul.f32.gmra.mxu0 %v3817
      %v3932 = vpop.f32.mrf.mxu0
      %v3933 = vadd.f32 0.0, %v3932
      %3934 = vmatmul.f32.gmra.mxu0 %v3820
      %v3935 = vpop.f32.mrf.mxu0
      %v3936 = vadd.f32 0.0, %v3935
      %3937 = vmatmul.f32.gmra.mxu0 %v3823
      %v3938 = vpop.f32.mrf.mxu0
      %v3939 = vadd.f32 0.0, %v3938
      %3940 = vmatmul.f32.gmra.mxu0 %v3826
      %v3941 = vpop.f32.mrf.mxu0
      %v3942 = vadd.f32 0.0, %v3941
      %3943 = vmatmul.f32.gmra.mxu0 %v3829
      %v3944 = vpop.f32.mrf.mxu0
      %v3945 = vadd.f32 0.0, %v3944
      %3946 = vmatmul.f32.gmra.mxu0 %v3832
      %v3947 = vpop.f32.mrf.mxu0
      %v3948 = vadd.f32 0.0, %v3947
      %3949 = vmatmul.f32.gmra.mxu0 %v3835
      %v3950 = vpop.f32.mrf.mxu0
      %v3951 = vadd.f32 0.0, %v3950
      %3952 = vmatmul.f32.gmra.mxu0 %v3838
      %v3953 = vpop.f32.mrf.mxu0
      %v3954 = vadd.f32 0.0, %v3953
      %3955 = vmatmul.f32.gmra.mxu0 %v3841
      %v3956 = vpop.f32.mrf.mxu0
      %v3957 = vadd.f32 0.0, %v3956
      %3958 = vmatmul.f32.gmra.mxu0 %v3844
      %v3959 = vpop.f32.mrf.mxu0
      %v3960 = vadd.f32 0.0, %v3959
      %3961 = vmatmul.f32.gmra.mxu0 %v3847
      %v3962 = vpop.f32.mrf.mxu0
      %v3963 = vadd.f32 0.0, %v3962
      %3964 = vmatmul.f32.gmra.mxu0 %v3850
      %v3965 = vpop.f32.mrf.mxu0
      %v3966 = vadd.f32 0.0, %v3965
      %3967 = vmatmul.f32.gmra.mxu0 %v3853
      %v3968 = vpop.f32.mrf.mxu0
      %v3969 = vadd.f32 0.0, %v3968
      %3970 = vmatmul.f32.gmra.mxu0 %v3856
      %v3971 = vpop.f32.mrf.mxu0
      %v3972 = vadd.f32 0.0, %v3971
      %3973 = vmatmul.f32.gmra.mxu0 %v3859
      %v3974 = vpop.f32.mrf.mxu0
      %v3975 = vadd.f32 0.0, %v3974
      %3976 = vmatmul.f32.gmra.mxu0 %v3862
      %v3977 = vpop.f32.mrf.mxu0
      %v3978 = vadd.f32 0.0, %v3977
      %3979 = vmatmul.f32.gmra.mxu0 %v3865
      %v3980 = vpop.f32.mrf.mxu0
      %v3981 = vadd.f32 0.0, %v3980
      %3982 = vmatmul.f32.gmra.mxu0 %v3868
      %v3983 = vpop.f32.mrf.mxu0
      %v3984 = vadd.f32 0.0, %v3983
      %3985 = vmatmul.f32.gmra.mxu0 %v3871
      %v3986 = vpop.f32.mrf.mxu0
      %v3987 = vadd.f32 0.0, %v3986
      %3988 = vmatmul.f32.gmra.mxu0 %v3874
      %v3989 = vpop.f32.mrf.mxu0
      %v3990 = vadd.f32 0.0, %v3989
      %3991 = vmatmul.f32.gmra.mxu0 %v3877
      %v3992 = vpop.f32.mrf.mxu0
      %v3993 = vadd.f32 0.0, %v3992
      %3994 = vmatmul.f32.gmra.mxu0 %v3880
      %v3995 = vpop.f32.mrf.mxu0
      %v3996 = vadd.f32 0.0, %v3995
      %3997 = vmatmul.f32.gmra.mxu0 %v3883
      %v3998 = vpop.f32.mrf.mxu0
      %v3999 = vadd.f32 0.0, %v3998
      %4000 = vmatmul.f32.gmra.mxu0 %v3886
      %v4001 = vpop.f32.mrf.mxu0
      %v4002 = vadd.f32 0.0, %v4001
      %4003 = vmatmul.f32.gmra.mxu0 %v3889
      %v4004 = vpop.f32.mrf.mxu0
      %v4005 = vadd.f32 0.0, %v4004
      %4006 = vmatmul.f32.gmra.mxu0 %v3892
      %v4007 = vpop.f32.mrf.mxu0
      %v4008 = vadd.f32 0.0, %v4007
      %4009 = vmatmul.f32.gmra.mxu0 %v3895
      %v4010 = vpop.f32.mrf.mxu0
      %v4011 = vadd.f32 0.0, %v4010
      %4012 = vdwg.mxu0
      %v4013 = vadd.f32 %v3736, %v3918
      %v4014 = vadd.f32 %v3737, %v3921
      %v4015 = vadd.f32 %v3738, %v3924
      %v4016 = vadd.f32 %v3739, %v3927
      %v4017 = vadd.f32 %v3740, %v3930
      %v4018 = vadd.f32 %v3741, %v3933
      %v4019 = vadd.f32 %v3742, %v3936
      %v4020 = vadd.f32 %v3743, %v3939
      %v4021 = vadd.f32 %v3744, %v3942
      %v4022 = vadd.f32 %v3745, %v3945
      %v4023 = vadd.f32 %v3746, %v3948
      %v4024 = vadd.f32 %v3747, %v3951
      %v4025 = vadd.f32 %v3748, %v3954
      %v4026 = vadd.f32 %v3749, %v3957
      %v4027 = vadd.f32 %v3750, %v3960
      %v4028 = vadd.f32 %v3751, %v3963
      %v4029 = vadd.f32 %v3752, %v3966
      %v4030 = vadd.f32 %v3753, %v3969
      %v4031 = vadd.f32 %v3754, %v3972
      %v4032 = vadd.f32 %v3755, %v3975
      %v4033 = vadd.f32 %v3756, %v3978
      %v4034 = vadd.f32 %v3757, %v3981
      %v4035 = vadd.f32 %v3758, %v3984
      %v4036 = vadd.f32 %v3759, %v3987
      %v4037 = vadd.f32 %v3760, %v3990
      %v4038 = vadd.f32 %v3761, %v3993
      %v4039 = vadd.f32 %v3762, %v3996
      %v4040 = vadd.f32 %v3763, %v3999
      %v4041 = vadd.f32 %v3764, %v4002
      %v4042 = vadd.f32 %v3765, %v4005
      %v4043 = vadd.f32 %v3766, %v4008
      %v4044 = vadd.f32 %v3767, %v4011
      %v4045 = vld [vmem:[%s2968 + $0x1] sm:$0xff]
      %v4046 = vld [vmem:[%s2968 + $0x9] sm:$0xff]
      %v4047 = vld [vmem:[%s2968 + $0x19] sm:$0xff]
      %v4048 = vld [vmem:[%s2968 + $0x21] sm:$0xff]
      %v4049 = vld [vmem:[%s2968 + $0x31] sm:$0xff]
      %v4050 = vld [vmem:[%s2968 + $0x39] sm:$0xff]
      %v4051 = vld [vmem:[%s2968 + $0x49] sm:$0xff]
      %v4052 = vld [vmem:[%s2968 + $0x51] sm:$0xff]
      %v4053 = vld [vmem:[%s2968 + $0x61] sm:$0xff]
      %v4054 = vld [vmem:[%s2968 + $0x69] sm:$0xff]
      %v4055 = vld [vmem:[%s2968 + $0x79] sm:$0xff]
      %v4056 = vld [vmem:[%s2968 + $0x81] sm:$0xff]
      %v4057 = vld [vmem:[%s2968 + $0x91] sm:$0xff]
      %v4058 = vld [vmem:[%s2968 + $0x99] sm:$0xff]
      %v4059 = vld [vmem:[%s2968 + $0xa9] sm:$0xff]
      %v4060 = vld [vmem:[%s2968 + $0xb1] sm:$0xff]
      %v4061 = vld [vmem:[%s2968 + $0xc1] sm:$0xff]
      %v4062 = vld [vmem:[%s2968 + $0xc9] sm:$0xff]
      %v4063 = vld [vmem:[%s2968 + $0xd9] sm:$0xff]
      %v4064 = vld [vmem:[%s2968 + $0xe1] sm:$0xff]
      %v4065 = vld [vmem:[%s2968 + $0xf1] sm:$0xff]
      %v4066 = vld [vmem:[%s2968 + $0xf9] sm:$0xff]
      %v4067 = vld [vmem:[%s2968 + $0x109] sm:$0xff]
      %v4068 = vld [vmem:[%s2968 + $0x111] sm:$0xff]
      %v4069 = vld [vmem:[%s2968 + $0x121] sm:$0xff]
      %v4070 = vld [vmem:[%s2968 + $0x129] sm:$0xff]
      %v4071 = vld [vmem:[%s2968 + $0x139] sm:$0xff]
      %v4072 = vld [vmem:[%s2968 + $0x141] sm:$0xff]
      %v4073 = vld [vmem:[%s2968 + $0x151] sm:$0xff]
      %v4074 = vld [vmem:[%s2968 + $0x159] sm:$0xff]
      %v4075 = vld [vmem:[%s2968 + $0x169] sm:$0xff]
      %v4076 = vld [vmem:[%s2968 + $0x171] sm:$0xff]
      %v4077 = vld [vmem:[%s4 + $0x10] sm:$0xf]
      %v4079 = vsel %vm279, %v4045, 0
      %v4082 = vsel %vm279, %v4046, 0
      %v4085 = vsel %vm279, %v4047, 0
      %v4088 = vsel %vm279, %v4048, 0
      %v4091 = vsel %vm279, %v4049, 0
      %v4094 = vsel %vm279, %v4050, 0
      %v4097 = vsel %vm279, %v4051, 0
      %v4100 = vsel %vm279, %v4052, 0
      %v4103 = vsel %vm279, %v4053, 0
      %v4106 = vsel %vm279, %v4054, 0
      %v4109 = vsel %vm279, %v4055, 0
      %v4112 = vsel %vm279, %v4056, 0
      %v4115 = vsel %vm279, %v4057, 0
      %v4118 = vsel %vm279, %v4058, 0
      %v4121 = vsel %vm279, %v4059, 0
      %v4124 = vsel %vm279, %v4060, 0
      %v4127 = vsel %vm279, %v4061, 0
      %v4130 = vsel %vm279, %v4062, 0
      %v4133 = vsel %vm279, %v4063, 0
      %v4136 = vsel %vm279, %v4064, 0
      %v4139 = vsel %vm279, %v4065, 0
      %v4142 = vsel %vm279, %v4066, 0
      %v4145 = vsel %vm279, %v4067, 0
      %v4148 = vsel %vm279, %v4068, 0
      %v4151 = vsel %vm279, %v4069, 0
      %v4154 = vsel %vm279, %v4070, 0
      %v4157 = vsel %vm279, %v4071, 0
      %v4160 = vsel %vm279, %v4072, 0
      %v4163 = vsel %vm279, %v4073, 0
      %v4166 = vsel %vm279, %v4074, 0
      %v4169 = vsel %vm279, %v4075, 0
      %v4172 = vsel %vm279, %v4076, 0
      %v4175 = vsel %vm595, %v4077, 0
      %4177 = vmatpush.msra.mxu0 0.0
      %4178 = vmatpush.msra.mxu0 0.0
      %4179 = vmatpush.msra.mxu0 0.0
      %4180 = vmatpush.msra.mxu0 0.0
      %4181 = vmatpush.msra.mxu0 0.0
      %4182 = vmatpush.msra.mxu0 0.0
      %4183 = vmatpush.msra.mxu0 0.0
      %4184 = vmatpush.msra.mxu0 0.0
      %4185 = vmatpush.msra.mxu0 0.0
      %4186 = vmatpush.msra.mxu0 0.0
      %4187 = vmatpush.msra.mxu0 0.0
      %4188 = vmatpush.msra.mxu0 0.0
      %4189 = vmatpush.msra.mxu0 0.0
      %4190 = vmatpush.msra.mxu0 0.0
      %4191 = vmatpush.msra.mxu0 0.0
      %4192 = vmatpush.msra.mxu0 %v4175
      %4193 = vmatmul.f32.gmra.mxu0 %v4079
      %v4194 = vpop.f32.mrf.mxu0
      %v4195 = vadd.f32 0.0, %v4194
      %4196 = vmatmul.f32.gmra.mxu0 %v4082
      %v4197 = vpop.f32.mrf.mxu0
      %v4198 = vadd.f32 0.0, %v4197
      %4199 = vmatmul.f32.gmra.mxu0 %v4085
      %v4200 = vpop.f32.mrf.mxu0
      %v4201 = vadd.f32 0.0, %v4200
      %4202 = vmatmul.f32.gmra.mxu0 %v4088
      %v4203 = vpop.f32.mrf.mxu0
      %v4204 = vadd.f32 0.0, %v4203
      %4205 = vmatmul.f32.gmra.mxu0 %v4091
      %v4206 = vpop.f32.mrf.mxu0
      %v4207 = vadd.f32 0.0, %v4206
      %4208 = vmatmul.f32.gmra.mxu0 %v4094
      %v4209 = vpop.f32.mrf.mxu0
      %v4210 = vadd.f32 0.0, %v4209
      %4211 = vmatmul.f32.gmra.mxu0 %v4097
      %v4212 = vpop.f32.mrf.mxu0
      %v4213 = vadd.f32 0.0, %v4212
      %4214 = vmatmul.f32.gmra.mxu0 %v4100
      %v4215 = vpop.f32.mrf.mxu0
      %v4216 = vadd.f32 0.0, %v4215
      %4217 = vmatmul.f32.gmra.mxu0 %v4103
      %v4218 = vpop.f32.mrf.mxu0
      %v4219 = vadd.f32 0.0, %v4218
      %4220 = vmatmul.f32.gmra.mxu0 %v4106
      %v4221 = vpop.f32.mrf.mxu0
      %v4222 = vadd.f32 0.0, %v4221
      %4223 = vmatmul.f32.gmra.mxu0 %v4109
      %v4224 = vpop.f32.mrf.mxu0
      %v4225 = vadd.f32 0.0, %v4224
      %4226 = vmatmul.f32.gmra.mxu0 %v4112
      %v4227 = vpop.f32.mrf.mxu0
      %v4228 = vadd.f32 0.0, %v4227
      %4229 = vmatmul.f32.gmra.mxu0 %v4115
      %v4230 = vpop.f32.mrf.mxu0
      %v4231 = vadd.f32 0.0, %v4230
      %4232 = vmatmul.f32.gmra.mxu0 %v4118
      %v4233 = vpop.f32.mrf.mxu0
      %v4234 = vadd.f32 0.0, %v4233
      %4235 = vmatmul.f32.gmra.mxu0 %v4121
      %v4236 = vpop.f32.mrf.mxu0
      %v4237 = vadd.f32 0.0, %v4236
      %4238 = vmatmul.f32.gmra.mxu0 %v4124
      %v4239 = vpop.f32.mrf.mxu0
      %v4240 = vadd.f32 0.0, %v4239
      %4241 = vmatmul.f32.gmra.mxu0 %v4127
      %v4242 = vpop.f32.mrf.mxu0
      %v4243 = vadd.f32 0.0, %v4242
      %4244 = vmatmul.f32.gmra.mxu0 %v4130
      %v4245 = vpop.f32.mrf.mxu0
      %v4246 = vadd.f32 0.0, %v4245
      %4247 = vmatmul.f32.gmra.mxu0 %v4133
      %v4248 = vpop.f32.mrf.mxu0
      %v4249 = vadd.f32 0.0, %v4248
      %4250 = vmatmul.f32.gmra.mxu0 %v4136
      %v4251 = vpop.f32.mrf.mxu0
      %v4252 = vadd.f32 0.0, %v4251
      %4253 = vmatmul.f32.gmra.mxu0 %v4139
      %v4254 = vpop.f32.mrf.mxu0
      %v4255 = vadd.f32 0.0, %v4254
      %4256 = vmatmul.f32.gmra.mxu0 %v4142
      %v4257 = vpop.f32.mrf.mxu0
      %v4258 = vadd.f32 0.0, %v4257
      %4259 = vmatmul.f32.gmra.mxu0 %v4145
      %v4260 = vpop.f32.mrf.mxu0
      %v4261 = vadd.f32 0.0, %v4260
      %4262 = vmatmul.f32.gmra.mxu0 %v4148
      %v4263 = vpop.f32.mrf.mxu0
      %v4264 = vadd.f32 0.0, %v4263
      %4265 = vmatmul.f32.gmra.mxu0 %v4151
      %v4266 = vpop.f32.mrf.mxu0
      %v4267 = vadd.f32 0.0, %v4266
      %4268 = vmatmul.f32.gmra.mxu0 %v4154
      %v4269 = vpop.f32.mrf.mxu0
      %v4270 = vadd.f32 0.0, %v4269
      %4271 = vmatmul.f32.gmra.mxu0 %v4157
      %v4272 = vpop.f32.mrf.mxu0
      %v4273 = vadd.f32 0.0, %v4272
      %4274 = vmatmul.f32.gmra.mxu0 %v4160
      %v4275 = vpop.f32.mrf.mxu0
      %v4276 = vadd.f32 0.0, %v4275
      %4277 = vmatmul.f32.gmra.mxu0 %v4163
      %v4278 = vpop.f32.mrf.mxu0
      %v4279 = vadd.f32 0.0, %v4278
      %4280 = vmatmul.f32.gmra.mxu0 %v4166
      %v4281 = vpop.f32.mrf.mxu0
      %v4282 = vadd.f32 0.0, %v4281
      %4283 = vmatmul.f32.gmra.mxu0 %v4169
      %v4284 = vpop.f32.mrf.mxu0
      %v4285 = vadd.f32 0.0, %v4284
      %4286 = vmatmul.f32.gmra.mxu0 %v4172
      %v4287 = vpop.f32.mrf.mxu0
      %v4288 = vadd.f32 0.0, %v4287
      %4289 = vdwg.mxu0
      %v4290 = vadd.f32 %v4013, %v4195
      %v4291 = vadd.f32 %v4014, %v4198
      %v4292 = vadd.f32 %v4015, %v4201
      %v4293 = vadd.f32 %v4016, %v4204
      %v4294 = vadd.f32 %v4017, %v4207
      %v4295 = vadd.f32 %v4018, %v4210
      %v4296 = vadd.f32 %v4019, %v4213
      %v4297 = vadd.f32 %v4020, %v4216
      %v4298 = vadd.f32 %v4021, %v4219
      %v4299 = vadd.f32 %v4022, %v4222
      %v4300 = vadd.f32 %v4023, %v4225
      %v4301 = vadd.f32 %v4024, %v4228
      %v4302 = vadd.f32 %v4025, %v4231
      %v4303 = vadd.f32 %v4026, %v4234
      %v4304 = vadd.f32 %v4027, %v4237
      %v4305 = vadd.f32 %v4028, %v4240
      %v4306 = vadd.f32 %v4029, %v4243
      %v4307 = vadd.f32 %v4030, %v4246
      %v4308 = vadd.f32 %v4031, %v4249
      %v4309 = vadd.f32 %v4032, %v4252
      %v4310 = vadd.f32 %v4033, %v4255
      %v4311 = vadd.f32 %v4034, %v4258
      %v4312 = vadd.f32 %v4035, %v4261
      %v4313 = vadd.f32 %v4036, %v4264
      %v4314 = vadd.f32 %v4037, %v4267
      %v4315 = vadd.f32 %v4038, %v4270
      %v4316 = vadd.f32 %v4039, %v4273
      %v4317 = vadd.f32 %v4040, %v4276
      %v4318 = vadd.f32 %v4041, %v4279
      %v4319 = vadd.f32 %v4042, %v4282
      %v4320 = vadd.f32 %v4043, %v4285
      %v4321 = vadd.f32 %v4044, %v4288
      %v4322 = vld [vmem:[%s2968 + $0x2] sm:$0xff]
      %v4323 = vld [vmem:[%s2968 + $0xa] sm:$0xff]
      %v4324 = vld [vmem:[%s2968 + $0x1a] sm:$0xff]
      %v4325 = vld [vmem:[%s2968 + $0x22] sm:$0xff]
      %v4326 = vld [vmem:[%s2968 + $0x32] sm:$0xff]
      %v4327 = vld [vmem:[%s2968 + $0x3a] sm:$0xff]
      %v4328 = vld [vmem:[%s2968 + $0x4a] sm:$0xff]
      %v4329 = vld [vmem:[%s2968 + $0x52] sm:$0xff]
      %v4330 = vld [vmem:[%s2968 + $0x62] sm:$0xff]
      %v4331 = vld [vmem:[%s2968 + $0x6a] sm:$0xff]
      %v4332 = vld [vmem:[%s2968 + $0x7a] sm:$0xff]
      %v4333 = vld [vmem:[%s2968 + $0x82] sm:$0xff]
      %v4334 = vld [vmem:[%s2968 + $0x92] sm:$0xff]
      %v4335 = vld [vmem:[%s2968 + $0x9a] sm:$0xff]
      %v4336 = vld [vmem:[%s2968 + $0xaa] sm:$0xff]
      %v4337 = vld [vmem:[%s2968 + $0xb2] sm:$0xff]
      %v4338 = vld [vmem:[%s2968 + $0xc2] sm:$0xff]
      %v4339 = vld [vmem:[%s2968 + $0xca] sm:$0xff]
      %v4340 = vld [vmem:[%s2968 + $0xda] sm:$0xff]
      %v4341 = vld [vmem:[%s2968 + $0xe2] sm:$0xff]
      %v4342 = vld [vmem:[%s2968 + $0xf2] sm:$0xff]
      %v4343 = vld [vmem:[%s2968 + $0xfa] sm:$0xff]
      %v4344 = vld [vmem:[%s2968 + $0x10a] sm:$0xff]
      %v4345 = vld [vmem:[%s2968 + $0x112] sm:$0xff]
      %v4346 = vld [vmem:[%s2968 + $0x122] sm:$0xff]
      %v4347 = vld [vmem:[%s2968 + $0x12a] sm:$0xff]
      %v4348 = vld [vmem:[%s2968 + $0x13a] sm:$0xff]
      %v4349 = vld [vmem:[%s2968 + $0x142] sm:$0xff]
      %v4350 = vld [vmem:[%s2968 + $0x152] sm:$0xff]
      %v4351 = vld [vmem:[%s2968 + $0x15a] sm:$0xff]
      %v4352 = vld [vmem:[%s2968 + $0x16a] sm:$0xff]
      %v4353 = vld [vmem:[%s2968 + $0x172] sm:$0xff]
      %v4354 = vld [vmem:[%s4 + $0x14] sm:$0xf]
      %v4356 = vsel %vm279, %v4322, 0
      %v4359 = vsel %vm279, %v4323, 0
      %v4362 = vsel %vm279, %v4324, 0
      %v4365 = vsel %vm279, %v4325, 0
      %v4368 = vsel %vm279, %v4326, 0
      %v4371 = vsel %vm279, %v4327, 0
      %v4374 = vsel %vm279, %v4328, 0
      %v4377 = vsel %vm279, %v4329, 0
      %v4380 = vsel %vm279, %v4330, 0
      %v4383 = vsel %vm279, %v4331, 0
      %v4386 = vsel %vm279, %v4332, 0
      %v4389 = vsel %vm279, %v4333, 0
      %v4392 = vsel %vm279, %v4334, 0
      %v4395 = vsel %vm279, %v4335, 0
      %v4398 = vsel %vm279, %v4336, 0
      %v4401 = vsel %vm279, %v4337, 0
      %v4404 = vsel %vm279, %v4338, 0
      %v4407 = vsel %vm279, %v4339, 0
      %v4410 = vsel %vm279, %v4340, 0
      %v4413 = vsel %vm279, %v4341, 0
      %v4416 = vsel %vm279, %v4342, 0
      %v4419 = vsel %vm279, %v4343, 0
      %v4422 = vsel %vm279, %v4344, 0
      %v4425 = vsel %vm279, %v4345, 0
      %v4428 = vsel %vm279, %v4346, 0
      %v4431 = vsel %vm279, %v4347, 0
      %v4434 = vsel %vm279, %v4348, 0
      %v4437 = vsel %vm279, %v4349, 0
      %v4440 = vsel %vm279, %v4350, 0
      %v4443 = vsel %vm279, %v4351, 0
      %v4446 = vsel %vm279, %v4352, 0
      %v4449 = vsel %vm279, %v4353, 0
      %v4452 = vsel %vm595, %v4354, 0
      %4454 = vmatpush.msra.mxu0 0.0
      %4455 = vmatpush.msra.mxu0 0.0
      %4456 = vmatpush.msra.mxu0 0.0
      %4457 = vmatpush.msra.mxu0 0.0
      %4458 = vmatpush.msra.mxu0 0.0
      %4459 = vmatpush.msra.mxu0 0.0
      %4460 = vmatpush.msra.mxu0 0.0
      %4461 = vmatpush.msra.mxu0 0.0
      %4462 = vmatpush.msra.mxu0 0.0
      %4463 = vmatpush.msra.mxu0 0.0
      %4464 = vmatpush.msra.mxu0 0.0
      %4465 = vmatpush.msra.mxu0 0.0
      %4466 = vmatpush.msra.mxu0 0.0
      %4467 = vmatpush.msra.mxu0 0.0
      %4468 = vmatpush.msra.mxu0 0.0
      %4469 = vmatpush.msra.mxu0 %v4452
      %4470 = vmatmul.f32.gmra.mxu0 %v4356
      %v4471 = vpop.f32.mrf.mxu0
      %v4472 = vadd.f32 0.0, %v4471
      %4473 = vmatmul.f32.gmra.mxu0 %v4359
      %v4474 = vpop.f32.mrf.mxu0
      %v4475 = vadd.f32 0.0, %v4474
      %4476 = vmatmul.f32.gmra.mxu0 %v4362
      %v4477 = vpop.f32.mrf.mxu0
      %v4478 = vadd.f32 0.0, %v4477
      %4479 = vmatmul.f32.gmra.mxu0 %v4365
      %v4480 = vpop.f32.mrf.mxu0
      %v4481 = vadd.f32 0.0, %v4480
      %4482 = vmatmul.f32.gmra.mxu0 %v4368
      %v4483 = vpop.f32.mrf.mxu0
      %v4484 = vadd.f32 0.0, %v4483
      %4485 = vmatmul.f32.gmra.mxu0 %v4371
      %v4486 = vpop.f32.mrf.mxu0
      %v4487 = vadd.f32 0.0, %v4486
      %4488 = vmatmul.f32.gmra.mxu0 %v4374
      %v4489 = vpop.f32.mrf.mxu0
      %v4490 = vadd.f32 0.0, %v4489
      %4491 = vmatmul.f32.gmra.mxu0 %v4377
      %v4492 = vpop.f32.mrf.mxu0
      %v4493 = vadd.f32 0.0, %v4492
      %4494 = vmatmul.f32.gmra.mxu0 %v4380
      %v4495 = vpop.f32.mrf.mxu0
      %v4496 = vadd.f32 0.0, %v4495
      %4497 = vmatmul.f32.gmra.mxu0 %v4383
      %v4498 = vpop.f32.mrf.mxu0
      %v4499 = vadd.f32 0.0, %v4498
      %4500 = vmatmul.f32.gmra.mxu0 %v4386
      %v4501 = vpop.f32.mrf.mxu0
      %v4502 = vadd.f32 0.0, %v4501
      %4503 = vmatmul.f32.gmra.mxu0 %v4389
      %v4504 = vpop.f32.mrf.mxu0
      %v4505 = vadd.f32 0.0, %v4504
      %4506 = vmatmul.f32.gmra.mxu0 %v4392
      %v4507 = vpop.f32.mrf.mxu0
      %v4508 = vadd.f32 0.0, %v4507
      %4509 = vmatmul.f32.gmra.mxu0 %v4395
      %v4510 = vpop.f32.mrf.mxu0
      %v4511 = vadd.f32 0.0, %v4510
      %4512 = vmatmul.f32.gmra.mxu0 %v4398
      %v4513 = vpop.f32.mrf.mxu0
      %v4514 = vadd.f32 0.0, %v4513
      %4515 = vmatmul.f32.gmra.mxu0 %v4401
      %v4516 = vpop.f32.mrf.mxu0
      %v4517 = vadd.f32 0.0, %v4516
      %4518 = vmatmul.f32.gmra.mxu0 %v4404
      %v4519 = vpop.f32.mrf.mxu0
      %v4520 = vadd.f32 0.0, %v4519
      %4521 = vmatmul.f32.gmra.mxu0 %v4407
      %v4522 = vpop.f32.mrf.mxu0
      %v4523 = vadd.f32 0.0, %v4522
      %4524 = vmatmul.f32.gmra.mxu0 %v4410
      %v4525 = vpop.f32.mrf.mxu0
      %v4526 = vadd.f32 0.0, %v4525
      %4527 = vmatmul.f32.gmra.mxu0 %v4413
      %v4528 = vpop.f32.mrf.mxu0
      %v4529 = vadd.f32 0.0, %v4528
      %4530 = vmatmul.f32.gmra.mxu0 %v4416
      %v4531 = vpop.f32.mrf.mxu0
      %v4532 = vadd.f32 0.0, %v4531
      %4533 = vmatmul.f32.gmra.mxu0 %v4419
      %v4534 = vpop.f32.mrf.mxu0
      %v4535 = vadd.f32 0.0, %v4534
      %4536 = vmatmul.f32.gmra.mxu0 %v4422
      %v4537 = vpop.f32.mrf.mxu0
      %v4538 = vadd.f32 0.0, %v4537
      %4539 = vmatmul.f32.gmra.mxu0 %v4425
      %v4540 = vpop.f32.mrf.mxu0
      %v4541 = vadd.f32 0.0, %v4540
      %4542 = vmatmul.f32.gmra.mxu0 %v4428
      %v4543 = vpop.f32.mrf.mxu0
      %v4544 = vadd.f32 0.0, %v4543
      %4545 = vmatmul.f32.gmra.mxu0 %v4431
      %v4546 = vpop.f32.mrf.mxu0
      %v4547 = vadd.f32 0.0, %v4546
      %4548 = vmatmul.f32.gmra.mxu0 %v4434
      %v4549 = vpop.f32.mrf.mxu0
      %v4550 = vadd.f32 0.0, %v4549
      %4551 = vmatmul.f32.gmra.mxu0 %v4437
      %v4552 = vpop.f32.mrf.mxu0
      %v4553 = vadd.f32 0.0, %v4552
      %4554 = vmatmul.f32.gmra.mxu0 %v4440
      %v4555 = vpop.f32.mrf.mxu0
      %v4556 = vadd.f32 0.0, %v4555
      %4557 = vmatmul.f32.gmra.mxu0 %v4443
      %v4558 = vpop.f32.mrf.mxu0
      %v4559 = vadd.f32 0.0, %v4558
      %4560 = vmatmul.f32.gmra.mxu0 %v4446
      %v4561 = vpop.f32.mrf.mxu0
      %v4562 = vadd.f32 0.0, %v4561
      %4563 = vmatmul.f32.gmra.mxu0 %v4449
      %v4564 = vpop.f32.mrf.mxu0
      %v4565 = vadd.f32 0.0, %v4564
      %4566 = vdwg.mxu0
      %v4567 = vadd.f32 %v4290, %v4472
      %v4568 = vadd.f32 %v4291, %v4475
      %v4569 = vadd.f32 %v4292, %v4478
      %v4570 = vadd.f32 %v4293, %v4481
      %v4571 = vadd.f32 %v4294, %v4484
      %v4572 = vadd.f32 %v4295, %v4487
      %v4573 = vadd.f32 %v4296, %v4490
      %v4574 = vadd.f32 %v4297, %v4493
      %v4575 = vadd.f32 %v4298, %v4496
      %v4576 = vadd.f32 %v4299, %v4499
      %v4577 = vadd.f32 %v4300, %v4502
      %v4578 = vadd.f32 %v4301, %v4505
      %v4579 = vadd.f32 %v4302, %v4508
      %v4580 = vadd.f32 %v4303, %v4511
      %v4581 = vadd.f32 %v4304, %v4514
      %v4582 = vadd.f32 %v4305, %v4517
      %v4583 = vadd.f32 %v4306, %v4520
      %v4584 = vadd.f32 %v4307, %v4523
      %v4585 = vadd.f32 %v4308, %v4526
      %v4586 = vadd.f32 %v4309, %v4529
      %v4587 = vadd.f32 %v4310, %v4532
      %v4588 = vadd.f32 %v4311, %v4535
      %v4589 = vadd.f32 %v4312, %v4538
      %v4590 = vadd.f32 %v4313, %v4541
      %v4591 = vadd.f32 %v4314, %v4544
      %v4592 = vadd.f32 %v4315, %v4547
      %v4593 = vadd.f32 %v4316, %v4550
      %v4594 = vadd.f32 %v4317, %v4553
      %v4595 = vadd.f32 %v4318, %v4556
      %v4596 = vadd.f32 %v4319, %v4559
      %v4597 = vadd.f32 %v4320, %v4562
      %v4598 = vadd.f32 %v4321, %v4565
      %s4599 = scalar_lea.vmem [#allocation3], 48
      %v4600 = vld [vmem:[%s4599] sm:$0xff]
      %v4601 = vld [vmem:[%s4599 + $0x8] sm:$0xff]
      %v4602 = vld [vmem:[%s4599 + $0x18] sm:$0xff]
      %v4603 = vld [vmem:[%s4599 + $0x20] sm:$0xff]
      %v4604 = vld [vmem:[%s4599 + $0x30] sm:$0xff]
      %v4605 = vld [vmem:[%s4599 + $0x38] sm:$0xff]
      %v4606 = vld [vmem:[%s4599 + $0x48] sm:$0xff]
      %v4607 = vld [vmem:[%s4599 + $0x50] sm:$0xff]
      %v4608 = vld [vmem:[%s4599 + $0x60] sm:$0xff]
      %v4609 = vld [vmem:[%s4599 + $0x68] sm:$0xff]
      %v4610 = vld [vmem:[%s4599 + $0x78] sm:$0xff]
      %v4611 = vld [vmem:[%s4599 + $0x80] sm:$0xff]
      %v4612 = vld [vmem:[%s4599 + $0x90] sm:$0xff]
      %v4613 = vld [vmem:[%s4599 + $0x98] sm:$0xff]
      %v4614 = vld [vmem:[%s4599 + $0xa8] sm:$0xff]
      %v4615 = vld [vmem:[%s4599 + $0xb0] sm:$0xff]
      %v4616 = vld [vmem:[%s4599 + $0xc0] sm:$0xff]
      %v4617 = vld [vmem:[%s4599 + $0xc8] sm:$0xff]
      %v4618 = vld [vmem:[%s4599 + $0xd8] sm:$0xff]
      %v4619 = vld [vmem:[%s4599 + $0xe0] sm:$0xff]
      %v4620 = vld [vmem:[%s4599 + $0xf0] sm:$0xff]
      %v4621 = vld [vmem:[%s4599 + $0xf8] sm:$0xff]
      %v4622 = vld [vmem:[%s4599 + $0x108] sm:$0xff]
      %v4623 = vld [vmem:[%s4599 + $0x110] sm:$0xff]
      %v4624 = vld [vmem:[%s4599 + $0x120] sm:$0xff]
      %v4625 = vld [vmem:[%s4599 + $0x128] sm:$0xff]
      %v4626 = vld [vmem:[%s4599 + $0x138] sm:$0xff]
      %v4627 = vld [vmem:[%s4599 + $0x140] sm:$0xff]
      %v4628 = vld [vmem:[%s4599 + $0x150] sm:$0xff]
      %v4629 = vld [vmem:[%s4599 + $0x158] sm:$0xff]
      %v4630 = vld [vmem:[%s4599 + $0x168] sm:$0xff]
      %v4631 = vld [vmem:[%s4599 + $0x170] sm:$0xff]
      %v4632 = vld [vmem:[%s4 + $0x18] sm:$0xf]
      %v4634 = vsel %vm279, %v4600, 0
      %v4637 = vsel %vm279, %v4601, 0
      %v4640 = vsel %vm279, %v4602, 0
      %v4643 = vsel %vm279, %v4603, 0
      %v4646 = vsel %vm279, %v4604, 0
      %v4649 = vsel %vm279, %v4605, 0
      %v4652 = vsel %vm279, %v4606, 0
      %v4655 = vsel %vm279, %v4607, 0
      %v4658 = vsel %vm279, %v4608, 0
      %v4661 = vsel %vm279, %v4609, 0
      %v4664 = vsel %vm279, %v4610, 0
      %v4667 = vsel %vm279, %v4611, 0
      %v4670 = vsel %vm279, %v4612, 0
      %v4673 = vsel %vm279, %v4613, 0
      %v4676 = vsel %vm279, %v4614, 0
      %v4679 = vsel %vm279, %v4615, 0
      %v4682 = vsel %vm279, %v4616, 0
      %v4685 = vsel %vm279, %v4617, 0
      %v4688 = vsel %vm279, %v4618, 0
      %v4691 = vsel %vm279, %v4619, 0
      %v4694 = vsel %vm279, %v4620, 0
      %v4697 = vsel %vm279, %v4621, 0
      %v4700 = vsel %vm279, %v4622, 0
      %v4703 = vsel %vm279, %v4623, 0
      %v4706 = vsel %vm279, %v4624, 0
      %v4709 = vsel %vm279, %v4625, 0
      %v4712 = vsel %vm279, %v4626, 0
      %v4715 = vsel %vm279, %v4627, 0
      %v4718 = vsel %vm279, %v4628, 0
      %v4721 = vsel %vm279, %v4629, 0
      %v4724 = vsel %vm279, %v4630, 0
      %v4727 = vsel %vm279, %v4631, 0
      %v4730 = vsel %vm595, %v4632, 0
      %4732 = vmatpush.msra.mxu0 0.0
      %4733 = vmatpush.msra.mxu0 0.0
      %4734 = vmatpush.msra.mxu0 0.0
      %4735 = vmatpush.msra.mxu0 0.0
      %4736 = vmatpush.msra.mxu0 0.0
      %4737 = vmatpush.msra.mxu0 0.0
      %4738 = vmatpush.msra.mxu0 0.0
      %4739 = vmatpush.msra.mxu0 0.0
      %4740 = vmatpush.msra.mxu0 0.0
      %4741 = vmatpush.msra.mxu0 0.0
      %4742 = vmatpush.msra.mxu0 0.0
      %4743 = vmatpush.msra.mxu0 0.0
      %4744 = vmatpush.msra.mxu0 0.0
      %4745 = vmatpush.msra.mxu0 0.0
      %4746 = vmatpush.msra.mxu0 0.0
      %4747 = vmatpush.msra.mxu0 %v4730
      %4748 = vmatmul.f32.gmra.mxu0 %v4634
      %v4749 = vpop.f32.mrf.mxu0
      %v4750 = vadd.f32 0.0, %v4749
      %4751 = vmatmul.f32.gmra.mxu0 %v4637
      %v4752 = vpop.f32.mrf.mxu0
      %v4753 = vadd.f32 0.0, %v4752
      %4754 = vmatmul.f32.gmra.mxu0 %v4640
      %v4755 = vpop.f32.mrf.mxu0
      %v4756 = vadd.f32 0.0, %v4755
      %4757 = vmatmul.f32.gmra.mxu0 %v4643
      %v4758 = vpop.f32.mrf.mxu0
      %v4759 = vadd.f32 0.0, %v4758
      %4760 = vmatmul.f32.gmra.mxu0 %v4646
      %v4761 = vpop.f32.mrf.mxu0
      %v4762 = vadd.f32 0.0, %v4761
      %4763 = vmatmul.f32.gmra.mxu0 %v4649
      %v4764 = vpop.f32.mrf.mxu0
      %v4765 = vadd.f32 0.0, %v4764
      %4766 = vmatmul.f32.gmra.mxu0 %v4652
      %v4767 = vpop.f32.mrf.mxu0
      %v4768 = vadd.f32 0.0, %v4767
      %4769 = vmatmul.f32.gmra.mxu0 %v4655
      %v4770 = vpop.f32.mrf.mxu0
      %v4771 = vadd.f32 0.0, %v4770
      %4772 = vmatmul.f32.gmra.mxu0 %v4658
      %v4773 = vpop.f32.mrf.mxu0
      %v4774 = vadd.f32 0.0, %v4773
      %4775 = vmatmul.f32.gmra.mxu0 %v4661
      %v4776 = vpop.f32.mrf.mxu0
      %v4777 = vadd.f32 0.0, %v4776
      %4778 = vmatmul.f32.gmra.mxu0 %v4664
      %v4779 = vpop.f32.mrf.mxu0
      %v4780 = vadd.f32 0.0, %v4779
      %4781 = vmatmul.f32.gmra.mxu0 %v4667
      %v4782 = vpop.f32.mrf.mxu0
      %v4783 = vadd.f32 0.0, %v4782
      %4784 = vmatmul.f32.gmra.mxu0 %v4670
      %v4785 = vpop.f32.mrf.mxu0
      %v4786 = vadd.f32 0.0, %v4785
      %4787 = vmatmul.f32.gmra.mxu0 %v4673
      %v4788 = vpop.f32.mrf.mxu0
      %v4789 = vadd.f32 0.0, %v4788
      %4790 = vmatmul.f32.gmra.mxu0 %v4676
      %v4791 = vpop.f32.mrf.mxu0
      %v4792 = vadd.f32 0.0, %v4791
      %4793 = vmatmul.f32.gmra.mxu0 %v4679
      %v4794 = vpop.f32.mrf.mxu0
      %v4795 = vadd.f32 0.0, %v4794
      %4796 = vmatmul.f32.gmra.mxu0 %v4682
      %v4797 = vpop.f32.mrf.mxu0
      %v4798 = vadd.f32 0.0, %v4797
      %4799 = vmatmul.f32.gmra.mxu0 %v4685
      %v4800 = vpop.f32.mrf.mxu0
      %v4801 = vadd.f32 0.0, %v4800
      %4802 = vmatmul.f32.gmra.mxu0 %v4688
      %v4803 = vpop.f32.mrf.mxu0
      %v4804 = vadd.f32 0.0, %v4803
      %4805 = vmatmul.f32.gmra.mxu0 %v4691
      %v4806 = vpop.f32.mrf.mxu0
      %v4807 = vadd.f32 0.0, %v4806
      %4808 = vmatmul.f32.gmra.mxu0 %v4694
      %v4809 = vpop.f32.mrf.mxu0
      %v4810 = vadd.f32 0.0, %v4809
      %4811 = vmatmul.f32.gmra.mxu0 %v4697
      %v4812 = vpop.f32.mrf.mxu0
      %v4813 = vadd.f32 0.0, %v4812
      %4814 = vmatmul.f32.gmra.mxu0 %v4700
      %v4815 = vpop.f32.mrf.mxu0
      %v4816 = vadd.f32 0.0, %v4815
      %4817 = vmatmul.f32.gmra.mxu0 %v4703
      %v4818 = vpop.f32.mrf.mxu0
      %v4819 = vadd.f32 0.0, %v4818
      %4820 = vmatmul.f32.gmra.mxu0 %v4706
      %v4821 = vpop.f32.mrf.mxu0
      %v4822 = vadd.f32 0.0, %v4821
      %4823 = vmatmul.f32.gmra.mxu0 %v4709
      %v4824 = vpop.f32.mrf.mxu0
      %v4825 = vadd.f32 0.0, %v4824
      %4826 = vmatmul.f32.gmra.mxu0 %v4712
      %v4827 = vpop.f32.mrf.mxu0
      %v4828 = vadd.f32 0.0, %v4827
      %4829 = vmatmul.f32.gmra.mxu0 %v4715
      %v4830 = vpop.f32.mrf.mxu0
      %v4831 = vadd.f32 0.0, %v4830
      %4832 = vmatmul.f32.gmra.mxu0 %v4718
      %v4833 = vpop.f32.mrf.mxu0
      %v4834 = vadd.f32 0.0, %v4833
      %4835 = vmatmul.f32.gmra.mxu0 %v4721
      %v4836 = vpop.f32.mrf.mxu0
      %v4837 = vadd.f32 0.0, %v4836
      %4838 = vmatmul.f32.gmra.mxu0 %v4724
      %v4839 = vpop.f32.mrf.mxu0
      %v4840 = vadd.f32 0.0, %v4839
      %4841 = vmatmul.f32.gmra.mxu0 %v4727
      %v4842 = vpop.f32.mrf.mxu0
      %v4843 = vadd.f32 0.0, %v4842
      %4844 = vdwg.mxu0
      %v4845 = vadd.f32 %v4567, %v4750
      %v4846 = vadd.f32 %v4568, %v4753
      %v4847 = vadd.f32 %v4569, %v4756
      %v4848 = vadd.f32 %v4570, %v4759
      %v4849 = vadd.f32 %v4571, %v4762
      %v4850 = vadd.f32 %v4572, %v4765
      %v4851 = vadd.f32 %v4573, %v4768
      %v4852 = vadd.f32 %v4574, %v4771
      %v4853 = vadd.f32 %v4575, %v4774
      %v4854 = vadd.f32 %v4576, %v4777
      %v4855 = vadd.f32 %v4577, %v4780
      %v4856 = vadd.f32 %v4578, %v4783
      %v4857 = vadd.f32 %v4579, %v4786
      %v4858 = vadd.f32 %v4580, %v4789
      %v4859 = vadd.f32 %v4581, %v4792
      %v4860 = vadd.f32 %v4582, %v4795
      %v4861 = vadd.f32 %v4583, %v4798
      %v4862 = vadd.f32 %v4584, %v4801
      %v4863 = vadd.f32 %v4585, %v4804
      %v4864 = vadd.f32 %v4586, %v4807
      %v4865 = vadd.f32 %v4587, %v4810
      %v4866 = vadd.f32 %v4588, %v4813
      %v4867 = vadd.f32 %v4589, %v4816
      %v4868 = vadd.f32 %v4590, %v4819
      %v4869 = vadd.f32 %v4591, %v4822
      %v4870 = vadd.f32 %v4592, %v4825
      %v4871 = vadd.f32 %v4593, %v4828
      %v4872 = vadd.f32 %v4594, %v4831
      %v4873 = vadd.f32 %v4595, %v4834
      %v4874 = vadd.f32 %v4596, %v4837
      %v4875 = vadd.f32 %v4597, %v4840
      %v4876 = vadd.f32 %v4598, %v4843
      %v4877 = vld [vmem:[%s4599 + $0x1] sm:$0xff]
      %v4878 = vld [vmem:[%s4599 + $0x9] sm:$0xff]
      %v4879 = vld [vmem:[%s4599 + $0x19] sm:$0xff]
      %v4880 = vld [vmem:[%s4599 + $0x21] sm:$0xff]
      %v4881 = vld [vmem:[%s4599 + $0x31] sm:$0xff]
      %v4882 = vld [vmem:[%s4599 + $0x39] sm:$0xff]
      %v4883 = vld [vmem:[%s4599 + $0x49] sm:$0xff]
      %v4884 = vld [vmem:[%s4599 + $0x51] sm:$0xff]
      %v4885 = vld [vmem:[%s4599 + $0x61] sm:$0xff]
      %v4886 = vld [vmem:[%s4599 + $0x69] sm:$0xff]
      %v4887 = vld [vmem:[%s4599 + $0x79] sm:$0xff]
      %v4888 = vld [vmem:[%s4599 + $0x81] sm:$0xff]
      %v4889 = vld [vmem:[%s4599 + $0x91] sm:$0xff]
      %v4890 = vld [vmem:[%s4599 + $0x99] sm:$0xff]
      %v4891 = vld [vmem:[%s4599 + $0xa9] sm:$0xff]
      %v4892 = vld [vmem:[%s4599 + $0xb1] sm:$0xff]
      %v4893 = vld [vmem:[%s4599 + $0xc1] sm:$0xff]
      %v4894 = vld [vmem:[%s4599 + $0xc9] sm:$0xff]
      %v4895 = vld [vmem:[%s4599 + $0xd9] sm:$0xff]
      %v4896 = vld [vmem:[%s4599 + $0xe1] sm:$0xff]
      %v4897 = vld [vmem:[%s4599 + $0xf1] sm:$0xff]
      %v4898 = vld [vmem:[%s4599 + $0xf9] sm:$0xff]
      %v4899 = vld [vmem:[%s4599 + $0x109] sm:$0xff]
      %v4900 = vld [vmem:[%s4599 + $0x111] sm:$0xff]
      %v4901 = vld [vmem:[%s4599 + $0x121] sm:$0xff]
      %v4902 = vld [vmem:[%s4599 + $0x129] sm:$0xff]
      %v4903 = vld [vmem:[%s4599 + $0x139] sm:$0xff]
      %v4904 = vld [vmem:[%s4599 + $0x141] sm:$0xff]
      %v4905 = vld [vmem:[%s4599 + $0x151] sm:$0xff]
      %v4906 = vld [vmem:[%s4599 + $0x159] sm:$0xff]
      %v4907 = vld [vmem:[%s4599 + $0x169] sm:$0xff]
      %v4908 = vld [vmem:[%s4599 + $0x171] sm:$0xff]
      %v4909 = vld [vmem:[%s4 + $0x1c] sm:$0xf]
      %v4911 = vsel %vm279, %v4877, 0
      %v4914 = vsel %vm279, %v4878, 0
      %v4917 = vsel %vm279, %v4879, 0
      %v4920 = vsel %vm279, %v4880, 0
      %v4923 = vsel %vm279, %v4881, 0
      %v4926 = vsel %vm279, %v4882, 0
      %v4929 = vsel %vm279, %v4883, 0
      %v4932 = vsel %vm279, %v4884, 0
      %v4935 = vsel %vm279, %v4885, 0
      %v4938 = vsel %vm279, %v4886, 0
      %v4941 = vsel %vm279, %v4887, 0
      %v4944 = vsel %vm279, %v4888, 0
      %v4947 = vsel %vm279, %v4889, 0
      %v4950 = vsel %vm279, %v4890, 0
      %v4953 = vsel %vm279, %v4891, 0
      %v4956 = vsel %vm279, %v4892, 0
      %v4959 = vsel %vm279, %v4893, 0
      %v4962 = vsel %vm279, %v4894, 0
      %v4965 = vsel %vm279, %v4895, 0
      %v4968 = vsel %vm279, %v4896, 0
      %v4971 = vsel %vm279, %v4897, 0
      %v4974 = vsel %vm279, %v4898, 0
      %v4977 = vsel %vm279, %v4899, 0
      %v4980 = vsel %vm279, %v4900, 0
      %v4983 = vsel %vm279, %v4901, 0
      %v4986 = vsel %vm279, %v4902, 0
      %v4989 = vsel %vm279, %v4903, 0
      %v4992 = vsel %vm279, %v4904, 0
      %v4995 = vsel %vm279, %v4905, 0
      %v4998 = vsel %vm279, %v4906, 0
      %v5001 = vsel %vm279, %v4907, 0
      %v5004 = vsel %vm279, %v4908, 0
      %v5007 = vsel %vm595, %v4909, 0
      %5009 = vmatpush.msra.mxu0 0.0
      %5010 = vmatpush.msra.mxu0 0.0
      %5011 = vmatpush.msra.mxu0 0.0
      %5012 = vmatpush.msra.mxu0 0.0
      %5013 = vmatpush.msra.mxu0 0.0
      %5014 = vmatpush.msra.mxu0 0.0
      %5015 = vmatpush.msra.mxu0 0.0
      %5016 = vmatpush.msra.mxu0 0.0
      %5017 = vmatpush.msra.mxu0 0.0
      %5018 = vmatpush.msra.mxu0 0.0
      %5019 = vmatpush.msra.mxu0 0.0
      %5020 = vmatpush.msra.mxu0 0.0
      %5021 = vmatpush.msra.mxu0 0.0
      %5022 = vmatpush.msra.mxu0 0.0
      %5023 = vmatpush.msra.mxu0 0.0
      %5024 = vmatpush.msra.mxu0 %v5007
      %5025 = vmatmul.f32.gmra.mxu0 %v4911
      %v5026 = vpop.f32.mrf.mxu0
      %v5027 = vadd.f32 0.0, %v5026
      %5028 = vmatmul.f32.gmra.mxu0 %v4914
      %v5029 = vpop.f32.mrf.mxu0
      %v5030 = vadd.f32 0.0, %v5029
      %5031 = vmatmul.f32.gmra.mxu0 %v4917
      %v5032 = vpop.f32.mrf.mxu0
      %v5033 = vadd.f32 0.0, %v5032
      %5034 = vmatmul.f32.gmra.mxu0 %v4920
      %v5035 = vpop.f32.mrf.mxu0
      %v5036 = vadd.f32 0.0, %v5035
      %5037 = vmatmul.f32.gmra.mxu0 %v4923
      %v5038 = vpop.f32.mrf.mxu0
      %v5039 = vadd.f32 0.0, %v5038
      %5040 = vmatmul.f32.gmra.mxu0 %v4926
      %v5041 = vpop.f32.mrf.mxu0
      %v5042 = vadd.f32 0.0, %v5041
      %5043 = vmatmul.f32.gmra.mxu0 %v4929
      %v5044 = vpop.f32.mrf.mxu0
      %v5045 = vadd.f32 0.0, %v5044
      %5046 = vmatmul.f32.gmra.mxu0 %v4932
      %v5047 = vpop.f32.mrf.mxu0
      %v5048 = vadd.f32 0.0, %v5047
      %5049 = vmatmul.f32.gmra.mxu0 %v4935
      %v5050 = vpop.f32.mrf.mxu0
      %v5051 = vadd.f32 0.0, %v5050
      %5052 = vmatmul.f32.gmra.mxu0 %v4938
      %v5053 = vpop.f32.mrf.mxu0
      %v5054 = vadd.f32 0.0, %v5053
      %5055 = vmatmul.f32.gmra.mxu0 %v4941
      %v5056 = vpop.f32.mrf.mxu0
      %v5057 = vadd.f32 0.0, %v5056
      %5058 = vmatmul.f32.gmra.mxu0 %v4944
      %v5059 = vpop.f32.mrf.mxu0
      %v5060 = vadd.f32 0.0, %v5059
      %5061 = vmatmul.f32.gmra.mxu0 %v4947
      %v5062 = vpop.f32.mrf.mxu0
      %v5063 = vadd.f32 0.0, %v5062
      %5064 = vmatmul.f32.gmra.mxu0 %v4950
      %v5065 = vpop.f32.mrf.mxu0
      %v5066 = vadd.f32 0.0, %v5065
      %5067 = vmatmul.f32.gmra.mxu0 %v4953
      %v5068 = vpop.f32.mrf.mxu0
      %v5069 = vadd.f32 0.0, %v5068
      %5070 = vmatmul.f32.gmra.mxu0 %v4956
      %v5071 = vpop.f32.mrf.mxu0
      %v5072 = vadd.f32 0.0, %v5071
      %5073 = vmatmul.f32.gmra.mxu0 %v4959
      %v5074 = vpop.f32.mrf.mxu0
      %v5075 = vadd.f32 0.0, %v5074
      %5076 = vmatmul.f32.gmra.mxu0 %v4962
      %v5077 = vpop.f32.mrf.mxu0
      %v5078 = vadd.f32 0.0, %v5077
      %5079 = vmatmul.f32.gmra.mxu0 %v4965
      %v5080 = vpop.f32.mrf.mxu0
      %v5081 = vadd.f32 0.0, %v5080
      %5082 = vmatmul.f32.gmra.mxu0 %v4968
      %v5083 = vpop.f32.mrf.mxu0
      %v5084 = vadd.f32 0.0, %v5083
      %5085 = vmatmul.f32.gmra.mxu0 %v4971
      %v5086 = vpop.f32.mrf.mxu0
      %v5087 = vadd.f32 0.0, %v5086
      %5088 = vmatmul.f32.gmra.mxu0 %v4974
      %v5089 = vpop.f32.mrf.mxu0
      %v5090 = vadd.f32 0.0, %v5089
      %5091 = vmatmul.f32.gmra.mxu0 %v4977
      %v5092 = vpop.f32.mrf.mxu0
      %v5093 = vadd.f32 0.0, %v5092
      %5094 = vmatmul.f32.gmra.mxu0 %v4980
      %v5095 = vpop.f32.mrf.mxu0
      %v5096 = vadd.f32 0.0, %v5095
      %5097 = vmatmul.f32.gmra.mxu0 %v4983
      %v5098 = vpop.f32.mrf.mxu0
      %v5099 = vadd.f32 0.0, %v5098
      %5100 = vmatmul.f32.gmra.mxu0 %v4986
      %v5101 = vpop.f32.mrf.mxu0
      %v5102 = vadd.f32 0.0, %v5101
      %5103 = vmatmul.f32.gmra.mxu0 %v4989
      %v5104 = vpop.f32.mrf.mxu0
      %v5105 = vadd.f32 0.0, %v5104
      %5106 = vmatmul.f32.gmra.mxu0 %v4992
      %v5107 = vpop.f32.mrf.mxu0
      %v5108 = vadd.f32 0.0, %v5107
      %5109 = vmatmul.f32.gmra.mxu0 %v4995
      %v5110 = vpop.f32.mrf.mxu0
      %v5111 = vadd.f32 0.0, %v5110
      %5112 = vmatmul.f32.gmra.mxu0 %v4998
      %v5113 = vpop.f32.mrf.mxu0
      %v5114 = vadd.f32 0.0, %v5113
      %5115 = vmatmul.f32.gmra.mxu0 %v5001
      %v5116 = vpop.f32.mrf.mxu0
      %v5117 = vadd.f32 0.0, %v5116
      %5118 = vmatmul.f32.gmra.mxu0 %v5004
      %v5119 = vpop.f32.mrf.mxu0
      %v5120 = vadd.f32 0.0, %v5119
      %5121 = vdwg.mxu0
      %v5122 = vadd.f32 %v4845, %v5027
      %v5123 = vadd.f32 %v4846, %v5030
      %v5124 = vadd.f32 %v4847, %v5033
      %v5125 = vadd.f32 %v4848, %v5036
      %v5126 = vadd.f32 %v4849, %v5039
      %v5127 = vadd.f32 %v4850, %v5042
      %v5128 = vadd.f32 %v4851, %v5045
      %v5129 = vadd.f32 %v4852, %v5048
      %v5130 = vadd.f32 %v4853, %v5051
      %v5131 = vadd.f32 %v4854, %v5054
      %v5132 = vadd.f32 %v4855, %v5057
      %v5133 = vadd.f32 %v4856, %v5060
      %v5134 = vadd.f32 %v4857, %v5063
      %v5135 = vadd.f32 %v4858, %v5066
      %v5136 = vadd.f32 %v4859, %v5069
      %v5137 = vadd.f32 %v4860, %v5072
      %v5138 = vadd.f32 %v4861, %v5075
      %v5139 = vadd.f32 %v4862, %v5078
      %v5140 = vadd.f32 %v4863, %v5081
      %v5141 = vadd.f32 %v4864, %v5084
      %v5142 = vadd.f32 %v4865, %v5087
      %v5143 = vadd.f32 %v4866, %v5090
      %v5144 = vadd.f32 %v4867, %v5093
      %v5145 = vadd.f32 %v4868, %v5096
      %v5146 = vadd.f32 %v4869, %v5099
      %v5147 = vadd.f32 %v4870, %v5102
      %v5148 = vadd.f32 %v4871, %v5105
      %v5149 = vadd.f32 %v4872, %v5108
      %v5150 = vadd.f32 %v4873, %v5111
      %v5151 = vadd.f32 %v4874, %v5114
      %v5152 = vadd.f32 %v4875, %v5117
      %v5153 = vadd.f32 %v4876, %v5120
      %v5154 = vld [vmem:[%s4599 + $0x2] sm:$0xff]
      %v5155 = vld [vmem:[%s4599 + $0xa] sm:$0xff]
      %v5156 = vld [vmem:[%s4599 + $0x1a] sm:$0xff]
      %v5157 = vld [vmem:[%s4599 + $0x22] sm:$0xff]
      %v5158 = vld [vmem:[%s4599 + $0x32] sm:$0xff]
      %v5159 = vld [vmem:[%s4599 + $0x3a] sm:$0xff]
      %v5160 = vld [vmem:[%s4599 + $0x4a] sm:$0xff]
      %v5161 = vld [vmem:[%s4599 + $0x52] sm:$0xff]
      %v5162 = vld [vmem:[%s4599 + $0x62] sm:$0xff]
      %v5163 = vld [vmem:[%s4599 + $0x6a] sm:$0xff]
      %v5164 = vld [vmem:[%s4599 + $0x7a] sm:$0xff]
      %v5165 = vld [vmem:[%s4599 + $0x82] sm:$0xff]
      %v5166 = vld [vmem:[%s4599 + $0x92] sm:$0xff]
      %v5167 = vld [vmem:[%s4599 + $0x9a] sm:$0xff]
      %v5168 = vld [vmem:[%s4599 + $0xaa] sm:$0xff]
      %v5169 = vld [vmem:[%s4599 + $0xb2] sm:$0xff]
      %v5170 = vld [vmem:[%s4599 + $0xc2] sm:$0xff]
      %v5171 = vld [vmem:[%s4599 + $0xca] sm:$0xff]
      %v5172 = vld [vmem:[%s4599 + $0xda] sm:$0xff]
      %v5173 = vld [vmem:[%s4599 + $0xe2] sm:$0xff]
      %v5174 = vld [vmem:[%s4599 + $0xf2] sm:$0xff]
      %v5175 = vld [vmem:[%s4599 + $0xfa] sm:$0xff]
      %v5176 = vld [vmem:[%s4599 + $0x10a] sm:$0xff]
      %v5177 = vld [vmem:[%s4599 + $0x112] sm:$0xff]
      %v5178 = vld [vmem:[%s4599 + $0x122] sm:$0xff]
      %v5179 = vld [vmem:[%s4599 + $0x12a] sm:$0xff]
      %v5180 = vld [vmem:[%s4599 + $0x13a] sm:$0xff]
      %v5181 = vld [vmem:[%s4599 + $0x142] sm:$0xff]
      %v5182 = vld [vmem:[%s4599 + $0x152] sm:$0xff]
      %v5183 = vld [vmem:[%s4599 + $0x15a] sm:$0xff]
      %v5184 = vld [vmem:[%s4599 + $0x16a] sm:$0xff]
      %v5185 = vld [vmem:[%s4599 + $0x172] sm:$0xff]
      %v5186 = vld [vmem:[%s4 + $0x20] sm:$0xf]
      %v5188 = vsel %vm279, %v5154, 0
      %v5191 = vsel %vm279, %v5155, 0
      %v5194 = vsel %vm279, %v5156, 0
      %v5197 = vsel %vm279, %v5157, 0
      %v5200 = vsel %vm279, %v5158, 0
      %v5203 = vsel %vm279, %v5159, 0
      %v5206 = vsel %vm279, %v5160, 0
      %v5209 = vsel %vm279, %v5161, 0
      %v5212 = vsel %vm279, %v5162, 0
      %v5215 = vsel %vm279, %v5163, 0
      %v5218 = vsel %vm279, %v5164, 0
      %v5221 = vsel %vm279, %v5165, 0
      %v5224 = vsel %vm279, %v5166, 0
      %v5227 = vsel %vm279, %v5167, 0
      %v5230 = vsel %vm279, %v5168, 0
      %v5233 = vsel %vm279, %v5169, 0
      %v5236 = vsel %vm279, %v5170, 0
      %v5239 = vsel %vm279, %v5171, 0
      %v5242 = vsel %vm279, %v5172, 0
      %v5245 = vsel %vm279, %v5173, 0
      %v5248 = vsel %vm279, %v5174, 0
      %v5251 = vsel %vm279, %v5175, 0
      %v5254 = vsel %vm279, %v5176, 0
      %v5257 = vsel %vm279, %v5177, 0
      %v5260 = vsel %vm279, %v5178, 0
      %v5263 = vsel %vm279, %v5179, 0
      %v5266 = vsel %vm279, %v5180, 0
      %v5269 = vsel %vm279, %v5181, 0
      %v5272 = vsel %vm279, %v5182, 0
      %v5275 = vsel %vm279, %v5183, 0
      %v5278 = vsel %vm279, %v5184, 0
      %v5281 = vsel %vm279, %v5185, 0
      %v5284 = vsel %vm595, %v5186, 0
      %5286 = vmatpush.msra.mxu0 0.0
      %5287 = vmatpush.msra.mxu0 0.0
      %5288 = vmatpush.msra.mxu0 0.0
      %5289 = vmatpush.msra.mxu0 0.0
      %5290 = vmatpush.msra.mxu0 0.0
      %5291 = vmatpush.msra.mxu0 0.0
      %5292 = vmatpush.msra.mxu0 0.0
      %5293 = vmatpush.msra.mxu0 0.0
      %5294 = vmatpush.msra.mxu0 0.0
      %5295 = vmatpush.msra.mxu0 0.0
      %5296 = vmatpush.msra.mxu0 0.0
      %5297 = vmatpush.msra.mxu0 0.0
      %5298 = vmatpush.msra.mxu0 0.0
      %5299 = vmatpush.msra.mxu0 0.0
      %5300 = vmatpush.msra.mxu0 0.0
      %5301 = vmatpush.msra.mxu0 %v5284
      %5302 = vmatmul.f32.gmra.mxu0 %v5188
      %v5303 = vpop.f32.mrf.mxu0
      %v5304 = vadd.f32 0.0, %v5303
      %5305 = vmatmul.f32.gmra.mxu0 %v5191
      %v5306 = vpop.f32.mrf.mxu0
      %v5307 = vadd.f32 0.0, %v5306
      %5308 = vmatmul.f32.gmra.mxu0 %v5194
      %v5309 = vpop.f32.mrf.mxu0
      %v5310 = vadd.f32 0.0, %v5309
      %5311 = vmatmul.f32.gmra.mxu0 %v5197
      %v5312 = vpop.f32.mrf.mxu0
      %v5313 = vadd.f32 0.0, %v5312
      %5314 = vmatmul.f32.gmra.mxu0 %v5200
      %v5315 = vpop.f32.mrf.mxu0
      %v5316 = vadd.f32 0.0, %v5315
      %5317 = vmatmul.f32.gmra.mxu0 %v5203
      %v5318 = vpop.f32.mrf.mxu0
      %v5319 = vadd.f32 0.0, %v5318
      %5320 = vmatmul.f32.gmra.mxu0 %v5206
      %v5321 = vpop.f32.mrf.mxu0
      %v5322 = vadd.f32 0.0, %v5321
      %5323 = vmatmul.f32.gmra.mxu0 %v5209
      %v5324 = vpop.f32.mrf.mxu0
      %v5325 = vadd.f32 0.0, %v5324
      %5326 = vmatmul.f32.gmra.mxu0 %v5212
      %v5327 = vpop.f32.mrf.mxu0
      %v5328 = vadd.f32 0.0, %v5327
      %5329 = vmatmul.f32.gmra.mxu0 %v5215
      %v5330 = vpop.f32.mrf.mxu0
      %v5331 = vadd.f32 0.0, %v5330
      %5332 = vmatmul.f32.gmra.mxu0 %v5218
      %v5333 = vpop.f32.mrf.mxu0
      %v5334 = vadd.f32 0.0, %v5333
      %5335 = vmatmul.f32.gmra.mxu0 %v5221
      %v5336 = vpop.f32.mrf.mxu0
      %v5337 = vadd.f32 0.0, %v5336
      %5338 = vmatmul.f32.gmra.mxu0 %v5224
      %v5339 = vpop.f32.mrf.mxu0
      %v5340 = vadd.f32 0.0, %v5339
      %5341 = vmatmul.f32.gmra.mxu0 %v5227
      %v5342 = vpop.f32.mrf.mxu0
      %v5343 = vadd.f32 0.0, %v5342
      %5344 = vmatmul.f32.gmra.mxu0 %v5230
      %v5345 = vpop.f32.mrf.mxu0
      %v5346 = vadd.f32 0.0, %v5345
      %5347 = vmatmul.f32.gmra.mxu0 %v5233
      %v5348 = vpop.f32.mrf.mxu0
      %v5349 = vadd.f32 0.0, %v5348
      %5350 = vmatmul.f32.gmra.mxu0 %v5236
      %v5351 = vpop.f32.mrf.mxu0
      %v5352 = vadd.f32 0.0, %v5351
      %5353 = vmatmul.f32.gmra.mxu0 %v5239
      %v5354 = vpop.f32.mrf.mxu0
      %v5355 = vadd.f32 0.0, %v5354
      %5356 = vmatmul.f32.gmra.mxu0 %v5242
      %v5357 = vpop.f32.mrf.mxu0
      %v5358 = vadd.f32 0.0, %v5357
      %5359 = vmatmul.f32.gmra.mxu0 %v5245
      %v5360 = vpop.f32.mrf.mxu0
      %v5361 = vadd.f32 0.0, %v5360
      %5362 = vmatmul.f32.gmra.mxu0 %v5248
      %v5363 = vpop.f32.mrf.mxu0
      %v5364 = vadd.f32 0.0, %v5363
      %5365 = vmatmul.f32.gmra.mxu0 %v5251
      %v5366 = vpop.f32.mrf.mxu0
      %v5367 = vadd.f32 0.0, %v5366
      %5368 = vmatmul.f32.gmra.mxu0 %v5254
      %v5369 = vpop.f32.mrf.mxu0
      %v5370 = vadd.f32 0.0, %v5369
      %5371 = vmatmul.f32.gmra.mxu0 %v5257
      %v5372 = vpop.f32.mrf.mxu0
      %v5373 = vadd.f32 0.0, %v5372
      %5374 = vmatmul.f32.gmra.mxu0 %v5260
      %v5375 = vpop.f32.mrf.mxu0
      %v5376 = vadd.f32 0.0, %v5375
      %5377 = vmatmul.f32.gmra.mxu0 %v5263
      %v5378 = vpop.f32.mrf.mxu0
      %v5379 = vadd.f32 0.0, %v5378
      %5380 = vmatmul.f32.gmra.mxu0 %v5266
      %v5381 = vpop.f32.mrf.mxu0
      %v5382 = vadd.f32 0.0, %v5381
      %5383 = vmatmul.f32.gmra.mxu0 %v5269
      %v5384 = vpop.f32.mrf.mxu0
      %v5385 = vadd.f32 0.0, %v5384
      %5386 = vmatmul.f32.gmra.mxu0 %v5272
      %v5387 = vpop.f32.mrf.mxu0
      %v5388 = vadd.f32 0.0, %v5387
      %5389 = vmatmul.f32.gmra.mxu0 %v5275
      %v5390 = vpop.f32.mrf.mxu0
      %v5391 = vadd.f32 0.0, %v5390
      %5392 = vmatmul.f32.gmra.mxu0 %v5278
      %v5393 = vpop.f32.mrf.mxu0
      %v5394 = vadd.f32 0.0, %v5393
      %5395 = vmatmul.f32.gmra.mxu0 %v5281
      %v5396 = vpop.f32.mrf.mxu0
      %v5397 = vadd.f32 0.0, %v5396
      %5398 = vdwg.mxu0
      %v5399 = vadd.f32 %v5122, %v5304
      %v5400 = vadd.f32 %v5123, %v5307
      %v5401 = vadd.f32 %v5124, %v5310
      %v5402 = vadd.f32 %v5125, %v5313
      %v5403 = vadd.f32 %v5126, %v5316
      %v5404 = vadd.f32 %v5127, %v5319
      %v5405 = vadd.f32 %v5128, %v5322
      %v5406 = vadd.f32 %v5129, %v5325
      %v5407 = vadd.f32 %v5130, %v5328
      %v5408 = vadd.f32 %v5131, %v5331
      %v5409 = vadd.f32 %v5132, %v5334
      %v5410 = vadd.f32 %v5133, %v5337
      %v5411 = vadd.f32 %v5134, %v5340
      %v5412 = vadd.f32 %v5135, %v5343
      %v5413 = vadd.f32 %v5136, %v5346
      %v5414 = vadd.f32 %v5137, %v5349
      %v5415 = vadd.f32 %v5138, %v5352
      %v5416 = vadd.f32 %v5139, %v5355
      %v5417 = vadd.f32 %v5140, %v5358
      %v5418 = vadd.f32 %v5141, %v5361
      %v5419 = vadd.f32 %v5142, %v5364
      %v5420 = vadd.f32 %v5143, %v5367
      %v5421 = vadd.f32 %v5144, %v5370
      %v5422 = vadd.f32 %v5145, %v5373
      %v5423 = vadd.f32 %v5146, %v5376
      %v5424 = vadd.f32 %v5147, %v5379
      %v5425 = vadd.f32 %v5148, %v5382
      %v5426 = vadd.f32 %v5149, %v5385
      %v5427 = vadd.f32 %v5150, %v5388
      %v5428 = vadd.f32 %v5151, %v5391
      %v5429 = vadd.f32 %v5152, %v5394
      %v5430 = vadd.f32 %v5153, %v5397
      %v5431 = vld [vmem:[%s5] sm:$0x1]
      %v5433 = vperm.slane %v5431, 0
      %v5435 = vmul.f32 %v5399, %v5433
      %v5436 = vmul.f32 %v5400, %v5433
      %v5437 = vmul.f32 %v5401, %v5433
      %v5438 = vmul.f32 %v5402, %v5433
      %v5439 = vmul.f32 %v5403, %v5433
      %v5440 = vmul.f32 %v5404, %v5433
      %v5441 = vmul.f32 %v5405, %v5433
      %v5442 = vmul.f32 %v5406, %v5433
      %v5443 = vmul.f32 %v5407, %v5433
      %v5444 = vmul.f32 %v5408, %v5433
      %v5445 = vmul.f32 %v5409, %v5433
      %v5446 = vmul.f32 %v5410, %v5433
      %v5447 = vmul.f32 %v5411, %v5433
      %v5448 = vmul.f32 %v5412, %v5433
      %v5449 = vmul.f32 %v5413, %v5433
      %v5450 = vmul.f32 %v5414, %v5433
      %v5451 = vmul.f32 %v5415, %v5433
      %v5452 = vmul.f32 %v5416, %v5433
      %v5453 = vmul.f32 %v5417, %v5433
      %v5454 = vmul.f32 %v5418, %v5433
      %v5455 = vmul.f32 %v5419, %v5433
      %v5456 = vmul.f32 %v5420, %v5433
      %v5457 = vmul.f32 %v5421, %v5433
      %v5458 = vmul.f32 %v5422, %v5433
      %v5459 = vmul.f32 %v5423, %v5433
      %v5460 = vmul.f32 %v5424, %v5433
      %v5461 = vmul.f32 %v5425, %v5433
      %v5462 = vmul.f32 %v5426, %v5433
      %v5463 = vmul.f32 %v5427, %v5433
      %v5464 = vmul.f32 %v5428, %v5433
      %v5465 = vmul.f32 %v5429, %v5433
      %v5466 = vmul.f32 %v5430, %v5433
      %v5467 = vld [vmem:[%s6] sm:$0x1]
      %v5469 = vperm.slane %v5467, 0
      %v5471 = vadd.f32 %v5435, %v5469
      %v5472 = vadd.f32 %v5436, %v5469
      %v5473 = vadd.f32 %v5437, %v5469
      %v5474 = vadd.f32 %v5438, %v5469
      %v5475 = vadd.f32 %v5439, %v5469
      %v5476 = vadd.f32 %v5440, %v5469
      %v5477 = vadd.f32 %v5441, %v5469
      %v5478 = vadd.f32 %v5442, %v5469
      %v5479 = vadd.f32 %v5443, %v5469
      %v5480 = vadd.f32 %v5444, %v5469
      %v5481 = vadd.f32 %v5445, %v5469
      %v5482 = vadd.f32 %v5446, %v5469
      %v5483 = vadd.f32 %v5447, %v5469
      %v5484 = vadd.f32 %v5448, %v5469
      %v5485 = vadd.f32 %v5449, %v5469
      %v5486 = vadd.f32 %v5450, %v5469
      %v5487 = vadd.f32 %v5451, %v5469
      %v5488 = vadd.f32 %v5452, %v5469
      %v5489 = vadd.f32 %v5453, %v5469
      %v5490 = vadd.f32 %v5454, %v5469
      %v5491 = vadd.f32 %v5455, %v5469
      %v5492 = vadd.f32 %v5456, %v5469
      %v5493 = vadd.f32 %v5457, %v5469
      %v5494 = vadd.f32 %v5458, %v5469
      %v5495 = vadd.f32 %v5459, %v5469
      %v5496 = vadd.f32 %v5460, %v5469
      %v5497 = vadd.f32 %v5461, %v5469
      %v5498 = vadd.f32 %v5462, %v5469
      %v5499 = vadd.f32 %v5463, %v5469
      %v5500 = vadd.f32 %v5464, %v5469
      %v5501 = vadd.f32 %v5465, %v5469
      %v5502 = vadd.f32 %v5466, %v5469
      %v5503 = vmax.f32 %v5471, 0.0
      %v5504 = vmax.f32 %v5472, 0.0
      %v5505 = vmax.f32 %v5473, 0.0
      %v5506 = vmax.f32 %v5474, 0.0
      %v5507 = vmax.f32 %v5475, 0.0
      %v5508 = vmax.f32 %v5476, 0.0
      %v5509 = vmax.f32 %v5477, 0.0
      %v5510 = vmax.f32 %v5478, 0.0
      %v5511 = vmax.f32 %v5479, 0.0
      %v5512 = vmax.f32 %v5480, 0.0
      %v5513 = vmax.f32 %v5481, 0.0
      %v5514 = vmax.f32 %v5482, 0.0
      %v5515 = vmax.f32 %v5483, 0.0
      %v5516 = vmax.f32 %v5484, 0.0
      %v5517 = vmax.f32 %v5485, 0.0
      %v5518 = vmax.f32 %v5486, 0.0
      %v5519 = vmax.f32 %v5487, 0.0
      %v5520 = vmax.f32 %v5488, 0.0
      %v5521 = vmax.f32 %v5489, 0.0
      %v5522 = vmax.f32 %v5490, 0.0
      %v5523 = vmax.f32 %v5491, 0.0
      %v5524 = vmax.f32 %v5492, 0.0
      %v5525 = vmax.f32 %v5493, 0.0
      %v5526 = vmax.f32 %v5494, 0.0
      %v5527 = vmax.f32 %v5495, 0.0
      %v5528 = vmax.f32 %v5496, 0.0
      %v5529 = vmax.f32 %v5497, 0.0
      %v5530 = vmax.f32 %v5498, 0.0
      %v5531 = vmax.f32 %v5499, 0.0
      %v5532 = vmax.f32 %v5500, 0.0
      %v5533 = vmax.f32 %v5501, 0.0
      %v5534 = vmax.f32 %v5502, 0.0
      %vm5535 = vcmask 64512
      %5536 = vst.msk [vmem:[%s278] sm:$0xff] %vm5535, %v5503
      %5537 = vst.msk [vmem:[%s278 + $0x8] sm:$0xff] %vm5535, %v5504
      %5538 = vst.msk [vmem:[%s278 + $0x10] sm:$0xff] %vm5535, %v5505
      %5539 = vst.msk [vmem:[%s278 + $0x18] sm:$0xff] %vm5535, %v5506
      %5540 = vst.msk [vmem:[%s278 + $0x20] sm:$0xff] %vm5535, %v5507
      %5541 = vst.msk [vmem:[%s278 + $0x28] sm:$0xff] %vm5535, %v5508
      %5542 = vst.msk [vmem:[%s278 + $0x30] sm:$0xff] %vm5535, %v5509
      %5543 = vst.msk [vmem:[%s278 + $0x38] sm:$0xff] %vm5535, %v5510
      %5544 = vst.msk [vmem:[%s278 + $0x40] sm:$0xff] %vm5535, %v5511
      %5545 = vst.msk [vmem:[%s278 + $0x48] sm:$0xff] %vm5535, %v5512
      %5546 = vst.msk [vmem:[%s278 + $0x50] sm:$0xff] %vm5535, %v5513
      %5547 = vst.msk [vmem:[%s278 + $0x58] sm:$0xff] %vm5535, %v5514
      %5548 = vst.msk [vmem:[%s278 + $0x60] sm:$0xff] %vm5535, %v5515
      %5549 = vst.msk [vmem:[%s278 + $0x68] sm:$0xff] %vm5535, %v5516
      %5550 = vst.msk [vmem:[%s278 + $0x70] sm:$0xff] %vm5535, %v5517
      %5551 = vst.msk [vmem:[%s278 + $0x78] sm:$0xff] %vm5535, %v5518
      %5552 = vst.msk [vmem:[%s278 + $0x80] sm:$0xff] %vm5535, %v5519
      %5553 = vst.msk [vmem:[%s278 + $0x88] sm:$0xff] %vm5535, %v5520
      %5554 = vst.msk [vmem:[%s278 + $0x90] sm:$0xff] %vm5535, %v5521
      %5555 = vst.msk [vmem:[%s278 + $0x98] sm:$0xff] %vm5535, %v5522
      %5556 = vst.msk [vmem:[%s278 + $0xa0] sm:$0xff] %vm5535, %v5523
      %5557 = vst.msk [vmem:[%s278 + $0xa8] sm:$0xff] %vm5535, %v5524
      %5558 = vst.msk [vmem:[%s278 + $0xb0] sm:$0xff] %vm5535, %v5525
      %5559 = vst.msk [vmem:[%s278 + $0xb8] sm:$0xff] %vm5535, %v5526
      %5560 = vst.msk [vmem:[%s278 + $0xc0] sm:$0xff] %vm5535, %v5527
      %5561 = vst.msk [vmem:[%s278 + $0xc8] sm:$0xff] %vm5535, %v5528
      %5562 = vst.msk [vmem:[%s278 + $0xd0] sm:$0xff] %vm5535, %v5529
      %5563 = vst.msk [vmem:[%s278 + $0xd8] sm:$0xff] %vm5535, %v5530
      %5564 = vst.msk [vmem:[%s278 + $0xe0] sm:$0xff] %vm5535, %v5531
      %5565 = vst.msk [vmem:[%s278 + $0xe8] sm:$0xff] %vm5535, %v5532
      %5566 = vst.msk [vmem:[%s278 + $0xf0] sm:$0xff] %vm5535, %v5533
      %5567 = vst.msk [vmem:[%s278 + $0xf8] sm:$0xff] %vm5535, %v5534
      %p5568 = scmp.lt.s32.totalorder %s18, 1
      %s5569 = scalar_select %p5568, %s18, 1
      %s5570 = smul.addr %s5569, 32
      %s5571 = smul.addr %s5570, 8
      %s5572 = scalar_lea.vmem %s7, %s5571
      // Predicated region
      $region49: #{tpu_custom_call.1} parent=47 // pred_check
        %p5573 = pneg %p188
      $region50: #{tpu_custom_call.1} parent=47 // pred_check_branch
        %5575 = sbr.rel (%p5573) target = $region52
      $region51: #{tpu_custom_call.1} parent=47 // pred_region
        _
      $region52: #{tpu_custom_call.1} parent=47 // pred_fallthru
        _
    $region48: #{tpu_custom_call.1} parent=5 // pred_fallthru
      _
    %p5576 = scmp.le.s32.totalorder 2, %s13
    // Predicated region
    $region53: #{tpu_custom_call.1} parent=5 // pred_check
      %p5577 = pneg %p5576
    $region54: #{tpu_custom_call.1} parent=5 // pred_check_branch
      %5579 = sbr.rel (%p5577) target = $region56
    $region55: #{tpu_custom_call.1} parent=5 // pred_region
      %s5580 = ssub.s32 %s13, 2
      // Predicated region
      $region57: #{tpu_custom_call.1} parent=55 // pred_check
        %p5581 = pneg %p194
      $region58: #{tpu_custom_call.1} parent=55 // pred_check_branch
        %5583 = sbr.rel (%p5581) target = $region60
      $region59: #{tpu_custom_call.1} parent=55 // pred_region
        %p5584 = scmp.lt.s32.totalorder %s19, 1
        %s5585 = scalar_select %p5584, %s19, 1
        %s5586 = smul.addr %s5585, 32
        %s5587 = smul.addr %s5586, 8
        %s5588 = scalar_lea.vmem %s7, %s5587
      $region60: #{tpu_custom_call.1} parent=55 // pred_fallthru
        _
    $region56: #{tpu_custom_call.1} parent=5 // pred_fallthru
      _
  $region6: #{tpu_custom_call.1} parent=0 // loop_footer
    %s17 = sadd.s32 1, %s13
  $region7: #{tpu_custom_call.1} parent=0 // loop_footer_branch
    %12 = sbr.rel target = $region3
  $region8: #{tpu_custom_call.1} parent=0 // loop_exit
    _

</llo_original>
